<compile_context>
chip_gen: v7x
topology: tpu7x:2x2x1
jax: 0.10.0
libtpu: 0.0.40
codegen_flags: <defaults>
</compile_context>

<pallas_src>
import functools
import math

import jax
import jax.numpy as jnp
from jax.experimental import pallas as pl
from jax.experimental.pallas import tpu as pltpu


# ----------------------------------------------------------------------------
# Pallas kernels
# ----------------------------------------------------------------------------
def _layernorm(x, g, b, eps=1e-5):
    mu = jnp.mean(x, axis=-1, keepdims=True)
    var = jnp.mean(jnp.square(x - mu), axis=-1, keepdims=True)
    return (x - mu) * jax.lax.rsqrt(var + eps) * g + b


def performer_reduce_kernel(T_total, needs_mask,
                            x_ref, g1_ref, b1_ref, wkqv_ref, bkqv_ref, w_prm_ref,
                            qp_ref, v_ref, kpsum_ref, kptv_ref):
    """Per token tile: LN1 -> kqv -> prm_exp (once); stash qp/v; accumulate
    kp_sum (1, m) and kptv (m, emb) in resident f32 output blocks."""
    t = pl.program_id(1)
    tq = x_ref.shape[2]
    emb = wkqv_ref.shape[1] // 3
    m = w_prm_ref.shape[1]
    inv_sqrt_m = 1.0 / math.sqrt(m)

    # LayerNorm 1 over the feature (sublane) axis of the channel-major block.
    xf = x_ref[0].astype(jnp.float32)                               # (dim, tq)
    mu = jnp.mean(xf, axis=0, keepdims=True)                        # (1, tq)
    var = jnp.mean(jnp.square(xf - mu), axis=0, keepdims=True)
    xn = (xf - mu) * jax.lax.rsqrt(var + 1e-5) * g1_ref[...] + b1_ref[...]

    # kqv linear: contract the feature axis (LHS-transposed, MXU-native);
    # result lands token-major (tq, 3*emb).
    kqv = jax.lax.dot_general(xn.astype(jnp.bfloat16), wkqv_ref[...],
                              (((0,), (0,)), ((), ())),
                              preferred_element_type=jnp.float32) + bkqv_ref[...]
    k = kqv[:, 0:emb]
    q = kqv[:, emb:2 * emb]
    v = kqv[:, 2 * emb:3 * emb]

    w_prm = w_prm_ref[...]                                          # (emb, m) bf16

    def prm_exp(z):                                                 # (tq, emb) f32
        zd = 0.5 * jnp.sum(z * z, axis=-1, keepdims=True)           # (tq, 1)
        wtz = jnp.dot(z.astype(jnp.bfloat16), w_prm,
                      preferred_element_type=jnp.float32)           # (tq, m)
        return jnp.exp(wtz - zd) * inv_sqrt_m

    kp = prm_exp(k)
    qp = prm_exp(q)

    if needs_mask:
        # Only the reduction operands need masking; padded rows of the qp / v
        # stashes are clipped on writeback and never read back validly.
        row = jax.lax.broadcasted_iota(jnp.int32, (tq, 1), 0) + t * tq
        valid = row < T_total
        kp = jnp.where(valid, kp, 0.0)          # NaN-safe select
        v_red = jnp.where(valid, v, 0.0)
    else:
        v_red = v

    qp_ref[0] = qp                                                  # f32 stash
    v_ref[0] = v.astype(jnp.bfloat16)                               # bf16 stash

    @pl.when(t == 0)
    def _init():
        kpsum_ref[...] = jnp.zeros_like(kpsum_ref)
        kptv_ref[...] = jnp.zeros_like(kptv_ref)

    kpsum_ref[0] = kpsum_ref[0] + jnp.sum(kp, axis=0, keepdims=True)      # (1, m)
    kptv_ref[0] = kptv_ref[0] + jax.lax.dot_general(                      # (m, emb)
        kp.astype(jnp.bfloat16), v_red.astype(jnp.bfloat16),
        (((0,), (0,)), ((), ())), preferred_element_type=jnp.float32)


def performer_finalize_kernel(qp_ref, v_ref, kpsum_ref, kptv_ref,
                              wproj_ref, bproj_ref, g2_ref, b2_ref,
                              wm1_ref, bm1_ref, wm2_ref, bm2_ref, o_ref):
    """Per token tile: y = qp@kptv / D; proj + v residual; LN2; MLP + residual.
    Output stored lane-dense channel-major (emb, tq)."""
    qp = qp_ref[0]                                     # (tq, m) f32
    v = v_ref[0].astype(jnp.float32)                   # (tq, emb)
    kpsum = kpsum_ref[0]                               # (1, m) f32
    kptv = kptv_ref[0]                                 # (m, emb) f32

    D = jnp.sum(qp * kpsum, axis=-1, keepdims=True)    # (tq, 1) f32
    y = jnp.dot(qp.astype(jnp.bfloat16), kptv.astype(jnp.bfloat16),
                preferred_element_type=jnp.float32)    # (tq, emb)
    y = y * pl.reciprocal(D + 1e-8, approx=True)
    y = v + jnp.dot(y.astype(jnp.bfloat16), wproj_ref[...],
                    preferred_element_type=jnp.float32) + bproj_ref[...]

    yn = _layernorm(y, g2_ref[...], b2_ref[...])
    h = jnp.dot(yn.astype(jnp.bfloat16), wm1_ref[...],
                preferred_element_type=jnp.float32) + bm1_ref[...]
    h = jax.nn.gelu(h, approximate=True)               # tanh GELU -> EUP slot
    h = jnp.dot(h.astype(jnp.bfloat16), wm2_ref[...],
                preferred_element_type=jnp.float32) + bm2_ref[...]

    o_ref[0] = jnp.transpose(y + h).astype(o_ref.dtype)


def linear_kernel(x_ref, w_ref, b_ref, o_ref):
    """Final project: (dim, tq)-major tokens @ W + b -> (tq, dout)."""
    o_ref[0] = (jax.lax.dot_general(x_ref[0], w_ref[...],
                                    (((0,), (0,)), ((), ())),
                                    preferred_element_type=jnp.float32)
                + b_ref[...]).astype(o_ref.dtype)


# ----------------------------------------------------------------------------
# Pallas wrappers
# ----------------------------------------------------------------------------
_VMEM_LIMIT = 32 * 1024 * 1024


def _token_tile(T):
    # Tokens live on the lane axis of the channel-major x block, so tq must be a
    # multiple of 128 or the full token extent.
    if T <= 1024:
        return T
    for cand in (1024, 896, 768, 640, 512, 384, 256, 128):
        if T % cand == 0:
            return cand
    return 1024           # fall back to masked partial last tile


def _const_spec(a):
    nd = a.ndim
    return pl.BlockSpec(a.shape, lambda bi, ti, _nd=nd: (0,) * _nd)


def token_performer_pallas(x_cm, p):
    """x_cm: (B, dim, T) bf16 channel-major tokens -> (B, emb, T) bf16."""
    B, dim, T = x_cm.shape
    emb = p['wproj'].shape[0]
    m = p['w_prm_t'].shape[1]

    tq = _token_tile(T)
    nt = pl.cdiv(T, tq)
    needs_mask = (T % tq) != 0

    # ---- call 1: global reductions + qp / v stash -------------------------
    red_args = (x_cm, p['g1'], p['b1'], p['wkqv'], p['bkqv'], p['w_prm_t'])
    red_in_specs = [pl.BlockSpec((1, dim, tq), lambda bi, ti: (bi, 0, ti))]
    red_in_specs += [_const_spec(a) for a in red_args[1:]]
    red_cost = pl.CostEstimate(
        flops=2 * B * T * (dim * 3 * emb + 2 * emb * m + m * emb),
        transcendentals=2 * B * T * m,
        bytes_accessed=int(x_cm.size * 2 + B * T * (m * 4 + emb * 2)
                           + B * m * (emb + 1) * 4 + dim * 3 * emb * 2))
    qp, v_st, kpsum, kptv = pl.pallas_call(
        functools.partial(performer_reduce_kernel, T, needs_mask),
        out_shape=(jax.ShapeDtypeStruct((B, T, m), jnp.float32),      # qp stash
                   jax.ShapeDtypeStruct((B, T, emb), jnp.bfloat16),   # v stash
                   jax.ShapeDtypeStruct((B, 1, m), jnp.float32),      # kp_sum
                   jax.ShapeDtypeStruct((B, m, emb), jnp.float32)),   # kptv
        grid=(B, nt),
        in_specs=red_in_specs,
        out_specs=(pl.BlockSpec((1, tq, m), lambda bi, ti: (bi, ti, 0)),
                   pl.BlockSpec((1, tq, emb), lambda bi, ti: (bi, ti, 0)),
                   pl.BlockSpec((1, 1, m), lambda bi, ti: (bi, 0, 0)),
                   pl.BlockSpec((1, m, emb), lambda bi, ti: (bi, 0, 0))),
        compiler_params=pltpu.CompilerParams(
            dimension_semantics=("parallel", "arbitrary"),
            vmem_limit_bytes=_VMEM_LIMIT),
        cost_estimate=red_cost,
    )(*red_args)

    # ---- call 2: finalize (fully parallel grid: feeds both v7x TCs) -------
    fin_args = (qp, v_st, kpsum, kptv, p['wproj'], p['bproj'], p['g2'], p['b2'],
                p['wm1'], p['bm1'], p['wm2'], p['bm2'])
    fin_in_specs = [
        pl.BlockSpec((1, tq, m), lambda bi, ti: (bi, ti, 0)),
        pl.BlockSpec((1, tq, emb), lambda bi, ti: (bi, ti, 0)),
        pl.BlockSpec((1, 1, m), lambda bi, ti: (bi, 0, 0)),
        pl.BlockSpec((1, m, emb), lambda bi, ti: (bi, 0, 0)),
    ] + [_const_spec(a) for a in fin_args[4:]]
    fin_cost = pl.CostEstimate(
        flops=2 * B * T * (m * emb + 3 * emb * emb),
        transcendentals=B * T * emb,
        bytes_accessed=int(B * T * (m * 4 + emb * 2) + B * emb * T * 2
                           + 3 * emb * emb * 2))
    return pl.pallas_call(
        performer_finalize_kernel,
        out_shape=jax.ShapeDtypeStruct((B, emb, T), jnp.bfloat16),
        grid=(B, nt),
        in_specs=fin_in_specs,
        out_specs=pl.BlockSpec((1, emb, tq), lambda bi, ti: (bi, 0, ti)),
        compiler_params=pltpu.CompilerParams(
            dimension_semantics=("parallel", "parallel"),
            vmem_limit_bytes=_VMEM_LIMIT),
        cost_estimate=fin_cost,
    )(*fin_args)


def linear_pallas(x_cm, w, b):
    """x_cm: (B, din, T) bf16 channel-major -> (B, T, dout) bf16 token-major."""
    B, din, T = x_cm.shape
    dout = w.shape[1]
    tq = _token_tile(T)
    nt = pl.cdiv(T, tq)
    cost = pl.CostEstimate(
        flops=2 * B * T * din * dout, transcendentals=0,
        bytes_accessed=int(x_cm.size * 2 + B * T * dout * 2 + din * dout * 2))
    return pl.pallas_call(
        linear_kernel,
        out_shape=jax.ShapeDtypeStruct((B, T, dout), jnp.bfloat16),
        grid=(B, nt),
        in_specs=[pl.BlockSpec((1, din, tq), lambda bi, ti: (bi, 0, ti)),
                  pl.BlockSpec((din, dout), lambda bi, ti: (0, 0)),
                  pl.BlockSpec((1, dout), lambda bi, ti: (0, 0))],
        out_specs=pl.BlockSpec((1, tq, dout), lambda bi, ti: (bi, ti, 0)),
        compiler_params=pltpu.CompilerParams(
            dimension_semantics=("parallel", "parallel"),
            vmem_limit_bytes=_VMEM_LIMIT),
        cost_estimate=cost,
    )(x_cm, w, b)


# ----------------------------------------------------------------------------
# Glue: torch.nn.Unfold equivalent (pure indexing, kept in plain JAX).
# Output left CHANNEL-MAJOR (B, C*k*k, L) — PyTorch's native Unfold layout —
# so no HBM transpose is needed before or after the Pallas kernels.
# ----------------------------------------------------------------------------
def unfold_tokens_cm(x, k, s, p):
    # TODO(synk): fold patch extraction into the Pallas kernel via strided/Element
    # index_maps so the (B, C*k*k, L) HBM intermediate disappears entirely.
    B, C, H, W = x.shape
    xp = jnp.pad(x, ((0, 0), (0, 0), (p, p), (p, p)))
    Ho = (H + 2 * p - k) // s + 1
    Wo = (W + 2 * p - k) // s + 1
    cols = []
    for i in range(k):
        for j in range(k):
            cols.append(xp[:, :, i:i + s * (Ho - 1) + 1:s, j:j + s * (Wo - 1) + 1:s])
    pats = jnp.stack(cols, axis=2)                   # (B, C, k*k, Ho, Wo)
    return pats.reshape(B, C * k * k, Ho * Wo)       # PyTorch Unfold ordering


# ----------------------------------------------------------------------------
# Parameter init (deterministic, synthetic); matmul weights in bf16
# ----------------------------------------------------------------------------
def init_performer_params(key, dim, emb, kernel_ratio=0.5):
    m = max(int(emb * kernel_ratio), 1)
    ks = jax.random.split(key, 5)
    p = {}
    p['g1'] = jnp.ones((dim, 1), jnp.float32)        # LN1 runs channel-major
    p['b1'] = jnp.zeros((dim, 1), jnp.float32)
    p['wkqv'] = (0.02 * jax.random.normal(ks[0], (dim, 3 * emb), jnp.float32)
                 ).astype(jnp.bfloat16)
    p['bkqv'] = jnp.zeros((1, 3 * emb), jnp.float32)
    # performer random features: orthonormal columns scaled by sqrt(m), stored
    # transposed as (emb, m) so the kernel does a standard (T,emb)@(emb,m) matmul.
    a = jax.random.normal(ks[1], (emb, m), jnp.float32)
    q_mat, _ = jnp.linalg.qr(a)
    p['w_prm_t'] = (q_mat * math.sqrt(m)).astype(jnp.bfloat16)
    p['wproj'] = (0.02 * jax.random.normal(ks[2], (emb, emb), jnp.float32)
                  ).astype(jnp.bfloat16)
    p['bproj'] = jnp.zeros((1, emb), jnp.float32)
    p['g2'] = jnp.ones((1, emb), jnp.float32)
    p['b2'] = jnp.zeros((1, emb), jnp.float32)
    p['wm1'] = (0.02 * jax.random.normal(ks[3], (emb, emb), jnp.float32)
                ).astype(jnp.bfloat16)
    p['bm1'] = jnp.zeros((1, emb), jnp.float32)
    p['wm2'] = (0.02 * jax.random.normal(ks[4], (emb, emb), jnp.float32)
                ).astype(jnp.bfloat16)
    p['bm2'] = jnp.zeros((1, emb), jnp.float32)
    return p


def init_t2t_params(key, in_chans, token_dim, embed_dim):
    k1, k2, k3 = jax.random.split(key, 3)
    return {
        'att1': init_performer_params(k1, dim=in_chans * 7 * 7, emb=token_dim),
        'att2': init_performer_params(k2, dim=token_dim * 3 * 3, emb=token_dim),
        'proj_w': (0.02 * jax.random.normal(k3, (token_dim * 3 * 3, embed_dim),
                                            jnp.float32)).astype(jnp.bfloat16),
        'proj_b': jnp.zeros((1, embed_dim), jnp.float32),
    }


# ----------------------------------------------------------------------------
# T2T_module forward (tokens_type='performer')
# ----------------------------------------------------------------------------
def t2t_forward(x, params, token_dim, embed_dim):
    b, _, h, w = x.shape
    x = x.astype(jnp.bfloat16)

    # stage 1: Unfold(7,7) s=4 p=2 -> Token_performer (channel-major in & out)
    t0 = unfold_tokens_cm(x, 7, 4, 2)                           # (B, C*49, L0)
    C1_ct = token_performer_pallas(t0, params['att1'])          # (B, token_dim, L0)
    C1 = C1_ct.reshape(b, token_dim, h // 4, w // 4)            # free reshape

    # stage 2: Unfold(3,3) s=2 p=1 -> Token_performer
    t1 = unfold_tokens_cm(C1, 3, 2, 1)                          # (B, token_dim*9, L1)
    C2_ct = token_performer_pallas(t1, params['att2'])          # (B, token_dim, L1)
    C2 = C2_ct.reshape(b, token_dim, h // 8, w // 8)

    # stage 3: Unfold(3,3) s=2 p=1 -> Linear project
    t2 = unfold_tokens_cm(C2, 3, 2, 1)                          # (B, token_dim*9, L2)
    xout = linear_pallas(t2, params['proj_w'], params['proj_b'])  # (B, L2, embed_dim)
    C3 = jnp.transpose(xout, (0, 2, 1)).reshape(b, embed_dim, h // 16, w // 16)

    return xout, [C1, C2, C3]


# ----------------------------------------------------------------------------
if __name__ == "__main__":
    B, C, H, W = 2, 3, 32, 32          # small shapes; H, W divisible by 16
    token_dim, embed_dim = 32, 64      # small versions of (64, 768)

    x = jax.random.normal(jax.random.PRNGKey(0), (B, C, H, W), jnp.float32)
    params = init_t2t_params(jax.random.PRNGKey(1), in_chans=C,
                             token_dim=token_dim, embed_dim=embed_dim)

    fwd = jax.jit(lambda xx, pp: t2t_forward(xx, pp, token_dim, embed_dim))
    xout, (C1, C2, C3) = fwd(x, params)
    jax.block_until_ready((xout, C1, C2, C3))

    assert xout.shape == (B, (H // 16) * (W // 16), embed_dim)
    assert C1.shape == (B, token_dim, H // 4, W // 4)
    assert C2.shape == (B, token_dim, H // 8, W // 8)
    assert C3.shape == (B, embed_dim, H // 16, W // 16)
    assert bool(jnp.all(jnp.isfinite(xout.astype(jnp.float32))))
    print("KERNEL_OK")
</pallas_src>

<mosaic_0001>
module attributes {stable_mosaic.version = 11 : i64} {
  func.func @performer_finalize_kernel(%arg0: i32, %arg1: i32, %arg2: memref<1x64x16xf32, #tpu.memory_space<vmem>>, %arg3: memref<1x64x32xbf16, #tpu.memory_space<vmem>>, %arg4: memref<1x1x16xf32, #tpu.memory_space<vmem>>, %arg5: memref<1x16x32xf32, #tpu.memory_space<vmem>>, %arg6: memref<32x32xbf16, #tpu.memory_space<vmem>>, %arg7: memref<1x32xf32, #tpu.memory_space<vmem>>, %arg8: memref<1x32xf32, #tpu.memory_space<vmem>>, %arg9: memref<1x32xf32, #tpu.memory_space<vmem>>, %arg10: memref<32x32xbf16, #tpu.memory_space<vmem>>, %arg11: memref<1x32xf32, #tpu.memory_space<vmem>>, %arg12: memref<32x32xbf16, #tpu.memory_space<vmem>>, %arg13: memref<1x32xf32, #tpu.memory_space<vmem>>, %arg14: memref<1x32x64xbf16, #tpu.memory_space<vmem>>) attributes {dimension_semantics = [#tpu.dimension_semantics<parallel>, #tpu.dimension_semantics<parallel>], iteration_bounds = array<i64: 2, 1>, scalar_prefetch = 0 : i64, scratch_operands = 0 : i64, tpu.core_type = #tpu.core_type<tc>, window_params = [{transform_indices = @transform_0, window_bounds = array<i64: 1, 64, 16>}, {transform_indices = @transform_1, window_bounds = array<i64: 1, 64, 32>}, {transform_indices = @transform_2, window_bounds = array<i64: 1, 1, 16>}, {transform_indices = @transform_3, window_bounds = array<i64: 1, 16, 32>}, {pipeline_mode = #tpu.pipeline_mode<synchronous>, transform_indices = @transform_4, window_bounds = array<i64: 32, 32>}, {pipeline_mode = #tpu.pipeline_mode<synchronous>, transform_indices = @transform_5, window_bounds = array<i64: 1, 32>}, {pipeline_mode = #tpu.pipeline_mode<synchronous>, transform_indices = @transform_6, window_bounds = array<i64: 1, 32>}, {pipeline_mode = #tpu.pipeline_mode<synchronous>, transform_indices = @transform_7, window_bounds = array<i64: 1, 32>}, {pipeline_mode = #tpu.pipeline_mode<synchronous>, transform_indices = @transform_8, window_bounds = array<i64: 32, 32>}, {pipeline_mode = #tpu.pipeline_mode<synchronous>, transform_indices = @transform_9, window_bounds = array<i64: 1, 32>}, {pipeline_mode = #tpu.pipeline_mode<synchronous>, transform_indices = @transform_10, window_bounds = array<i64: 32, 32>}, {pipeline_mode = #tpu.pipeline_mode<synchronous>, transform_indices = @transform_11, window_bounds = array<i64: 1, 32>}, {transform_indices = @transform_12, window_bounds = array<i64: 1, 32, 64>}]} {
    %c0 = arith.constant 0 : index
    %c0_0 = arith.constant 0 : index
    %c0_1 = arith.constant 0 : index
    %0 = vector.load %arg2[%c0, %c0_0, %c0_1] : memref<1x64x16xf32, #tpu.memory_space<vmem>>, vector<1x64x16xf32>
    %1 = vector.shape_cast %0 : vector<1x64x16xf32> to vector<64x16xf32>
    %c0_2 = arith.constant 0 : index
    %c0_3 = arith.constant 0 : index
    %c0_4 = arith.constant 0 : index
    %2 = vector.load %arg3[%c0_2, %c0_3, %c0_4] : memref<1x64x32xbf16, #tpu.memory_space<vmem>>, vector<1x64x32xbf16>
    %3 = vector.shape_cast %2 : vector<1x64x32xbf16> to vector<64x32xbf16>
    %4 = arith.extf %3 : vector<64x32xbf16> to vector<64x32xf32>
    %c0_5 = arith.constant 0 : index
    %c0_6 = arith.constant 0 : index
    %c0_7 = arith.constant 0 : index
    %5 = vector.load %arg4[%c0_5, %c0_6, %c0_7] : memref<1x1x16xf32, #tpu.memory_space<vmem>>, vector<1x1x16xf32>
    %6 = vector.shape_cast %5 : vector<1x1x16xf32> to vector<1x16xf32>
    %c0_8 = arith.constant 0 : index
    %c0_9 = arith.constant 0 : index
    %c0_10 = arith.constant 0 : index
    %7 = vector.load %arg5[%c0_8, %c0_9, %c0_10] : memref<1x16x32xf32, #tpu.memory_space<vmem>>, vector<1x16x32xf32>
    %8 = vector.shape_cast %7 : vector<1x16x32xf32> to vector<16x32xf32>
    %9 = vector.broadcast %6 : vector<1x16xf32> to vector<64x16xf32>
    %10 = arith.mulf %1, %9 : vector<64x16xf32>
    %cst = arith.constant dense<0.000000e+00> : vector<64xf32>
    %11 = vector.multi_reduction <add>, %10, %cst [1] : vector<64x16xf32> to vector<64xf32>
    %12 = vector.shape_cast %11 : vector<64xf32> to vector<64x1xf32>
    %13 = arith.truncf %1 : vector<64x16xf32> to vector<64x16xbf16>
    %14 = arith.truncf %8 : vector<16x32xf32> to vector<16x32xbf16>
    %cst_11 = arith.constant dense<0.000000e+00> : vector<64x32xf32>
    %15 = tpu.matmul %13, %14, %cst_11 {dimension_numbers = #tpu.dot_dimension_numbers<[1], [0], [0], [1], [0, 0, 1, 1], [], []>} : vector<64x16xbf16>, vector<16x32xbf16>, vector<64x32xf32> -> vector<64x32xf32>
    %cst_12 = arith.constant 9.99999993E-9 : f32
    %16 = vector.broadcast %cst_12 : f32 to vector<64x1xf32>
    %17 = arith.addf %12, %16 : vector<64x1xf32>
    %18 = tpu.reciprocal %17 {approx = true} : vector<64x1xf32> -> vector<64x1xf32>
    %19 = vector.broadcast %18 : vector<64x1xf32> to vector<64x32xf32>
    %20 = arith.mulf %15, %19 : vector<64x32xf32>
    %21 = arith.truncf %20 : vector<64x32xf32> to vector<64x32xbf16>
    %c0_13 = arith.constant 0 : index
    %c0_14 = arith.constant 0 : index
    %22 = vector.load %arg6[%c0_13, %c0_14] : memref<32x32xbf16, #tpu.memory_space<vmem>>, vector<32x32xbf16>
    %cst_15 = arith.constant dense<0.000000e+00> : vector<64x32xf32>
    %23 = tpu.matmul %21, %22, %cst_15 {dimension_numbers = #tpu.dot_dimension_numbers<[1], [0], [0], [1], [0, 0, 1, 1], [], []>} : vector<64x32xbf16>, vector<32x32xbf16>, vector<64x32xf32> -> vector<64x32xf32>
    %24 = arith.addf %4, %23 : vector<64x32xf32>
    %c0_16 = arith.constant 0 : index
    %c0_17 = arith.constant 0 : index
    %25 = vector.load %arg7[%c0_16, %c0_17] : memref<1x32xf32, #tpu.memory_space<vmem>>, vector<1x32xf32>
    %26 = vector.broadcast %25 : vector<1x32xf32> to vector<64x32xf32>
    %27 = arith.addf %24, %26 : vector<64x32xf32>
    %c0_18 = arith.constant 0 : index
    %c0_19 = arith.constant 0 : index
    %28 = vector.load %arg8[%c0_18, %c0_19] : memref<1x32xf32, #tpu.memory_space<vmem>>, vector<1x32xf32>
    %c0_20 = arith.constant 0 : index
    %c0_21 = arith.constant 0 : index
    %29 = vector.load %arg9[%c0_20, %c0_21] : memref<1x32xf32, #tpu.memory_space<vmem>>, vector<1x32xf32>
    %cst_22 = arith.constant dense<0.000000e+00> : vector<64xf32>
    %30 = vector.multi_reduction <add>, %27, %cst_22 [1] : vector<64x32xf32> to vector<64xf32>
    %31 = vector.shape_cast %30 : vector<64xf32> to vector<64x1xf32>
    %cst_23 = arith.constant 3.200000e+01 : f32
    %32 = vector.broadcast %cst_23 : f32 to vector<64x1xf32>
    %33 = arith.divf %31, %32 : vector<64x1xf32>
    %34 = vector.broadcast %33 : vector<64x1xf32> to vector<64x32xf32>
    %35 = arith.subf %27, %34 : vector<64x32xf32>
    %36 = arith.mulf %35, %35 : vector<64x32xf32>
    %cst_24 = arith.constant dense<0.000000e+00> : vector<64xf32>
    %37 = vector.multi_reduction <add>, %36, %cst_24 [1] : vector<64x32xf32> to vector<64xf32>
    %38 = vector.shape_cast %37 : vector<64xf32> to vector<64x1xf32>
    %cst_25 = arith.constant 3.200000e+01 : f32
    %39 = vector.broadcast %cst_25 : f32 to vector<64x1xf32>
    %40 = arith.divf %38, %39 : vector<64x1xf32>
    %41 = vector.broadcast %33 : vector<64x1xf32> to vector<64x32xf32>
    %42 = arith.subf %27, %41 : vector<64x32xf32>
    %cst_26 = arith.constant 9.99999974E-6 : f32
    %43 = vector.broadcast %cst_26 : f32 to vector<64x1xf32>
    %44 = arith.addf %40, %43 : vector<64x1xf32>
    %45 = math.rsqrt %44 : vector<64x1xf32>
    %46 = vector.broadcast %45 : vector<64x1xf32> to vector<64x32xf32>
    %47 = arith.mulf %42, %46 : vector<64x32xf32>
    %48 = vector.broadcast %28 : vector<1x32xf32> to vector<64x32xf32>
    %49 = arith.mulf %47, %48 : vector<64x32xf32>
    %50 = vector.broadcast %29 : vector<1x32xf32> to vector<64x32xf32>
    %51 = arith.addf %49, %50 : vector<64x32xf32>
    %52 = arith.truncf %51 : vector<64x32xf32> to vector<64x32xbf16>
    %c0_27 = arith.constant 0 : index
    %c0_28 = arith.constant 0 : index
    %53 = vector.load %arg10[%c0_27, %c0_28] : memref<32x32xbf16, #tpu.memory_space<vmem>>, vector<32x32xbf16>
    %cst_29 = arith.constant dense<0.000000e+00> : vector<64x32xf32>
    %54 = tpu.matmul %52, %53, %cst_29 {dimension_numbers = #tpu.dot_dimension_numbers<[1], [0], [0], [1], [0, 0, 1, 1], [], []>} : vector<64x32xbf16>, vector<32x32xbf16>, vector<64x32xf32> -> vector<64x32xf32>
    %c0_30 = arith.constant 0 : index
    %c0_31 = arith.constant 0 : index
    %55 = vector.load %arg11[%c0_30, %c0_31] : memref<1x32xf32, #tpu.memory_space<vmem>>, vector<1x32xf32>
    %56 = vector.broadcast %55 : vector<1x32xf32> to vector<64x32xf32>
    %57 = arith.addf %54, %56 : vector<64x32xf32>
    %58 = arith.mulf %57, %57 : vector<64x32xf32>
    %59 = arith.mulf %57, %58 : vector<64x32xf32>
    %cst_32 = arith.constant 4.471500e-02 : f32
    %60 = vector.broadcast %cst_32 : f32 to vector<64x32xf32>
    %61 = arith.mulf %60, %59 : vector<64x32xf32>
    %62 = arith.addf %57, %61 : vector<64x32xf32>
    %cst_33 = arith.constant 0.797884583 : f32
    %63 = vector.broadcast %cst_33 : f32 to vector<64x32xf32>
    %64 = arith.mulf %63, %62 : vector<64x32xf32>
    %65 = math.tanh %64 : vector<64x32xf32>
    %cst_34 = arith.constant 1.000000e+00 : f32
    %66 = vector.broadcast %cst_34 : f32 to vector<64x32xf32>
    %67 = arith.addf %66, %65 : vector<64x32xf32>
    %cst_35 = arith.constant 5.000000e-01 : f32
    %68 = vector.broadcast %cst_35 : f32 to vector<64x32xf32>
    %69 = arith.mulf %68, %67 : vector<64x32xf32>
    %70 = arith.mulf %57, %69 : vector<64x32xf32>
    %71 = arith.truncf %70 : vector<64x32xf32> to vector<64x32xbf16>
    %c0_36 = arith.constant 0 : index
    %c0_37 = arith.constant 0 : index
    %72 = vector.load %arg12[%c0_36, %c0_37] : memref<32x32xbf16, #tpu.memory_space<vmem>>, vector<32x32xbf16>
    %cst_38 = arith.constant dense<0.000000e+00> : vector<64x32xf32>
    %73 = tpu.matmul %71, %72, %cst_38 {dimension_numbers = #tpu.dot_dimension_numbers<[1], [0], [0], [1], [0, 0, 1, 1], [], []>} : vector<64x32xbf16>, vector<32x32xbf16>, vector<64x32xf32> -> vector<64x32xf32>
    %c0_39 = arith.constant 0 : index
    %c0_40 = arith.constant 0 : index
    %74 = vector.load %arg13[%c0_39, %c0_40] : memref<1x32xf32, #tpu.memory_space<vmem>>, vector<1x32xf32>
    %75 = vector.broadcast %74 : vector<1x32xf32> to vector<64x32xf32>
    %76 = arith.addf %73, %75 : vector<64x32xf32>
    %77 = arith.addf %27, %76 : vector<64x32xf32>
    %78 = tpu.transpose %77, [1, 0] : vector<64x32xf32> -> vector<32x64xf32>
    %79 = arith.truncf %78 : vector<32x64xf32> to vector<32x64xbf16>
    %c0_41 = arith.constant 0 : index
    %c0_42 = arith.constant 0 : index
    %c0_43 = arith.constant 0 : index
    %80 = vector.load %arg14[%c0_41, %c0_42, %c0_43] : memref<1x32x64xbf16, #tpu.memory_space<vmem>>, vector<1x32x64xbf16>
    %81 = vector.shape_cast %80 : vector<1x32x64xbf16> to vector<32x64xbf16>
    %82 = vector.shape_cast %79 : vector<32x64xbf16> to vector<1x32x64xbf16>
    tpu.vector_store %arg14[%c0_41, %c0_42, %c0_43], %82 {strides = array<i32>} : memref<1x32x64xbf16, #tpu.memory_space<vmem>>, vector<1x32x64xbf16>,
    return
  }
  func.func @transform_0(%arg0: i32, %arg1: i32) -> (i32, i32, i32) {
    %c0_i32 = arith.constant 0 : i32
    %c0_i32_0 = arith.constant 0 : i32
    return %arg0, %arg1, %c0_i32 : i32, i32, i32
  }
  func.func @transform_1(%arg0: i32, %arg1: i32) -> (i32, i32, i32) {
    %c0_i32 = arith.constant 0 : i32
    %c0_i32_0 = arith.constant 0 : i32
    return %arg0, %arg1, %c0_i32 : i32, i32, i32
  }
  func.func @transform_2(%arg0: i32, %arg1: i32) -> (i32, i32, i32) {
    %c0_i32 = arith.constant 0 : i32
    %c0_i32_0 = arith.constant 0 : i32
    %c0_i32_1 = arith.constant 0 : i32
    return %arg0, %c0_i32, %c0_i32_0 : i32, i32, i32
  }
  func.func @transform_3(%arg0: i32, %arg1: i32) -> (i32, i32, i32) {
    %c0_i32 = arith.constant 0 : i32
    %c0_i32_0 = arith.constant 0 : i32
    %c0_i32_1 = arith.constant 0 : i32
    return %arg0, %c0_i32, %c0_i32_0 : i32, i32, i32
  }
  func.func @transform_4(%arg0: i32, %arg1: i32) -> (i32, i32) {
    %c0_i32 = arith.constant 0 : i32
    %c0_i32_0 = arith.constant 0 : i32
    %c0_i32_1 = arith.constant 0 : i32
    return %c0_i32, %c0_i32_0 : i32, i32
  }
  func.func @transform_5(%arg0: i32, %arg1: i32) -> (i32, i32) {
    %c0_i32 = arith.constant 0 : i32
    %c0_i32_0 = arith.constant 0 : i32
    %c0_i32_1 = arith.constant 0 : i32
    return %c0_i32, %c0_i32_0 : i32, i32
  }
  func.func @transform_6(%arg0: i32, %arg1: i32) -> (i32, i32) {
    %c0_i32 = arith.constant 0 : i32
    %c0_i32_0 = arith.constant 0 : i32
    %c0_i32_1 = arith.constant 0 : i32
    return %c0_i32, %c0_i32_0 : i32, i32
  }
  func.func @transform_7(%arg0: i32, %arg1: i32) -> (i32, i32) {
    %c0_i32 = arith.constant 0 : i32
    %c0_i32_0 = arith.constant 0 : i32
    %c0_i32_1 = arith.constant 0 : i32
    return %c0_i32, %c0_i32_0 : i32, i32
  }
  func.func @transform_8(%arg0: i32, %arg1: i32) -> (i32, i32) {
    %c0_i32 = arith.constant 0 : i32
    %c0_i32_0 = arith.constant 0 : i32
    %c0_i32_1 = arith.constant 0 : i32
    return %c0_i32, %c0_i32_0 : i32, i32
  }
  func.func @transform_9(%arg0: i32, %arg1: i32) -> (i32, i32) {
    %c0_i32 = arith.constant 0 : i32
    %c0_i32_0 = arith.constant 0 : i32
    %c0_i32_1 = arith.constant 0 : i32
    return %c0_i32, %c0_i32_0 : i32, i32
  }
  func.func @transform_10(%arg0: i32, %arg1: i32) -> (i32, i32) {
    %c0_i32 = arith.constant 0 : i32
    %c0_i32_0 = arith.constant 0 : i32
    %c0_i32_1 = arith.constant 0 : i32
    return %c0_i32, %c0_i32_0 : i32, i32
  }
  func.func @transform_11(%arg0: i32, %arg1: i32) -> (i32, i32) {
    %c0_i32 = arith.constant 0 : i32
    %c0_i32_0 = arith.constant 0 : i32
    %c0_i32_1 = arith.constant 0 : i32
    return %c0_i32, %c0_i32_0 : i32, i32
  }
  func.func @transform_12(%arg0: i32, %arg1: i32) -> (i32, i32, i32) {
    %c0_i32 = arith.constant 0 : i32
    %c0_i32_0 = arith.constant 0 : i32
    return %arg0, %c0_i32, %arg1 : i32, i32, i32
  }
}

module attributes {stable_mosaic.version = 11 : i64} {
  func.func @performer_reduce_kernel(%arg0: i32, %arg1: i32, %arg2: memref<1x147x64xbf16, #tpu.memory_space<vmem>>, %arg3: memref<147x1xf32, #tpu.memory_space<vmem>>, %arg4: memref<147x1xf32, #tpu.memory_space<vmem>>, %arg5: memref<147x96xbf16, #tpu.memory_space<vmem>>, %arg6: memref<1x96xf32, #tpu.memory_space<vmem>>, %arg7: memref<32x16xbf16, #tpu.memory_space<vmem>>, %arg8: memref<1x64x16xf32, #tpu.memory_space<vmem>>, %arg9: memref<1x64x32xbf16, #tpu.memory_space<vmem>>, %arg10: memref<1x1x16xf32, #tpu.memory_space<vmem>>, %arg11: memref<1x16x32xf32, #tpu.memory_space<vmem>>) attributes {dimension_semantics = [#tpu.dimension_semantics<parallel>, #tpu.dimension_semantics<arbitrary>], iteration_bounds = array<i64: 2, 1>, scalar_prefetch = 0 : i64, scratch_operands = 0 : i64, tpu.core_type = #tpu.core_type<tc>, window_params = [{transform_indices = @transform_0, window_bounds = array<i64: 1, 147, 64>}, {pipeline_mode = #tpu.pipeline_mode<synchronous>, transform_indices = @transform_1, window_bounds = array<i64: 147, 1>}, {pipeline_mode = #tpu.pipeline_mode<synchronous>, transform_indices = @transform_2, window_bounds = array<i64: 147, 1>}, {pipeline_mode = #tpu.pipeline_mode<synchronous>, transform_indices = @transform_3, window_bounds = array<i64: 147, 96>}, {pipeline_mode = #tpu.pipeline_mode<synchronous>, transform_indices = @transform_4, window_bounds = array<i64: 1, 96>}, {pipeline_mode = #tpu.pipeline_mode<synchronous>, transform_indices = @transform_5, window_bounds = array<i64: 32, 16>}, {transform_indices = @transform_6, window_bounds = array<i64: 1, 64, 16>}, {transform_indices = @transform_7, window_bounds = array<i64: 1, 64, 32>}, {transform_indices = @transform_8, window_bounds = array<i64: 1, 1, 16>}, {transform_indices = @transform_9, window_bounds = array<i64: 1, 16, 32>}]} {
    %c0 = arith.constant 0 : index
    %c0_0 = arith.constant 0 : index
    %c0_1 = arith.constant 0 : index
    %0 = vector.load %arg2[%c0, %c0_0, %c0_1] : memref<1x147x64xbf16, #tpu.memory_space<vmem>>, vector<1x147x64xbf16>
    %1 = vector.shape_cast %0 : vector<1x147x64xbf16> to vector<147x64xbf16>
    %2 = arith.extf %1 : vector<147x64xbf16> to vector<147x64xf32>
    %cst = arith.constant dense<0.000000e+00> : vector<64xf32>
    %3 = vector.multi_reduction <add>, %2, %cst [0] : vector<147x64xf32> to vector<64xf32>
    %4 = vector.shape_cast %3 : vector<64xf32> to vector<1x64xf32>
    %cst_2 = arith.constant 1.470000e+02 : f32
    %5 = vector.broadcast %cst_2 : f32 to vector<1x64xf32>
    %6 = arith.divf %4, %5 : vector<1x64xf32>
    %7 = vector.broadcast %6 : vector<1x64xf32> to vector<147x64xf32>
    %8 = arith.subf %2, %7 : vector<147x64xf32>
    %9 = arith.mulf %8, %8 : vector<147x64xf32>
    %cst_3 = arith.constant dense<0.000000e+00> : vector<64xf32>
    %10 = vector.multi_reduction <add>, %9, %cst_3 [0] : vector<147x64xf32> to vector<64xf32>
    %11 = vector.shape_cast %10 : vector<64xf32> to vector<1x64xf32>
    %cst_4 = arith.constant 1.470000e+02 : f32
    %12 = vector.broadcast %cst_4 : f32 to vector<1x64xf32>
    %13 = arith.divf %11, %12 : vector<1x64xf32>
    %14 = vector.broadcast %6 : vector<1x64xf32> to vector<147x64xf32>
    %15 = arith.subf %2, %14 : vector<147x64xf32>
    %cst_5 = arith.constant 9.99999974E-6 : f32
    %16 = vector.broadcast %cst_5 : f32 to vector<1x64xf32>
    %17 = arith.addf %13, %16 : vector<1x64xf32>
    %18 = math.rsqrt %17 : vector<1x64xf32>
    %19 = vector.broadcast %18 : vector<1x64xf32> to vector<147x64xf32>
    %20 = arith.mulf %15, %19 : vector<147x64xf32>
    %c0_6 = arith.constant 0 : index
    %c0_7 = arith.constant 0 : index
    %21 = vector.load %arg3[%c0_6, %c0_7] : memref<147x1xf32, #tpu.memory_space<vmem>>, vector<147x1xf32>
    %22 = vector.broadcast %21 : vector<147x1xf32> to vector<147x64xf32>
    %23 = arith.mulf %20, %22 : vector<147x64xf32>
    %c0_8 = arith.constant 0 : index
    %c0_9 = arith.constant 0 : index
    %24 = vector.load %arg4[%c0_8, %c0_9] : memref<147x1xf32, #tpu.memory_space<vmem>>, vector<147x1xf32>
    %25 = vector.broadcast %24 : vector<147x1xf32> to vector<147x64xf32>
    %26 = arith.addf %23, %25 : vector<147x64xf32>
    %27 = arith.truncf %26 : vector<147x64xf32> to vector<147x64xbf16>
    %c0_10 = arith.constant 0 : index
    %c0_11 = arith.constant 0 : index
    %28 = vector.load %arg5[%c0_10, %c0_11] : memref<147x96xbf16, #tpu.memory_space<vmem>>, vector<147x96xbf16>
    %cst_12 = arith.constant dense<0.000000e+00> : vector<64x96xf32>
    %29 = tpu.matmul %27, %28, %cst_12 {dimension_numbers = #tpu.dot_dimension_numbers<[0], [0], [1], [1], [0, 1, 1, 1], [], []>} : vector<147x64xbf16>, vector<147x96xbf16>, vector<64x96xf32> -> vector<64x96xf32>
    %c0_13 = arith.constant 0 : index
    %c0_14 = arith.constant 0 : index
    %30 = vector.load %arg6[%c0_13, %c0_14] : memref<1x96xf32, #tpu.memory_space<vmem>>, vector<1x96xf32>
    %31 = vector.broadcast %30 : vector<1x96xf32> to vector<64x96xf32>
    %32 = arith.addf %29, %31 : vector<64x96xf32>
    %33 = vector.extract_strided_slice %32 {offsets = [0, 0], sizes = [64, 32], strides = [1, 1]} : vector<64x96xf32> to vector<64x32xf32>
    %34 = vector.extract_strided_slice %32 {offsets = [0, 32], sizes = [64, 32], strides = [1, 1]} : vector<64x96xf32> to vector<64x32xf32>
    %35 = vector.extract_strided_slice %32 {offsets = [0, 64], sizes = [64, 32], strides = [1, 1]} : vector<64x96xf32> to vector<64x32xf32>
    %c0_15 = arith.constant 0 : index
    %c0_16 = arith.constant 0 : index
    %36 = vector.load %arg7[%c0_15, %c0_16] : memref<32x16xbf16, #tpu.memory_space<vmem>>, vector<32x16xbf16>
    %37 = arith.mulf %33, %33 : vector<64x32xf32>
    %cst_17 = arith.constant dense<0.000000e+00> : vector<64xf32>
    %38 = vector.multi_reduction <add>, %37, %cst_17 [1] : vector<64x32xf32> to vector<64xf32>
    %39 = vector.shape_cast %38 : vector<64xf32> to vector<64x1xf32>
    %cst_18 = arith.constant 5.000000e-01 : f32
    %40 = vector.broadcast %cst_18 : f32 to vector<64x1xf32>
    %41 = arith.mulf %40, %39 : vector<64x1xf32>
    %42 = arith.truncf %33 : vector<64x32xf32> to vector<64x32xbf16>
    %cst_19 = arith.constant dense<0.000000e+00> : vector<64x16xf32>
    %43 = tpu.matmul %42, %36, %cst_19 {dimension_numbers = #tpu.dot_dimension_numbers<[1], [0], [0], [1], [0, 0, 1, 1], [], []>} : vector<64x32xbf16>, vector<32x16xbf16>, vector<64x16xf32> -> vector<64x16xf32>
    %44 = vector.broadcast %41 : vector<64x1xf32> to vector<64x16xf32>
    %45 = arith.subf %43, %44 : vector<64x16xf32>
    %46 = math.exp %45 : vector<64x16xf32>
    %cst_20 = arith.constant 2.500000e-01 : f32
    %47 = vector.broadcast %cst_20 : f32 to vector<64x16xf32>
    %48 = arith.mulf %46, %47 : vector<64x16xf32>
    %49 = arith.mulf %34, %34 : vector<64x32xf32>
    %cst_21 = arith.constant dense<0.000000e+00> : vector<64xf32>
    %50 = vector.multi_reduction <add>, %49, %cst_21 [1] : vector<64x32xf32> to vector<64xf32>
    %51 = vector.shape_cast %50 : vector<64xf32> to vector<64x1xf32>
    %cst_22 = arith.constant 5.000000e-01 : f32
    %52 = vector.broadcast %cst_22 : f32 to vector<64x1xf32>
    %53 = arith.mulf %52, %51 : vector<64x1xf32>
    %54 = arith.truncf %34 : vector<64x32xf32> to vector<64x32xbf16>
    %cst_23 = arith.constant dense<0.000000e+00> : vector<64x16xf32>
    %55 = tpu.matmul %54, %36, %cst_23 {dimension_numbers = #tpu.dot_dimension_numbers<[1], [0], [0], [1], [0, 0, 1, 1], [], []>} : vector<64x32xbf16>, vector<32x16xbf16>, vector<64x16xf32> -> vector<64x16xf32>
    %56 = vector.broadcast %53 : vector<64x1xf32> to vector<64x16xf32>
    %57 = arith.subf %55, %56 : vector<64x16xf32>
    %58 = math.exp %57 : vector<64x16xf32>
    %cst_24 = arith.constant 2.500000e-01 : f32
    %59 = vector.broadcast %cst_24 : f32 to vector<64x16xf32>
    %60 = arith.mulf %58, %59 : vector<64x16xf32>
    %c0_25 = arith.constant 0 : index
    %c0_26 = arith.constant 0 : index
    %c0_27 = arith.constant 0 : index
    %61 = vector.load %arg8[%c0_25, %c0_26, %c0_27] : memref<1x64x16xf32, #tpu.memory_space<vmem>>, vector<1x64x16xf32>
    %62 = vector.shape_cast %61 : vector<1x64x16xf32> to vector<64x16xf32>
    %63 = vector.shape_cast %60 : vector<64x16xf32> to vector<1x64x16xf32>
    tpu.vector_store %arg8[%c0_25, %c0_26, %c0_27], %63 {strides = array<i32>} : memref<1x64x16xf32, #tpu.memory_space<vmem>>, vector<1x64x16xf32>,
    %64 = arith.truncf %35 : vector<64x32xf32> to vector<64x32xbf16>
    %c0_28 = arith.constant 0 : index
    %c0_29 = arith.constant 0 : index
    %c0_30 = arith.constant 0 : index
    %65 = vector.load %arg9[%c0_28, %c0_29, %c0_30] : memref<1x64x32xbf16, #tpu.memory_space<vmem>>, vector<1x64x32xbf16>
    %66 = vector.shape_cast %65 : vector<1x64x32xbf16> to vector<64x32xbf16>
    %67 = vector.shape_cast %64 : vector<64x32xbf16> to vector<1x64x32xbf16>
    tpu.vector_store %arg9[%c0_28, %c0_29, %c0_30], %67 {strides = array<i32>} : memref<1x64x32xbf16, #tpu.memory_space<vmem>>, vector<1x64x32xbf16>,
    %c0_i32 = arith.constant 0 : i32
    %68 = arith.cmpi eq, %arg1, %c0_i32 : i32
    %69 = arith.extui %68 : i1 to i32
    %c0_i32_31 = arith.constant 0 : i32
    %70 = arith.cmpi ne, %69, %c0_i32_31 : i32
    scf.if %70 {
      %cst_46 = arith.constant 0.000000e+00 : f32
      %88 = vector.broadcast %cst_46 : f32 to vector<1x1x16xf32>
      %c0_47 = arith.constant 0 : index
      %c0_48 = arith.constant 0 : index
      %c0_49 = arith.constant 0 : index
      %89 = vector.load %arg10[%c0_47, %c0_48, %c0_49] : memref<1x1x16xf32, #tpu.memory_space<vmem>>, vector<1x1x16xf32>
      tpu.vector_store %arg10[%c0_47, %c0_48, %c0_49], %88 {strides = array<i32>} : memref<1x1x16xf32, #tpu.memory_space<vmem>>, vector<1x1x16xf32>,
      %cst_50 = arith.constant 0.000000e+00 : f32
      %90 = vector.broadcast %cst_50 : f32 to vector<1x16x32xf32>
      %c0_51 = arith.constant 0 : index
      %c0_52 = arith.constant 0 : index
      %c0_53 = arith.constant 0 : index
      %91 = vector.load %arg11[%c0_51, %c0_52, %c0_53] : memref<1x16x32xf32, #tpu.memory_space<vmem>>, vector<1x16x32xf32>
      tpu.vector_store %arg11[%c0_51, %c0_52, %c0_53], %90 {strides = array<i32>} : memref<1x16x32xf32, #tpu.memory_space<vmem>>, vector<1x16x32xf32>,
    } else {
    }
    %c0_32 = arith.constant 0 : index
    %c0_33 = arith.constant 0 : index
    %c0_34 = arith.constant 0 : index
    %71 = vector.load %arg10[%c0_32, %c0_33, %c0_34] : memref<1x1x16xf32, #tpu.memory_space<vmem>>, vector<1x1x16xf32>
    %72 = vector.shape_cast %71 : vector<1x1x16xf32> to vector<1x16xf32>
    %cst_35 = arith.constant dense<0.000000e+00> : vector<16xf32>
    %73 = vector.multi_reduction <add>, %48, %cst_35 [0] : vector<64x16xf32> to vector<16xf32>
    %74 = vector.shape_cast %73 : vector<16xf32> to vector<1x16xf32>
    %75 = arith.addf %72, %74 : vector<1x16xf32>
    %c0_36 = arith.constant 0 : index
    %c0_37 = arith.constant 0 : index
    %c0_38 = arith.constant 0 : index
    %76 = vector.load %arg10[%c0_36, %c0_37, %c0_38] : memref<1x1x16xf32, #tpu.memory_space<vmem>>, vector<1x1x16xf32>
    %77 = vector.shape_cast %76 : vector<1x1x16xf32> to vector<1x16xf32>
    %78 = vector.shape_cast %75 : vector<1x16xf32> to vector<1x1x16xf32>
    tpu.vector_store %arg10[%c0_36, %c0_37, %c0_38], %78 {strides = array<i32>} : memref<1x1x16xf32, #tpu.memory_space<vmem>>, vector<1x1x16xf32>,
    %c0_39 = arith.constant 0 : index
    %c0_40 = arith.constant 0 : index
    %c0_41 = arith.constant 0 : index
    %79 = vector.load %arg11[%c0_39, %c0_40, %c0_41] : memref<1x16x32xf32, #tpu.memory_space<vmem>>, vector<1x16x32xf32>
    %80 = vector.shape_cast %79 : vector<1x16x32xf32> to vector<16x32xf32>
    %81 = arith.truncf %48 : vector<64x16xf32> to vector<64x16xbf16>
    %82 = arith.truncf %35 : vector<64x32xf32> to vector<64x32xbf16>
    %cst_42 = arith.constant dense<0.000000e+00> : vector<16x32xf32>
    %83 = tpu.matmul %81, %82, %cst_42 {dimension_numbers = #tpu.dot_dimension_numbers<[0], [0], [1], [1], [0, 1, 1, 1], [], []>} : vector<64x16xbf16>, vector<64x32xbf16>, vector<16x32xf32> -> vector<16x32xf32>
    %84 = arith.addf %80, %83 : vector<16x32xf32>
    %c0_43 = arith.constant 0 : index
    %c0_44 = arith.constant 0 : index
    %c0_45 = arith.constant 0 : index
    %85 = vector.load %arg11[%c0_43, %c0_44, %c0_45] : memref<1x16x32xf32, #tpu.memory_space<vmem>>, vector<1x16x32xf32>
    %86 = vector.shape_cast %85 : vector<1x16x32xf32> to vector<16x32xf32>
    %87 = vector.shape_cast %84 : vector<16x32xf32> to vector<1x16x32xf32>
    tpu.vector_store %arg11[%c0_43, %c0_44, %c0_45], %87 {strides = array<i32>} : memref<1x16x32xf32, #tpu.memory_space<vmem>>, vector<1x16x32xf32>,
    return
  }
  func.func @transform_0(%arg0: i32, %arg1: i32) -> (i32, i32, i32) {
    %c0_i32 = arith.constant 0 : i32
    %c0_i32_0 = arith.constant 0 : i32
    return %arg0, %c0_i32, %arg1 : i32, i32, i32
  }
  func.func @transform_1(%arg0: i32, %arg1: i32) -> (i32, i32) {
    %c0_i32 = arith.constant 0 : i32
    %c0_i32_0 = arith.constant 0 : i32
    %c0_i32_1 = arith.constant 0 : i32
    return %c0_i32, %c0_i32_0 : i32, i32
  }
  func.func @transform_2(%arg0: i32, %arg1: i32) -> (i32, i32) {
    %c0_i32 = arith.constant 0 : i32
    %c0_i32_0 = arith.constant 0 : i32
    %c0_i32_1 = arith.constant 0 : i32
    return %c0_i32, %c0_i32_0 : i32, i32
  }
  func.func @transform_3(%arg0: i32, %arg1: i32) -> (i32, i32) {
    %c0_i32 = arith.constant 0 : i32
    %c0_i32_0 = arith.constant 0 : i32
    %c0_i32_1 = arith.constant 0 : i32
    return %c0_i32, %c0_i32_0 : i32, i32
  }
  func.func @transform_4(%arg0: i32, %arg1: i32) -> (i32, i32) {
    %c0_i32 = arith.constant 0 : i32
    %c0_i32_0 = arith.constant 0 : i32
    %c0_i32_1 = arith.constant 0 : i32
    return %c0_i32, %c0_i32_0 : i32, i32
  }
  func.func @transform_5(%arg0: i32, %arg1: i32) -> (i32, i32) {
    %c0_i32 = arith.constant 0 : i32
    %c0_i32_0 = arith.constant 0 : i32
    %c0_i32_1 = arith.constant 0 : i32
    return %c0_i32, %c0_i32_0 : i32, i32
  }
  func.func @transform_6(%arg0: i32, %arg1: i32) -> (i32, i32, i32) {
    %c0_i32 = arith.constant 0 : i32
    %c0_i32_0 = arith.constant 0 : i32
    return %arg0, %arg1, %c0_i32 : i32, i32, i32
  }
  func.func @transform_7(%arg0: i32, %arg1: i32) -> (i32, i32, i32) {
    %c0_i32 = arith.constant 0 : i32
    %c0_i32_0 = arith.constant 0 : i32
    return %arg0, %arg1, %c0_i32 : i32, i32, i32
  }
  func.func @transform_8(%arg0: i32, %arg1: i32) -> (i32, i32, i32) {
    %c0_i32 = arith.constant 0 : i32
    %c0_i32_0 = arith.constant 0 : i32
    %c0_i32_1 = arith.constant 0 : i32
    return %arg0, %c0_i32, %c0_i32_0 : i32, i32, i32
  }
  func.func @transform_9(%arg0: i32, %arg1: i32) -> (i32, i32, i32) {
    %c0_i32 = arith.constant 0 : i32
    %c0_i32_0 = arith.constant 0 : i32
    %c0_i32_1 = arith.constant 0 : i32
    return %arg0, %c0_i32, %c0_i32_0 : i32, i32, i32
  }
}

module attributes {stable_mosaic.version = 11 : i64} {
  func.func @performer_reduce_kernel(%arg0: i32, %arg1: i32, %arg2: memref<1x288x16xbf16, #tpu.memory_space<vmem>>, %arg3: memref<288x1xf32, #tpu.memory_space<vmem>>, %arg4: memref<288x1xf32, #tpu.memory_space<vmem>>, %arg5: memref<288x96xbf16, #tpu.memory_space<vmem>>, %arg6: memref<1x96xf32, #tpu.memory_space<vmem>>, %arg7: memref<32x16xbf16, #tpu.memory_space<vmem>>, %arg8: memref<1x16x16xf32, #tpu.memory_space<vmem>>, %arg9: memref<1x16x32xbf16, #tpu.memory_space<vmem>>, %arg10: memref<1x1x16xf32, #tpu.memory_space<vmem>>, %arg11: memref<1x16x32xf32, #tpu.memory_space<vmem>>) attributes {dimension_semantics = [#tpu.dimension_semantics<parallel>, #tpu.dimension_semantics<arbitrary>], iteration_bounds = array<i64: 2, 1>, scalar_prefetch = 0 : i64, scratch_operands = 0 : i64, tpu.core_type = #tpu.core_type<tc>, window_params = [{transform_indices = @transform_0, window_bounds = array<i64: 1, 288, 16>}, {pipeline_mode = #tpu.pipeline_mode<synchronous>, transform_indices = @transform_1, window_bounds = array<i64: 288, 1>}, {pipeline_mode = #tpu.pipeline_mode<synchronous>, transform_indices = @transform_2, window_bounds = array<i64: 288, 1>}, {pipeline_mode = #tpu.pipeline_mode<synchronous>, transform_indices = @transform_3, window_bounds = array<i64: 288, 96>}, {pipeline_mode = #tpu.pipeline_mode<synchronous>, transform_indices = @transform_4, window_bounds = array<i64: 1, 96>}, {pipeline_mode = #tpu.pipeline_mode<synchronous>, transform_indices = @transform_5, window_bounds = array<i64: 32, 16>}, {transform_indices = @transform_6, window_bounds = array<i64: 1, 16, 16>}, {transform_indices = @transform_7, window_bounds = array<i64: 1, 16, 32>}, {transform_indices = @transform_8, window_bounds = array<i64: 1, 1, 16>}, {transform_indices = @transform_9, window_bounds = array<i64: 1, 16, 32>}]} {
    %c0 = arith.constant 0 : index
    %c0_0 = arith.constant 0 : index
    %c0_1 = arith.constant 0 : index
    %0 = vector.load %arg2[%c0, %c0_0, %c0_1] : memref<1x288x16xbf16, #tpu.memory_space<vmem>>, vector<1x288x16xbf16>
    %1 = vector.shape_cast %0 : vector<1x288x16xbf16> to vector<288x16xbf16>
    %2 = arith.extf %1 : vector<288x16xbf16> to vector<288x16xf32>
    %cst = arith.constant dense<0.000000e+00> : vector<16xf32>
    %3 = vector.multi_reduction <add>, %2, %cst [0] : vector<288x16xf32> to vector<16xf32>
    %4 = vector.shape_cast %3 : vector<16xf32> to vector<1x16xf32>
    %cst_2 = arith.constant 2.880000e+02 : f32
    %5 = vector.broadcast %cst_2 : f32 to vector<1x16xf32>
    %6 = arith.divf %4, %5 : vector<1x16xf32>
    %7 = vector.broadcast %6 : vector<1x16xf32> to vector<288x16xf32>
    %8 = arith.subf %2, %7 : vector<288x16xf32>
    %9 = arith.mulf %8, %8 : vector<288x16xf32>
    %cst_3 = arith.constant dense<0.000000e+00> : vector<16xf32>
    %10 = vector.multi_reduction <add>, %9, %cst_3 [0] : vector<288x16xf32> to vector<16xf32>
    %11 = vector.shape_cast %10 : vector<16xf32> to vector<1x16xf32>
    %cst_4 = arith.constant 2.880000e+02 : f32
    %12 = vector.broadcast %cst_4 : f32 to vector<1x16xf32>
    %13 = arith.divf %11, %12 : vector<1x16xf32>
    %14 = vector.broadcast %6 : vector<1x16xf32> to vector<288x16xf32>
    %15 = arith.subf %2, %14 : vector<288x16xf32>
    %cst_5 = arith.constant 9.99999974E-6 : f32
    %16 = vector.broadcast %cst_5 : f32 to vector<1x16xf32>
    %17 = arith.addf %13, %16 : vector<1x16xf32>
    %18 = math.rsqrt %17 : vector<1x16xf32>
    %19 = vector.broadcast %18 : vector<1x16xf32> to vector<288x16xf32>
    %20 = arith.mulf %15, %19 : vector<288x16xf32>
    %c0_6 = arith.constant 0 : index
    %c0_7 = arith.constant 0 : index
    %21 = vector.load %arg3[%c0_6, %c0_7] : memref<288x1xf32, #tpu.memory_space<vmem>>, vector<288x1xf32>
    %22 = vector.broadcast %21 : vector<288x1xf32> to vector<288x16xf32>
    %23 = arith.mulf %20, %22 : vector<288x16xf32>
    %c0_8 = arith.constant 0 : index
    %c0_9 = arith.constant 0 : index
    %24 = vector.load %arg4[%c0_8, %c0_9] : memref<288x1xf32, #tpu.memory_space<vmem>>, vector<288x1xf32>
    %25 = vector.broadcast %24 : vector<288x1xf32> to vector<288x16xf32>
    %26 = arith.addf %23, %25 : vector<288x16xf32>
    %27 = arith.truncf %26 : vector<288x16xf32> to vector<288x16xbf16>
    %c0_10 = arith.constant 0 : index
    %c0_11 = arith.constant 0 : index
    %28 = vector.load %arg5[%c0_10, %c0_11] : memref<288x96xbf16, #tpu.memory_space<vmem>>, vector<288x96xbf16>
    %cst_12 = arith.constant dense<0.000000e+00> : vector<16x96xf32>
    %29 = tpu.matmul %27, %28, %cst_12 {dimension_numbers = #tpu.dot_dimension_numbers<[0], [0], [1], [1], [0, 1, 1, 1], [], []>} : vector<288x16xbf16>, vector<288x96xbf16>, vector<16x96xf32> -> vector<16x96xf32>
    %c0_13 = arith.constant 0 : index
    %c0_14 = arith.constant 0 : index
    %30 = vector.load %arg6[%c0_13, %c0_14] : memref<1x96xf32, #tpu.memory_space<vmem>>, vector<1x96xf32>
    %31 = vector.broadcast %30 : vector<1x96xf32> to vector<16x96xf32>
    %32 = arith.addf %29, %31 : vector<16x96xf32>
    %33 = vector.extract_strided_slice %32 {offsets = [0, 0], sizes = [16, 32], strides = [1, 1]} : vector<16x96xf32> to vector<16x32xf32>
    %34 = vector.extract_strided_slice %32 {offsets = [0, 32], sizes = [16, 32], strides = [1, 1]} : vector<16x96xf32> to vector<16x32xf32>
    %35 = vector.extract_strided_slice %32 {offsets = [0, 64], sizes = [16, 32], strides = [1, 1]} : vector<16x96xf32> to vector<16x32xf32>
    %c0_15 = arith.constant 0 : index
    %c0_16 = arith.constant 0 : index
    %36 = vector.load %arg7[%c0_15, %c0_16] : memref<32x16xbf16, #tpu.memory_space<vmem>>, vector<32x16xbf16>
    %37 = arith.mulf %33, %33 : vector<16x32xf32>
    %cst_17 = arith.constant dense<0.000000e+00> : vector<16xf32>
    %38 = vector.multi_reduction <add>, %37, %cst_17 [1] : vector<16x32xf32> to vector<16xf32>
    %39 = vector.shape_cast %38 : vector<16xf32> to vector<16x1xf32>
    %cst_18 = arith.constant 5.000000e-01 : f32
    %40 = vector.broadcast %cst_18 : f32 to vector<16x1xf32>
    %41 = arith.mulf %40, %39 : vector<16x1xf32>
    %42 = arith.truncf %33 : vector<16x32xf32> to vector<16x32xbf16>
    %cst_19 = arith.constant dense<0.000000e+00> : vector<16x16xf32>
    %43 = tpu.matmul %42, %36, %cst_19 {dimension_numbers = #tpu.dot_dimension_numbers<[1], [0], [0], [1], [0, 0, 1, 1], [], []>} : vector<16x32xbf16>, vector<32x16xbf16>, vector<16x16xf32> -> vector<16x16xf32>
    %44 = vector.broadcast %41 : vector<16x1xf32> to vector<16x16xf32>
    %45 = arith.subf %43, %44 : vector<16x16xf32>
    %46 = math.exp %45 : vector<16x16xf32>
    %cst_20 = arith.constant 2.500000e-01 : f32
    %47 = vector.broadcast %cst_20 : f32 to vector<16x16xf32>
    %48 = arith.mulf %46, %47 : vector<16x16xf32>
    %49 = arith.mulf %34, %34 : vector<16x32xf32>
    %cst_21 = arith.constant dense<0.000000e+00> : vector<16xf32>
    %50 = vector.multi_reduction <add>, %49, %cst_21 [1] : vector<16x32xf32> to vector<16xf32>
    %51 = vector.shape_cast %50 : vector<16xf32> to vector<16x1xf32>
    %cst_22 = arith.constant 5.000000e-01 : f32
    %52 = vector.broadcast %cst_22 : f32 to vector<16x1xf32>
    %53 = arith.mulf %52, %51 : vector<16x1xf32>
    %54 = arith.truncf %34 : vector<16x32xf32> to vector<16x32xbf16>
    %cst_23 = arith.constant dense<0.000000e+00> : vector<16x16xf32>
    %55 = tpu.matmul %54, %36, %cst_23 {dimension_numbers = #tpu.dot_dimension_numbers<[1], [0], [0], [1], [0, 0, 1, 1], [], []>} : vector<16x32xbf16>, vector<32x16xbf16>, vector<16x16xf32> -> vector<16x16xf32>
    %56 = vector.broadcast %53 : vector<16x1xf32> to vector<16x16xf32>
    %57 = arith.subf %55, %56 : vector<16x16xf32>
    %58 = math.exp %57 : vector<16x16xf32>
    %cst_24 = arith.constant 2.500000e-01 : f32
    %59 = vector.broadcast %cst_24 : f32 to vector<16x16xf32>
    %60 = arith.mulf %58, %59 : vector<16x16xf32>
    %c0_25 = arith.constant 0 : index
    %c0_26 = arith.constant 0 : index
    %c0_27 = arith.constant 0 : index
    %61 = vector.load %arg8[%c0_25, %c0_26, %c0_27] : memref<1x16x16xf32, #tpu.memory_space<vmem>>, vector<1x16x16xf32>
    %62 = vector.shape_cast %61 : vector<1x16x16xf32> to vector<16x16xf32>
    %63 = vector.shape_cast %60 : vector<16x16xf32> to vector<1x16x16xf32>
    tpu.vector_store %arg8[%c0_25, %c0_26, %c0_27], %63 {strides = array<i32>} : memref<1x16x16xf32, #tpu.memory_space<vmem>>, vector<1x16x16xf32>,
    %64 = arith.truncf %35 : vector<16x32xf32> to vector<16x32xbf16>
    %c0_28 = arith.constant 0 : index
    %c0_29 = arith.constant 0 : index
    %c0_30 = arith.constant 0 : index
    %65 = vector.load %arg9[%c0_28, %c0_29, %c0_30] : memref<1x16x32xbf16, #tpu.memory_space<vmem>>, vector<1x16x32xbf16>
    %66 = vector.shape_cast %65 : vector<1x16x32xbf16> to vector<16x32xbf16>
    %67 = vector.shape_cast %64 : vector<16x32xbf16> to vector<1x16x32xbf16>
    tpu.vector_store %arg9[%c0_28, %c0_29, %c0_30], %67 {strides = array<i32>} : memref<1x16x32xbf16, #tpu.memory_space<vmem>>, vector<1x16x32xbf16>,
    %c0_i32 = arith.constant 0 : i32
    %68 = arith.cmpi eq, %arg1, %c0_i32 : i32
    %69 = arith.extui %68 : i1 to i32
    %c0_i32_31 = arith.constant 0 : i32
    %70 = arith.cmpi ne, %69, %c0_i32_31 : i32
    scf.if %70 {
      %cst_46 = arith.constant 0.000000e+00 : f32
      %88 = vector.broadcast %cst_46 : f32 to vector<1x1x16xf32>
      %c0_47 = arith.constant 0 : index
      %c0_48 = arith.constant 0 : index
      %c0_49 = arith.constant 0 : index
      %89 = vector.load %arg10[%c0_47, %c0_48, %c0_49] : memref<1x1x16xf32, #tpu.memory_space<vmem>>, vector<1x1x16xf32>
      tpu.vector_store %arg10[%c0_47, %c0_48, %c0_49], %88 {strides = array<i32>} : memref<1x1x16xf32, #tpu.memory_space<vmem>>, vector<1x1x16xf32>,
      %cst_50 = arith.constant 0.000000e+00 : f32
      %90 = vector.broadcast %cst_50 : f32 to vector<1x16x32xf32>
      %c0_51 = arith.constant 0 : index
      %c0_52 = arith.constant 0 : index
      %c0_53 = arith.constant 0 : index
      %91 = vector.load %arg11[%c0_51, %c0_52, %c0_53] : memref<1x16x32xf32, #tpu.memory_space<vmem>>, vector<1x16x32xf32>
      tpu.vector_store %arg11[%c0_51, %c0_52, %c0_53], %90 {strides = array<i32>} : memref<1x16x32xf32, #tpu.memory_space<vmem>>, vector<1x16x32xf32>,
    } else {
    }
    %c0_32 = arith.constant 0 : index
    %c0_33 = arith.constant 0 : index
    %c0_34 = arith.constant 0 : index
    %71 = vector.load %arg10[%c0_32, %c0_33, %c0_34] : memref<1x1x16xf32, #tpu.memory_space<vmem>>, vector<1x1x16xf32>
    %72 = vector.shape_cast %71 : vector<1x1x16xf32> to vector<1x16xf32>
    %cst_35 = arith.constant dense<0.000000e+00> : vector<16xf32>
    %73 = vector.multi_reduction <add>, %48, %cst_35 [0] : vector<16x16xf32> to vector<16xf32>
    %74 = vector.shape_cast %73 : vector<16xf32> to vector<1x16xf32>
    %75 = arith.addf %72, %74 : vector<1x16xf32>
    %c0_36 = arith.constant 0 : index
    %c0_37 = arith.constant 0 : index
    %c0_38 = arith.constant 0 : index
    %76 = vector.load %arg10[%c0_36, %c0_37, %c0_38] : memref<1x1x16xf32, #tpu.memory_space<vmem>>, vector<1x1x16xf32>
    %77 = vector.shape_cast %76 : vector<1x1x16xf32> to vector<1x16xf32>
    %78 = vector.shape_cast %75 : vector<1x16xf32> to vector<1x1x16xf32>
    tpu.vector_store %arg10[%c0_36, %c0_37, %c0_38], %78 {strides = array<i32>} : memref<1x1x16xf32, #tpu.memory_space<vmem>>, vector<1x1x16xf32>,
    %c0_39 = arith.constant 0 : index
    %c0_40 = arith.constant 0 : index
    %c0_41 = arith.constant 0 : index
    %79 = vector.load %arg11[%c0_39, %c0_40, %c0_41] : memref<1x16x32xf32, #tpu.memory_space<vmem>>, vector<1x16x32xf32>
    %80 = vector.shape_cast %79 : vector<1x16x32xf32> to vector<16x32xf32>
    %81 = arith.truncf %48 : vector<16x16xf32> to vector<16x16xbf16>
    %82 = arith.truncf %35 : vector<16x32xf32> to vector<16x32xbf16>
    %cst_42 = arith.constant dense<0.000000e+00> : vector<16x32xf32>
    %83 = tpu.matmul %81, %82, %cst_42 {dimension_numbers = #tpu.dot_dimension_numbers<[0], [0], [1], [1], [0, 1, 1, 1], [], []>} : vector<16x16xbf16>, vector<16x32xbf16>, vector<16x32xf32> -> vector<16x32xf32>
    %84 = arith.addf %80, %83 : vector<16x32xf32>
    %c0_43 = arith.constant 0 : index
    %c0_44 = arith.constant 0 : index
    %c0_45 = arith.constant 0 : index
    %85 = vector.load %arg11[%c0_43, %c0_44, %c0_45] : memref<1x16x32xf32, #tpu.memory_space<vmem>>, vector<1x16x32xf32>
    %86 = vector.shape_cast %85 : vector<1x16x32xf32> to vector<16x32xf32>
    %87 = vector.shape_cast %84 : vector<16x32xf32> to vector<1x16x32xf32>
    tpu.vector_store %arg11[%c0_43, %c0_44, %c0_45], %87 {strides = array<i32>} : memref<1x16x32xf32, #tpu.memory_space<vmem>>, vector<1x16x32xf32>,
    return
  }
  func.func @transform_0(%arg0: i32, %arg1: i32) -> (i32, i32, i32) {
    %c0_i32 = arith.constant 0 : i32
    %c0_i32_0 = arith.constant 0 : i32
    return %arg0, %c0_i32, %arg1 : i32, i32, i32
  }
  func.func @transform_1(%arg0: i32, %arg1: i32) -> (i32, i32) {
    %c0_i32 = arith.constant 0 : i32
    %c0_i32_0 = arith.constant 0 : i32
    %c0_i32_1 = arith.constant 0 : i32
    return %c0_i32, %c0_i32_0 : i32, i32
  }
  func.func @transform_2(%arg0: i32, %arg1: i32) -> (i32, i32) {
    %c0_i32 = arith.constant 0 : i32
    %c0_i32_0 = arith.constant 0 : i32
    %c0_i32_1 = arith.constant 0 : i32
    return %c0_i32, %c0_i32_0 : i32, i32
  }
  func.func @transform_3(%arg0: i32, %arg1: i32) -> (i32, i32) {
    %c0_i32 = arith.constant 0 : i32
    %c0_i32_0 = arith.constant 0 : i32
    %c0_i32_1 = arith.constant 0 : i32
    return %c0_i32, %c0_i32_0 : i32, i32
  }
  func.func @transform_4(%arg0: i32, %arg1: i32) -> (i32, i32) {
    %c0_i32 = arith.constant 0 : i32
    %c0_i32_0 = arith.constant 0 : i32
    %c0_i32_1 = arith.constant 0 : i32
    return %c0_i32, %c0_i32_0 : i32, i32
  }
  func.func @transform_5(%arg0: i32, %arg1: i32) -> (i32, i32) {
    %c0_i32 = arith.constant 0 : i32
    %c0_i32_0 = arith.constant 0 : i32
    %c0_i32_1 = arith.constant 0 : i32
    return %c0_i32, %c0_i32_0 : i32, i32
  }
  func.func @transform_6(%arg0: i32, %arg1: i32) -> (i32, i32, i32) {
    %c0_i32 = arith.constant 0 : i32
    %c0_i32_0 = arith.constant 0 : i32
    return %arg0, %arg1, %c0_i32 : i32, i32, i32
  }
  func.func @transform_7(%arg0: i32, %arg1: i32) -> (i32, i32, i32) {
    %c0_i32 = arith.constant 0 : i32
    %c0_i32_0 = arith.constant 0 : i32
    return %arg0, %arg1, %c0_i32 : i32, i32, i32
  }
  func.func @transform_8(%arg0: i32, %arg1: i32) -> (i32, i32, i32) {
    %c0_i32 = arith.constant 0 : i32
    %c0_i32_0 = arith.constant 0 : i32
    %c0_i32_1 = arith.constant 0 : i32
    return %arg0, %c0_i32, %c0_i32_0 : i32, i32, i32
  }
  func.func @transform_9(%arg0: i32, %arg1: i32) -> (i32, i32, i32) {
    %c0_i32 = arith.constant 0 : i32
    %c0_i32_0 = arith.constant 0 : i32
    %c0_i32_1 = arith.constant 0 : i32
    return %arg0, %c0_i32, %c0_i32_0 : i32, i32, i32
  }
}

module attributes {stable_mosaic.version = 11 : i64} {
  func.func @performer_finalize_kernel(%arg0: i32, %arg1: i32, %arg2: memref<1x16x16xf32, #tpu.memory_space<vmem>>, %arg3: memref<1x16x32xbf16, #tpu.memory_space<vmem>>, %arg4: memref<1x1x16xf32, #tpu.memory_space<vmem>>, %arg5: memref<1x16x32xf32, #tpu.memory_space<vmem>>, %arg6: memref<32x32xbf16, #tpu.memory_space<vmem>>, %arg7: memref<1x32xf32, #tpu.memory_space<vmem>>, %arg8: memref<1x32xf32, #tpu.memory_space<vmem>>, %arg9: memref<1x32xf32, #tpu.memory_space<vmem>>, %arg10: memref<32x32xbf16, #tpu.memory_space<vmem>>, %arg11: memref<1x32xf32, #tpu.memory_space<vmem>>, %arg12: memref<32x32xbf16, #tpu.memory_space<vmem>>, %arg13: memref<1x32xf32, #tpu.memory_space<vmem>>, %arg14: memref<1x32x16xbf16, #tpu.memory_space<vmem>>) attributes {dimension_semantics = [#tpu.dimension_semantics<parallel>, #tpu.dimension_semantics<parallel>], iteration_bounds = array<i64: 2, 1>, scalar_prefetch = 0 : i64, scratch_operands = 0 : i64, tpu.core_type = #tpu.core_type<tc>, window_params = [{transform_indices = @transform_0, window_bounds = array<i64: 1, 16, 16>}, {transform_indices = @transform_1, window_bounds = array<i64: 1, 16, 32>}, {transform_indices = @transform_2, window_bounds = array<i64: 1, 1, 16>}, {transform_indices = @transform_3, window_bounds = array<i64: 1, 16, 32>}, {pipeline_mode = #tpu.pipeline_mode<synchronous>, transform_indices = @transform_4, window_bounds = array<i64: 32, 32>}, {pipeline_mode = #tpu.pipeline_mode<synchronous>, transform_indices = @transform_5, window_bounds = array<i64: 1, 32>}, {pipeline_mode = #tpu.pipeline_mode<synchronous>, transform_indices = @transform_6, window_bounds = array<i64: 1, 32>}, {pipeline_mode = #tpu.pipeline_mode<synchronous>, transform_indices = @transform_7, window_bounds = array<i64: 1, 32>}, {pipeline_mode = #tpu.pipeline_mode<synchronous>, transform_indices = @transform_8, window_bounds = array<i64: 32, 32>}, {pipeline_mode = #tpu.pipeline_mode<synchronous>, transform_indices = @transform_9, window_bounds = array<i64: 1, 32>}, {pipeline_mode = #tpu.pipeline_mode<synchronous>, transform_indices = @transform_10, window_bounds = array<i64: 32, 32>}, {pipeline_mode = #tpu.pipeline_mode<synchronous>, transform_indices = @transform_11, window_bounds = array<i64: 1, 32>}, {transform_indices = @transform_12, window_bounds = array<i64: 1, 32, 16>}]} {
    %c0 = arith.constant 0 : index
    %c0_0 = arith.constant 0 : index
    %c0_1 = arith.constant 0 : index
    %0 = vector.load %arg2[%c0, %c0_0, %c0_1] : memref<1x16x16xf32, #tpu.memory_space<vmem>>, vector<1x16x16xf32>
    %1 = vector.shape_cast %0 : vector<1x16x16xf32> to vector<16x16xf32>
    %c0_2 = arith.constant 0 : index
    %c0_3 = arith.constant 0 : index
    %c0_4 = arith.constant 0 : index
    %2 = vector.load %arg3[%c0_2, %c0_3, %c0_4] : memref<1x16x32xbf16, #tpu.memory_space<vmem>>, vector<1x16x32xbf16>
    %3 = vector.shape_cast %2 : vector<1x16x32xbf16> to vector<16x32xbf16>
    %4 = arith.extf %3 : vector<16x32xbf16> to vector<16x32xf32>
    %c0_5 = arith.constant 0 : index
    %c0_6 = arith.constant 0 : index
    %c0_7 = arith.constant 0 : index
    %5 = vector.load %arg4[%c0_5, %c0_6, %c0_7] : memref<1x1x16xf32, #tpu.memory_space<vmem>>, vector<1x1x16xf32>
    %6 = vector.shape_cast %5 : vector<1x1x16xf32> to vector<1x16xf32>
    %c0_8 = arith.constant 0 : index
    %c0_9 = arith.constant 0 : index
    %c0_10 = arith.constant 0 : index
    %7 = vector.load %arg5[%c0_8, %c0_9, %c0_10] : memref<1x16x32xf32, #tpu.memory_space<vmem>>, vector<1x16x32xf32>
    %8 = vector.shape_cast %7 : vector<1x16x32xf32> to vector<16x32xf32>
    %9 = vector.broadcast %6 : vector<1x16xf32> to vector<16x16xf32>
    %10 = arith.mulf %1, %9 : vector<16x16xf32>
    %cst = arith.constant dense<0.000000e+00> : vector<16xf32>
    %11 = vector.multi_reduction <add>, %10, %cst [1] : vector<16x16xf32> to vector<16xf32>
    %12 = vector.shape_cast %11 : vector<16xf32> to vector<16x1xf32>
    %13 = arith.truncf %1 : vector<16x16xf32> to vector<16x16xbf16>
    %14 = arith.truncf %8 : vector<16x32xf32> to vector<16x32xbf16>
    %cst_11 = arith.constant dense<0.000000e+00> : vector<16x32xf32>
    %15 = tpu.matmul %13, %14, %cst_11 {dimension_numbers = #tpu.dot_dimension_numbers<[1], [0], [0], [1], [0, 0, 1, 1], [], []>} : vector<16x16xbf16>, vector<16x32xbf16>, vector<16x32xf32> -> vector<16x32xf32>
    %cst_12 = arith.constant 9.99999993E-9 : f32
    %16 = vector.broadcast %cst_12 : f32 to vector<16x1xf32>
    %17 = arith.addf %12, %16 : vector<16x1xf32>
    %18 = tpu.reciprocal %17 {approx = true} : vector<16x1xf32> -> vector<16x1xf32>
    %19 = vector.broadcast %18 : vector<16x1xf32> to vector<16x32xf32>
    %20 = arith.mulf %15, %19 : vector<16x32xf32>
    %21 = arith.truncf %20 : vector<16x32xf32> to vector<16x32xbf16>
    %c0_13 = arith.constant 0 : index
    %c0_14 = arith.constant 0 : index
    %22 = vector.load %arg6[%c0_13, %c0_14] : memref<32x32xbf16, #tpu.memory_space<vmem>>, vector<32x32xbf16>
    %cst_15 = arith.constant dense<0.000000e+00> : vector<16x32xf32>
    %23 = tpu.matmul %21, %22, %cst_15 {dimension_numbers = #tpu.dot_dimension_numbers<[1], [0], [0], [1], [0, 0, 1, 1], [], []>} : vector<16x32xbf16>, vector<32x32xbf16>, vector<16x32xf32> -> vector<16x32xf32>
    %24 = arith.addf %4, %23 : vector<16x32xf32>
    %c0_16 = arith.constant 0 : index
    %c0_17 = arith.constant 0 : index
    %25 = vector.load %arg7[%c0_16, %c0_17] : memref<1x32xf32, #tpu.memory_space<vmem>>, vector<1x32xf32>
    %26 = vector.broadcast %25 : vector<1x32xf32> to vector<16x32xf32>
    %27 = arith.addf %24, %26 : vector<16x32xf32>
    %c0_18 = arith.constant 0 : index
    %c0_19 = arith.constant 0 : index
    %28 = vector.load %arg8[%c0_18, %c0_19] : memref<1x32xf32, #tpu.memory_space<vmem>>, vector<1x32xf32>
    %c0_20 = arith.constant 0 : index
    %c0_21 = arith.constant 0 : index
    %29 = vector.load %arg9[%c0_20, %c0_21] : memref<1x32xf32, #tpu.memory_space<vmem>>, vector<1x32xf32>
    %cst_22 = arith.constant dense<0.000000e+00> : vector<16xf32>
    %30 = vector.multi_reduction <add>, %27, %cst_22 [1] : vector<16x32xf32> to vector<16xf32>
    %31 = vector.shape_cast %30 : vector<16xf32> to vector<16x1xf32>
    %cst_23 = arith.constant 3.200000e+01 : f32
    %32 = vector.broadcast %cst_23 : f32 to vector<16x1xf32>
    %33 = arith.divf %31, %32 : vector<16x1xf32>
    %34 = vector.broadcast %33 : vector<16x1xf32> to vector<16x32xf32>
    %35 = arith.subf %27, %34 : vector<16x32xf32>
    %36 = arith.mulf %35, %35 : vector<16x32xf32>
    %cst_24 = arith.constant dense<0.000000e+00> : vector<16xf32>
    %37 = vector.multi_reduction <add>, %36, %cst_24 [1] : vector<16x32xf32> to vector<16xf32>
    %38 = vector.shape_cast %37 : vector<16xf32> to vector<16x1xf32>
    %cst_25 = arith.constant 3.200000e+01 : f32
    %39 = vector.broadcast %cst_25 : f32 to vector<16x1xf32>
    %40 = arith.divf %38, %39 : vector<16x1xf32>
    %41 = vector.broadcast %33 : vector<16x1xf32> to vector<16x32xf32>
    %42 = arith.subf %27, %41 : vector<16x32xf32>
    %cst_26 = arith.constant 9.99999974E-6 : f32
    %43 = vector.broadcast %cst_26 : f32 to vector<16x1xf32>
    %44 = arith.addf %40, %43 : vector<16x1xf32>
    %45 = math.rsqrt %44 : vector<16x1xf32>
    %46 = vector.broadcast %45 : vector<16x1xf32> to vector<16x32xf32>
    %47 = arith.mulf %42, %46 : vector<16x32xf32>
    %48 = vector.broadcast %28 : vector<1x32xf32> to vector<16x32xf32>
    %49 = arith.mulf %47, %48 : vector<16x32xf32>
    %50 = vector.broadcast %29 : vector<1x32xf32> to vector<16x32xf32>
    %51 = arith.addf %49, %50 : vector<16x32xf32>
    %52 = arith.truncf %51 : vector<16x32xf32> to vector<16x32xbf16>
    %c0_27 = arith.constant 0 : index
    %c0_28 = arith.constant 0 : index
    %53 = vector.load %arg10[%c0_27, %c0_28] : memref<32x32xbf16, #tpu.memory_space<vmem>>, vector<32x32xbf16>
    %cst_29 = arith.constant dense<0.000000e+00> : vector<16x32xf32>
    %54 = tpu.matmul %52, %53, %cst_29 {dimension_numbers = #tpu.dot_dimension_numbers<[1], [0], [0], [1], [0, 0, 1, 1], [], []>} : vector<16x32xbf16>, vector<32x32xbf16>, vector<16x32xf32> -> vector<16x32xf32>
    %c0_30 = arith.constant 0 : index
    %c0_31 = arith.constant 0 : index
    %55 = vector.load %arg11[%c0_30, %c0_31] : memref<1x32xf32, #tpu.memory_space<vmem>>, vector<1x32xf32>
    %56 = vector.broadcast %55 : vector<1x32xf32> to vector<16x32xf32>
    %57 = arith.addf %54, %56 : vector<16x32xf32>
    %58 = arith.mulf %57, %57 : vector<16x32xf32>
    %59 = arith.mulf %57, %58 : vector<16x32xf32>
    %cst_32 = arith.constant 4.471500e-02 : f32
    %60 = vector.broadcast %cst_32 : f32 to vector<16x32xf32>
    %61 = arith.mulf %60, %59 : vector<16x32xf32>
    %62 = arith.addf %57, %61 : vector<16x32xf32>
    %cst_33 = arith.constant 0.797884583 : f32
    %63 = vector.broadcast %cst_33 : f32 to vector<16x32xf32>
    %64 = arith.mulf %63, %62 : vector<16x32xf32>
    %65 = math.tanh %64 : vector<16x32xf32>
    %cst_34 = arith.constant 1.000000e+00 : f32
    %66 = vector.broadcast %cst_34 : f32 to vector<16x32xf32>
    %67 = arith.addf %66, %65 : vector<16x32xf32>
    %cst_35 = arith.constant 5.000000e-01 : f32
    %68 = vector.broadcast %cst_35 : f32 to vector<16x32xf32>
    %69 = arith.mulf %68, %67 : vector<16x32xf32>
    %70 = arith.mulf %57, %69 : vector<16x32xf32>
    %71 = arith.truncf %70 : vector<16x32xf32> to vector<16x32xbf16>
    %c0_36 = arith.constant 0 : index
    %c0_37 = arith.constant 0 : index
    %72 = vector.load %arg12[%c0_36, %c0_37] : memref<32x32xbf16, #tpu.memory_space<vmem>>, vector<32x32xbf16>
    %cst_38 = arith.constant dense<0.000000e+00> : vector<16x32xf32>
    %73 = tpu.matmul %71, %72, %cst_38 {dimension_numbers = #tpu.dot_dimension_numbers<[1], [0], [0], [1], [0, 0, 1, 1], [], []>} : vector<16x32xbf16>, vector<32x32xbf16>, vector<16x32xf32> -> vector<16x32xf32>
    %c0_39 = arith.constant 0 : index
    %c0_40 = arith.constant 0 : index
    %74 = vector.load %arg13[%c0_39, %c0_40] : memref<1x32xf32, #tpu.memory_space<vmem>>, vector<1x32xf32>
    %75 = vector.broadcast %74 : vector<1x32xf32> to vector<16x32xf32>
    %76 = arith.addf %73, %75 : vector<16x32xf32>
    %77 = arith.addf %27, %76 : vector<16x32xf32>
    %78 = tpu.transpose %77, [1, 0] : vector<16x32xf32> -> vector<32x16xf32>
    %79 = arith.truncf %78 : vector<32x16xf32> to vector<32x16xbf16>
    %c0_41 = arith.constant 0 : index
    %c0_42 = arith.constant 0 : index
    %c0_43 = arith.constant 0 : index
    %80 = vector.load %arg14[%c0_41, %c0_42, %c0_43] : memref<1x32x16xbf16, #tpu.memory_space<vmem>>, vector<1x32x16xbf16>
    %81 = vector.shape_cast %80 : vector<1x32x16xbf16> to vector<32x16xbf16>
    %82 = vector.shape_cast %79 : vector<32x16xbf16> to vector<1x32x16xbf16>
    tpu.vector_store %arg14[%c0_41, %c0_42, %c0_43], %82 {strides = array<i32>} : memref<1x32x16xbf16, #tpu.memory_space<vmem>>, vector<1x32x16xbf16>,
    return
  }
  func.func @transform_0(%arg0: i32, %arg1: i32) -> (i32, i32, i32) {
    %c0_i32 = arith.constant 0 : i32
    %c0_i32_0 = arith.constant 0 : i32
    return %arg0, %arg1, %c0_i32 : i32, i32, i32
  }
  func.func @transform_1(%arg0: i32, %arg1: i32) -> (i32, i32, i32) {
    %c0_i32 = arith.constant 0 : i32
    %c0_i32_0 = arith.constant 0 : i32
    return %arg0, %arg1, %c0_i32 : i32, i32, i32
  }
  func.func @transform_2(%arg0: i32, %arg1: i32) -> (i32, i32, i32) {
    %c0_i32 = arith.constant 0 : i32
    %c0_i32_0 = arith.constant 0 : i32
    %c0_i32_1 = arith.constant 0 : i32
    return %arg0, %c0_i32, %c0_i32_0 : i32, i32, i32
  }
  func.func @transform_3(%arg0: i32, %arg1: i32) -> (i32, i32, i32) {
    %c0_i32 = arith.constant 0 : i32
    %c0_i32_0 = arith.constant 0 : i32
    %c0_i32_1 = arith.constant 0 : i32
    return %arg0, %c0_i32, %c0_i32_0 : i32, i32, i32
  }
  func.func @transform_4(%arg0: i32, %arg1: i32) -> (i32, i32) {
    %c0_i32 = arith.constant 0 : i32
    %c0_i32_0 = arith.constant 0 : i32
    %c0_i32_1 = arith.constant 0 : i32
    return %c0_i32, %c0_i32_0 : i32, i32
  }
  func.func @transform_5(%arg0: i32, %arg1: i32) -> (i32, i32) {
    %c0_i32 = arith.constant 0 : i32
    %c0_i32_0 = arith.constant 0 : i32
    %c0_i32_1 = arith.constant 0 : i32
    return %c0_i32, %c0_i32_0 : i32, i32
  }
  func.func @transform_6(%arg0: i32, %arg1: i32) -> (i32, i32) {
    %c0_i32 = arith.constant 0 : i32
    %c0_i32_0 = arith.constant 0 : i32
    %c0_i32_1 = arith.constant 0 : i32
    return %c0_i32, %c0_i32_0 : i32, i32
  }
  func.func @transform_7(%arg0: i32, %arg1: i32) -> (i32, i32) {
    %c0_i32 = arith.constant 0 : i32
    %c0_i32_0 = arith.constant 0 : i32
    %c0_i32_1 = arith.constant 0 : i32
    return %c0_i32, %c0_i32_0 : i32, i32
  }
  func.func @transform_8(%arg0: i32, %arg1: i32) -> (i32, i32) {
    %c0_i32 = arith.constant 0 : i32
    %c0_i32_0 = arith.constant 0 : i32
    %c0_i32_1 = arith.constant 0 : i32
    return %c0_i32, %c0_i32_0 : i32, i32
  }
  func.func @transform_9(%arg0: i32, %arg1: i32) -> (i32, i32) {
    %c0_i32 = arith.constant 0 : i32
    %c0_i32_0 = arith.constant 0 : i32
    %c0_i32_1 = arith.constant 0 : i32
    return %c0_i32, %c0_i32_0 : i32, i32
  }
  func.func @transform_10(%arg0: i32, %arg1: i32) -> (i32, i32) {
    %c0_i32 = arith.constant 0 : i32
    %c0_i32_0 = arith.constant 0 : i32
    %c0_i32_1 = arith.constant 0 : i32
    return %c0_i32, %c0_i32_0 : i32, i32
  }
  func.func @transform_11(%arg0: i32, %arg1: i32) -> (i32, i32) {
    %c0_i32 = arith.constant 0 : i32
    %c0_i32_0 = arith.constant 0 : i32
    %c0_i32_1 = arith.constant 0 : i32
    return %c0_i32, %c0_i32_0 : i32, i32
  }
  func.func @transform_12(%arg0: i32, %arg1: i32) -> (i32, i32, i32) {
    %c0_i32 = arith.constant 0 : i32
    %c0_i32_0 = arith.constant 0 : i32
    return %arg0, %c0_i32, %arg1 : i32, i32, i32
  }
}

module attributes {stable_mosaic.version = 11 : i64} {
  func.func @linear_kernel(%arg0: i32, %arg1: i32, %arg2: memref<1x288x4xbf16, #tpu.memory_space<vmem>>, %arg3: memref<288x64xbf16, #tpu.memory_space<vmem>>, %arg4: memref<1x64xf32, #tpu.memory_space<vmem>>, %arg5: memref<1x4x64xbf16, #tpu.memory_space<vmem>>) attributes {dimension_semantics = [#tpu.dimension_semantics<parallel>, #tpu.dimension_semantics<parallel>], iteration_bounds = array<i64: 2, 1>, scalar_prefetch = 0 : i64, scratch_operands = 0 : i64, tpu.core_type = #tpu.core_type<tc>, window_params = [{transform_indices = @transform_0, window_bounds = array<i64: 1, 288, 4>}, {pipeline_mode = #tpu.pipeline_mode<synchronous>, transform_indices = @transform_1, window_bounds = array<i64: 288, 64>}, {pipeline_mode = #tpu.pipeline_mode<synchronous>, transform_indices = @transform_2, window_bounds = array<i64: 1, 64>}, {transform_indices = @transform_3, window_bounds = array<i64: 1, 4, 64>}]} {
    %c0 = arith.constant 0 : index
    %c0_0 = arith.constant 0 : index
    %c0_1 = arith.constant 0 : index
    %0 = vector.load %arg2[%c0, %c0_0, %c0_1] : memref<1x288x4xbf16, #tpu.memory_space<vmem>>, vector<1x288x4xbf16>
    %1 = vector.shape_cast %0 : vector<1x288x4xbf16> to vector<288x4xbf16>
    %c0_2 = arith.constant 0 : index
    %c0_3 = arith.constant 0 : index
    %2 = vector.load %arg3[%c0_2, %c0_3] : memref<288x64xbf16, #tpu.memory_space<vmem>>, vector<288x64xbf16>
    %cst = arith.constant dense<0.000000e+00> : vector<4x64xf32>
    %3 = tpu.matmul %1, %2, %cst {dimension_numbers = #tpu.dot_dimension_numbers<[0], [0], [1], [1], [0, 1, 1, 1], [], []>} : vector<288x4xbf16>, vector<288x64xbf16>, vector<4x64xf32> -> vector<4x64xf32>
    %c0_4 = arith.constant 0 : index
    %c0_5 = arith.constant 0 : index
    %4 = vector.load %arg4[%c0_4, %c0_5] : memref<1x64xf32, #tpu.memory_space<vmem>>, vector<1x64xf32>
    %5 = vector.broadcast %4 : vector<1x64xf32> to vector<4x64xf32>
    %6 = arith.addf %3, %5 : vector<4x64xf32>
    %7 = arith.truncf %6 : vector<4x64xf32> to vector<4x64xbf16>
    %c0_6 = arith.constant 0 : index
    %c0_7 = arith.constant 0 : index
    %c0_8 = arith.constant 0 : index
    %8 = vector.load %arg5[%c0_6, %c0_7, %c0_8] : memref<1x4x64xbf16, #tpu.memory_space<vmem>>, vector<1x4x64xbf16>
    %9 = vector.shape_cast %8 : vector<1x4x64xbf16> to vector<4x64xbf16>
    %10 = vector.shape_cast %7 : vector<4x64xbf16> to vector<1x4x64xbf16>
    tpu.vector_store %arg5[%c0_6, %c0_7, %c0_8], %10 {strides = array<i32>} : memref<1x4x64xbf16, #tpu.memory_space<vmem>>, vector<1x4x64xbf16>,
    return
  }
  func.func @transform_0(%arg0: i32, %arg1: i32) -> (i32, i32, i32) {
    %c0_i32 = arith.constant 0 : i32
    %c0_i32_0 = arith.constant 0 : i32
    return %arg0, %c0_i32, %arg1 : i32, i32, i32
  }
  func.func @transform_1(%arg0: i32, %arg1: i32) -> (i32, i32) {
    %c0_i32 = arith.constant 0 : i32
    %c0_i32_0 = arith.constant 0 : i32
    %c0_i32_1 = arith.constant 0 : i32
    return %c0_i32, %c0_i32_0 : i32, i32
  }
  func.func @transform_2(%arg0: i32, %arg1: i32) -> (i32, i32) {
    %c0_i32 = arith.constant 0 : i32
    %c0_i32_0 = arith.constant 0 : i32
    %c0_i32_1 = arith.constant 0 : i32
    return %c0_i32, %c0_i32_0 : i32, i32
  }
  func.func @transform_3(%arg0: i32, %arg1: i32) -> (i32, i32, i32) {
    %c0_i32 = arith.constant 0 : i32
    %c0_i32_0 = arith.constant 0 : i32
    return %arg0, %arg1, %c0_i32 : i32, i32, i32
  }
}

</mosaic_0001>

<llo_original>
// kernel: _lambda_.6
$region0: #{_lambda_.6}
  #allocation0 [shape = 'u32[]', space=smem, size = 0x4, offset = 0x4, fixed_abs, tag = 'smem constant byte address 0x4 - core index']
  #allocation1 [shape = 'u32[144,128]{1,0:T(1,128)}', space=vmem, size = 0x12000, scoped, tag = 'internal scratch']
  %s0 = inlined_call_operand.vmem [shape: f32[2,64,16], index: 0, kind: input, shape index: {}]
  %s1 = inlined_call_operand.vmem [shape: bf16[2,64,32], index: 1, kind: input, shape index: {}]
  %s2 = inlined_call_operand.vmem [shape: f32[2,1,16], index: 2, kind: input, shape index: {}]
  %s3 = inlined_call_operand.vmem [shape: f32[2,16,32], index: 3, kind: input, shape index: {}]
  %s4 = inlined_call_operand.vmem [shape: bf16[32,32], index: 4, kind: input, shape index: {}]
  %s5 = inlined_call_operand.vmem [shape: f32[1,32], index: 5, kind: input, shape index: {}]
  %s6 = inlined_call_operand.vmem [shape: f32[1,32], index: 6, kind: input, shape index: {}]
  %s7 = inlined_call_operand.vmem [shape: f32[1,32], index: 7, kind: input, shape index: {}]
  %s8 = inlined_call_operand.vmem [shape: bf16[32,32], index: 8, kind: input, shape index: {}]
  %s9 = inlined_call_operand.vmem [shape: f32[1,32], index: 9, kind: input, shape index: {}]
  %s10 = inlined_call_operand.vmem [shape: bf16[32,32], index: 10, kind: input, shape index: {}]
  %s11 = inlined_call_operand.vmem [shape: f32[1,32], index: 11, kind: input, shape index: {}]
  %s12 = inlined_call_operand.vmem [shape: bf16[2,32,64], index: 12, kind: output, shape index: {}]
  %s13 = sld [smem:[#allocation0]]
  $region81: #{_lambda_.6} parent=0
    _
  %s15 = ssub.s32 1, %s13
  %s16 = scalar_select 0, %s15, %s13
  loop: start=0, step=1, limit=4
  $region2: #{_lambda_.6} parent=0 // loop_pre_header
    _
  $region3: #{_lambda_.6} parent=0 // loop_header
    %s18 = sphi 0, %s22
    %p19 = scmp.ge.s32.totalorder %s18, 4
    %s25 = sphi 0, %s37
    %s26 = sphi 0, %s33
    %s27 = sphi 0, %s25
    %s28 = sphi 0, %s26
    %s29 = sphi 0, %s27
    %s30 = sphi 0, %s28
    %s42 = sphi 0, %s44
    %s45 = sphi 0, %s42
    %s46 = sphi 0, %s45
    %s62 = sphi 0, %s46
    %s70 = sphi 0, %s72
    %s73 = sphi 0, %s70
    %s74 = sphi 0, %s73
    %s90 = sphi 0, %s74
    %s96 = sphi 0, %s98
    %s99 = sphi 0, %s96
    %s100 = sphi 0, %s99
    %s116 = sphi 0, %s100
    %s122 = sphi 0, %s124
    %s125 = sphi 0, %s122
    %s126 = sphi 0, %s125
    %s142 = sphi 0, %s126
    %s146 = sphi 0, %s146
    %s148 = sphi 0, %s146
    %s149 = sphi 0, %s148
    %s163 = sphi 0, %s149
    %s167 = sphi 0, %s167
    %s169 = sphi 0, %s167
    %s170 = sphi 0, %s169
    %s184 = sphi 0, %s170
    %s188 = sphi 0, %s188
    %s190 = sphi 0, %s188
    %s191 = sphi 0, %s190
    %s205 = sphi 0, %s191
    %s209 = sphi 0, %s209
    %s211 = sphi 0, %s209
    %s212 = sphi 0, %s211
    %s226 = sphi 0, %s212
    %s230 = sphi 0, %s230
    %s232 = sphi 0, %s230
    %s233 = sphi 0, %s232
    %s247 = sphi 0, %s233
    %s251 = sphi 0, %s251
    %s253 = sphi 0, %s251
    %s254 = sphi 0, %s253
    %s268 = sphi 0, %s254
    %s272 = sphi 0, %s272
    %s274 = sphi 0, %s272
    %s275 = sphi 0, %s274
    %s289 = sphi 0, %s275
    %s293 = sphi 0, %s293
    %s295 = sphi 0, %s293
    %s296 = sphi 0, %s295
    %s310 = sphi 0, %s296
    %s318 = sphi 0, %s320
    %s321 = sphi 0, %s318
    %s322 = sphi 0, %s321
    %s338 = sphi 0, %s322
  $region4: #{_lambda_.6} parent=0 // loop_header_branch
    %21 = sbr.rel (%p19) target = $region8
  $region5: #{_lambda_.6} parent=0 // loop_body
    %s23 = ssub.s32 %s18, 1
    %s24 = ssub.s32 %s18, 2
    %s31 = sadd.s32 1, %s26
    %p32 = scmp.ge.s32.totalorder %s31, 1
    %s33 = scalar_select %p32, 0, %s31
    %s34 = sadd.s32 1, %s25
    %s35 = scalar_select %p32, %s34, %s25
    %p36 = scmp.ge.s32.totalorder %s35, 2
    %s37 = scalar_select %p36, 0, %s35
    %s38 = ssub.s32 %s25, %s37
    %s39 = ssub.s32 %s26, %s33
    %s40 = sor.u32 %s38, %s39
    %p41 = scmp.eq.s32.totalorder %s40, 0
    %s43 = sadd.s32 %s42, 1
    %s44 = scalar_select %p41, %s42, %s43
    %p47 = pneg %p41
    %p48 = scmp.eq.s32.totalorder %s18, 1
    %p49 = por %p47, %p48
    %p50 = scmp.ne.s32.totalorder %s42, %s45
    %p51 = scmp.eq.s32.totalorder %s18, 0
    %p52 = por %p50, %p51
    %p53 = scmp.ne.s32.totalorder %s42, %s45
    %p54 = scmp.eq.s32.totalorder %s23, 1
    %p55 = por %p53, %p54
    %p56 = scmp.ne.s32.totalorder %s45, %s46
    %p57 = scmp.eq.s32.totalorder %s23, 0
    %p58 = por %p56, %p57
    %p59 = scmp.ne.s32.totalorder %s45, %s46
    %p60 = scmp.eq.s32.totalorder %s24, 1
    %p61 = por %p59, %p60
    %p63 = scmp.ne.s32.totalorder %s46, %s62
    %p64 = scmp.eq.s32.totalorder %s24, 0
    %p65 = por %p63, %p64
    %s66 = ssub.s32 %s25, %s37
    %s67 = ssub.s32 %s26, %s33
    %s68 = sor.u32 %s66, %s67
    %p69 = scmp.eq.s32.totalorder %s68, 0
    %s71 = sadd.s32 %s70, 1
    %s72 = scalar_select %p69, %s70, %s71
    %p75 = pneg %p69
    %p76 = scmp.eq.s32.totalorder %s18, 1
    %p77 = por %p75, %p76
    %p78 = scmp.ne.s32.totalorder %s70, %s73
    %p79 = scmp.eq.s32.totalorder %s18, 0
    %p80 = por %p78, %p79
    %p81 = scmp.ne.s32.totalorder %s70, %s73
    %p82 = scmp.eq.s32.totalorder %s23, 1
    %p83 = por %p81, %p82
    %p84 = scmp.ne.s32.totalorder %s73, %s74
    %p85 = scmp.eq.s32.totalorder %s23, 0
    %p86 = por %p84, %p85
    %p87 = scmp.ne.s32.totalorder %s73, %s74
    %p88 = scmp.eq.s32.totalorder %s24, 1
    %p89 = por %p87, %p88
    %p91 = scmp.ne.s32.totalorder %s74, %s90
    %p92 = scmp.eq.s32.totalorder %s24, 0
    %p93 = por %p91, %p92
    %s94 = ssub.s32 %s25, %s37
    %p95 = scmp.eq.s32.totalorder %s94, 0
    %s97 = sadd.s32 %s96, 1
    %s98 = scalar_select %p95, %s96, %s97
    %p101 = pneg %p95
    %p102 = scmp.eq.s32.totalorder %s18, 1
    %p103 = por %p101, %p102
    %p104 = scmp.ne.s32.totalorder %s96, %s99
    %p105 = scmp.eq.s32.totalorder %s18, 0
    %p106 = por %p104, %p105
    %p107 = scmp.ne.s32.totalorder %s96, %s99
    %p108 = scmp.eq.s32.totalorder %s23, 1
    %p109 = por %p107, %p108
    %p110 = scmp.ne.s32.totalorder %s99, %s100
    %p111 = scmp.eq.s32.totalorder %s23, 0
    %p112 = por %p110, %p111
    %p113 = scmp.ne.s32.totalorder %s99, %s100
    %p114 = scmp.eq.s32.totalorder %s24, 1
    %p115 = por %p113, %p114
    %p117 = scmp.ne.s32.totalorder %s100, %s116
    %p118 = scmp.eq.s32.totalorder %s24, 0
    %p119 = por %p117, %p118
    %s120 = ssub.s32 %s25, %s37
    %p121 = scmp.eq.s32.totalorder %s120, 0
    %s123 = sadd.s32 %s122, 1
    %s124 = scalar_select %p121, %s122, %s123
    %p127 = pneg %p121
    %p128 = scmp.eq.s32.totalorder %s18, 1
    %p129 = por %p127, %p128
    %p130 = scmp.ne.s32.totalorder %s122, %s125
    %p131 = scmp.eq.s32.totalorder %s18, 0
    %p132 = por %p130, %p131
    %p133 = scmp.ne.s32.totalorder %s122, %s125
    %p134 = scmp.eq.s32.totalorder %s23, 1
    %p135 = por %p133, %p134
    %p136 = scmp.ne.s32.totalorder %s125, %s126
    %p137 = scmp.eq.s32.totalorder %s23, 0
    %p138 = por %p136, %p137
    %p139 = scmp.ne.s32.totalorder %s125, %s126
    %p140 = scmp.eq.s32.totalorder %s24, 1
    %p141 = por %p139, %p140
    %p143 = scmp.ne.s32.totalorder %s126, %s142
    %p144 = scmp.eq.s32.totalorder %s24, 0
    %p145 = por %p143, %p144
    %s147 = sadd.s32 %s146, 1
    %p150 = scmp.eq.s32.totalorder %s18, 1
    %p151 = scmp.ne.s32.totalorder %s146, %s148
    %p152 = scmp.eq.s32.totalorder %s18, 0
    %p153 = por %p151, %p152
    %p154 = scmp.ne.s32.totalorder %s146, %s148
    %p155 = scmp.eq.s32.totalorder %s23, 1
    %p156 = por %p154, %p155
    %p157 = scmp.ne.s32.totalorder %s148, %s149
    %p158 = scmp.eq.s32.totalorder %s23, 0
    %p159 = por %p157, %p158
    %p160 = scmp.ne.s32.totalorder %s148, %s149
    %p161 = scmp.eq.s32.totalorder %s24, 1
    %p162 = por %p160, %p161
    %p164 = scmp.ne.s32.totalorder %s149, %s163
    %p165 = scmp.eq.s32.totalorder %s24, 0
    %p166 = por %p164, %p165
    %s168 = sadd.s32 %s167, 1
    %p171 = scmp.eq.s32.totalorder %s18, 1
    %p172 = scmp.ne.s32.totalorder %s167, %s169
    %p173 = scmp.eq.s32.totalorder %s18, 0
    %p174 = por %p172, %p173
    %p175 = scmp.ne.s32.totalorder %s167, %s169
    %p176 = scmp.eq.s32.totalorder %s23, 1
    %p177 = por %p175, %p176
    %p178 = scmp.ne.s32.totalorder %s169, %s170
    %p179 = scmp.eq.s32.totalorder %s23, 0
    %p180 = por %p178, %p179
    %p181 = scmp.ne.s32.totalorder %s169, %s170
    %p182 = scmp.eq.s32.totalorder %s24, 1
    %p183 = por %p181, %p182
    %p185 = scmp.ne.s32.totalorder %s170, %s184
    %p186 = scmp.eq.s32.totalorder %s24, 0
    %p187 = por %p185, %p186
    %s189 = sadd.s32 %s188, 1
    %p192 = scmp.eq.s32.totalorder %s18, 1
    %p193 = scmp.ne.s32.totalorder %s188, %s190
    %p194 = scmp.eq.s32.totalorder %s18, 0
    %p195 = por %p193, %p194
    %p196 = scmp.ne.s32.totalorder %s188, %s190
    %p197 = scmp.eq.s32.totalorder %s23, 1
    %p198 = por %p196, %p197
    %p199 = scmp.ne.s32.totalorder %s190, %s191
    %p200 = scmp.eq.s32.totalorder %s23, 0
    %p201 = por %p199, %p200
    %p202 = scmp.ne.s32.totalorder %s190, %s191
    %p203 = scmp.eq.s32.totalorder %s24, 1
    %p204 = por %p202, %p203
    %p206 = scmp.ne.s32.totalorder %s191, %s205
    %p207 = scmp.eq.s32.totalorder %s24, 0
    %p208 = por %p206, %p207
    %s210 = sadd.s32 %s209, 1
    %p213 = scmp.eq.s32.totalorder %s18, 1
    %p214 = scmp.ne.s32.totalorder %s209, %s211
    %p215 = scmp.eq.s32.totalorder %s18, 0
    %p216 = por %p214, %p215
    %p217 = scmp.ne.s32.totalorder %s209, %s211
    %p218 = scmp.eq.s32.totalorder %s23, 1
    %p219 = por %p217, %p218
    %p220 = scmp.ne.s32.totalorder %s211, %s212
    %p221 = scmp.eq.s32.totalorder %s23, 0
    %p222 = por %p220, %p221
    %p223 = scmp.ne.s32.totalorder %s211, %s212
    %p224 = scmp.eq.s32.totalorder %s24, 1
    %p225 = por %p223, %p224
    %p227 = scmp.ne.s32.totalorder %s212, %s226
    %p228 = scmp.eq.s32.totalorder %s24, 0
    %p229 = por %p227, %p228
    %s231 = sadd.s32 %s230, 1
    %p234 = scmp.eq.s32.totalorder %s18, 1
    %p235 = scmp.ne.s32.totalorder %s230, %s232
    %p236 = scmp.eq.s32.totalorder %s18, 0
    %p237 = por %p235, %p236
    %p238 = scmp.ne.s32.totalorder %s230, %s232
    %p239 = scmp.eq.s32.totalorder %s23, 1
    %p240 = por %p238, %p239
    %p241 = scmp.ne.s32.totalorder %s232, %s233
    %p242 = scmp.eq.s32.totalorder %s23, 0
    %p243 = por %p241, %p242
    %p244 = scmp.ne.s32.totalorder %s232, %s233
    %p245 = scmp.eq.s32.totalorder %s24, 1
    %p246 = por %p244, %p245
    %p248 = scmp.ne.s32.totalorder %s233, %s247
    %p249 = scmp.eq.s32.totalorder %s24, 0
    %p250 = por %p248, %p249
    %s252 = sadd.s32 %s251, 1
    %p255 = scmp.eq.s32.totalorder %s18, 1
    %p256 = scmp.ne.s32.totalorder %s251, %s253
    %p257 = scmp.eq.s32.totalorder %s18, 0
    %p258 = por %p256, %p257
    %p259 = scmp.ne.s32.totalorder %s251, %s253
    %p260 = scmp.eq.s32.totalorder %s23, 1
    %p261 = por %p259, %p260
    %p262 = scmp.ne.s32.totalorder %s253, %s254
    %p263 = scmp.eq.s32.totalorder %s23, 0
    %p264 = por %p262, %p263
    %p265 = scmp.ne.s32.totalorder %s253, %s254
    %p266 = scmp.eq.s32.totalorder %s24, 1
    %p267 = por %p265, %p266
    %p269 = scmp.ne.s32.totalorder %s254, %s268
    %p270 = scmp.eq.s32.totalorder %s24, 0
    %p271 = por %p269, %p270
    %s273 = sadd.s32 %s272, 1
    %p276 = scmp.eq.s32.totalorder %s18, 1
    %p277 = scmp.ne.s32.totalorder %s272, %s274
    %p278 = scmp.eq.s32.totalorder %s18, 0
    %p279 = por %p277, %p278
    %p280 = scmp.ne.s32.totalorder %s272, %s274
    %p281 = scmp.eq.s32.totalorder %s23, 1
    %p282 = por %p280, %p281
    %p283 = scmp.ne.s32.totalorder %s274, %s275
    %p284 = scmp.eq.s32.totalorder %s23, 0
    %p285 = por %p283, %p284
    %p286 = scmp.ne.s32.totalorder %s274, %s275
    %p287 = scmp.eq.s32.totalorder %s24, 1
    %p288 = por %p286, %p287
    %p290 = scmp.ne.s32.totalorder %s275, %s289
    %p291 = scmp.eq.s32.totalorder %s24, 0
    %p292 = por %p290, %p291
    %s294 = sadd.s32 %s293, 1
    %p297 = scmp.eq.s32.totalorder %s18, 1
    %p298 = scmp.ne.s32.totalorder %s293, %s295
    %p299 = scmp.eq.s32.totalorder %s18, 0
    %p300 = por %p298, %p299
    %p301 = scmp.ne.s32.totalorder %s293, %s295
    %p302 = scmp.eq.s32.totalorder %s23, 1
    %p303 = por %p301, %p302
    %p304 = scmp.ne.s32.totalorder %s295, %s296
    %p305 = scmp.eq.s32.totalorder %s23, 0
    %p306 = por %p304, %p305
    %p307 = scmp.ne.s32.totalorder %s295, %s296
    %p308 = scmp.eq.s32.totalorder %s24, 1
    %p309 = por %p307, %p308
    %p311 = scmp.ne.s32.totalorder %s296, %s310
    %p312 = scmp.eq.s32.totalorder %s24, 0
    %p313 = por %p311, %p312
    %s314 = ssub.s32 %s25, %s37
    %s315 = ssub.s32 %s26, %s33
    %s316 = sor.u32 %s314, %s315
    %p317 = scmp.eq.s32.totalorder %s316, 0
    %s319 = sadd.s32 %s318, 1
    %s320 = scalar_select %p317, %s318, %s319
    %p323 = pneg %p317
    %p324 = scmp.eq.s32.totalorder %s18, 1
    %p325 = por %p323, %p324
    %p326 = scmp.ne.s32.totalorder %s318, %s321
    %p327 = scmp.eq.s32.totalorder %s18, 0
    %p328 = por %p326, %p327
    %p329 = scmp.ne.s32.totalorder %s318, %s321
    %p330 = scmp.eq.s32.totalorder %s23, 1
    %p331 = por %p329, %p330
    %p332 = scmp.ne.s32.totalorder %s321, %s322
    %p333 = scmp.eq.s32.totalorder %s23, 0
    %p334 = por %p332, %p333
    %p335 = scmp.ne.s32.totalorder %s321, %s322
    %p336 = scmp.eq.s32.totalorder %s24, 1
    %p337 = por %p335, %p336
    %p339 = scmp.ne.s32.totalorder %s322, %s338
    %p340 = scmp.eq.s32.totalorder %s24, 0
    %p341 = por %p339, %p340
    %p342 = scmp.le.s32.totalorder 1, %s18
    %p343 = scmp.lt.s32.totalorder %s18, 3
    %p344 = pnand %p342, %p343
    %p345 = pneg %p344
    // Predicated region
    $region9: #{_lambda_.6} parent=5 // pred_check
      _
    $region10: #{_lambda_.6} parent=5 // pred_check_branch
      %347 = sbr.rel (%p344) target = $region12
    $region11: #{_lambda_.6} parent=5 // pred_region
      %s348 = ssub.s32 %s18, 1
      // Predicated region
      $region13: #{_lambda_.6} parent=11 // pred_check
        %p349 = pneg %p159
      $region14: #{_lambda_.6} parent=11 // pred_check_branch
        %351 = sbr.rel (%p349) target = $region16
      $region15: #{_lambda_.6} parent=11 // pred_region
        _
      $region16: #{_lambda_.6} parent=11 // pred_fallthru
        _
      // Predicated region
      $region17: #{_lambda_.6} parent=11 // pred_check
        %p352 = pneg %p180
      $region18: #{_lambda_.6} parent=11 // pred_check_branch
        %354 = sbr.rel (%p352) target = $region20
      $region19: #{_lambda_.6} parent=11 // pred_region
        _
      $region20: #{_lambda_.6} parent=11 // pred_fallthru
        _
      // Predicated region
      $region21: #{_lambda_.6} parent=11 // pred_check
        %p355 = pneg %p201
      $region22: #{_lambda_.6} parent=11 // pred_check_branch
        %357 = sbr.rel (%p355) target = $region24
      $region23: #{_lambda_.6} parent=11 // pred_region
        _
      $region24: #{_lambda_.6} parent=11 // pred_fallthru
        _
      // Predicated region
      $region25: #{_lambda_.6} parent=11 // pred_check
        %p358 = pneg %p222
      $region26: #{_lambda_.6} parent=11 // pred_check_branch
        %360 = sbr.rel (%p358) target = $region28
      $region27: #{_lambda_.6} parent=11 // pred_region
        _
      $region28: #{_lambda_.6} parent=11 // pred_fallthru
        _
      // Predicated region
      $region29: #{_lambda_.6} parent=11 // pred_check
        %p361 = pneg %p243
      $region30: #{_lambda_.6} parent=11 // pred_check_branch
        %363 = sbr.rel (%p361) target = $region32
      $region31: #{_lambda_.6} parent=11 // pred_region
        _
      $region32: #{_lambda_.6} parent=11 // pred_fallthru
        _
      // Predicated region
      $region33: #{_lambda_.6} parent=11 // pred_check
        %p364 = pneg %p264
      $region34: #{_lambda_.6} parent=11 // pred_check_branch
        %366 = sbr.rel (%p364) target = $region36
      $region35: #{_lambda_.6} parent=11 // pred_region
        _
      $region36: #{_lambda_.6} parent=11 // pred_fallthru
        _
      // Predicated region
      $region37: #{_lambda_.6} parent=11 // pred_check
        %p367 = pneg %p285
      $region38: #{_lambda_.6} parent=11 // pred_check_branch
        %369 = sbr.rel (%p367) target = $region40
      $region39: #{_lambda_.6} parent=11 // pred_region
        _
      $region40: #{_lambda_.6} parent=11 // pred_fallthru
        _
      // Predicated region
      $region41: #{_lambda_.6} parent=11 // pred_check
        %p370 = pneg %p306
      $region42: #{_lambda_.6} parent=11 // pred_check_branch
        %372 = sbr.rel (%p370) target = $region44
      $region43: #{_lambda_.6} parent=11 // pred_region
        _
      $region44: #{_lambda_.6} parent=11 // pred_fallthru
        _
    $region12: #{_lambda_.6} parent=5 // pred_fallthru
      _
    %p373 = scmp.lt.s32.totalorder %s18, 2
    // Predicated region
    $region45: #{_lambda_.6} parent=5 // pred_check
      %p374 = pneg %p373
    $region46: #{_lambda_.6} parent=5 // pred_check_branch
      %376 = sbr.rel (%p374) target = $region48
    $region47: #{_lambda_.6} parent=5 // pred_region
      // Predicated region
      $region49: #{_lambda_.6} parent=47 // pred_check
        %p377 = pneg %p52
      $region50: #{_lambda_.6} parent=47 // pred_check_branch
        %379 = sbr.rel (%p377) target = $region52
      $region51: #{_lambda_.6} parent=47 // pred_region
        %s380 = smul.u32 8, %s26
        %p381 = scmp.lt.s32.totalorder %s25, 1
        %s382 = scalar_select %p381, %s25, 1
        %p383 = scmp.lt.s32.totalorder %s380, 7
        %s384 = scalar_select %p383, %s380, 7
        %s385 = smul.addr %s382, 8
        %s386 = sadd.s32 %s384, %s385
        %s387 = smul.addr %s386, 8
        %s388 = scalar_lea.vmem %s0, %s387
        %s389 = smul.u32 8, %s26
      $region52: #{_lambda_.6} parent=47 // pred_fallthru
        _
      // Predicated region
      $region53: #{_lambda_.6} parent=47 // pred_check
        %p390 = pneg %p80
      $region54: #{_lambda_.6} parent=47 // pred_check_branch
        %392 = sbr.rel (%p390) target = $region56
      $region55: #{_lambda_.6} parent=47 // pred_region
        %s393 = smul.u32 8, %s26
        %p394 = scmp.lt.s32.totalorder %s25, 1
        %s395 = scalar_select %p394, %s25, 1
        %p396 = scmp.lt.s32.totalorder %s393, 7
        %s397 = scalar_select %p396, %s393, 7
        %s398 = smul.addr %s395, 8
        %s399 = sadd.s32 %s397, %s398
        %s400 = smul.addr %s399, 4
        %s401 = scalar_lea.vmem %s1, %s400
        %s402 = smul.u32 8, %s26
      $region56: #{_lambda_.6} parent=47 // pred_fallthru
        _
      // Predicated region
      $region57: #{_lambda_.6} parent=47 // pred_check
        %p403 = pneg %p106
      $region58: #{_lambda_.6} parent=47 // pred_check_branch
        %405 = sbr.rel (%p403) target = $region60
      $region59: #{_lambda_.6} parent=47 // pred_region
        %p406 = scmp.lt.s32.totalorder %s25, 1
        %s407 = scalar_select %p406, %s25, 1
        %s408 = scalar_lea.vmem %s2, %s407
      $region60: #{_lambda_.6} parent=47 // pred_fallthru
        _
      // Predicated region
      $region61: #{_lambda_.6} parent=47 // pred_check
        %p409 = pneg %p132
      $region62: #{_lambda_.6} parent=47 // pred_check_branch
        %411 = sbr.rel (%p409) target = $region64
      $region63: #{_lambda_.6} parent=47 // pred_region
        %p412 = scmp.lt.s32.totalorder %s25, 1
        %s413 = scalar_select %p412, %s25, 1
        %s414 = smul.addr %s413, 2
        %s415 = smul.addr %s414, 8
        %s416 = scalar_lea.vmem %s3, %s415
      $region64: #{_lambda_.6} parent=47 // pred_fallthru
        _
    $region48: #{_lambda_.6} parent=5 // pred_fallthru
      _
    %p417 = scmp.le.s32.totalorder 1, %s18
    %p418 = scmp.lt.s32.totalorder %s18, 3
    %p419 = pnand %p417, %p418
    %p420 = pneg %p419
    // Predicated region
    $region65: #{_lambda_.6} parent=5 // pred_check
      _
    $region66: #{_lambda_.6} parent=5 // pred_check_branch
      %422 = sbr.rel (%p419) target = $region68
    $region67: #{_lambda_.6} parent=5 // pred_region
      %s423 = ssub.s32 %s18, 1
      %s424 = smul.u32 8, %s28
      %p425 = scmp.lt.s32.totalorder %s27, 1
      %s426 = scalar_select %p425, %s27, 1
      %p427 = scmp.lt.s32.totalorder %s424, 7
      %s428 = scalar_select %p427, %s424, 7
      %s429 = smul.addr %s426, 8
      %s430 = sadd.s32 %s428, %s429
      %s431 = smul.addr %s430, 8
      %s432 = scalar_lea.vmem %s0, %s431
      %p433 = pneg %p58
      %p434 = pneg %p55
      %s435 = smul.u32 8, %s28
      %p436 = scmp.lt.s32.totalorder %s27, 1
      %s437 = scalar_select %p436, %s27, 1
      %p438 = scmp.lt.s32.totalorder %s435, 7
      %s439 = scalar_select %p438, %s435, 7
      %s440 = smul.addr %s437, 8
      %s441 = sadd.s32 %s439, %s440
      %s442 = smul.addr %s441, 4
      %s443 = scalar_lea.vmem %s1, %s442
      %p444 = pneg %p86
      %p445 = pneg %p83
      %p446 = scmp.lt.s32.totalorder %s27, 1
      %s447 = scalar_select %p446, %s27, 1
      %s448 = scalar_lea.vmem %s2, %s447
      %p449 = pneg %p112
      %p450 = pneg %p109
      %p451 = scmp.lt.s32.totalorder %s27, 1
      %s452 = scalar_select %p451, %s27, 1
      %s453 = smul.addr %s452, 2
      %s454 = smul.addr %s453, 8
      %s455 = scalar_lea.vmem %s3, %s454
      %p456 = pneg %p138
      %p457 = pneg %p135
      %p458 = pneg %p159
      %p459 = pneg %p156
      %p460 = pneg %p180
      %p461 = pneg %p177
      %p462 = pneg %p201
      %p463 = pneg %p198
      %p464 = pneg %p222
      %p465 = pneg %p219
      %p466 = pneg %p243
      %p467 = pneg %p240
      %p468 = pneg %p264
      %p469 = pneg %p261
      %p470 = pneg %p285
      %p471 = pneg %p282
      %p472 = pneg %p306
      %p473 = pneg %p303
      %p474 = pneg %p334
      %p475 = pneg %p331
      %p476 = scmp.lt.s32.totalorder %s27, 1
      %s477 = scalar_select %p476, %s27, 1
      %p478 = scmp.lt.s32.totalorder %s28, 0
      %s479 = scalar_select %p478, %s28, 0
      %s480 = smul.addr %s477, 4
      %s481 = sadd.s32 %s479, %s480
      %s482 = smul.addr %s481, 4
      %s483 = scalar_lea.vmem %s12, %s482
      %s484 = smul.u32 8, %s28
      %p485 = scmp.lt.s32.totalorder %s27, 1
      %s486 = scalar_select %p485, %s27, 1
      %p487 = scmp.lt.s32.totalorder %s484, 7
      %s488 = scalar_select %p487, %s484, 7
      %s489 = smul.addr %s486, 8
      %s490 = sadd.s32 %s488, %s489
      %s491 = smul.addr %s490, 8
      %s492 = scalar_lea.vmem %s0, %s491
      %s493 = smul.u32 8, %s28
      %s494 = smul.u32 8, %s28
      %p495 = scmp.lt.s32.totalorder %s27, 1
      %s496 = scalar_select %p495, %s27, 1
      %p497 = scmp.lt.s32.totalorder %s494, 7
      %s498 = scalar_select %p497, %s494, 7
      %s499 = smul.addr %s496, 8
      %s500 = sadd.s32 %s498, %s499
      %s501 = smul.addr %s500, 4
      %s502 = scalar_lea.vmem %s1, %s501
      %s503 = smul.u32 8, %s28
      %p504 = scmp.lt.s32.totalorder %s27, 1
      %s505 = scalar_select %p504, %s27, 1
      %s506 = scalar_lea.vmem %s2, %s505
      %p507 = scmp.lt.s32.totalorder %s27, 1
      %s508 = scalar_select %p507, %s27, 1
      %s509 = smul.addr %s508, 2
      %s510 = smul.addr %s509, 8
      %s511 = scalar_lea.vmem %s3, %s510
      %p512 = scmp.lt.s32.totalorder %s27, 1
      %s513 = scalar_select %p512, %s27, 1
      %p514 = scmp.lt.s32.totalorder %s28, 0
      %s515 = scalar_select %p514, %s28, 0
      %s516 = smul.addr %s513, 4
      %s517 = sadd.s32 %s515, %s516
      %s518 = smul.addr %s517, 4
      %s519 = scalar_lea.vmem %s12, %s518
      %v521 = vld [vmem:[%s492] sm:$0xff]
      %v522 = vld [vmem:[%s492 + $0x8] sm:$0xff]
      %v523 = vld [vmem:[%s492 + $0x10] sm:$0xff]
      %v524 = vld [vmem:[%s492 + $0x18] sm:$0xff]
      %v525 = vld [vmem:[%s492 + $0x20] sm:$0xff]
      %v526 = vld [vmem:[%s492 + $0x28] sm:$0xff]
      %v527 = vld [vmem:[%s492 + $0x30] sm:$0xff]
      %v528 = vld [vmem:[%s492 + $0x38] sm:$0xff]
      %v529 = vld [vmem:[%s502] sm:$0xf]
      %v530 = vld [vmem:[%s502 + $0x4] sm:$0xf]
      %v531 = vld [vmem:[%s502 + $0x8] sm:$0xf]
      %v532 = vld [vmem:[%s502 + $0xc] sm:$0xf]
      %v533 = vld [vmem:[%s502 + $0x10] sm:$0xf]
      %v534 = vld [vmem:[%s502 + $0x14] sm:$0xf]
      %v535 = vld [vmem:[%s502 + $0x18] sm:$0xf]
      %v536 = vld [vmem:[%s502 + $0x1c] sm:$0xf]
      %v537 = vunpack.c.l.bf16 %v529
      %v538 = vunpack.c.l.bf16 %v530
      %v539 = vunpack.c.l.bf16 %v531
      %v540 = vunpack.c.l.bf16 %v532
      %v541 = vunpack.c.l.bf16 %v533
      %v542 = vunpack.c.l.bf16 %v534
      %v543 = vunpack.c.l.bf16 %v535
      %v544 = vunpack.c.l.bf16 %v536
      %v545 = vld [vmem:[%s506] sm:$0x1]
      %v546 = vld [vmem:[%s511] sm:$0xff]
      %v547 = vld [vmem:[%s511 + $0x8] sm:$0xff]
      %v549 = vlaneseq
      %v550 = vshrl.u32 %v549, 7
      %v551 = vsub.s32 0, %v550
      %v552 = vrot.slane %v545, %v551
      %v554 = vmul.f32 %v521, %v552
      %v555 = vmul.f32 %v522, %v552
      %v556 = vmul.f32 %v523, %v552
      %v557 = vmul.f32 %v524, %v552
      %v558 = vmul.f32 %v525, %v552
      %v559 = vmul.f32 %v526, %v552
      %v560 = vmul.f32 %v527, %v552
      %v561 = vmul.f32 %v528, %v552
      %vm562 = vcmask 130048
      %v563 = vsel %vm562, %v554, 0.0
      %564 = vadd.xlane.f32.xlu0 %v563
      %v565 = vpop.xlane.xlu0 %564
      %v566 = vsel %vm562, %v555, 0.0
      %567 = vadd.xlane.f32.xlu0 %v566
      %v568 = vpop.xlane.xlu0 %567
      %v569 = vsel %vm562, %v556, 0.0
      %570 = vadd.xlane.f32.xlu0 %v569
      %v571 = vpop.xlane.xlu0 %570
      %v572 = vsel %vm562, %v557, 0.0
      %573 = vadd.xlane.f32.xlu0 %v572
      %v574 = vpop.xlane.xlu0 %573
      %v575 = vsel %vm562, %v558, 0.0
      %576 = vadd.xlane.f32.xlu0 %v575
      %v577 = vpop.xlane.xlu0 %576
      %v578 = vsel %vm562, %v559, 0.0
      %579 = vadd.xlane.f32.xlu0 %v578
      %v580 = vpop.xlane.xlu0 %579
      %v581 = vsel %vm562, %v560, 0.0
      %582 = vadd.xlane.f32.xlu0 %v581
      %v583 = vpop.xlane.xlu0 %582
      %v584 = vsel %vm562, %v561, 0.0
      %585 = vadd.xlane.f32.xlu0 %v584
      %v586 = vpop.xlane.xlu0 %585
      %v587 = vpack.c.bf16 %v522, %v521
      %v588 = vpack.c.bf16 %v524, %v523
      %v589 = vpack.c.bf16 %v526, %v525
      %v590 = vpack.c.bf16 %v528, %v527
      %v591 = vpack.c.bf16 %v547, %v546
      %v593 = vsel %vm562, %v587, 0
      %v596 = vsel %vm562, %v588, 0
      %v599 = vsel %vm562, %v589, 0
      %v602 = vsel %vm562, %v590, 0
      %604 = vmatprep.subr.bf16.mxu0 0
      %605 = vmatpush1.bf16.msra.mxu0 %v591
      %606 = vmatprep.subr.bf16.mxu0 0
      %607 = vmatpush1.bf16.msra.mxu0 0
      %608 = vmatprep.subr.bf16.mxu0 0
      %609 = vmatpush1.bf16.msra.mxu0 0
      %610 = vmatprep.subr.bf16.mxu0 0
      %611 = vmatpush1.bf16.msra.mxu0 0
      %612 = vmatprep.subr.bf16.mxu0 0
      %613 = vmatpush1.bf16.msra.mxu0 0
      %614 = vmatprep.subr.bf16.mxu0 0
      %615 = vmatpush1.bf16.msra.mxu0 0
      %616 = vmatprep.subr.bf16.mxu0 0
      %617 = vmatpush1.bf16.msra.mxu0 0
      %618 = vmatprep.subr.bf16.mxu0 0
      %619 = vmatpush1.bf16.msra.mxu0 0
      %620 = vmatprep.subr.bf16.mxu0 0
      %621 = vmatpush1.bf16.msra.mxu0 0
      %622 = vmatprep.subr.bf16.mxu0 0
      %623 = vmatpush1.bf16.msra.mxu0 0
      %624 = vmatprep.subr.bf16.mxu0 0
      %625 = vmatpush1.bf16.msra.mxu0 0
      %626 = vmatprep.subr.bf16.mxu0 0
      %627 = vmatpush1.bf16.msra.mxu0 0
      %628 = vmatprep.subr.bf16.mxu0 0
      %629 = vmatpush1.bf16.msra.mxu0 0
      %630 = vmatprep.subr.bf16.mxu0 0
      %631 = vmatpush1.bf16.msra.mxu0 0
      %632 = vmatprep.subr.bf16.mxu0 0
      %633 = vmatpush1.bf16.msra.mxu0 0
      %634 = vmatprep.subr.bf16.mxu0 0
      %635 = vmatpush1.bf16.msra.mxu0 0
      %636 = vmatprep.mubr.bf16.mxu0 0
      %637 = vmatmul.mubr.bf16.gmra.mrb[0].mxu0 %v593
      %v638 = vpop.f32.mrb[0].mxu0
      %v639 = vadd.f32 0.0, %v638
      %v640 = vpop.f32.mrb[0].mxu0
      %v641 = vpop.f32.mrb[0].mxu0
      %v642 = vadd.f32 0.0, %v641
      %v643 = vpop.f32.mrb[0].mxu0
      %644 = vmatprep.mubr.bf16.mxu0 0
      %645 = vmatmul.mubr.bf16.gmra.mrb[0].mxu0 %v596
      %v646 = vpop.f32.mrb[0].mxu0
      %v647 = vadd.f32 0.0, %v646
      %v648 = vpop.f32.mrb[0].mxu0
      %v649 = vpop.f32.mrb[0].mxu0
      %v650 = vadd.f32 0.0, %v649
      %v651 = vpop.f32.mrb[0].mxu0
      %652 = vmatprep.mubr.bf16.mxu0 0
      %653 = vmatmul.mubr.bf16.gmra.mrb[0].mxu0 %v599
      %v654 = vpop.f32.mrb[0].mxu0
      %v655 = vadd.f32 0.0, %v654
      %v656 = vpop.f32.mrb[0].mxu0
      %v657 = vpop.f32.mrb[0].mxu0
      %v658 = vadd.f32 0.0, %v657
      %v659 = vpop.f32.mrb[0].mxu0
      %660 = vmatprep.mubr.bf16.mxu0 0
      %661 = vmatmul.mubr.bf16.gmra.mrb[0].mxu0 %v602
      %v662 = vpop.f32.mrb[0].mxu0
      %v663 = vadd.f32 0.0, %v662
      %v664 = vpop.f32.mrb[0].mxu0
      %v665 = vpop.f32.mrb[0].mxu0
      %v666 = vadd.f32 0.0, %v665
      %v667 = vpop.f32.mrb[0].mxu0
      %668 = vdwg.mxu0
      %v669 = vadd.f32 %v565, 1e-08
      %v670 = vadd.f32 %v568, 1e-08
      %v671 = vadd.f32 %v571, 1e-08
      %v672 = vadd.f32 %v574, 1e-08
      %v673 = vadd.f32 %v577, 1e-08
      %v674 = vadd.f32 %v580, 1e-08
      %v675 = vadd.f32 %v583, 1e-08
      %v676 = vadd.f32 %v586, 1e-08
      %v677 = vrcp.pop %v669
      %v678 = vrcp.pop %v670
      %v679 = vrcp.pop %v671
      %v680 = vrcp.pop %v672
      %v681 = vrcp.pop %v673
      %v682 = vrcp.pop %v674
      %v683 = vrcp.pop %v675
      %v684 = vrcp.pop %v676
      %v685 = vmul.f32 %v639, %v677
      %v686 = vmul.f32 %v642, %v678
      %v687 = vmul.f32 %v647, %v679
      %v688 = vmul.f32 %v650, %v680
      %v689 = vmul.f32 %v655, %v681
      %v690 = vmul.f32 %v658, %v682
      %v691 = vmul.f32 %v663, %v683
      %v692 = vmul.f32 %v666, %v684
      %v693 = vpack.c.bf16 %v686, %v685
      %v694 = vpack.c.bf16 %v688, %v687
      %v695 = vpack.c.bf16 %v690, %v689
      %v696 = vpack.c.bf16 %v692, %v691
      %v697 = vld [vmem:[%s4] sm:$0xf]
      %v698 = vld [vmem:[%s4 + $0x4] sm:$0xf]
      %v699 = vld [vmem:[%s4 + $0x8] sm:$0xf]
      %v700 = vld [vmem:[%s4 + $0xc] sm:$0xf]
      %v705 = vunpack.c.l.b16 %v697
      %v706 = vunpack.c.l.b16 %v698
      %v707 = vunpack.c.l.b16 %v699
      %v708 = vunpack.c.l.b16 %v700
      %v709 = vpack.c.b16 %v706, %v705
      %v710 = vpack.c.b16 %v708, %v707
      %vm713 = vcmask 261120
      %v715 = vsel %vm713, %v693, 0
      %v718 = vsel %vm713, %v694, 0
      %v721 = vsel %vm713, %v695, 0
      %v724 = vsel %vm713, %v696, 0
      %726 = vmatprep.subr.bf16.mxu0 0
      %727 = vmatpush1.bf16.msra.mxu0 %v709
      %728 = vmatprep.subr.bf16.mxu0 0
      %729 = vmatpush1.bf16.msra.mxu0 %v710
      %730 = vmatprep.subr.bf16.mxu0 0
      %731 = vmatpush1.bf16.msra.mxu0 0
      %732 = vmatprep.subr.bf16.mxu0 0
      %733 = vmatpush1.bf16.msra.mxu0 0
      %734 = vmatprep.subr.bf16.mxu0 0
      %735 = vmatpush1.bf16.msra.mxu0 0
      %736 = vmatprep.subr.bf16.mxu0 0
      %737 = vmatpush1.bf16.msra.mxu0 0
      %738 = vmatprep.subr.bf16.mxu0 0
      %739 = vmatpush1.bf16.msra.mxu0 0
      %740 = vmatprep.subr.bf16.mxu0 0
      %741 = vmatpush1.bf16.msra.mxu0 0
      %742 = vmatprep.subr.bf16.mxu0 0
      %743 = vmatpush1.bf16.msra.mxu0 0
      %744 = vmatprep.subr.bf16.mxu0 0
      %745 = vmatpush1.bf16.msra.mxu0 0
      %746 = vmatprep.subr.bf16.mxu0 0
      %747 = vmatpush1.bf16.msra.mxu0 0
      %748 = vmatprep.subr.bf16.mxu0 0
      %749 = vmatpush1.bf16.msra.mxu0 0
      %750 = vmatprep.subr.bf16.mxu0 0
      %751 = vmatpush1.bf16.msra.mxu0 0
      %752 = vmatprep.subr.bf16.mxu0 0
      %753 = vmatpush1.bf16.msra.mxu0 0
      %754 = vmatprep.subr.bf16.mxu0 0
      %755 = vmatpush1.bf16.msra.mxu0 0
      %756 = vmatprep.subr.bf16.mxu0 0
      %757 = vmatpush1.bf16.msra.mxu0 0
      %758 = vmatprep.mubr.bf16.mxu0 0
      %759 = vmatmul.mubr.bf16.gmra.mrb[0].mxu0 %v715
      %v760 = vpop.f32.mrb[0].mxu0
      %v761 = vadd.f32 0.0, %v760
      %v762 = vpop.f32.mrb[0].mxu0
      %v763 = vpop.f32.mrb[0].mxu0
      %v764 = vadd.f32 0.0, %v763
      %v765 = vpop.f32.mrb[0].mxu0
      %766 = vmatprep.mubr.bf16.mxu0 0
      %767 = vmatmul.mubr.bf16.gmra.mrb[0].mxu0 %v718
      %v768 = vpop.f32.mrb[0].mxu0
      %v769 = vadd.f32 0.0, %v768
      %v770 = vpop.f32.mrb[0].mxu0
      %v771 = vpop.f32.mrb[0].mxu0
      %v772 = vadd.f32 0.0, %v771
      %v773 = vpop.f32.mrb[0].mxu0
      %774 = vmatprep.mubr.bf16.mxu0 0
      %775 = vmatmul.mubr.bf16.gmra.mrb[0].mxu0 %v721
      %v776 = vpop.f32.mrb[0].mxu0
      %v777 = vadd.f32 0.0, %v776
      %v778 = vpop.f32.mrb[0].mxu0
      %v779 = vpop.f32.mrb[0].mxu0
      %v780 = vadd.f32 0.0, %v779
      %v781 = vpop.f32.mrb[0].mxu0
      %782 = vmatprep.mubr.bf16.mxu0 0
      %783 = vmatmul.mubr.bf16.gmra.mrb[0].mxu0 %v724
      %v784 = vpop.f32.mrb[0].mxu0
      %v785 = vadd.f32 0.0, %v784
      %v786 = vpop.f32.mrb[0].mxu0
      %v787 = vpop.f32.mrb[0].mxu0
      %v788 = vadd.f32 0.0, %v787
      %v789 = vpop.f32.mrb[0].mxu0
      %790 = vdwg.mxu0
      %v791 = vadd.f32 %v537, %v761
      %v792 = vadd.f32 %v538, %v764
      %v793 = vadd.f32 %v539, %v769
      %v794 = vadd.f32 %v540, %v772
      %v795 = vadd.f32 %v541, %v777
      %v796 = vadd.f32 %v542, %v780
      %v797 = vadd.f32 %v543, %v785
      %v798 = vadd.f32 %v544, %v788
      %v799 = vld [vmem:[%s5] sm:$0x1]
      %v801 = vlaneseq
      %v802 = vshrl.u32 %v801, 7
      %v803 = vsub.s32 0, %v802
      %v804 = vrot.slane %v799, %v803
      %v806 = vadd.f32 %v791, %v804
      %v807 = vadd.f32 %v792, %v804
      %v808 = vadd.f32 %v793, %v804
      %v809 = vadd.f32 %v794, %v804
      %v810 = vadd.f32 %v795, %v804
      %v811 = vadd.f32 %v796, %v804
      %v812 = vadd.f32 %v797, %v804
      %v813 = vadd.f32 %v798, %v804
      %v814 = vld [vmem:[%s6] sm:$0x1]
      %v815 = vld [vmem:[%s7] sm:$0x1]
      %v816 = vsel %vm713, %v806, 0.0
      %817 = vadd.xlane.f32.xlu0 %v816
      %v818 = vpop.xlane.xlu0 %817
      %v819 = vsel %vm713, %v807, 0.0
      %820 = vadd.xlane.f32.xlu0 %v819
      %v821 = vpop.xlane.xlu0 %820
      %v822 = vsel %vm713, %v808, 0.0
      %823 = vadd.xlane.f32.xlu0 %v822
      %v824 = vpop.xlane.xlu0 %823
      %v825 = vsel %vm713, %v809, 0.0
      %826 = vadd.xlane.f32.xlu0 %v825
      %v827 = vpop.xlane.xlu0 %826
      %v828 = vsel %vm713, %v810, 0.0
      %829 = vadd.xlane.f32.xlu0 %v828
      %v830 = vpop.xlane.xlu0 %829
      %v831 = vsel %vm713, %v811, 0.0
      %832 = vadd.xlane.f32.xlu0 %v831
      %v833 = vpop.xlane.xlu0 %832
      %v834 = vsel %vm713, %v812, 0.0
      %835 = vadd.xlane.f32.xlu0 %v834
      %v836 = vpop.xlane.xlu0 %835
      %v837 = vsel %vm713, %v813, 0.0
      %838 = vadd.xlane.f32.xlu0 %v837
      %v839 = vpop.xlane.xlu0 %838
      %v840 = vrcp.pop 32.0
      %v841 = vmul.f32 %v818, %v840
      %v842 = vmul.f32 %v821, %v840
      %v843 = vmul.f32 %v824, %v840
      %v844 = vmul.f32 %v827, %v840
      %v845 = vmul.f32 %v830, %v840
      %v846 = vmul.f32 %v833, %v840
      %v847 = vmul.f32 %v836, %v840
      %v848 = vmul.f32 %v839, %v840
      %v849 = vsub.f32 %v806, %v841
      %v850 = vsub.f32 %v807, %v842
      %v851 = vsub.f32 %v808, %v843
      %v852 = vsub.f32 %v809, %v844
      %v853 = vsub.f32 %v810, %v845
      %v854 = vsub.f32 %v811, %v846
      %v855 = vsub.f32 %v812, %v847
      %v856 = vsub.f32 %v813, %v848
      %v857 = vmul.f32 %v849, %v849
      %v858 = vmul.f32 %v850, %v850
      %v859 = vmul.f32 %v851, %v851
      %v860 = vmul.f32 %v852, %v852
      %v861 = vmul.f32 %v853, %v853
      %v862 = vmul.f32 %v854, %v854
      %v863 = vmul.f32 %v855, %v855
      %v864 = vmul.f32 %v856, %v856
      %v865 = vsel %vm713, %v857, 0.0
      %866 = vadd.xlane.f32.xlu0 %v865
      %v867 = vpop.xlane.xlu0 %866
      %v868 = vsel %vm713, %v858, 0.0
      %869 = vadd.xlane.f32.xlu0 %v868
      %v870 = vpop.xlane.xlu0 %869
      %v871 = vsel %vm713, %v859, 0.0
      %872 = vadd.xlane.f32.xlu0 %v871
      %v873 = vpop.xlane.xlu0 %872
      %v874 = vsel %vm713, %v860, 0.0
      %875 = vadd.xlane.f32.xlu0 %v874
      %v876 = vpop.xlane.xlu0 %875
      %v877 = vsel %vm713, %v861, 0.0
      %878 = vadd.xlane.f32.xlu0 %v877
      %v879 = vpop.xlane.xlu0 %878
      %v880 = vsel %vm713, %v862, 0.0
      %881 = vadd.xlane.f32.xlu0 %v880
      %v882 = vpop.xlane.xlu0 %881
      %v883 = vsel %vm713, %v863, 0.0
      %884 = vadd.xlane.f32.xlu0 %v883
      %v885 = vpop.xlane.xlu0 %884
      %v886 = vsel %vm713, %v864, 0.0
      %887 = vadd.xlane.f32.xlu0 %v886
      %v888 = vpop.xlane.xlu0 %887
      %v889 = vmul.f32 %v867, %v840
      %v890 = vmul.f32 %v870, %v840
      %v891 = vmul.f32 %v873, %v840
      %v892 = vmul.f32 %v876, %v840
      %v893 = vmul.f32 %v879, %v840
      %v894 = vmul.f32 %v882, %v840
      %v895 = vmul.f32 %v885, %v840
      %v896 = vmul.f32 %v888, %v840
      %v897 = vadd.f32 %v889, 1e-05
      %v898 = vadd.f32 %v890, 1e-05
      %v899 = vadd.f32 %v891, 1e-05
      %v900 = vadd.f32 %v892, 1e-05
      %v901 = vadd.f32 %v893, 1e-05
      %v902 = vadd.f32 %v894, 1e-05
      %v903 = vadd.f32 %v895, 1e-05
      %v904 = vadd.f32 %v896, 1e-05
      %v905 = vrsqrt.pop %v897
      %v906 = vrsqrt.pop %v898
      %v907 = vrsqrt.pop %v899
      %v908 = vrsqrt.pop %v900
      %v909 = vrsqrt.pop %v901
      %v910 = vrsqrt.pop %v902
      %v911 = vrsqrt.pop %v903
      %v912 = vrsqrt.pop %v904
      %v913 = vmul.f32 %v849, %v905
      %v914 = vmul.f32 %v850, %v906
      %v915 = vmul.f32 %v851, %v907
      %v916 = vmul.f32 %v852, %v908
      %v917 = vmul.f32 %v853, %v909
      %v918 = vmul.f32 %v854, %v910
      %v919 = vmul.f32 %v855, %v911
      %v920 = vmul.f32 %v856, %v912
      %v922 = vlaneseq
      %v923 = vshrl.u32 %v922, 7
      %v924 = vsub.s32 0, %v923
      %v925 = vrot.slane %v814, %v924
      %v927 = vmul.f32 %v913, %v925
      %v928 = vmul.f32 %v914, %v925
      %v929 = vmul.f32 %v915, %v925
      %v930 = vmul.f32 %v916, %v925
      %v931 = vmul.f32 %v917, %v925
      %v932 = vmul.f32 %v918, %v925
      %v933 = vmul.f32 %v919, %v925
      %v934 = vmul.f32 %v920, %v925
      %v936 = vlaneseq
      %v937 = vshrl.u32 %v936, 7
      %v938 = vsub.s32 0, %v937
      %v939 = vrot.slane %v815, %v938
      %v941 = vadd.f32 %v927, %v939
      %v942 = vadd.f32 %v928, %v939
      %v943 = vadd.f32 %v929, %v939
      %v944 = vadd.f32 %v930, %v939
      %v945 = vadd.f32 %v931, %v939
      %v946 = vadd.f32 %v932, %v939
      %v947 = vadd.f32 %v933, %v939
      %v948 = vadd.f32 %v934, %v939
      %v949 = vpack.c.bf16 %v942, %v941
      %v950 = vpack.c.bf16 %v944, %v943
      %v951 = vpack.c.bf16 %v946, %v945
      %v952 = vpack.c.bf16 %v948, %v947
      %v953 = vld [vmem:[%s8] sm:$0xf]
      %v954 = vld [vmem:[%s8 + $0x4] sm:$0xf]
      %v955 = vld [vmem:[%s8 + $0x8] sm:$0xf]
      %v956 = vld [vmem:[%s8 + $0xc] sm:$0xf]
      %v957 = vld [vmem:[%s9] sm:$0x1]
      %v959 = vlaneseq
      %v960 = vshrl.u32 %v959, 7
      %v961 = vsub.s32 0, %v960
      %v962 = vrot.slane %v957, %v961
      %v968 = vunpack.c.l.b16 %v953
      %v969 = vunpack.c.l.b16 %v954
      %v970 = vunpack.c.l.b16 %v955
      %v971 = vunpack.c.l.b16 %v956
      %v972 = vpack.c.b16 %v969, %v968
      %v973 = vpack.c.b16 %v971, %v970
      %v977 = vsel %vm713, %v949, 0
      %v980 = vsel %vm713, %v950, 0
      %v983 = vsel %vm713, %v951, 0
      %v986 = vsel %vm713, %v952, 0
      %988 = vmatprep.subr.bf16.mxu0 0
      %989 = vmatpush1.bf16.msra.mxu0 %v972
      %990 = vmatprep.subr.bf16.mxu0 0
      %991 = vmatpush1.bf16.msra.mxu0 %v973
      %992 = vmatprep.subr.bf16.mxu0 0
      %993 = vmatpush1.bf16.msra.mxu0 0
      %994 = vmatprep.subr.bf16.mxu0 0
      %995 = vmatpush1.bf16.msra.mxu0 0
      %996 = vmatprep.subr.bf16.mxu0 0
      %997 = vmatpush1.bf16.msra.mxu0 0
      %998 = vmatprep.subr.bf16.mxu0 0
      %999 = vmatpush1.bf16.msra.mxu0 0
      %1000 = vmatprep.subr.bf16.mxu0 0
      %1001 = vmatpush1.bf16.msra.mxu0 0
      %1002 = vmatprep.subr.bf16.mxu0 0
      %1003 = vmatpush1.bf16.msra.mxu0 0
      %1004 = vmatprep.subr.bf16.mxu0 0
      %1005 = vmatpush1.bf16.msra.mxu0 0
      %1006 = vmatprep.subr.bf16.mxu0 0
      %1007 = vmatpush1.bf16.msra.mxu0 0
      %1008 = vmatprep.subr.bf16.mxu0 0
      %1009 = vmatpush1.bf16.msra.mxu0 0
      %1010 = vmatprep.subr.bf16.mxu0 0
      %1011 = vmatpush1.bf16.msra.mxu0 0
      %1012 = vmatprep.subr.bf16.mxu0 0
      %1013 = vmatpush1.bf16.msra.mxu0 0
      %1014 = vmatprep.subr.bf16.mxu0 0
      %1015 = vmatpush1.bf16.msra.mxu0 0
      %1016 = vmatprep.subr.bf16.mxu0 0
      %1017 = vmatpush1.bf16.msra.mxu0 0
      %1018 = vmatprep.subr.bf16.mxu0 0
      %1019 = vmatpush1.bf16.msra.mxu0 0
      %1020 = vmatprep.mubr.bf16.mxu0 0
      %1021 = vmatmul.mubr.bf16.gmra.mrb[0].mxu0 %v977
      %v1022 = vpop.f32.mrb[0].mxu0
      %v1023 = vadd.f32 %v962, %v1022
      %v1024 = vpop.f32.mrb[0].mxu0
      %v1025 = vpop.f32.mrb[0].mxu0
      %v1026 = vadd.f32 %v962, %v1025
      %v1027 = vpop.f32.mrb[0].mxu0
      %1028 = vmatprep.mubr.bf16.mxu0 0
      %1029 = vmatmul.mubr.bf16.gmra.mrb[0].mxu0 %v980
      %v1030 = vpop.f32.mrb[0].mxu0
      %v1031 = vadd.f32 %v962, %v1030
      %v1032 = vpop.f32.mrb[0].mxu0
      %v1033 = vpop.f32.mrb[0].mxu0
      %v1034 = vadd.f32 %v962, %v1033
      %v1035 = vpop.f32.mrb[0].mxu0
      %1036 = vmatprep.mubr.bf16.mxu0 0
      %1037 = vmatmul.mubr.bf16.gmra.mrb[0].mxu0 %v983
      %v1038 = vpop.f32.mrb[0].mxu0
      %v1039 = vadd.f32 %v962, %v1038
      %v1040 = vpop.f32.mrb[0].mxu0
      %v1041 = vpop.f32.mrb[0].mxu0
      %v1042 = vadd.f32 %v962, %v1041
      %v1043 = vpop.f32.mrb[0].mxu0
      %1044 = vmatprep.mubr.bf16.mxu0 0
      %1045 = vmatmul.mubr.bf16.gmra.mrb[0].mxu0 %v986
      %v1046 = vpop.f32.mrb[0].mxu0
      %v1047 = vadd.f32 %v962, %v1046
      %v1048 = vpop.f32.mrb[0].mxu0
      %v1049 = vpop.f32.mrb[0].mxu0
      %v1050 = vadd.f32 %v962, %v1049
      %v1051 = vpop.f32.mrb[0].mxu0
      %1052 = vdwg.mxu0
      %v1053 = vmul.f32 %v1023, %v1023
      %v1054 = vmul.f32 %v1026, %v1026
      %v1055 = vmul.f32 %v1031, %v1031
      %v1056 = vmul.f32 %v1034, %v1034
      %v1057 = vmul.f32 %v1039, %v1039
      %v1058 = vmul.f32 %v1042, %v1042
      %v1059 = vmul.f32 %v1047, %v1047
      %v1060 = vmul.f32 %v1050, %v1050
      %v1061 = vmul.f32 %v1023, %v1053
      %v1062 = vmul.f32 %v1026, %v1054
      %v1063 = vmul.f32 %v1031, %v1055
      %v1064 = vmul.f32 %v1034, %v1056
      %v1065 = vmul.f32 %v1039, %v1057
      %v1066 = vmul.f32 %v1042, %v1058
      %v1067 = vmul.f32 %v1047, %v1059
      %v1068 = vmul.f32 %v1050, %v1060
      %v1069 = vmul.f32 %v1061, 0.044715
      %v1070 = vmul.f32 %v1062, 0.044715
      %v1071 = vmul.f32 %v1063, 0.044715
      %v1072 = vmul.f32 %v1064, 0.044715
      %v1073 = vmul.f32 %v1065, 0.044715
      %v1074 = vmul.f32 %v1066, 0.044715
      %v1075 = vmul.f32 %v1067, 0.044715
      %v1076 = vmul.f32 %v1068, 0.044715
      %v1077 = vadd.f32 %v1023, %v1069
      %v1078 = vadd.f32 %v1026, %v1070
      %v1079 = vadd.f32 %v1031, %v1071
      %v1080 = vadd.f32 %v1034, %v1072
      %v1081 = vadd.f32 %v1039, %v1073
      %v1082 = vadd.f32 %v1042, %v1074
      %v1083 = vadd.f32 %v1047, %v1075
      %v1084 = vadd.f32 %v1050, %v1076
      %v1085 = vmul.f32 %v1077, 0.7978846
      %v1086 = vmul.f32 %v1078, 0.7978846
      %v1087 = vmul.f32 %v1079, 0.7978846
      %v1088 = vmul.f32 %v1080, 0.7978846
      %v1089 = vmul.f32 %v1081, 0.7978846
      %v1090 = vmul.f32 %v1082, 0.7978846
      %v1091 = vmul.f32 %v1083, 0.7978846
      %v1092 = vmul.f32 %v1084, 0.7978846
      %v1093 = vtanh.pop %v1085
      %v1094 = vtanh.pop %v1086
      %v1095 = vtanh.pop %v1087
      %v1096 = vtanh.pop %v1088
      %v1097 = vtanh.pop %v1089
      %v1098 = vtanh.pop %v1090
      %v1099 = vtanh.pop %v1091
      %v1100 = vtanh.pop %v1092
      %v1101 = vadd.f32 %v1093, 1.0
      %v1102 = vadd.f32 %v1094, 1.0
      %v1103 = vadd.f32 %v1095, 1.0
      %v1104 = vadd.f32 %v1096, 1.0
      %v1105 = vadd.f32 %v1097, 1.0
      %v1106 = vadd.f32 %v1098, 1.0
      %v1107 = vadd.f32 %v1099, 1.0
      %v1108 = vadd.f32 %v1100, 1.0
      %v1109 = vmul.f32 %v1101, 0.5
      %v1110 = vmul.f32 %v1102, 0.5
      %v1111 = vmul.f32 %v1103, 0.5
      %v1112 = vmul.f32 %v1104, 0.5
      %v1113 = vmul.f32 %v1105, 0.5
      %v1114 = vmul.f32 %v1106, 0.5
      %v1115 = vmul.f32 %v1107, 0.5
      %v1116 = vmul.f32 %v1108, 0.5
      %v1117 = vmul.f32 %v1023, %v1109
      %v1118 = vmul.f32 %v1026, %v1110
      %v1119 = vmul.f32 %v1031, %v1111
      %v1120 = vmul.f32 %v1034, %v1112
      %v1121 = vmul.f32 %v1039, %v1113
      %v1122 = vmul.f32 %v1042, %v1114
      %v1123 = vmul.f32 %v1047, %v1115
      %v1124 = vmul.f32 %v1050, %v1116
      %v1125 = vpack.c.bf16 %v1118, %v1117
      %v1126 = vpack.c.bf16 %v1120, %v1119
      %v1127 = vpack.c.bf16 %v1122, %v1121
      %v1128 = vpack.c.bf16 %v1124, %v1123
      %v1129 = vld [vmem:[%s10] sm:$0xf]
      %v1130 = vld [vmem:[%s10 + $0x4] sm:$0xf]
      %v1131 = vld [vmem:[%s10 + $0x8] sm:$0xf]
      %v1132 = vld [vmem:[%s10 + $0xc] sm:$0xf]
      %v1133 = vld [vmem:[%s11] sm:$0x1]
      %v1135 = vlaneseq
      %v1136 = vshrl.u32 %v1135, 7
      %v1137 = vsub.s32 0, %v1136
      %v1138 = vrot.slane %v1133, %v1137
      %v1144 = vunpack.c.l.b16 %v1129
      %v1145 = vunpack.c.l.b16 %v1130
      %v1146 = vunpack.c.l.b16 %v1131
      %v1147 = vunpack.c.l.b16 %v1132
      %v1148 = vpack.c.b16 %v1145, %v1144
      %v1149 = vpack.c.b16 %v1147, %v1146
      %v1153 = vsel %vm713, %v1125, 0
      %v1156 = vsel %vm713, %v1126, 0
      %v1159 = vsel %vm713, %v1127, 0
      %v1162 = vsel %vm713, %v1128, 0
      %1164 = vmatprep.subr.bf16.mxu0 0
      %1165 = vmatpush1.bf16.msra.mxu0 %v1148
      %1166 = vmatprep.subr.bf16.mxu0 0
      %1167 = vmatpush1.bf16.msra.mxu0 %v1149
      %1168 = vmatprep.subr.bf16.mxu0 0
      %1169 = vmatpush1.bf16.msra.mxu0 0
      %1170 = vmatprep.subr.bf16.mxu0 0
      %1171 = vmatpush1.bf16.msra.mxu0 0
      %1172 = vmatprep.subr.bf16.mxu0 0
      %1173 = vmatpush1.bf16.msra.mxu0 0
      %1174 = vmatprep.subr.bf16.mxu0 0
      %1175 = vmatpush1.bf16.msra.mxu0 0
      %1176 = vmatprep.subr.bf16.mxu0 0
      %1177 = vmatpush1.bf16.msra.mxu0 0
      %1178 = vmatprep.subr.bf16.mxu0 0
      %1179 = vmatpush1.bf16.msra.mxu0 0
      %1180 = vmatprep.subr.bf16.mxu0 0
      %1181 = vmatpush1.bf16.msra.mxu0 0
      %1182 = vmatprep.subr.bf16.mxu0 0
      %1183 = vmatpush1.bf16.msra.mxu0 0
      %1184 = vmatprep.subr.bf16.mxu0 0
      %1185 = vmatpush1.bf16.msra.mxu0 0
      %1186 = vmatprep.subr.bf16.mxu0 0
      %1187 = vmatpush1.bf16.msra.mxu0 0
      %1188 = vmatprep.subr.bf16.mxu0 0
      %1189 = vmatpush1.bf16.msra.mxu0 0
      %1190 = vmatprep.subr.bf16.mxu0 0
      %1191 = vmatpush1.bf16.msra.mxu0 0
      %1192 = vmatprep.subr.bf16.mxu0 0
      %1193 = vmatpush1.bf16.msra.mxu0 0
      %1194 = vmatprep.subr.bf16.mxu0 0
      %1195 = vmatpush1.bf16.msra.mxu0 0
      %1196 = vmatprep.mubr.bf16.mxu0 0
      %1197 = vmatmul.mubr.bf16.gmra.mrb[0].mxu0 %v1153
      %v1198 = vpop.f32.mrb[0].mxu0
      %v1199 = vadd.f32 %v1138, %v1198
      %v1200 = vpop.f32.mrb[0].mxu0
      %v1201 = vpop.f32.mrb[0].mxu0
      %v1202 = vadd.f32 %v1138, %v1201
      %v1203 = vpop.f32.mrb[0].mxu0
      %1204 = vmatprep.mubr.bf16.mxu0 0
      %1205 = vmatmul.mubr.bf16.gmra.mrb[0].mxu0 %v1156
      %v1206 = vpop.f32.mrb[0].mxu0
      %v1207 = vadd.f32 %v1138, %v1206
      %v1208 = vpop.f32.mrb[0].mxu0
      %v1209 = vpop.f32.mrb[0].mxu0
      %v1210 = vadd.f32 %v1138, %v1209
      %v1211 = vpop.f32.mrb[0].mxu0
      %1212 = vmatprep.mubr.bf16.mxu0 0
      %1213 = vmatmul.mubr.bf16.gmra.mrb[0].mxu0 %v1159
      %v1214 = vpop.f32.mrb[0].mxu0
      %v1215 = vadd.f32 %v1138, %v1214
      %v1216 = vpop.f32.mrb[0].mxu0
      %v1217 = vpop.f32.mrb[0].mxu0
      %v1218 = vadd.f32 %v1138, %v1217
      %v1219 = vpop.f32.mrb[0].mxu0
      %1220 = vmatprep.mubr.bf16.mxu0 0
      %1221 = vmatmul.mubr.bf16.gmra.mrb[0].mxu0 %v1162
      %v1222 = vpop.f32.mrb[0].mxu0
      %v1223 = vadd.f32 %v1138, %v1222
      %v1224 = vpop.f32.mrb[0].mxu0
      %v1225 = vpop.f32.mrb[0].mxu0
      %v1226 = vadd.f32 %v1138, %v1225
      %v1227 = vpop.f32.mrb[0].mxu0
      %1228 = vdwg.mxu0
      %v1229 = vadd.f32 %v806, %v1199
      %v1230 = vadd.f32 %v807, %v1202
      %v1231 = vadd.f32 %v808, %v1207
      %v1232 = vadd.f32 %v809, %v1210
      %v1233 = vadd.f32 %v810, %v1215
      %v1234 = vadd.f32 %v811, %v1218
      %v1235 = vadd.f32 %v812, %v1223
      %v1236 = vadd.f32 %v813, %v1226
      %1237 = vxpose.xlu0.b32.start [1/16] %v1229, 128
      %1238 = vxpose.xlu0.b32.cont [2/16] %v1230, 128
      %1239 = vxpose.xlu0.b32.cont [3/16] %v1231, 128
      %1240 = vxpose.xlu0.b32.cont [4/16] %v1232, 128
      %1241 = vxpose.xlu0.b32.cont [5/16] %v1233, 128
      %1242 = vxpose.xlu0.b32.cont [6/16] %v1234, 128
      %1243 = vxpose.xlu0.b32.cont [7/16] %v1235, 128
      %1244 = vxpose.xlu0.b32.cont [8/16] %v1236, 128
      %1245 = vxpose.xlu0.b32.cont [9/16] 0.0, 128
      %1246 = vxpose.xlu0.b32.cont [10/16] 0.0, 128
      %1247 = vxpose.xlu0.b32.cont [11/16] 0.0, 128
      %1248 = vxpose.xlu0.b32.cont [12/16] 0.0, 128
      %1249 = vxpose.xlu0.b32.cont [13/16] 0.0, 128
      %1250 = vxpose.xlu0.b32.cont [14/16] 0.0, 128
      %1251 = vxpose.xlu0.b32.cont [15/16] 0.0, 128
      %1252 = vxpose.xlu0.b32.end [16/16] 0.0, 128
      %v1253 = vpop.trf.xlu0
      %v1254 = vpop.trf.xlu0
      %v1255 = vpop.trf.xlu0
      %v1256 = vpop.trf.xlu0
      %v1257 = vpop.trf.xlu0
      %v1258 = vpop.trf.xlu0
      %v1259 = vpop.trf.xlu0
      %v1260 = vpop.trf.xlu0
      %v1261 = vpop.trf.xlu0
      %v1262 = vpop.trf.xlu0
      %v1263 = vpop.trf.xlu0
      %v1264 = vpop.trf.xlu0
      %v1265 = vpop.trf.xlu0
      %v1266 = vpop.trf.xlu0
      %v1267 = vpop.trf.xlu0
      %v1268 = vpop.trf.xlu0
      %v1269 = vpack.c.bf16 %v1254, %v1253
      %v1270 = vpack.c.bf16 %v1256, %v1255
      %v1273 = vunpack.c.l.b16 %v1269
      %v1274 = vunpack.c.h.b16 %v1269
      %v1275 = vunpack.c.l.b16 %v1270
      %v1276 = vunpack.c.h.b16 %v1270
      %v1277 = vpack.c.b16 %v1273, %v1273
      %v1278 = vpack.c.b16 %v1274, %v1274
      %v1279 = vpack.c.b16 %v1275, %v1275
      %v1280 = vpack.c.b16 %v1276, %v1276
      %vm1285 = vcmask 519168
      %1286 = vst.msk [vmem:[%s519] sm:$0xf] %vm1285, %v1277
      %1287 = vst.msk [vmem:[%s519 + $0x4] sm:$0xf] %vm1285, %v1278
      %1288 = vst.msk [vmem:[%s519 + $0x8] sm:$0xf] %vm1285, %v1279
      %1289 = vst.msk [vmem:[%s519 + $0xc] sm:$0xf] %vm1285, %v1280
      %p1290 = scmp.lt.s32.totalorder %s27, 1
      %s1291 = scalar_select %p1290, %s27, 1
      %p1292 = scmp.lt.s32.totalorder %s28, 0
      %s1293 = scalar_select %p1292, %s28, 0
      %s1294 = smul.addr %s1291, 4
      %s1295 = sadd.s32 %s1293, %s1294
      %s1296 = smul.addr %s1295, 4
      %s1297 = scalar_lea.vmem %s12, %s1296
      // Predicated region
      $region69: #{_lambda_.6} parent=67 // pred_check
        %p1298 = pneg %p331
      $region70: #{_lambda_.6} parent=67 // pred_check_branch
        %1300 = sbr.rel (%p1298) target = $region72
      $region71: #{_lambda_.6} parent=67 // pred_region
        _
      $region72: #{_lambda_.6} parent=67 // pred_fallthru
        _
    $region68: #{_lambda_.6} parent=5 // pred_fallthru
      _
    %p1301 = scmp.le.s32.totalorder 2, %s18
    // Predicated region
    $region73: #{_lambda_.6} parent=5 // pred_check
      %p1302 = pneg %p1301
    $region74: #{_lambda_.6} parent=5 // pred_check_branch
      %1304 = sbr.rel (%p1302) target = $region76
    $region75: #{_lambda_.6} parent=5 // pred_region
      %s1305 = ssub.s32 %s18, 2
      // Predicated region
      $region77: #{_lambda_.6} parent=75 // pred_check
        %p1306 = pneg %p337
      $region78: #{_lambda_.6} parent=75 // pred_check_branch
        %1308 = sbr.rel (%p1306) target = $region80
      $region79: #{_lambda_.6} parent=75 // pred_region
        %p1309 = scmp.lt.s32.totalorder %s29, 1
        %s1310 = scalar_select %p1309, %s29, 1
        %p1311 = scmp.lt.s32.totalorder %s30, 0
        %s1312 = scalar_select %p1311, %s30, 0
        %s1313 = smul.addr %s1310, 4
        %s1314 = sadd.s32 %s1312, %s1313
        %s1315 = smul.addr %s1314, 4
        %s1316 = scalar_lea.vmem %s12, %s1315
      $region80: #{_lambda_.6} parent=75 // pred_fallthru
        _
    $region76: #{_lambda_.6} parent=5 // pred_fallthru
      _
  $region6: #{_lambda_.6} parent=0 // loop_footer
    %s22 = sadd.s32 1, %s18
  $region7: #{_lambda_.6} parent=0 // loop_footer_branch
    %17 = sbr.rel target = $region3
  $region8: #{_lambda_.6} parent=0 // loop_exit
    _

// kernel: _lambda_.5
$region0: #{_lambda_.5}
  #allocation0 [shape = 'u32[]', space=smem, size = 0x4, offset = 0x4, fixed_abs, tag = 'smem constant byte address 0x4 - core index']
  #allocation1 [shape = 'u32[144,128]{1,0:T(1,128)}', space=vmem, size = 0x12000, scoped, tag = 'internal scratch']
  %s0 = inlined_call_operand.vmem [shape: bf16[2,147,64], index: 0, kind: input, shape index: {}]
  %s1 = inlined_call_operand.vmem [shape: f32[147,1], index: 1, kind: input, shape index: {}]
  %s2 = inlined_call_operand.vmem [shape: f32[147,1], index: 2, kind: input, shape index: {}]
  %s3 = inlined_call_operand.vmem [shape: bf16[147,96], index: 3, kind: input, shape index: {}]
  %s4 = inlined_call_operand.vmem [shape: f32[1,96], index: 4, kind: input, shape index: {}]
  %s5 = inlined_call_operand.vmem [shape: bf16[32,16], index: 5, kind: input, shape index: {}]
  %s6 = inlined_call_operand.vmem [shape: f32[2,64,16], index: 6, kind: output, shape index: {0}]
  %s7 = inlined_call_operand.vmem [shape: bf16[2,64,32], index: 7, kind: output, shape index: {1}]
  %s8 = inlined_call_operand.vmem [shape: f32[2,1,16], index: 8, kind: output, shape index: {2}]
  %s9 = inlined_call_operand.vmem [shape: f32[2,16,32], index: 9, kind: output, shape index: {3}]
  %10 = xla_tuple %s6, %s7, %s8, %s9
  %s11 = sld [smem:[#allocation0]]
  $region85: #{_lambda_.5} parent=0
    _
  %s13 = ssub.s32 1, %s11
  %s14 = scalar_select 0, %s13, %s11
  loop: start=0, step=1, limit=4
  $region2: #{_lambda_.5} parent=0 // loop_pre_header
    _
  $region3: #{_lambda_.5} parent=0 // loop_header
    %s16 = sphi 0, %s20
    %p17 = scmp.ge.s32.totalorder %s16, 4
    %s23 = sphi 0, %s35
    %s24 = sphi 0, %s31
    %s25 = sphi 0, %s23
    %s26 = sphi 0, %s24
    %s27 = sphi 0, %s25
    %s28 = sphi 0, %s26
    %s40 = sphi 0, %s42
    %s43 = sphi 0, %s40
    %s44 = sphi 0, %s43
    %s60 = sphi 0, %s44
    %s64 = sphi 0, %s64
    %s66 = sphi 0, %s64
    %s67 = sphi 0, %s66
    %s81 = sphi 0, %s67
    %s85 = sphi 0, %s85
    %s87 = sphi 0, %s85
    %s88 = sphi 0, %s87
    %s102 = sphi 0, %s88
    %s106 = sphi 0, %s106
    %s108 = sphi 0, %s106
    %s109 = sphi 0, %s108
    %s123 = sphi 0, %s109
    %s127 = sphi 0, %s127
    %s129 = sphi 0, %s127
    %s130 = sphi 0, %s129
    %s144 = sphi 0, %s130
    %s148 = sphi 0, %s148
    %s150 = sphi 0, %s148
    %s151 = sphi 0, %s150
    %s165 = sphi 0, %s151
    %s173 = sphi 0, %s175
    %s176 = sphi 0, %s173
    %s177 = sphi 0, %s176
    %s193 = sphi 0, %s177
    %s201 = sphi 0, %s203
    %s204 = sphi 0, %s201
    %s205 = sphi 0, %s204
    %s221 = sphi 0, %s205
    %s227 = sphi 0, %s229
    %s230 = sphi 0, %s227
    %s231 = sphi 0, %s230
    %s247 = sphi 0, %s231
    %s253 = sphi 0, %s255
    %s256 = sphi 0, %s253
    %s257 = sphi 0, %s256
    %s273 = sphi 0, %s257
  $region4: #{_lambda_.5} parent=0 // loop_header_branch
    %19 = sbr.rel (%p17) target = $region8
  $region5: #{_lambda_.5} parent=0 // loop_body
    %s21 = ssub.s32 %s16, 1
    %s22 = ssub.s32 %s16, 2
    %s29 = sadd.s32 1, %s24
    %p30 = scmp.ge.s32.totalorder %s29, 1
    %s31 = scalar_select %p30, 0, %s29
    %s32 = sadd.s32 1, %s23
    %s33 = scalar_select %p30, %s32, %s23
    %p34 = scmp.ge.s32.totalorder %s33, 2
    %s35 = scalar_select %p34, 0, %s33
    %s36 = ssub.s32 %s23, %s35
    %s37 = ssub.s32 %s24, %s31
    %s38 = sor.u32 %s36, %s37
    %p39 = scmp.eq.s32.totalorder %s38, 0
    %s41 = sadd.s32 %s40, 1
    %s42 = scalar_select %p39, %s40, %s41
    %p45 = pneg %p39
    %p46 = scmp.eq.s32.totalorder %s16, 1
    %p47 = por %p45, %p46
    %p48 = scmp.ne.s32.totalorder %s40, %s43
    %p49 = scmp.eq.s32.totalorder %s16, 0
    %p50 = por %p48, %p49
    %p51 = scmp.ne.s32.totalorder %s40, %s43
    %p52 = scmp.eq.s32.totalorder %s21, 1
    %p53 = por %p51, %p52
    %p54 = scmp.ne.s32.totalorder %s43, %s44
    %p55 = scmp.eq.s32.totalorder %s21, 0
    %p56 = por %p54, %p55
    %p57 = scmp.ne.s32.totalorder %s43, %s44
    %p58 = scmp.eq.s32.totalorder %s22, 1
    %p59 = por %p57, %p58
    %p61 = scmp.ne.s32.totalorder %s44, %s60
    %p62 = scmp.eq.s32.totalorder %s22, 0
    %p63 = por %p61, %p62
    %s65 = sadd.s32 %s64, 1
    %p68 = scmp.eq.s32.totalorder %s16, 1
    %p69 = scmp.ne.s32.totalorder %s64, %s66
    %p70 = scmp.eq.s32.totalorder %s16, 0
    %p71 = por %p69, %p70
    %p72 = scmp.ne.s32.totalorder %s64, %s66
    %p73 = scmp.eq.s32.totalorder %s21, 1
    %p74 = por %p72, %p73
    %p75 = scmp.ne.s32.totalorder %s66, %s67
    %p76 = scmp.eq.s32.totalorder %s21, 0
    %p77 = por %p75, %p76
    %p78 = scmp.ne.s32.totalorder %s66, %s67
    %p79 = scmp.eq.s32.totalorder %s22, 1
    %p80 = por %p78, %p79
    %p82 = scmp.ne.s32.totalorder %s67, %s81
    %p83 = scmp.eq.s32.totalorder %s22, 0
    %p84 = por %p82, %p83
    %s86 = sadd.s32 %s85, 1
    %p89 = scmp.eq.s32.totalorder %s16, 1
    %p90 = scmp.ne.s32.totalorder %s85, %s87
    %p91 = scmp.eq.s32.totalorder %s16, 0
    %p92 = por %p90, %p91
    %p93 = scmp.ne.s32.totalorder %s85, %s87
    %p94 = scmp.eq.s32.totalorder %s21, 1
    %p95 = por %p93, %p94
    %p96 = scmp.ne.s32.totalorder %s87, %s88
    %p97 = scmp.eq.s32.totalorder %s21, 0
    %p98 = por %p96, %p97
    %p99 = scmp.ne.s32.totalorder %s87, %s88
    %p100 = scmp.eq.s32.totalorder %s22, 1
    %p101 = por %p99, %p100
    %p103 = scmp.ne.s32.totalorder %s88, %s102
    %p104 = scmp.eq.s32.totalorder %s22, 0
    %p105 = por %p103, %p104
    %s107 = sadd.s32 %s106, 1
    %p110 = scmp.eq.s32.totalorder %s16, 1
    %p111 = scmp.ne.s32.totalorder %s106, %s108
    %p112 = scmp.eq.s32.totalorder %s16, 0
    %p113 = por %p111, %p112
    %p114 = scmp.ne.s32.totalorder %s106, %s108
    %p115 = scmp.eq.s32.totalorder %s21, 1
    %p116 = por %p114, %p115
    %p117 = scmp.ne.s32.totalorder %s108, %s109
    %p118 = scmp.eq.s32.totalorder %s21, 0
    %p119 = por %p117, %p118
    %p120 = scmp.ne.s32.totalorder %s108, %s109
    %p121 = scmp.eq.s32.totalorder %s22, 1
    %p122 = por %p120, %p121
    %p124 = scmp.ne.s32.totalorder %s109, %s123
    %p125 = scmp.eq.s32.totalorder %s22, 0
    %p126 = por %p124, %p125
    %s128 = sadd.s32 %s127, 1
    %p131 = scmp.eq.s32.totalorder %s16, 1
    %p132 = scmp.ne.s32.totalorder %s127, %s129
    %p133 = scmp.eq.s32.totalorder %s16, 0
    %p134 = por %p132, %p133
    %p135 = scmp.ne.s32.totalorder %s127, %s129
    %p136 = scmp.eq.s32.totalorder %s21, 1
    %p137 = por %p135, %p136
    %p138 = scmp.ne.s32.totalorder %s129, %s130
    %p139 = scmp.eq.s32.totalorder %s21, 0
    %p140 = por %p138, %p139
    %p141 = scmp.ne.s32.totalorder %s129, %s130
    %p142 = scmp.eq.s32.totalorder %s22, 1
    %p143 = por %p141, %p142
    %p145 = scmp.ne.s32.totalorder %s130, %s144
    %p146 = scmp.eq.s32.totalorder %s22, 0
    %p147 = por %p145, %p146
    %s149 = sadd.s32 %s148, 1
    %p152 = scmp.eq.s32.totalorder %s16, 1
    %p153 = scmp.ne.s32.totalorder %s148, %s150
    %p154 = scmp.eq.s32.totalorder %s16, 0
    %p155 = por %p153, %p154
    %p156 = scmp.ne.s32.totalorder %s148, %s150
    %p157 = scmp.eq.s32.totalorder %s21, 1
    %p158 = por %p156, %p157
    %p159 = scmp.ne.s32.totalorder %s150, %s151
    %p160 = scmp.eq.s32.totalorder %s21, 0
    %p161 = por %p159, %p160
    %p162 = scmp.ne.s32.totalorder %s150, %s151
    %p163 = scmp.eq.s32.totalorder %s22, 1
    %p164 = por %p162, %p163
    %p166 = scmp.ne.s32.totalorder %s151, %s165
    %p167 = scmp.eq.s32.totalorder %s22, 0
    %p168 = por %p166, %p167
    %s169 = ssub.s32 %s23, %s35
    %s170 = ssub.s32 %s24, %s31
    %s171 = sor.u32 %s169, %s170
    %p172 = scmp.eq.s32.totalorder %s171, 0
    %s174 = sadd.s32 %s173, 1
    %s175 = scalar_select %p172, %s173, %s174
    %p178 = pneg %p172
    %p179 = scmp.eq.s32.totalorder %s16, 1
    %p180 = por %p178, %p179
    %p181 = scmp.ne.s32.totalorder %s173, %s176
    %p182 = scmp.eq.s32.totalorder %s16, 0
    %p183 = por %p181, %p182
    %p184 = scmp.ne.s32.totalorder %s173, %s176
    %p185 = scmp.eq.s32.totalorder %s21, 1
    %p186 = por %p184, %p185
    %p187 = scmp.ne.s32.totalorder %s176, %s177
    %p188 = scmp.eq.s32.totalorder %s21, 0
    %p189 = por %p187, %p188
    %p190 = scmp.ne.s32.totalorder %s176, %s177
    %p191 = scmp.eq.s32.totalorder %s22, 1
    %p192 = por %p190, %p191
    %p194 = scmp.ne.s32.totalorder %s177, %s193
    %p195 = scmp.eq.s32.totalorder %s22, 0
    %p196 = por %p194, %p195
    %s197 = ssub.s32 %s23, %s35
    %s198 = ssub.s32 %s24, %s31
    %s199 = sor.u32 %s197, %s198
    %p200 = scmp.eq.s32.totalorder %s199, 0
    %s202 = sadd.s32 %s201, 1
    %s203 = scalar_select %p200, %s201, %s202
    %p206 = pneg %p200
    %p207 = scmp.eq.s32.totalorder %s16, 1
    %p208 = por %p206, %p207
    %p209 = scmp.ne.s32.totalorder %s201, %s204
    %p210 = scmp.eq.s32.totalorder %s16, 0
    %p211 = por %p209, %p210
    %p212 = scmp.ne.s32.totalorder %s201, %s204
    %p213 = scmp.eq.s32.totalorder %s21, 1
    %p214 = por %p212, %p213
    %p215 = scmp.ne.s32.totalorder %s204, %s205
    %p216 = scmp.eq.s32.totalorder %s21, 0
    %p217 = por %p215, %p216
    %p218 = scmp.ne.s32.totalorder %s204, %s205
    %p219 = scmp.eq.s32.totalorder %s22, 1
    %p220 = por %p218, %p219
    %p222 = scmp.ne.s32.totalorder %s205, %s221
    %p223 = scmp.eq.s32.totalorder %s22, 0
    %p224 = por %p222, %p223
    %s225 = ssub.s32 %s23, %s35
    %p226 = scmp.eq.s32.totalorder %s225, 0
    %s228 = sadd.s32 %s227, 1
    %s229 = scalar_select %p226, %s227, %s228
    %p232 = pneg %p226
    %p233 = scmp.eq.s32.totalorder %s16, 1
    %p234 = por %p232, %p233
    %p235 = scmp.ne.s32.totalorder %s227, %s230
    %p236 = scmp.eq.s32.totalorder %s16, 0
    %p237 = por %p235, %p236
    %p238 = scmp.ne.s32.totalorder %s227, %s230
    %p239 = scmp.eq.s32.totalorder %s21, 1
    %p240 = por %p238, %p239
    %p241 = scmp.ne.s32.totalorder %s230, %s231
    %p242 = scmp.eq.s32.totalorder %s21, 0
    %p243 = por %p241, %p242
    %p244 = scmp.ne.s32.totalorder %s230, %s231
    %p245 = scmp.eq.s32.totalorder %s22, 1
    %p246 = por %p244, %p245
    %p248 = scmp.ne.s32.totalorder %s231, %s247
    %p249 = scmp.eq.s32.totalorder %s22, 0
    %p250 = por %p248, %p249
    %s251 = ssub.s32 %s23, %s35
    %p252 = scmp.eq.s32.totalorder %s251, 0
    %s254 = sadd.s32 %s253, 1
    %s255 = scalar_select %p252, %s253, %s254
    %p258 = pneg %p252
    %p259 = scmp.eq.s32.totalorder %s16, 1
    %p260 = por %p258, %p259
    %p261 = scmp.ne.s32.totalorder %s253, %s256
    %p262 = scmp.eq.s32.totalorder %s16, 0
    %p263 = por %p261, %p262
    %p264 = scmp.ne.s32.totalorder %s253, %s256
    %p265 = scmp.eq.s32.totalorder %s21, 1
    %p266 = por %p264, %p265
    %p267 = scmp.ne.s32.totalorder %s256, %s257
    %p268 = scmp.eq.s32.totalorder %s21, 0
    %p269 = por %p267, %p268
    %p270 = scmp.ne.s32.totalorder %s256, %s257
    %p271 = scmp.eq.s32.totalorder %s22, 1
    %p272 = por %p270, %p271
    %p274 = scmp.ne.s32.totalorder %s257, %s273
    %p275 = scmp.eq.s32.totalorder %s22, 0
    %p276 = por %p274, %p275
    %p277 = scmp.le.s32.totalorder 1, %s16
    %p278 = scmp.lt.s32.totalorder %s16, 3
    %p279 = pnand %p277, %p278
    %p280 = pneg %p279
    // Predicated region
    $region9: #{_lambda_.5} parent=5 // pred_check
      _
    $region10: #{_lambda_.5} parent=5 // pred_check_branch
      %282 = sbr.rel (%p279) target = $region12
    $region11: #{_lambda_.5} parent=5 // pred_region
      %s283 = ssub.s32 %s16, 1
      // Predicated region
      $region13: #{_lambda_.5} parent=11 // pred_check
        %p284 = pneg %p77
      $region14: #{_lambda_.5} parent=11 // pred_check_branch
        %286 = sbr.rel (%p284) target = $region16
      $region15: #{_lambda_.5} parent=11 // pred_region
        _
      $region16: #{_lambda_.5} parent=11 // pred_fallthru
        _
      // Predicated region
      $region17: #{_lambda_.5} parent=11 // pred_check
        %p287 = pneg %p98
      $region18: #{_lambda_.5} parent=11 // pred_check_branch
        %289 = sbr.rel (%p287) target = $region20
      $region19: #{_lambda_.5} parent=11 // pred_region
        _
      $region20: #{_lambda_.5} parent=11 // pred_fallthru
        _
      // Predicated region
      $region21: #{_lambda_.5} parent=11 // pred_check
        %p290 = pneg %p119
      $region22: #{_lambda_.5} parent=11 // pred_check_branch
        %292 = sbr.rel (%p290) target = $region24
      $region23: #{_lambda_.5} parent=11 // pred_region
        _
      $region24: #{_lambda_.5} parent=11 // pred_fallthru
        _
      // Predicated region
      $region25: #{_lambda_.5} parent=11 // pred_check
        %p293 = pneg %p140
      $region26: #{_lambda_.5} parent=11 // pred_check_branch
        %295 = sbr.rel (%p293) target = $region28
      $region27: #{_lambda_.5} parent=11 // pred_region
        _
      $region28: #{_lambda_.5} parent=11 // pred_fallthru
        _
      // Predicated region
      $region29: #{_lambda_.5} parent=11 // pred_check
        %p296 = pneg %p161
      $region30: #{_lambda_.5} parent=11 // pred_check_branch
        %298 = sbr.rel (%p296) target = $region32
      $region31: #{_lambda_.5} parent=11 // pred_region
        _
      $region32: #{_lambda_.5} parent=11 // pred_fallthru
        _
    $region12: #{_lambda_.5} parent=5 // pred_fallthru
      _
    %p299 = scmp.lt.s32.totalorder %s16, 2
    // Predicated region
    $region33: #{_lambda_.5} parent=5 // pred_check
      %p300 = pneg %p299
    $region34: #{_lambda_.5} parent=5 // pred_check_branch
      %302 = sbr.rel (%p300) target = $region36
    $region35: #{_lambda_.5} parent=5 // pred_region
      // Predicated region
      $region37: #{_lambda_.5} parent=35 // pred_check
        %p303 = pneg %p50
      $region38: #{_lambda_.5} parent=35 // pred_check_branch
        %305 = sbr.rel (%p303) target = $region40
      $region39: #{_lambda_.5} parent=35 // pred_region
        %p306 = scmp.lt.s32.totalorder %s23, 1
        %s307 = scalar_select %p306, %s23, 1
        %p308 = scmp.lt.s32.totalorder %s24, 0
        %s309 = scalar_select %p308, %s24, 0
        %s310 = smul.addr %s307, 19
        %s311 = sadd.s32 %s309, %s310
        %s312 = smul.addr %s311, 4
        %s313 = scalar_lea.vmem %s0, %s312
      $region40: #{_lambda_.5} parent=35 // pred_fallthru
        _
    $region36: #{_lambda_.5} parent=5 // pred_fallthru
      _
    %p314 = scmp.le.s32.totalorder 1, %s16
    %p315 = scmp.lt.s32.totalorder %s16, 3
    %p316 = pnand %p314, %p315
    %p317 = pneg %p316
    // Predicated region
    $region41: #{_lambda_.5} parent=5 // pred_check
      _
    $region42: #{_lambda_.5} parent=5 // pred_check_branch
      %319 = sbr.rel (%p316) target = $region44
    $region43: #{_lambda_.5} parent=5 // pred_region
      %s320 = ssub.s32 %s16, 1
      %p321 = scmp.lt.s32.totalorder %s25, 1
      %s322 = scalar_select %p321, %s25, 1
      %p323 = scmp.lt.s32.totalorder %s26, 0
      %s324 = scalar_select %p323, %s26, 0
      %s325 = smul.addr %s322, 19
      %s326 = sadd.s32 %s324, %s325
      %s327 = smul.addr %s326, 4
      %s328 = scalar_lea.vmem %s0, %s327
      %p329 = pneg %p56
      %p330 = pneg %p53
      %p331 = pneg %p77
      %p332 = pneg %p74
      %p333 = pneg %p98
      %p334 = pneg %p95
      %p335 = pneg %p119
      %p336 = pneg %p116
      %p337 = pneg %p140
      %p338 = pneg %p137
      %p339 = pneg %p161
      %p340 = pneg %p158
      %p341 = pneg %p189
      %p342 = pneg %p186
      %s343 = smul.u32 8, %s26
      %p344 = scmp.lt.s32.totalorder %s25, 1
      %s345 = scalar_select %p344, %s25, 1
      %p346 = scmp.lt.s32.totalorder %s343, 7
      %s347 = scalar_select %p346, %s343, 7
      %s348 = smul.addr %s345, 8
      %s349 = sadd.s32 %s347, %s348
      %s350 = smul.addr %s349, 8
      %s351 = scalar_lea.vmem %s6, %s350
      %p352 = pneg %p217
      %p353 = pneg %p214
      %s354 = smul.u32 8, %s26
      %p355 = scmp.lt.s32.totalorder %s25, 1
      %s356 = scalar_select %p355, %s25, 1
      %p357 = scmp.lt.s32.totalorder %s354, 7
      %s358 = scalar_select %p357, %s354, 7
      %s359 = smul.addr %s356, 8
      %s360 = sadd.s32 %s358, %s359
      %s361 = smul.addr %s360, 4
      %s362 = scalar_lea.vmem %s7, %s361
      %p363 = pneg %p243
      %p364 = pneg %p240
      %p365 = scmp.lt.s32.totalorder %s25, 1
      %s366 = scalar_select %p365, %s25, 1
      %s367 = scalar_lea.vmem %s8, %s366
      %p368 = pneg %p269
      %p369 = pneg %p266
      %p370 = scmp.lt.s32.totalorder %s25, 1
      %s371 = scalar_select %p370, %s25, 1
      %s372 = smul.addr %s371, 2
      %s373 = smul.addr %s372, 8
      %s374 = scalar_lea.vmem %s9, %s373
      %p375 = scmp.lt.s32.totalorder %s25, 1
      %s376 = scalar_select %p375, %s25, 1
      %p377 = scmp.lt.s32.totalorder %s26, 0
      %s378 = scalar_select %p377, %s26, 0
      %s379 = smul.addr %s376, 19
      %s380 = sadd.s32 %s378, %s379
      %s381 = smul.addr %s380, 4
      %s382 = scalar_lea.vmem %s0, %s381
      %s383 = smul.u32 8, %s26
      %p384 = scmp.lt.s32.totalorder %s25, 1
      %s385 = scalar_select %p384, %s25, 1
      %p386 = scmp.lt.s32.totalorder %s383, 7
      %s387 = scalar_select %p386, %s383, 7
      %s388 = smul.addr %s385, 8
      %s389 = sadd.s32 %s387, %s388
      %s390 = smul.addr %s389, 8
      %s391 = scalar_lea.vmem %s6, %s390
      %s392 = smul.u32 8, %s26
      %s393 = smul.u32 8, %s26
      %p394 = scmp.lt.s32.totalorder %s25, 1
      %s395 = scalar_select %p394, %s25, 1
      %p396 = scmp.lt.s32.totalorder %s393, 7
      %s397 = scalar_select %p396, %s393, 7
      %s398 = smul.addr %s395, 8
      %s399 = sadd.s32 %s397, %s398
      %s400 = smul.addr %s399, 4
      %s401 = scalar_lea.vmem %s7, %s400
      %s402 = smul.u32 8, %s26
      %p403 = scmp.lt.s32.totalorder %s25, 1
      %s404 = scalar_select %p403, %s25, 1
      %s405 = scalar_lea.vmem %s8, %s404
      %p406 = scmp.lt.s32.totalorder %s25, 1
      %s407 = scalar_select %p406, %s25, 1
      %s408 = smul.addr %s407, 2
      %s409 = smul.addr %s408, 8
      %s410 = scalar_lea.vmem %s9, %s409
      %v412 = vld [vmem:[%s382] sm:$0xf]
      %v413 = vld [vmem:[%s382 + $0x4] sm:$0xf]
      %v414 = vld [vmem:[%s382 + $0x8] sm:$0xf]
      %v415 = vld [vmem:[%s382 + $0xc] sm:$0xf]
      %v416 = vld [vmem:[%s382 + $0x10] sm:$0xf]
      %v417 = vld [vmem:[%s382 + $0x14] sm:$0xf]
      %v418 = vld [vmem:[%s382 + $0x18] sm:$0xf]
      %v419 = vld [vmem:[%s382 + $0x1c] sm:$0xf]
      %v420 = vld [vmem:[%s382 + $0x20] sm:$0xf]
      %v421 = vld [vmem:[%s382 + $0x24] sm:$0xf]
      %v422 = vld [vmem:[%s382 + $0x28] sm:$0xf]
      %v423 = vld [vmem:[%s382 + $0x2c] sm:$0xf]
      %v424 = vld [vmem:[%s382 + $0x30] sm:$0xf]
      %v425 = vld [vmem:[%s382 + $0x34] sm:$0xf]
      %v426 = vld [vmem:[%s382 + $0x38] sm:$0xf]
      %v427 = vld [vmem:[%s382 + $0x3c] sm:$0xf]
      %v428 = vld [vmem:[%s382 + $0x40] sm:$0xf]
      %v429 = vld [vmem:[%s382 + $0x44] sm:$0xf]
      %v430 = vld [vmem:[%s382 + $0x48] sm:$0x3]
      %v431 = vunpack.c.l.bf16 %v412
      %v432 = vunpack.c.l.bf16 %v413
      %v433 = vunpack.c.l.bf16 %v414
      %v434 = vunpack.c.l.bf16 %v415
      %v435 = vunpack.c.l.bf16 %v416
      %v436 = vunpack.c.l.bf16 %v417
      %v437 = vunpack.c.l.bf16 %v418
      %v438 = vunpack.c.l.bf16 %v419
      %v439 = vunpack.c.l.bf16 %v420
      %v440 = vunpack.c.l.bf16 %v421
      %v441 = vunpack.c.l.bf16 %v422
      %v442 = vunpack.c.l.bf16 %v423
      %v443 = vunpack.c.l.bf16 %v424
      %v444 = vunpack.c.l.bf16 %v425
      %v445 = vunpack.c.l.bf16 %v426
      %v446 = vunpack.c.l.bf16 %v427
      %v447 = vunpack.c.l.bf16 %v428
      %v448 = vunpack.c.l.bf16 %v429
      %v449 = vunpack.c.l.bf16 %v430
      %vm450 = vcmask 523264
      %v451 = vsel %vm450, %v431, 0.0
      %v452 = vsel %vm450, %v432, 0.0
      %v453 = vadd.f32 %v451, %v452
      %v454 = vsel %vm450, %v433, 0.0
      %v455 = vadd.f32 %v453, %v454
      %v456 = vsel %vm450, %v434, 0.0
      %v457 = vadd.f32 %v455, %v456
      %v458 = vsel %vm450, %v435, 0.0
      %v459 = vadd.f32 %v457, %v458
      %v460 = vsel %vm450, %v436, 0.0
      %v461 = vadd.f32 %v459, %v460
      %v462 = vsel %vm450, %v437, 0.0
      %v463 = vadd.f32 %v461, %v462
      %v464 = vsel %vm450, %v438, 0.0
      %v465 = vadd.f32 %v463, %v464
      %v466 = vsel %vm450, %v439, 0.0
      %v467 = vadd.f32 %v465, %v466
      %v468 = vsel %vm450, %v440, 0.0
      %v469 = vadd.f32 %v467, %v468
      %v470 = vsel %vm450, %v441, 0.0
      %v471 = vadd.f32 %v469, %v470
      %v472 = vsel %vm450, %v442, 0.0
      %v473 = vadd.f32 %v471, %v472
      %v474 = vsel %vm450, %v443, 0.0
      %v475 = vadd.f32 %v473, %v474
      %v476 = vsel %vm450, %v444, 0.0
      %v477 = vadd.f32 %v475, %v476
      %v478 = vsel %vm450, %v445, 0.0
      %v479 = vadd.f32 %v477, %v478
      %v480 = vsel %vm450, %v446, 0.0
      %v481 = vadd.f32 %v479, %v480
      %v482 = vsel %vm450, %v447, 0.0
      %v483 = vadd.f32 %v481, %v482
      %v484 = vsel %vm450, %v448, 0.0
      %v485 = vadd.f32 %v483, %v484
      %vm486 = vcmask 518144
      %v487 = vsel %vm486, %v449, 0.0
      %v488 = vadd.f32 %v485, %v487
      %v489 = vrot.slane %v488, 4
      %v490 = vadd.f32 %v488, %v489
      %v491 = vrot.slane %v490, 2
      %v492 = vadd.f32 %v490, %v491
      %v493 = vrot.slane %v492, 1
      %v494 = vadd.f32 %v492, %v493
      %v495 = vrcp.pop 147.0
      %v496 = vmul.f32 %v494, %v495
      %v497 = vsub.f32 %v431, %v496
      %v498 = vsub.f32 %v432, %v496
      %v499 = vsub.f32 %v433, %v496
      %v500 = vsub.f32 %v434, %v496
      %v501 = vsub.f32 %v435, %v496
      %v502 = vsub.f32 %v436, %v496
      %v503 = vsub.f32 %v437, %v496
      %v504 = vsub.f32 %v438, %v496
      %v505 = vsub.f32 %v439, %v496
      %v506 = vsub.f32 %v440, %v496
      %v507 = vsub.f32 %v441, %v496
      %v508 = vsub.f32 %v442, %v496
      %v509 = vsub.f32 %v443, %v496
      %v510 = vsub.f32 %v444, %v496
      %v511 = vsub.f32 %v445, %v496
      %v512 = vsub.f32 %v446, %v496
      %v513 = vsub.f32 %v447, %v496
      %v514 = vsub.f32 %v448, %v496
      %v515 = vsub.f32 %v449, %v496
      %v516 = vmul.f32 %v497, %v497
      %v517 = vmul.f32 %v498, %v498
      %v518 = vmul.f32 %v499, %v499
      %v519 = vmul.f32 %v500, %v500
      %v520 = vmul.f32 %v501, %v501
      %v521 = vmul.f32 %v502, %v502
      %v522 = vmul.f32 %v503, %v503
      %v523 = vmul.f32 %v504, %v504
      %v524 = vmul.f32 %v505, %v505
      %v525 = vmul.f32 %v506, %v506
      %v526 = vmul.f32 %v507, %v507
      %v527 = vmul.f32 %v508, %v508
      %v528 = vmul.f32 %v509, %v509
      %v529 = vmul.f32 %v510, %v510
      %v530 = vmul.f32 %v511, %v511
      %v531 = vmul.f32 %v512, %v512
      %v532 = vmul.f32 %v513, %v513
      %v533 = vmul.f32 %v514, %v514
      %v534 = vmul.f32 %v515, %v515
      %v535 = vsel %vm450, %v516, 0.0
      %v536 = vsel %vm450, %v517, 0.0
      %v537 = vadd.f32 %v535, %v536
      %v538 = vsel %vm450, %v518, 0.0
      %v539 = vadd.f32 %v537, %v538
      %v540 = vsel %vm450, %v519, 0.0
      %v541 = vadd.f32 %v539, %v540
      %v542 = vsel %vm450, %v520, 0.0
      %v543 = vadd.f32 %v541, %v542
      %v544 = vsel %vm450, %v521, 0.0
      %v545 = vadd.f32 %v543, %v544
      %v546 = vsel %vm450, %v522, 0.0
      %v547 = vadd.f32 %v545, %v546
      %v548 = vsel %vm450, %v523, 0.0
      %v549 = vadd.f32 %v547, %v548
      %v550 = vsel %vm450, %v524, 0.0
      %v551 = vadd.f32 %v549, %v550
      %v552 = vsel %vm450, %v525, 0.0
      %v553 = vadd.f32 %v551, %v552
      %v554 = vsel %vm450, %v526, 0.0
      %v555 = vadd.f32 %v553, %v554
      %v556 = vsel %vm450, %v527, 0.0
      %v557 = vadd.f32 %v555, %v556
      %v558 = vsel %vm450, %v528, 0.0
      %v559 = vadd.f32 %v557, %v558
      %v560 = vsel %vm450, %v529, 0.0
      %v561 = vadd.f32 %v559, %v560
      %v562 = vsel %vm450, %v530, 0.0
      %v563 = vadd.f32 %v561, %v562
      %v564 = vsel %vm450, %v531, 0.0
      %v565 = vadd.f32 %v563, %v564
      %v566 = vsel %vm450, %v532, 0.0
      %v567 = vadd.f32 %v565, %v566
      %v568 = vsel %vm450, %v533, 0.0
      %v569 = vadd.f32 %v567, %v568
      %v570 = vsel %vm486, %v534, 0.0
      %v571 = vadd.f32 %v569, %v570
      %v572 = vrot.slane %v571, 4
      %v573 = vadd.f32 %v571, %v572
      %v574 = vrot.slane %v573, 2
      %v575 = vadd.f32 %v573, %v574
      %v576 = vrot.slane %v575, 1
      %v577 = vadd.f32 %v575, %v576
      %v578 = vmul.f32 %v577, %v495
      %v579 = vadd.f32 %v578, 1e-05
      %v580 = vrsqrt.pop %v579
      %v581 = vmul.f32 %v497, %v580
      %v582 = vmul.f32 %v498, %v580
      %v583 = vmul.f32 %v499, %v580
      %v584 = vmul.f32 %v500, %v580
      %v585 = vmul.f32 %v501, %v580
      %v586 = vmul.f32 %v502, %v580
      %v587 = vmul.f32 %v503, %v580
      %v588 = vmul.f32 %v504, %v580
      %v589 = vmul.f32 %v505, %v580
      %v590 = vmul.f32 %v506, %v580
      %v591 = vmul.f32 %v507, %v580
      %v592 = vmul.f32 %v508, %v580
      %v593 = vmul.f32 %v509, %v580
      %v594 = vmul.f32 %v510, %v580
      %v595 = vmul.f32 %v511, %v580
      %v596 = vmul.f32 %v512, %v580
      %v597 = vmul.f32 %v513, %v580
      %v598 = vmul.f32 %v514, %v580
      %v599 = vmul.f32 %v515, %v580
      %v600 = vld [vmem:[%s1] sm:$0xff]
      %v601 = vld [vmem:[%s1 + $0x8] sm:$0xff]
      %v602 = vld [vmem:[%s1 + $0x10] sm:$0xff]
      %v603 = vld [vmem:[%s1 + $0x18] sm:$0xff]
      %v604 = vld [vmem:[%s1 + $0x20] sm:$0xff]
      %v605 = vld [vmem:[%s1 + $0x28] sm:$0xff]
      %v606 = vld [vmem:[%s1 + $0x30] sm:$0xff]
      %v607 = vld [vmem:[%s1 + $0x38] sm:$0xff]
      %v608 = vld [vmem:[%s1 + $0x40] sm:$0xff]
      %v609 = vld [vmem:[%s1 + $0x48] sm:$0xff]
      %v610 = vld [vmem:[%s1 + $0x50] sm:$0xff]
      %v611 = vld [vmem:[%s1 + $0x58] sm:$0xff]
      %v612 = vld [vmem:[%s1 + $0x60] sm:$0xff]
      %v613 = vld [vmem:[%s1 + $0x68] sm:$0xff]
      %v614 = vld [vmem:[%s1 + $0x70] sm:$0xff]
      %v615 = vld [vmem:[%s1 + $0x78] sm:$0xff]
      %v616 = vld [vmem:[%s1 + $0x80] sm:$0xff]
      %v617 = vld [vmem:[%s1 + $0x88] sm:$0xff]
      %v618 = vld [vmem:[%s1 + $0x90] sm:$0x7]
      %620 = vset.pattern.permute.xlu0 0
      %621 = vperm.xlu0 %620, %v600
      %v622 = vpop.permute.xlu0 %621
      %625 = vset.pattern.permute.xlu0 0
      %626 = vperm.xlu0 %625, %v601
      %v627 = vpop.permute.xlu0 %626
      %630 = vset.pattern.permute.xlu0 0
      %631 = vperm.xlu0 %630, %v602
      %v632 = vpop.permute.xlu0 %631
      %635 = vset.pattern.permute.xlu0 0
      %636 = vperm.xlu0 %635, %v603
      %v637 = vpop.permute.xlu0 %636
      %640 = vset.pattern.permute.xlu0 0
      %641 = vperm.xlu0 %640, %v604
      %v642 = vpop.permute.xlu0 %641
      %645 = vset.pattern.permute.xlu0 0
      %646 = vperm.xlu0 %645, %v605
      %v647 = vpop.permute.xlu0 %646
      %650 = vset.pattern.permute.xlu0 0
      %651 = vperm.xlu0 %650, %v606
      %v652 = vpop.permute.xlu0 %651
      %655 = vset.pattern.permute.xlu0 0
      %656 = vperm.xlu0 %655, %v607
      %v657 = vpop.permute.xlu0 %656
      %660 = vset.pattern.permute.xlu0 0
      %661 = vperm.xlu0 %660, %v608
      %v662 = vpop.permute.xlu0 %661
      %665 = vset.pattern.permute.xlu0 0
      %666 = vperm.xlu0 %665, %v609
      %v667 = vpop.permute.xlu0 %666
      %670 = vset.pattern.permute.xlu0 0
      %671 = vperm.xlu0 %670, %v610
      %v672 = vpop.permute.xlu0 %671
      %675 = vset.pattern.permute.xlu0 0
      %676 = vperm.xlu0 %675, %v611
      %v677 = vpop.permute.xlu0 %676
      %680 = vset.pattern.permute.xlu0 0
      %681 = vperm.xlu0 %680, %v612
      %v682 = vpop.permute.xlu0 %681
      %685 = vset.pattern.permute.xlu0 0
      %686 = vperm.xlu0 %685, %v613
      %v687 = vpop.permute.xlu0 %686
      %690 = vset.pattern.permute.xlu0 0
      %691 = vperm.xlu0 %690, %v614
      %v692 = vpop.permute.xlu0 %691
      %695 = vset.pattern.permute.xlu0 0
      %696 = vperm.xlu0 %695, %v615
      %v697 = vpop.permute.xlu0 %696
      %700 = vset.pattern.permute.xlu0 0
      %701 = vperm.xlu0 %700, %v616
      %v702 = vpop.permute.xlu0 %701
      %705 = vset.pattern.permute.xlu0 0
      %706 = vperm.xlu0 %705, %v617
      %v707 = vpop.permute.xlu0 %706
      %710 = vset.pattern.permute.xlu0 0
      %711 = vperm.xlu0 %710, %v618
      %v712 = vpop.permute.xlu0 %711
      %v714 = vmul.f32 %v581, %v622
      %v715 = vmul.f32 %v582, %v627
      %v716 = vmul.f32 %v583, %v632
      %v717 = vmul.f32 %v584, %v637
      %v718 = vmul.f32 %v585, %v642
      %v719 = vmul.f32 %v586, %v647
      %v720 = vmul.f32 %v587, %v652
      %v721 = vmul.f32 %v588, %v657
      %v722 = vmul.f32 %v589, %v662
      %v723 = vmul.f32 %v590, %v667
      %v724 = vmul.f32 %v591, %v672
      %v725 = vmul.f32 %v592, %v677
      %v726 = vmul.f32 %v593, %v682
      %v727 = vmul.f32 %v594, %v687
      %v728 = vmul.f32 %v595, %v692
      %v729 = vmul.f32 %v596, %v697
      %v730 = vmul.f32 %v597, %v702
      %v731 = vmul.f32 %v598, %v707
      %v732 = vmul.f32 %v599, %v712
      %v733 = vld [vmem:[%s2] sm:$0xff]
      %v734 = vld [vmem:[%s2 + $0x8] sm:$0xff]
      %v735 = vld [vmem:[%s2 + $0x10] sm:$0xff]
      %v736 = vld [vmem:[%s2 + $0x18] sm:$0xff]
      %v737 = vld [vmem:[%s2 + $0x20] sm:$0xff]
      %v738 = vld [vmem:[%s2 + $0x28] sm:$0xff]
      %v739 = vld [vmem:[%s2 + $0x30] sm:$0xff]
      %v740 = vld [vmem:[%s2 + $0x38] sm:$0xff]
      %v741 = vld [vmem:[%s2 + $0x40] sm:$0xff]
      %v742 = vld [vmem:[%s2 + $0x48] sm:$0xff]
      %v743 = vld [vmem:[%s2 + $0x50] sm:$0xff]
      %v744 = vld [vmem:[%s2 + $0x58] sm:$0xff]
      %v745 = vld [vmem:[%s2 + $0x60] sm:$0xff]
      %v746 = vld [vmem:[%s2 + $0x68] sm:$0xff]
      %v747 = vld [vmem:[%s2 + $0x70] sm:$0xff]
      %v748 = vld [vmem:[%s2 + $0x78] sm:$0xff]
      %v749 = vld [vmem:[%s2 + $0x80] sm:$0xff]
      %v750 = vld [vmem:[%s2 + $0x88] sm:$0xff]
      %v751 = vld [vmem:[%s2 + $0x90] sm:$0x7]
      %753 = vset.pattern.permute.xlu0 0
      %754 = vperm.xlu0 %753, %v733
      %v755 = vpop.permute.xlu0 %754
      %758 = vset.pattern.permute.xlu0 0
      %759 = vperm.xlu0 %758, %v734
      %v760 = vpop.permute.xlu0 %759
      %763 = vset.pattern.permute.xlu0 0
      %764 = vperm.xlu0 %763, %v735
      %v765 = vpop.permute.xlu0 %764
      %768 = vset.pattern.permute.xlu0 0
      %769 = vperm.xlu0 %768, %v736
      %v770 = vpop.permute.xlu0 %769
      %773 = vset.pattern.permute.xlu0 0
      %774 = vperm.xlu0 %773, %v737
      %v775 = vpop.permute.xlu0 %774
      %778 = vset.pattern.permute.xlu0 0
      %779 = vperm.xlu0 %778, %v738
      %v780 = vpop.permute.xlu0 %779
      %783 = vset.pattern.permute.xlu0 0
      %784 = vperm.xlu0 %783, %v739
      %v785 = vpop.permute.xlu0 %784
      %788 = vset.pattern.permute.xlu0 0
      %789 = vperm.xlu0 %788, %v740
      %v790 = vpop.permute.xlu0 %789
      %793 = vset.pattern.permute.xlu0 0
      %794 = vperm.xlu0 %793, %v741
      %v795 = vpop.permute.xlu0 %794
      %798 = vset.pattern.permute.xlu0 0
      %799 = vperm.xlu0 %798, %v742
      %v800 = vpop.permute.xlu0 %799
      %803 = vset.pattern.permute.xlu0 0
      %804 = vperm.xlu0 %803, %v743
      %v805 = vpop.permute.xlu0 %804
      %808 = vset.pattern.permute.xlu0 0
      %809 = vperm.xlu0 %808, %v744
      %v810 = vpop.permute.xlu0 %809
      %813 = vset.pattern.permute.xlu0 0
      %814 = vperm.xlu0 %813, %v745
      %v815 = vpop.permute.xlu0 %814
      %818 = vset.pattern.permute.xlu0 0
      %819 = vperm.xlu0 %818, %v746
      %v820 = vpop.permute.xlu0 %819
      %823 = vset.pattern.permute.xlu0 0
      %824 = vperm.xlu0 %823, %v747
      %v825 = vpop.permute.xlu0 %824
      %828 = vset.pattern.permute.xlu0 0
      %829 = vperm.xlu0 %828, %v748
      %v830 = vpop.permute.xlu0 %829
      %833 = vset.pattern.permute.xlu0 0
      %834 = vperm.xlu0 %833, %v749
      %v835 = vpop.permute.xlu0 %834
      %838 = vset.pattern.permute.xlu0 0
      %839 = vperm.xlu0 %838, %v750
      %v840 = vpop.permute.xlu0 %839
      %843 = vset.pattern.permute.xlu0 0
      %844 = vperm.xlu0 %843, %v751
      %v845 = vpop.permute.xlu0 %844
      %v847 = vadd.f32 %v714, %v755
      %v848 = vadd.f32 %v715, %v760
      %v849 = vadd.f32 %v716, %v765
      %v850 = vadd.f32 %v717, %v770
      %v851 = vadd.f32 %v718, %v775
      %v852 = vadd.f32 %v719, %v780
      %v853 = vadd.f32 %v720, %v785
      %v854 = vadd.f32 %v721, %v790
      %v855 = vadd.f32 %v722, %v795
      %v856 = vadd.f32 %v723, %v800
      %v857 = vadd.f32 %v724, %v805
      %v858 = vadd.f32 %v725, %v810
      %v859 = vadd.f32 %v726, %v815
      %v860 = vadd.f32 %v727, %v820
      %v861 = vadd.f32 %v728, %v825
      %v862 = vadd.f32 %v729, %v830
      %v863 = vadd.f32 %v730, %v835
      %v864 = vadd.f32 %v731, %v840
      %v865 = vadd.f32 %v732, %v845
      %v866 = vpack.c.bf16 %v848, %v847
      %v867 = vpack.c.bf16 %v850, %v849
      %v868 = vpack.c.bf16 %v852, %v851
      %v869 = vpack.c.bf16 %v854, %v853
      %v870 = vpack.c.bf16 %v856, %v855
      %v871 = vpack.c.bf16 %v858, %v857
      %v872 = vpack.c.bf16 %v860, %v859
      %v873 = vpack.c.bf16 %v862, %v861
      %v874 = vpack.c.bf16 %v864, %v863
      %v875 = vpack.c.bf16 %v865, %v865
      %v876 = vld [vmem:[%s3] sm:$0xf]
      %v877 = vld [vmem:[%s3 + $0x4] sm:$0xf]
      %v878 = vld [vmem:[%s3 + $0x8] sm:$0xf]
      %v879 = vld [vmem:[%s3 + $0xc] sm:$0xf]
      %v880 = vld [vmem:[%s3 + $0x10] sm:$0xf]
      %v881 = vld [vmem:[%s3 + $0x14] sm:$0xf]
      %v882 = vld [vmem:[%s3 + $0x18] sm:$0xf]
      %v883 = vld [vmem:[%s3 + $0x1c] sm:$0xf]
      %v884 = vld [vmem:[%s3 + $0x20] sm:$0xf]
      %v885 = vld [vmem:[%s3 + $0x24] sm:$0xf]
      %v886 = vld [vmem:[%s3 + $0x28] sm:$0xf]
      %v887 = vld [vmem:[%s3 + $0x2c] sm:$0xf]
      %v888 = vld [vmem:[%s3 + $0x30] sm:$0xf]
      %v889 = vld [vmem:[%s3 + $0x34] sm:$0xf]
      %v890 = vld [vmem:[%s3 + $0x38] sm:$0xf]
      %v891 = vld [vmem:[%s3 + $0x3c] sm:$0xf]
      %v892 = vld [vmem:[%s3 + $0x40] sm:$0xf]
      %v893 = vld [vmem:[%s3 + $0x44] sm:$0xf]
      %v894 = vld [vmem:[%s3 + $0x48] sm:$0x3]
      %v895 = vld [vmem:[%s4] sm:$0x1]
      %v897 = vlaneseq
      %v898 = vshrl.u32 %v897, 7
      %v899 = vsub.s32 0, %v898
      %v900 = vrot.slane %v895, %v899
      %902 = vxpose.xlu0.c.b16.start [1/8] %v866, 128
      %903 = vxpose.xlu0.c.b16.cont [2/8] %v867, 128
      %904 = vxpose.xlu0.c.b16.cont [3/8] %v868, 128
      %905 = vxpose.xlu0.c.b16.cont [4/8] %v869, 128
      %906 = vxpose.xlu0.c.b16.cont [5/8] %v870, 128
      %907 = vxpose.xlu0.c.b16.cont [6/8] %v871, 128
      %908 = vxpose.xlu0.c.b16.cont [7/8] %v872, 128
      %909 = vxpose.xlu0.c.b16.end [8/8] %v873, 128
      %v910 = vpop.trf.xlu0
      %v911 = vpop.trf.xlu0
      %v912 = vpop.trf.xlu0
      %v913 = vpop.trf.xlu0
      %v914 = vpop.trf.xlu0
      %v915 = vpop.trf.xlu0
      %v916 = vpop.trf.xlu0
      %v917 = vpop.trf.xlu0
      %918 = vxpose.xlu0.c.b16.start [1/8] %v874, 128
      %919 = vxpose.xlu0.c.b16.cont [2/8] %v875, 128
      %920 = vxpose.xlu0.c.b16.cont [3/8] 0, 128
      %921 = vxpose.xlu0.c.b16.cont [4/8] 0, 128
      %922 = vxpose.xlu0.c.b16.cont [5/8] 0, 128
      %923 = vxpose.xlu0.c.b16.cont [6/8] 0, 128
      %924 = vxpose.xlu0.c.b16.cont [7/8] 0, 128
      %925 = vxpose.xlu0.c.b16.end [8/8] 0, 128
      %v926 = vpop.trf.xlu0
      %v927 = vpop.trf.xlu0
      %v928 = vpop.trf.xlu0
      %v929 = vpop.trf.xlu0
      %v930 = vpop.trf.xlu0
      %v931 = vpop.trf.xlu0
      %v932 = vpop.trf.xlu0
      %v933 = vpop.trf.xlu0
      %v953 = vunpack.c.l.b16 %v876
      %v954 = vunpack.c.l.b16 %v877
      %v955 = vunpack.c.l.b16 %v878
      %v956 = vunpack.c.l.b16 %v879
      %v957 = vunpack.c.l.b16 %v880
      %v958 = vunpack.c.l.b16 %v881
      %v959 = vunpack.c.l.b16 %v882
      %v960 = vunpack.c.l.b16 %v883
      %v961 = vunpack.c.l.b16 %v884
      %v962 = vunpack.c.l.b16 %v885
      %v963 = vunpack.c.l.b16 %v886
      %v964 = vunpack.c.l.b16 %v887
      %v965 = vunpack.c.l.b16 %v888
      %v966 = vunpack.c.l.b16 %v889
      %v967 = vunpack.c.l.b16 %v890
      %v968 = vunpack.c.l.b16 %v891
      %v969 = vunpack.c.l.b16 %v892
      %v970 = vunpack.c.l.b16 %v893
      %v971 = vunpack.c.l.b16 %v894
      %v972 = vpack.c.b16 %v954, %v953
      %v973 = vpack.c.b16 %v956, %v955
      %v974 = vpack.c.b16 %v958, %v957
      %v975 = vpack.c.b16 %v960, %v959
      %v976 = vpack.c.b16 %v962, %v961
      %v977 = vpack.c.b16 %v964, %v963
      %v978 = vpack.c.b16 %v966, %v965
      %v979 = vpack.c.b16 %v968, %v967
      %v980 = vpack.c.b16 %v970, %v969
      %v981 = vpack.c.b16 %v971, %v971
      %vm991 = vcmask 154624
      %v993 = vsel %vm991, %v926, 0
      %v996 = vsel %vm991, %v927, 0
      %v999 = vsel %vm991, %v928, 0
      %v1002 = vsel %vm991, %v929, 0
      %vm1004 = vcmask 1040384
      %vm1005 = vcmask 1041408
      %v1006 = vsel %vm1004, 4294967295, 65535
      %v1007 = vsel %vm1005, %v1006, 0
      %v1009 = vand.u32 %v981, %v1007
      %1011 = vmatprep.subr.bf16.mxu0 0
      %1012 = vmatpush1.bf16.msra.mxu0 %v972
      %1013 = vmatprep.subr.bf16.mxu0 0
      %1014 = vmatpush1.bf16.msra.mxu0 %v973
      %1015 = vmatprep.subr.bf16.mxu0 0
      %1016 = vmatpush1.bf16.msra.mxu0 %v974
      %1017 = vmatprep.subr.bf16.mxu0 0
      %1018 = vmatpush1.bf16.msra.mxu0 %v975
      %1019 = vmatprep.subr.bf16.mxu0 0
      %1020 = vmatpush1.bf16.msra.mxu0 %v976
      %1021 = vmatprep.subr.bf16.mxu0 0
      %1022 = vmatpush1.bf16.msra.mxu0 %v977
      %1023 = vmatprep.subr.bf16.mxu0 0
      %1024 = vmatpush1.bf16.msra.mxu0 %v978
      %1025 = vmatprep.subr.bf16.mxu0 0
      %1026 = vmatpush1.bf16.msra.mxu0 %v979
      %1027 = vmatprep.subr.bf16.mxu0 0
      %1028 = vmatpush1.bf16.msra.mxu0 %v980
      %1029 = vmatprep.subr.bf16.mxu0 0
      %1030 = vmatpush1.bf16.msra.mxu0 %v1009
      %1031 = vmatprep.subr.bf16.mxu0 0
      %1032 = vmatpush1.bf16.msra.mxu0 0
      %1033 = vmatprep.subr.bf16.mxu0 0
      %1034 = vmatpush1.bf16.msra.mxu0 0
      %1035 = vmatprep.subr.bf16.mxu0 0
      %1036 = vmatpush1.bf16.msra.mxu0 0
      %1037 = vmatprep.subr.bf16.mxu0 0
      %1038 = vmatpush1.bf16.msra.mxu0 0
      %1039 = vmatprep.subr.bf16.mxu0 0
      %1040 = vmatpush1.bf16.msra.mxu0 0
      %1041 = vmatprep.subr.bf16.mxu0 0
      %1042 = vmatpush1.bf16.msra.mxu0 0
      %1043 = vmatprep.mubr.bf16.mxu0 %v993
      %1044 = vmatmul.mubr.bf16.gmra.mrb[0].mxu0 %v910
      %v1045 = vpop.f32.mrb[0].mxu0
      %v1046 = vadd.f32 %v900, %v1045
      %v1047 = vpop.f32.mrb[0].mxu0
      %v1048 = vpop.f32.mrb[0].mxu0
      %v1049 = vadd.f32 %v900, %v1048
      %v1050 = vpop.f32.mrb[0].mxu0
      %1051 = vmatprep.mubr.bf16.mxu0 %v996
      %1052 = vmatmul.mubr.bf16.gmra.mrb[0].mxu0 %v911
      %v1053 = vpop.f32.mrb[0].mxu0
      %v1054 = vadd.f32 %v900, %v1053
      %v1055 = vpop.f32.mrb[0].mxu0
      %v1056 = vpop.f32.mrb[0].mxu0
      %v1057 = vadd.f32 %v900, %v1056
      %v1058 = vpop.f32.mrb[0].mxu0
      %1059 = vmatprep.mubr.bf16.mxu0 %v999
      %1060 = vmatmul.mubr.bf16.gmra.mrb[0].mxu0 %v912
      %v1061 = vpop.f32.mrb[0].mxu0
      %v1062 = vadd.f32 %v900, %v1061
      %v1063 = vpop.f32.mrb[0].mxu0
      %v1064 = vpop.f32.mrb[0].mxu0
      %v1065 = vadd.f32 %v900, %v1064
      %v1066 = vpop.f32.mrb[0].mxu0
      %1067 = vmatprep.mubr.bf16.mxu0 %v1002
      %1068 = vmatmul.mubr.bf16.gmra.mrb[0].mxu0 %v913
      %v1069 = vpop.f32.mrb[0].mxu0
      %v1070 = vadd.f32 %v900, %v1069
      %v1071 = vpop.f32.mrb[0].mxu0
      %v1072 = vpop.f32.mrb[0].mxu0
      %v1073 = vadd.f32 %v900, %v1072
      %v1074 = vpop.f32.mrb[0].mxu0
      %1075 = vdwg.mxu0
      %v1076 = vld [vmem:[%s5] sm:$0xf]
      %v1077 = vld [vmem:[%s5 + $0x4] sm:$0xf]
      %v1078 = vld [vmem:[%s5 + $0x8] sm:$0xf]
      %v1079 = vld [vmem:[%s5 + $0xc] sm:$0xf]
      %v1080 = vmul.f32 %v1046, %v1046
      %v1081 = vmul.f32 %v1049, %v1049
      %v1082 = vmul.f32 %v1054, %v1054
      %v1083 = vmul.f32 %v1057, %v1057
      %v1084 = vmul.f32 %v1062, %v1062
      %v1085 = vmul.f32 %v1065, %v1065
      %v1086 = vmul.f32 %v1070, %v1070
      %v1087 = vmul.f32 %v1073, %v1073
      %vm1088 = vcmask 261120
      %v1089 = vsel %vm1088, %v1080, 0.0
      %1090 = vadd.xlane.f32.xlu0 %v1089
      %v1091 = vpop.xlane.xlu0 %1090
      %v1092 = vsel %vm1088, %v1081, 0.0
      %1093 = vadd.xlane.f32.xlu0 %v1092
      %v1094 = vpop.xlane.xlu0 %1093
      %v1095 = vsel %vm1088, %v1082, 0.0
      %1096 = vadd.xlane.f32.xlu0 %v1095
      %v1097 = vpop.xlane.xlu0 %1096
      %v1098 = vsel %vm1088, %v1083, 0.0
      %1099 = vadd.xlane.f32.xlu0 %v1098
      %v1100 = vpop.xlane.xlu0 %1099
      %v1101 = vsel %vm1088, %v1084, 0.0
      %1102 = vadd.xlane.f32.xlu0 %v1101
      %v1103 = vpop.xlane.xlu0 %1102
      %v1104 = vsel %vm1088, %v1085, 0.0
      %1105 = vadd.xlane.f32.xlu0 %v1104
      %v1106 = vpop.xlane.xlu0 %1105
      %v1107 = vsel %vm1088, %v1086, 0.0
      %1108 = vadd.xlane.f32.xlu0 %v1107
      %v1109 = vpop.xlane.xlu0 %1108
      %v1110 = vsel %vm1088, %v1087, 0.0
      %1111 = vadd.xlane.f32.xlu0 %v1110
      %v1112 = vpop.xlane.xlu0 %1111
      %v1113 = vmul.f32 %v1091, 0.5
      %v1114 = vmul.f32 %v1094, 0.5
      %v1115 = vmul.f32 %v1097, 0.5
      %v1116 = vmul.f32 %v1100, 0.5
      %v1117 = vmul.f32 %v1103, 0.5
      %v1118 = vmul.f32 %v1106, 0.5
      %v1119 = vmul.f32 %v1109, 0.5
      %v1120 = vmul.f32 %v1112, 0.5
      %v1121 = vpack.c.bf16 %v1049, %v1046
      %v1122 = vpack.c.bf16 %v1057, %v1054
      %v1123 = vpack.c.bf16 %v1065, %v1062
      %v1124 = vpack.c.bf16 %v1073, %v1070
      %v1129 = vunpack.c.l.b16 %v1076
      %v1130 = vunpack.c.l.b16 %v1077
      %v1131 = vunpack.c.l.b16 %v1078
      %v1132 = vunpack.c.l.b16 %v1079
      %v1133 = vpack.c.b16 %v1130, %v1129
      %v1134 = vpack.c.b16 %v1132, %v1131
      %v1138 = vsel %vm1088, %v1121, 0
      %v1141 = vsel %vm1088, %v1122, 0
      %v1144 = vsel %vm1088, %v1123, 0
      %v1147 = vsel %vm1088, %v1124, 0
      %1149 = vmatprep.subr.bf16.mxu0 0
      %1150 = vmatpush1.bf16.msra.mxu0 %v1133
      %1151 = vmatprep.subr.bf16.mxu0 0
      %1152 = vmatpush1.bf16.msra.mxu0 %v1134
      %1153 = vmatprep.subr.bf16.mxu0 0
      %1154 = vmatpush1.bf16.msra.mxu0 0
      %1155 = vmatprep.subr.bf16.mxu0 0
      %1156 = vmatpush1.bf16.msra.mxu0 0
      %1157 = vmatprep.subr.bf16.mxu0 0
      %1158 = vmatpush1.bf16.msra.mxu0 0
      %1159 = vmatprep.subr.bf16.mxu0 0
      %1160 = vmatpush1.bf16.msra.mxu0 0
      %1161 = vmatprep.subr.bf16.mxu0 0
      %1162 = vmatpush1.bf16.msra.mxu0 0
      %1163 = vmatprep.subr.bf16.mxu0 0
      %1164 = vmatpush1.bf16.msra.mxu0 0
      %1165 = vmatprep.subr.bf16.mxu0 0
      %1166 = vmatpush1.bf16.msra.mxu0 0
      %1167 = vmatprep.subr.bf16.mxu0 0
      %1168 = vmatpush1.bf16.msra.mxu0 0
      %1169 = vmatprep.subr.bf16.mxu0 0
      %1170 = vmatpush1.bf16.msra.mxu0 0
      %1171 = vmatprep.subr.bf16.mxu0 0
      %1172 = vmatpush1.bf16.msra.mxu0 0
      %1173 = vmatprep.subr.bf16.mxu0 0
      %1174 = vmatpush1.bf16.msra.mxu0 0
      %1175 = vmatprep.subr.bf16.mxu0 0
      %1176 = vmatpush1.bf16.msra.mxu0 0
      %1177 = vmatprep.subr.bf16.mxu0 0
      %1178 = vmatpush1.bf16.msra.mxu0 0
      %1179 = vmatprep.subr.bf16.mxu0 0
      %1180 = vmatpush1.bf16.msra.mxu0 0
      %1181 = vmatprep.mubr.bf16.mxu0 0
      %1182 = vmatmul.mubr.bf16.gmra.mrb[0].mxu0 %v1138
      %v1183 = vpop.f32.mrb[0].mxu0
      %v1184 = vadd.f32 0.0, %v1183
      %v1185 = vpop.f32.mrb[0].mxu0
      %v1186 = vpop.f32.mrb[0].mxu0
      %v1187 = vadd.f32 0.0, %v1186
      %v1188 = vpop.f32.mrb[0].mxu0
      %1189 = vmatprep.mubr.bf16.mxu0 0
      %1190 = vmatmul.mubr.bf16.gmra.mrb[0].mxu0 %v1141
      %v1191 = vpop.f32.mrb[0].mxu0
      %v1192 = vadd.f32 0.0, %v1191
      %v1193 = vpop.f32.mrb[0].mxu0
      %v1194 = vpop.f32.mrb[0].mxu0
      %v1195 = vadd.f32 0.0, %v1194
      %v1196 = vpop.f32.mrb[0].mxu0
      %1197 = vmatprep.mubr.bf16.mxu0 0
      %1198 = vmatmul.mubr.bf16.gmra.mrb[0].mxu0 %v1144
      %v1199 = vpop.f32.mrb[0].mxu0
      %v1200 = vadd.f32 0.0, %v1199
      %v1201 = vpop.f32.mrb[0].mxu0
      %v1202 = vpop.f32.mrb[0].mxu0
      %v1203 = vadd.f32 0.0, %v1202
      %v1204 = vpop.f32.mrb[0].mxu0
      %1205 = vmatprep.mubr.bf16.mxu0 0
      %1206 = vmatmul.mubr.bf16.gmra.mrb[0].mxu0 %v1147
      %v1207 = vpop.f32.mrb[0].mxu0
      %v1208 = vadd.f32 0.0, %v1207
      %v1209 = vpop.f32.mrb[0].mxu0
      %v1210 = vpop.f32.mrb[0].mxu0
      %v1211 = vadd.f32 0.0, %v1210
      %v1212 = vpop.f32.mrb[0].mxu0
      %1213 = vdwg.mxu0
      %v1214 = vsub.f32 %v1184, %v1113
      %v1215 = vsub.f32 %v1187, %v1114
      %v1216 = vsub.f32 %v1192, %v1115
      %v1217 = vsub.f32 %v1195, %v1116
      %v1218 = vsub.f32 %v1200, %v1117
      %v1219 = vsub.f32 %v1203, %v1118
      %v1220 = vsub.f32 %v1208, %v1119
      %v1221 = vsub.f32 %v1211, %v1120
      %v1222 = vmul.f32 %v1214, 1.442695
      %v1223 = vpow.pop %v1222
      %v1224 = vmul.f32 %v1215, 1.442695
      %v1225 = vpow.pop %v1224
      %v1226 = vmul.f32 %v1216, 1.442695
      %v1227 = vpow.pop %v1226
      %v1228 = vmul.f32 %v1217, 1.442695
      %v1229 = vpow.pop %v1228
      %v1230 = vmul.f32 %v1218, 1.442695
      %v1231 = vpow.pop %v1230
      %v1232 = vmul.f32 %v1219, 1.442695
      %v1233 = vpow.pop %v1232
      %v1234 = vmul.f32 %v1220, 1.442695
      %v1235 = vpow.pop %v1234
      %v1236 = vmul.f32 %v1221, 1.442695
      %v1237 = vpow.pop %v1236
      %v1238 = vmul.f32 %v1223, 0.25
      %v1239 = vmul.f32 %v1225, 0.25
      %v1240 = vmul.f32 %v1227, 0.25
      %v1241 = vmul.f32 %v1229, 0.25
      %v1242 = vmul.f32 %v1231, 0.25
      %v1243 = vmul.f32 %v1233, 0.25
      %v1244 = vmul.f32 %v1235, 0.25
      %v1245 = vmul.f32 %v1237, 0.25
      %1254 = vrot.lane.b32.xlu0 %v1080, 96
      %v1255 = vpop.permute.xlu0 %1254
      %1256 = vrot.lane.b32.xlu0 %v1081, 96
      %v1257 = vpop.permute.xlu0 %1256
      %1258 = vrot.lane.b32.xlu0 %v1082, 96
      %v1259 = vpop.permute.xlu0 %1258
      %1260 = vrot.lane.b32.xlu0 %v1083, 96
      %v1261 = vpop.permute.xlu0 %1260
      %1262 = vrot.lane.b32.xlu0 %v1084, 96
      %v1263 = vpop.permute.xlu0 %1262
      %1264 = vrot.lane.b32.xlu0 %v1085, 96
      %v1265 = vpop.permute.xlu0 %1264
      %1266 = vrot.lane.b32.xlu0 %v1086, 96
      %v1267 = vpop.permute.xlu0 %1266
      %1268 = vrot.lane.b32.xlu0 %v1087, 96
      %v1269 = vpop.permute.xlu0 %1268
      %v1278 = vsel %vm1088, %v1255, 0.0
      %1279 = vadd.xlane.f32.xlu0 %v1278
      %v1280 = vpop.xlane.xlu0 %1279
      %v1281 = vsel %vm1088, %v1257, 0.0
      %1282 = vadd.xlane.f32.xlu0 %v1281
      %v1283 = vpop.xlane.xlu0 %1282
      %v1284 = vsel %vm1088, %v1259, 0.0
      %1285 = vadd.xlane.f32.xlu0 %v1284
      %v1286 = vpop.xlane.xlu0 %1285
      %v1287 = vsel %vm1088, %v1261, 0.0
      %1288 = vadd.xlane.f32.xlu0 %v1287
      %v1289 = vpop.xlane.xlu0 %1288
      %v1290 = vsel %vm1088, %v1263, 0.0
      %1291 = vadd.xlane.f32.xlu0 %v1290
      %v1292 = vpop.xlane.xlu0 %1291
      %v1293 = vsel %vm1088, %v1265, 0.0
      %1294 = vadd.xlane.f32.xlu0 %v1293
      %v1295 = vpop.xlane.xlu0 %1294
      %v1296 = vsel %vm1088, %v1267, 0.0
      %1297 = vadd.xlane.f32.xlu0 %v1296
      %v1298 = vpop.xlane.xlu0 %1297
      %v1299 = vsel %vm1088, %v1269, 0.0
      %1300 = vadd.xlane.f32.xlu0 %v1299
      %v1301 = vpop.xlane.xlu0 %1300
      %v1302 = vmul.f32 %v1280, 0.5
      %v1303 = vmul.f32 %v1283, 0.5
      %v1304 = vmul.f32 %v1286, 0.5
      %v1305 = vmul.f32 %v1289, 0.5
      %v1306 = vmul.f32 %v1292, 0.5
      %v1307 = vmul.f32 %v1295, 0.5
      %v1308 = vmul.f32 %v1298, 0.5
      %v1309 = vmul.f32 %v1301, 0.5
      %1314 = vrot.lane.b32.xlu0 %v1121, 96
      %v1315 = vpop.permute.xlu0 %1314
      %1316 = vrot.lane.b32.xlu0 %v1122, 96
      %v1317 = vpop.permute.xlu0 %1316
      %1318 = vrot.lane.b32.xlu0 %v1123, 96
      %v1319 = vpop.permute.xlu0 %1318
      %1320 = vrot.lane.b32.xlu0 %v1124, 96
      %v1321 = vpop.permute.xlu0 %1320
      %v1323 = vsel %vm1088, %v1315, 0
      %v1326 = vsel %vm1088, %v1317, 0
      %v1329 = vsel %vm1088, %v1319, 0
      %v1332 = vsel %vm1088, %v1321, 0
      %1334 = vmatprep.subr.bf16.mxu0 0
      %1335 = vmatpush1.bf16.msra.mxu0 %v1133
      %1336 = vmatprep.subr.bf16.mxu0 0
      %1337 = vmatpush1.bf16.msra.mxu0 %v1134
      %1338 = vmatprep.subr.bf16.mxu0 0
      %1339 = vmatpush1.bf16.msra.mxu0 0
      %1340 = vmatprep.subr.bf16.mxu0 0
      %1341 = vmatpush1.bf16.msra.mxu0 0
      %1342 = vmatprep.subr.bf16.mxu0 0
      %1343 = vmatpush1.bf16.msra.mxu0 0
      %1344 = vmatprep.subr.bf16.mxu0 0
      %1345 = vmatpush1.bf16.msra.mxu0 0
      %1346 = vmatprep.subr.bf16.mxu0 0
      %1347 = vmatpush1.bf16.msra.mxu0 0
      %1348 = vmatprep.subr.bf16.mxu0 0
      %1349 = vmatpush1.bf16.msra.mxu0 0
      %1350 = vmatprep.subr.bf16.mxu0 0
      %1351 = vmatpush1.bf16.msra.mxu0 0
      %1352 = vmatprep.subr.bf16.mxu0 0
      %1353 = vmatpush1.bf16.msra.mxu0 0
      %1354 = vmatprep.subr.bf16.mxu0 0
      %1355 = vmatpush1.bf16.msra.mxu0 0
      %1356 = vmatprep.subr.bf16.mxu0 0
      %1357 = vmatpush1.bf16.msra.mxu0 0
      %1358 = vmatprep.subr.bf16.mxu0 0
      %1359 = vmatpush1.bf16.msra.mxu0 0
      %1360 = vmatprep.subr.bf16.mxu0 0
      %1361 = vmatpush1.bf16.msra.mxu0 0
      %1362 = vmatprep.subr.bf16.mxu0 0
      %1363 = vmatpush1.bf16.msra.mxu0 0
      %1364 = vmatprep.subr.bf16.mxu0 0
      %1365 = vmatpush1.bf16.msra.mxu0 0
      %1366 = vmatprep.mubr.bf16.mxu0 0
      %1367 = vmatmul.mubr.bf16.gmra.mrb[0].mxu0 %v1323
      %v1368 = vpop.f32.mrb[0].mxu0
      %v1369 = vadd.f32 0.0, %v1368
      %v1370 = vpop.f32.mrb[0].mxu0
      %v1371 = vpop.f32.mrb[0].mxu0
      %v1372 = vadd.f32 0.0, %v1371
      %v1373 = vpop.f32.mrb[0].mxu0
      %1374 = vmatprep.mubr.bf16.mxu0 0
      %1375 = vmatmul.mubr.bf16.gmra.mrb[0].mxu0 %v1326
      %v1376 = vpop.f32.mrb[0].mxu0
      %v1377 = vadd.f32 0.0, %v1376
      %v1378 = vpop.f32.mrb[0].mxu0
      %v1379 = vpop.f32.mrb[0].mxu0
      %v1380 = vadd.f32 0.0, %v1379
      %v1381 = vpop.f32.mrb[0].mxu0
      %1382 = vmatprep.mubr.bf16.mxu0 0
      %1383 = vmatmul.mubr.bf16.gmra.mrb[0].mxu0 %v1329
      %v1384 = vpop.f32.mrb[0].mxu0
      %v1385 = vadd.f32 0.0, %v1384
      %v1386 = vpop.f32.mrb[0].mxu0
      %v1387 = vpop.f32.mrb[0].mxu0
      %v1388 = vadd.f32 0.0, %v1387
      %v1389 = vpop.f32.mrb[0].mxu0
      %1390 = vmatprep.mubr.bf16.mxu0 0
      %1391 = vmatmul.mubr.bf16.gmra.mrb[0].mxu0 %v1332
      %v1392 = vpop.f32.mrb[0].mxu0
      %v1393 = vadd.f32 0.0, %v1392
      %v1394 = vpop.f32.mrb[0].mxu0
      %v1395 = vpop.f32.mrb[0].mxu0
      %v1396 = vadd.f32 0.0, %v1395
      %v1397 = vpop.f32.mrb[0].mxu0
      %1398 = vdwg.mxu0
      %v1399 = vsub.f32 %v1369, %v1302
      %v1400 = vsub.f32 %v1372, %v1303
      %v1401 = vsub.f32 %v1377, %v1304
      %v1402 = vsub.f32 %v1380, %v1305
      %v1403 = vsub.f32 %v1385, %v1306
      %v1404 = vsub.f32 %v1388, %v1307
      %v1405 = vsub.f32 %v1393, %v1308
      %v1406 = vsub.f32 %v1396, %v1309
      %v1407 = vmul.f32 %v1399, 1.442695
      %v1408 = vpow.pop %v1407
      %v1409 = vmul.f32 %v1400, 1.442695
      %v1410 = vpow.pop %v1409
      %v1411 = vmul.f32 %v1401, 1.442695
      %v1412 = vpow.pop %v1411
      %v1413 = vmul.f32 %v1402, 1.442695
      %v1414 = vpow.pop %v1413
      %v1415 = vmul.f32 %v1403, 1.442695
      %v1416 = vpow.pop %v1415
      %v1417 = vmul.f32 %v1404, 1.442695
      %v1418 = vpow.pop %v1417
      %v1419 = vmul.f32 %v1405, 1.442695
      %v1420 = vpow.pop %v1419
      %v1421 = vmul.f32 %v1406, 1.442695
      %v1422 = vpow.pop %v1421
      %v1423 = vmul.f32 %v1408, 0.25
      %v1424 = vmul.f32 %v1410, 0.25
      %v1425 = vmul.f32 %v1412, 0.25
      %v1426 = vmul.f32 %v1414, 0.25
      %v1427 = vmul.f32 %v1416, 0.25
      %v1428 = vmul.f32 %v1418, 0.25
      %v1429 = vmul.f32 %v1420, 0.25
      %v1430 = vmul.f32 %v1422, 0.25
      %vm1431 = vcmask 130048
      %1432 = vst.msk [vmem:[%s391] sm:$0xff] %vm1431, %v1423
      %1433 = vst.msk [vmem:[%s391 + $0x8] sm:$0xff] %vm1431, %v1424
      %1434 = vst.msk [vmem:[%s391 + $0x10] sm:$0xff] %vm1431, %v1425
      %1435 = vst.msk [vmem:[%s391 + $0x18] sm:$0xff] %vm1431, %v1426
      %1436 = vst.msk [vmem:[%s391 + $0x20] sm:$0xff] %vm1431, %v1427
      %1437 = vst.msk [vmem:[%s391 + $0x28] sm:$0xff] %vm1431, %v1428
      %1438 = vst.msk [vmem:[%s391 + $0x30] sm:$0xff] %vm1431, %v1429
      %1439 = vst.msk [vmem:[%s391 + $0x38] sm:$0xff] %vm1431, %v1430
      %v1440 = vunpack.c.l.b16 %v1121
      %v1441 = vunpack.c.h.b16 %v1121
      %v1442 = vunpack.c.l.b16 %v1122
      %v1443 = vunpack.c.h.b16 %v1122
      %v1444 = vunpack.c.l.b16 %v1123
      %v1445 = vunpack.c.h.b16 %v1123
      %v1446 = vunpack.c.l.b16 %v1124
      %v1447 = vunpack.c.h.b16 %v1124
      %v1448 = vpack.c.b16 %v1440, %v1440
      %v1449 = vpack.c.b16 %v1441, %v1441
      %v1450 = vpack.c.b16 %v1442, %v1442
      %v1451 = vpack.c.b16 %v1443, %v1443
      %v1452 = vpack.c.b16 %v1444, %v1444
      %v1453 = vpack.c.b16 %v1445, %v1445
      %v1454 = vpack.c.b16 %v1446, %v1446
      %v1455 = vpack.c.b16 %v1447, %v1447
      %1456 = vrot.lane.b32.xlu0 %v1448, 64
      %v1457 = vpop.permute.xlu0 %1456
      %1458 = vrot.lane.b32.xlu0 %v1449, 64
      %v1459 = vpop.permute.xlu0 %1458
      %1460 = vrot.lane.b32.xlu0 %v1450, 64
      %v1461 = vpop.permute.xlu0 %1460
      %1462 = vrot.lane.b32.xlu0 %v1451, 64
      %v1463 = vpop.permute.xlu0 %1462
      %1464 = vrot.lane.b32.xlu0 %v1452, 64
      %v1465 = vpop.permute.xlu0 %1464
      %1466 = vrot.lane.b32.xlu0 %v1453, 64
      %v1467 = vpop.permute.xlu0 %1466
      %1468 = vrot.lane.b32.xlu0 %v1454, 64
      %v1469 = vpop.permute.xlu0 %1468
      %1470 = vrot.lane.b32.xlu0 %v1455, 64
      %v1471 = vpop.permute.xlu0 %1470
      %vm1480 = vcmask 257024
      %1481 = vst.msk [vmem:[%s401] sm:$0xf] %vm1480, %v1457
      %1482 = vst.msk [vmem:[%s401 + $0x4] sm:$0xf] %vm1480, %v1459
      %1483 = vst.msk [vmem:[%s401 + $0x8] sm:$0xf] %vm1480, %v1461
      %1484 = vst.msk [vmem:[%s401 + $0xc] sm:$0xf] %vm1480, %v1463
      %1485 = vst.msk [vmem:[%s401 + $0x10] sm:$0xf] %vm1480, %v1465
      %1486 = vst.msk [vmem:[%s401 + $0x14] sm:$0xf] %vm1480, %v1467
      %1487 = vst.msk [vmem:[%s401 + $0x18] sm:$0xf] %vm1480, %v1469
      %1488 = vst.msk [vmem:[%s401 + $0x1c] sm:$0xf] %vm1480, %v1471
      %p1489 = scmp.eq.s32.totalorder %s26, 0
      // Predicated region
      $region45: #{_lambda_.5} parent=43 // pred_check
        %p1490 = pneg %p1489
      $region46: #{_lambda_.5} parent=43 // pred_check_branch
        %1492 = sbr.rel (%p1490) target = $region48
      $region47: #{_lambda_.5} parent=43 // pred_region
        %vm1493 = vcmask 122880
        %1494 = vst.msk [vmem:[%s405] sm:$0x1] %vm1493, 0.0
        %1495 = vst.msk [vmem:[%s410] sm:$0xff] %vm1088, 0.0
        %1496 = vst.msk [vmem:[%s410 + $0x8] sm:$0xff] %vm1088, 0.0
      $region48: #{_lambda_.5} parent=43 // pred_fallthru
        _
      %v1497 = vld [vmem:[%s405] sm:$0x1]
      %v1498 = vsel %vm1431, %v1238, 0.0
      %v1499 = vsel %vm1431, %v1239, 0.0
      %v1500 = vadd.f32 %v1498, %v1499
      %v1501 = vsel %vm1431, %v1240, 0.0
      %v1502 = vadd.f32 %v1500, %v1501
      %v1503 = vsel %vm1431, %v1241, 0.0
      %v1504 = vadd.f32 %v1502, %v1503
      %v1505 = vsel %vm1431, %v1242, 0.0
      %v1506 = vadd.f32 %v1504, %v1505
      %v1507 = vsel %vm1431, %v1243, 0.0
      %v1508 = vadd.f32 %v1506, %v1507
      %v1509 = vsel %vm1431, %v1244, 0.0
      %v1510 = vadd.f32 %v1508, %v1509
      %v1511 = vsel %vm1431, %v1245, 0.0
      %v1512 = vadd.f32 %v1510, %v1511
      %v1513 = vrot.slane %v1512, 4
      %v1514 = vadd.f32 %v1512, %v1513
      %v1515 = vrot.slane %v1514, 2
      %v1516 = vadd.f32 %v1514, %v1515
      %v1517 = vrot.slane %v1516, 1
      %v1518 = vadd.f32 %v1516, %v1517
      %v1519 = vadd.f32 %v1497, %v1518
      %vm1520 = vcmask 122880
      %1521 = vst.msk [vmem:[%s405] sm:$0x1] %vm1520, %v1519
      %v1522 = vld [vmem:[%s410] sm:$0xff]
      %v1523 = vld [vmem:[%s410 + $0x8] sm:$0xff]
      %v1524 = vpack.c.bf16 %v1239, %v1238
      %v1525 = vpack.c.bf16 %v1241, %v1240
      %v1526 = vpack.c.bf16 %v1243, %v1242
      %v1527 = vpack.c.bf16 %v1245, %v1244
      %1528 = vxpose.xlu0.c.b16.start [1/8] %v1524, 128
      %1529 = vxpose.xlu0.c.b16.cont [2/8] %v1525, 128
      %1530 = vxpose.xlu0.c.b16.cont [3/8] %v1526, 128
      %1531 = vxpose.xlu0.c.b16.cont [4/8] %v1527, 128
      %1532 = vxpose.xlu0.c.b16.cont [5/8] 0, 128
      %1533 = vxpose.xlu0.c.b16.cont [6/8] 0, 128
      %1534 = vxpose.xlu0.c.b16.cont [7/8] 0, 128
      %1535 = vxpose.xlu0.c.b16.end [8/8] 0, 128
      %v1536 = vpop.trf.xlu0
      %v1537 = vpop.trf.xlu0
      %v1538 = vpop.trf.xlu0
      %v1539 = vpop.trf.xlu0
      %v1540 = vpop.trf.xlu0
      %v1541 = vpop.trf.xlu0
      %v1542 = vpop.trf.xlu0
      %v1543 = vpop.trf.xlu0
      %1544 = vrot.lane.b32.xlu0 %v1121, 64
      %v1545 = vpop.permute.xlu0 %1544
      %1546 = vrot.lane.b32.xlu0 %v1122, 64
      %v1547 = vpop.permute.xlu0 %1546
      %1548 = vrot.lane.b32.xlu0 %v1123, 64
      %v1549 = vpop.permute.xlu0 %1548
      %1550 = vrot.lane.b32.xlu0 %v1124, 64
      %v1551 = vpop.permute.xlu0 %1550
      %v1557 = vsel %vm450, %v1536, 0
      %1559 = vmatprep.subr.bf16.mxu0 0
      %1560 = vmatpush1.bf16.msra.mxu0 %v1545
      %1561 = vmatprep.subr.bf16.mxu0 0
      %1562 = vmatpush1.bf16.msra.mxu0 %v1547
      %1563 = vmatprep.subr.bf16.mxu0 0
      %1564 = vmatpush1.bf16.msra.mxu0 %v1549
      %1565 = vmatprep.subr.bf16.mxu0 0
      %1566 = vmatpush1.bf16.msra.mxu0 %v1551
      %1567 = vmatprep.subr.bf16.mxu0 0
      %1568 = vmatpush1.bf16.msra.mxu0 0
      %1569 = vmatprep.subr.bf16.mxu0 0
      %1570 = vmatpush1.bf16.msra.mxu0 0
      %1571 = vmatprep.subr.bf16.mxu0 0
      %1572 = vmatpush1.bf16.msra.mxu0 0
      %1573 = vmatprep.subr.bf16.mxu0 0
      %1574 = vmatpush1.bf16.msra.mxu0 0
      %1575 = vmatprep.subr.bf16.mxu0 0
      %1576 = vmatpush1.bf16.msra.mxu0 0
      %1577 = vmatprep.subr.bf16.mxu0 0
      %1578 = vmatpush1.bf16.msra.mxu0 0
      %1579 = vmatprep.subr.bf16.mxu0 0
      %1580 = vmatpush1.bf16.msra.mxu0 0
      %1581 = vmatprep.subr.bf16.mxu0 0
      %1582 = vmatpush1.bf16.msra.mxu0 0
      %1583 = vmatprep.subr.bf16.mxu0 0
      %1584 = vmatpush1.bf16.msra.mxu0 0
      %1585 = vmatprep.subr.bf16.mxu0 0
      %1586 = vmatpush1.bf16.msra.mxu0 0
      %1587 = vmatprep.subr.bf16.mxu0 0
      %1588 = vmatpush1.bf16.msra.mxu0 0
      %1589 = vmatprep.subr.bf16.mxu0 0
      %1590 = vmatpush1.bf16.msra.mxu0 0
      %1591 = vmatprep.mubr.bf16.mxu0 0
      %1592 = vmatmul.mubr.bf16.gmra.mrb[0].mxu0 %v1557
      %v1593 = vpop.f32.mrb[0].mxu0
      %v1594 = vadd.f32 0.0, %v1593
      %v1595 = vpop.f32.mrb[0].mxu0
      %v1596 = vpop.f32.mrb[0].mxu0
      %v1597 = vadd.f32 0.0, %v1596
      %v1598 = vpop.f32.mrb[0].mxu0
      %1599 = vdwg.mxu0
      %v1600 = vadd.f32 %v1522, %v1594
      %v1601 = vadd.f32 %v1523, %v1597
      %1602 = vst.msk [vmem:[%s410] sm:$0xff] %vm1088, %v1600
      %1603 = vst.msk [vmem:[%s410 + $0x8] sm:$0xff] %vm1088, %v1601
      %s1604 = smul.u32 8, %s26
      %p1605 = scmp.lt.s32.totalorder %s25, 1
      %s1606 = scalar_select %p1605, %s25, 1
      %p1607 = scmp.lt.s32.totalorder %s1604, 7
      %s1608 = scalar_select %p1607, %s1604, 7
      %s1609 = smul.addr %s1606, 8
      %s1610 = sadd.s32 %s1608, %s1609
      %s1611 = smul.addr %s1610, 8
      %s1612 = scalar_lea.vmem %s6, %s1611
      %s1613 = smul.u32 8, %s26
      %p1614 = scmp.lt.s32.totalorder %s25, 1
      %s1615 = scalar_select %p1614, %s25, 1
      %p1616 = scmp.lt.s32.totalorder %s1613, 7
      %s1617 = scalar_select %p1616, %s1613, 7
      %s1618 = smul.addr %s1615, 8
      %s1619 = sadd.s32 %s1617, %s1618
      %s1620 = smul.addr %s1619, 4
      %s1621 = scalar_lea.vmem %s7, %s1620
      %p1622 = scmp.lt.s32.totalorder %s25, 1
      %s1623 = scalar_select %p1622, %s25, 1
      %s1624 = scalar_lea.vmem %s8, %s1623
      %p1625 = scmp.lt.s32.totalorder %s25, 1
      %s1626 = scalar_select %p1625, %s25, 1
      %s1627 = smul.addr %s1626, 2
      %s1628 = smul.addr %s1627, 8
      %s1629 = scalar_lea.vmem %s9, %s1628
      // Predicated region
      $region49: #{_lambda_.5} parent=43 // pred_check
        %p1630 = pneg %p186
      $region50: #{_lambda_.5} parent=43 // pred_check_branch
        %1632 = sbr.rel (%p1630) target = $region52
      $region51: #{_lambda_.5} parent=43 // pred_region
        %s1633 = smul.u32 8, %s26
      $region52: #{_lambda_.5} parent=43 // pred_fallthru
        _
      // Predicated region
      $region53: #{_lambda_.5} parent=43 // pred_check
        %p1634 = pneg %p214
      $region54: #{_lambda_.5} parent=43 // pred_check_branch
        %1636 = sbr.rel (%p1634) target = $region56
      $region55: #{_lambda_.5} parent=43 // pred_region
        %s1637 = smul.u32 8, %s26
      $region56: #{_lambda_.5} parent=43 // pred_fallthru
        _
      // Predicated region
      $region57: #{_lambda_.5} parent=43 // pred_check
        %p1638 = pneg %p240
      $region58: #{_lambda_.5} parent=43 // pred_check_branch
        %1640 = sbr.rel (%p1638) target = $region60
      $region59: #{_lambda_.5} parent=43 // pred_region
        _
      $region60: #{_lambda_.5} parent=43 // pred_fallthru
        _
      // Predicated region
      $region61: #{_lambda_.5} parent=43 // pred_check
        %p1641 = pneg %p266
      $region62: #{_lambda_.5} parent=43 // pred_check_branch
        %1643 = sbr.rel (%p1641) target = $region64
      $region63: #{_lambda_.5} parent=43 // pred_region
        _
      $region64: #{_lambda_.5} parent=43 // pred_fallthru
        _
    $region44: #{_lambda_.5} parent=5 // pred_fallthru
      _
    %p1644 = scmp.le.s32.totalorder 2, %s16
    // Predicated region
    $region65: #{_lambda_.5} parent=5 // pred_check
      %p1645 = pneg %p1644
    $region66: #{_lambda_.5} parent=5 // pred_check_branch
      %1647 = sbr.rel (%p1645) target = $region68
    $region67: #{_lambda_.5} parent=5 // pred_region
      %s1648 = ssub.s32 %s16, 2
      // Predicated region
      $region69: #{_lambda_.5} parent=67 // pred_check
        %p1649 = pneg %p192
      $region70: #{_lambda_.5} parent=67 // pred_check_branch
        %1651 = sbr.rel (%p1649) target = $region72
      $region71: #{_lambda_.5} parent=67 // pred_region
        %s1652 = smul.u32 8, %s28
        %p1653 = scmp.lt.s32.totalorder %s27, 1
        %s1654 = scalar_select %p1653, %s27, 1
        %p1655 = scmp.lt.s32.totalorder %s1652, 7
        %s1656 = scalar_select %p1655, %s1652, 7
        %s1657 = smul.addr %s1654, 8
        %s1658 = sadd.s32 %s1656, %s1657
        %s1659 = smul.addr %s1658, 8
        %s1660 = scalar_lea.vmem %s6, %s1659
      $region72: #{_lambda_.5} parent=67 // pred_fallthru
        _
      // Predicated region
      $region73: #{_lambda_.5} parent=67 // pred_check
        %p1661 = pneg %p220
      $region74: #{_lambda_.5} parent=67 // pred_check_branch
        %1663 = sbr.rel (%p1661) target = $region76
      $region75: #{_lambda_.5} parent=67 // pred_region
        %s1664 = smul.u32 8, %s28
        %p1665 = scmp.lt.s32.totalorder %s27, 1
        %s1666 = scalar_select %p1665, %s27, 1
        %p1667 = scmp.lt.s32.totalorder %s1664, 7
        %s1668 = scalar_select %p1667, %s1664, 7
        %s1669 = smul.addr %s1666, 8
        %s1670 = sadd.s32 %s1668, %s1669
        %s1671 = smul.addr %s1670, 4
        %s1672 = scalar_lea.vmem %s7, %s1671
      $region76: #{_lambda_.5} parent=67 // pred_fallthru
        _
      // Predicated region
      $region77: #{_lambda_.5} parent=67 // pred_check
        %p1673 = pneg %p246
      $region78: #{_lambda_.5} parent=67 // pred_check_branch
        %1675 = sbr.rel (%p1673) target = $region80
      $region79: #{_lambda_.5} parent=67 // pred_region
        %p1676 = scmp.lt.s32.totalorder %s27, 1
        %s1677 = scalar_select %p1676, %s27, 1
        %s1678 = scalar_lea.vmem %s8, %s1677
      $region80: #{_lambda_.5} parent=67 // pred_fallthru
        _
      // Predicated region
      $region81: #{_lambda_.5} parent=67 // pred_check
        %p1679 = pneg %p272
      $region82: #{_lambda_.5} parent=67 // pred_check_branch
        %1681 = sbr.rel (%p1679) target = $region84
      $region83: #{_lambda_.5} parent=67 // pred_region
        %p1682 = scmp.lt.s32.totalorder %s27, 1
        %s1683 = scalar_select %p1682, %s27, 1
        %s1684 = smul.addr %s1683, 2
        %s1685 = smul.addr %s1684, 8
        %s1686 = scalar_lea.vmem %s9, %s1685
      $region84: #{_lambda_.5} parent=67 // pred_fallthru
        _
    $region68: #{_lambda_.5} parent=5 // pred_fallthru
      _
  $region6: #{_lambda_.5} parent=0 // loop_footer
    %s20 = sadd.s32 1, %s16
  $region7: #{_lambda_.5} parent=0 // loop_footer_branch
    %15 = sbr.rel target = $region3
  $region8: #{_lambda_.5} parent=0 // loop_exit
    _

// kernel: _lambda_.7
$region0: #{_lambda_.7}
  #allocation0 [shape = 'u32[]', space=smem, size = 0x4, offset = 0x4, fixed_abs, tag = 'smem constant byte address 0x4 - core index']
  #allocation1 [shape = 'u32[144,128]{1,0:T(1,128)}', space=vmem, size = 0x12000, scoped, tag = 'internal scratch']
  %s0 = inlined_call_operand.vmem [shape: bf16[2,288,16], index: 0, kind: input, shape index: {}]
  %s1 = inlined_call_operand.vmem [shape: f32[288,1], index: 1, kind: input, shape index: {}]
  %s2 = inlined_call_operand.vmem [shape: f32[288,1], index: 2, kind: input, shape index: {}]
  %s3 = inlined_call_operand.vmem [shape: bf16[288,96], index: 3, kind: input, shape index: {}]
  %s4 = inlined_call_operand.vmem [shape: f32[1,96], index: 4, kind: input, shape index: {}]
  %s5 = inlined_call_operand.vmem [shape: bf16[32,16], index: 5, kind: input, shape index: {}]
  %s6 = inlined_call_operand.vmem [shape: f32[2,16,16], index: 6, kind: output, shape index: {0}]
  %s7 = inlined_call_operand.vmem [shape: bf16[2,16,32], index: 7, kind: output, shape index: {1}]
  %s8 = inlined_call_operand.vmem [shape: f32[2,1,16], index: 8, kind: output, shape index: {2}]
  %s9 = inlined_call_operand.vmem [shape: f32[2,16,32], index: 9, kind: output, shape index: {3}]
  %10 = xla_tuple %s6, %s7, %s8, %s9
  %s11 = sld [smem:[#allocation0]]
  $region85: #{_lambda_.7} parent=0
    _
  %s13 = ssub.s32 1, %s11
  %s14 = scalar_select 0, %s13, %s11
  loop: start=0, step=1, limit=4
  $region2: #{_lambda_.7} parent=0 // loop_pre_header
    _
  $region3: #{_lambda_.7} parent=0 // loop_header
    %s16 = sphi 0, %s20
    %p17 = scmp.ge.s32.totalorder %s16, 4
    %s23 = sphi 0, %s35
    %s24 = sphi 0, %s31
    %s25 = sphi 0, %s23
    %s26 = sphi 0, %s24
    %s27 = sphi 0, %s25
    %s28 = sphi 0, %s26
    %s40 = sphi 0, %s42
    %s43 = sphi 0, %s40
    %s44 = sphi 0, %s43
    %s60 = sphi 0, %s44
    %s64 = sphi 0, %s64
    %s66 = sphi 0, %s64
    %s67 = sphi 0, %s66
    %s81 = sphi 0, %s67
    %s85 = sphi 0, %s85
    %s87 = sphi 0, %s85
    %s88 = sphi 0, %s87
    %s102 = sphi 0, %s88
    %s106 = sphi 0, %s106
    %s108 = sphi 0, %s106
    %s109 = sphi 0, %s108
    %s123 = sphi 0, %s109
    %s127 = sphi 0, %s127
    %s129 = sphi 0, %s127
    %s130 = sphi 0, %s129
    %s144 = sphi 0, %s130
    %s148 = sphi 0, %s148
    %s150 = sphi 0, %s148
    %s151 = sphi 0, %s150
    %s165 = sphi 0, %s151
    %s173 = sphi 0, %s175
    %s176 = sphi 0, %s173
    %s177 = sphi 0, %s176
    %s193 = sphi 0, %s177
    %s201 = sphi 0, %s203
    %s204 = sphi 0, %s201
    %s205 = sphi 0, %s204
    %s221 = sphi 0, %s205
    %s227 = sphi 0, %s229
    %s230 = sphi 0, %s227
    %s231 = sphi 0, %s230
    %s247 = sphi 0, %s231
    %s253 = sphi 0, %s255
    %s256 = sphi 0, %s253
    %s257 = sphi 0, %s256
    %s273 = sphi 0, %s257
  $region4: #{_lambda_.7} parent=0 // loop_header_branch
    %19 = sbr.rel (%p17) target = $region8
  $region5: #{_lambda_.7} parent=0 // loop_body
    %s21 = ssub.s32 %s16, 1
    %s22 = ssub.s32 %s16, 2
    %s29 = sadd.s32 1, %s24
    %p30 = scmp.ge.s32.totalorder %s29, 1
    %s31 = scalar_select %p30, 0, %s29
    %s32 = sadd.s32 1, %s23
    %s33 = scalar_select %p30, %s32, %s23
    %p34 = scmp.ge.s32.totalorder %s33, 2
    %s35 = scalar_select %p34, 0, %s33
    %s36 = ssub.s32 %s23, %s35
    %s37 = ssub.s32 %s24, %s31
    %s38 = sor.u32 %s36, %s37
    %p39 = scmp.eq.s32.totalorder %s38, 0
    %s41 = sadd.s32 %s40, 1
    %s42 = scalar_select %p39, %s40, %s41
    %p45 = pneg %p39
    %p46 = scmp.eq.s32.totalorder %s16, 1
    %p47 = por %p45, %p46
    %p48 = scmp.ne.s32.totalorder %s40, %s43
    %p49 = scmp.eq.s32.totalorder %s16, 0
    %p50 = por %p48, %p49
    %p51 = scmp.ne.s32.totalorder %s40, %s43
    %p52 = scmp.eq.s32.totalorder %s21, 1
    %p53 = por %p51, %p52
    %p54 = scmp.ne.s32.totalorder %s43, %s44
    %p55 = scmp.eq.s32.totalorder %s21, 0
    %p56 = por %p54, %p55
    %p57 = scmp.ne.s32.totalorder %s43, %s44
    %p58 = scmp.eq.s32.totalorder %s22, 1
    %p59 = por %p57, %p58
    %p61 = scmp.ne.s32.totalorder %s44, %s60
    %p62 = scmp.eq.s32.totalorder %s22, 0
    %p63 = por %p61, %p62
    %s65 = sadd.s32 %s64, 1
    %p68 = scmp.eq.s32.totalorder %s16, 1
    %p69 = scmp.ne.s32.totalorder %s64, %s66
    %p70 = scmp.eq.s32.totalorder %s16, 0
    %p71 = por %p69, %p70
    %p72 = scmp.ne.s32.totalorder %s64, %s66
    %p73 = scmp.eq.s32.totalorder %s21, 1
    %p74 = por %p72, %p73
    %p75 = scmp.ne.s32.totalorder %s66, %s67
    %p76 = scmp.eq.s32.totalorder %s21, 0
    %p77 = por %p75, %p76
    %p78 = scmp.ne.s32.totalorder %s66, %s67
    %p79 = scmp.eq.s32.totalorder %s22, 1
    %p80 = por %p78, %p79
    %p82 = scmp.ne.s32.totalorder %s67, %s81
    %p83 = scmp.eq.s32.totalorder %s22, 0
    %p84 = por %p82, %p83
    %s86 = sadd.s32 %s85, 1
    %p89 = scmp.eq.s32.totalorder %s16, 1
    %p90 = scmp.ne.s32.totalorder %s85, %s87
    %p91 = scmp.eq.s32.totalorder %s16, 0
    %p92 = por %p90, %p91
    %p93 = scmp.ne.s32.totalorder %s85, %s87
    %p94 = scmp.eq.s32.totalorder %s21, 1
    %p95 = por %p93, %p94
    %p96 = scmp.ne.s32.totalorder %s87, %s88
    %p97 = scmp.eq.s32.totalorder %s21, 0
    %p98 = por %p96, %p97
    %p99 = scmp.ne.s32.totalorder %s87, %s88
    %p100 = scmp.eq.s32.totalorder %s22, 1
    %p101 = por %p99, %p100
    %p103 = scmp.ne.s32.totalorder %s88, %s102
    %p104 = scmp.eq.s32.totalorder %s22, 0
    %p105 = por %p103, %p104
    %s107 = sadd.s32 %s106, 1
    %p110 = scmp.eq.s32.totalorder %s16, 1
    %p111 = scmp.ne.s32.totalorder %s106, %s108
    %p112 = scmp.eq.s32.totalorder %s16, 0
    %p113 = por %p111, %p112
    %p114 = scmp.ne.s32.totalorder %s106, %s108
    %p115 = scmp.eq.s32.totalorder %s21, 1
    %p116 = por %p114, %p115
    %p117 = scmp.ne.s32.totalorder %s108, %s109
    %p118 = scmp.eq.s32.totalorder %s21, 0
    %p119 = por %p117, %p118
    %p120 = scmp.ne.s32.totalorder %s108, %s109
    %p121 = scmp.eq.s32.totalorder %s22, 1
    %p122 = por %p120, %p121
    %p124 = scmp.ne.s32.totalorder %s109, %s123
    %p125 = scmp.eq.s32.totalorder %s22, 0
    %p126 = por %p124, %p125
    %s128 = sadd.s32 %s127, 1
    %p131 = scmp.eq.s32.totalorder %s16, 1
    %p132 = scmp.ne.s32.totalorder %s127, %s129
    %p133 = scmp.eq.s32.totalorder %s16, 0
    %p134 = por %p132, %p133
    %p135 = scmp.ne.s32.totalorder %s127, %s129
    %p136 = scmp.eq.s32.totalorder %s21, 1
    %p137 = por %p135, %p136
    %p138 = scmp.ne.s32.totalorder %s129, %s130
    %p139 = scmp.eq.s32.totalorder %s21, 0
    %p140 = por %p138, %p139
    %p141 = scmp.ne.s32.totalorder %s129, %s130
    %p142 = scmp.eq.s32.totalorder %s22, 1
    %p143 = por %p141, %p142
    %p145 = scmp.ne.s32.totalorder %s130, %s144
    %p146 = scmp.eq.s32.totalorder %s22, 0
    %p147 = por %p145, %p146
    %s149 = sadd.s32 %s148, 1
    %p152 = scmp.eq.s32.totalorder %s16, 1
    %p153 = scmp.ne.s32.totalorder %s148, %s150
    %p154 = scmp.eq.s32.totalorder %s16, 0
    %p155 = por %p153, %p154
    %p156 = scmp.ne.s32.totalorder %s148, %s150
    %p157 = scmp.eq.s32.totalorder %s21, 1
    %p158 = por %p156, %p157
    %p159 = scmp.ne.s32.totalorder %s150, %s151
    %p160 = scmp.eq.s32.totalorder %s21, 0
    %p161 = por %p159, %p160
    %p162 = scmp.ne.s32.totalorder %s150, %s151
    %p163 = scmp.eq.s32.totalorder %s22, 1
    %p164 = por %p162, %p163
    %p166 = scmp.ne.s32.totalorder %s151, %s165
    %p167 = scmp.eq.s32.totalorder %s22, 0
    %p168 = por %p166, %p167
    %s169 = ssub.s32 %s23, %s35
    %s170 = ssub.s32 %s24, %s31
    %s171 = sor.u32 %s169, %s170
    %p172 = scmp.eq.s32.totalorder %s171, 0
    %s174 = sadd.s32 %s173, 1
    %s175 = scalar_select %p172, %s173, %s174
    %p178 = pneg %p172
    %p179 = scmp.eq.s32.totalorder %s16, 1
    %p180 = por %p178, %p179
    %p181 = scmp.ne.s32.totalorder %s173, %s176
    %p182 = scmp.eq.s32.totalorder %s16, 0
    %p183 = por %p181, %p182
    %p184 = scmp.ne.s32.totalorder %s173, %s176
    %p185 = scmp.eq.s32.totalorder %s21, 1
    %p186 = por %p184, %p185
    %p187 = scmp.ne.s32.totalorder %s176, %s177
    %p188 = scmp.eq.s32.totalorder %s21, 0
    %p189 = por %p187, %p188
    %p190 = scmp.ne.s32.totalorder %s176, %s177
    %p191 = scmp.eq.s32.totalorder %s22, 1
    %p192 = por %p190, %p191
    %p194 = scmp.ne.s32.totalorder %s177, %s193
    %p195 = scmp.eq.s32.totalorder %s22, 0
    %p196 = por %p194, %p195
    %s197 = ssub.s32 %s23, %s35
    %s198 = ssub.s32 %s24, %s31
    %s199 = sor.u32 %s197, %s198
    %p200 = scmp.eq.s32.totalorder %s199, 0
    %s202 = sadd.s32 %s201, 1
    %s203 = scalar_select %p200, %s201, %s202
    %p206 = pneg %p200
    %p207 = scmp.eq.s32.totalorder %s16, 1
    %p208 = por %p206, %p207
    %p209 = scmp.ne.s32.totalorder %s201, %s204
    %p210 = scmp.eq.s32.totalorder %s16, 0
    %p211 = por %p209, %p210
    %p212 = scmp.ne.s32.totalorder %s201, %s204
    %p213 = scmp.eq.s32.totalorder %s21, 1
    %p214 = por %p212, %p213
    %p215 = scmp.ne.s32.totalorder %s204, %s205
    %p216 = scmp.eq.s32.totalorder %s21, 0
    %p217 = por %p215, %p216
    %p218 = scmp.ne.s32.totalorder %s204, %s205
    %p219 = scmp.eq.s32.totalorder %s22, 1
    %p220 = por %p218, %p219
    %p222 = scmp.ne.s32.totalorder %s205, %s221
    %p223 = scmp.eq.s32.totalorder %s22, 0
    %p224 = por %p222, %p223
    %s225 = ssub.s32 %s23, %s35
    %p226 = scmp.eq.s32.totalorder %s225, 0
    %s228 = sadd.s32 %s227, 1
    %s229 = scalar_select %p226, %s227, %s228
    %p232 = pneg %p226
    %p233 = scmp.eq.s32.totalorder %s16, 1
    %p234 = por %p232, %p233
    %p235 = scmp.ne.s32.totalorder %s227, %s230
    %p236 = scmp.eq.s32.totalorder %s16, 0
    %p237 = por %p235, %p236
    %p238 = scmp.ne.s32.totalorder %s227, %s230
    %p239 = scmp.eq.s32.totalorder %s21, 1
    %p240 = por %p238, %p239
    %p241 = scmp.ne.s32.totalorder %s230, %s231
    %p242 = scmp.eq.s32.totalorder %s21, 0
    %p243 = por %p241, %p242
    %p244 = scmp.ne.s32.totalorder %s230, %s231
    %p245 = scmp.eq.s32.totalorder %s22, 1
    %p246 = por %p244, %p245
    %p248 = scmp.ne.s32.totalorder %s231, %s247
    %p249 = scmp.eq.s32.totalorder %s22, 0
    %p250 = por %p248, %p249
    %s251 = ssub.s32 %s23, %s35
    %p252 = scmp.eq.s32.totalorder %s251, 0
    %s254 = sadd.s32 %s253, 1
    %s255 = scalar_select %p252, %s253, %s254
    %p258 = pneg %p252
    %p259 = scmp.eq.s32.totalorder %s16, 1
    %p260 = por %p258, %p259
    %p261 = scmp.ne.s32.totalorder %s253, %s256
    %p262 = scmp.eq.s32.totalorder %s16, 0
    %p263 = por %p261, %p262
    %p264 = scmp.ne.s32.totalorder %s253, %s256
    %p265 = scmp.eq.s32.totalorder %s21, 1
    %p266 = por %p264, %p265
    %p267 = scmp.ne.s32.totalorder %s256, %s257
    %p268 = scmp.eq.s32.totalorder %s21, 0
    %p269 = por %p267, %p268
    %p270 = scmp.ne.s32.totalorder %s256, %s257
    %p271 = scmp.eq.s32.totalorder %s22, 1
    %p272 = por %p270, %p271
    %p274 = scmp.ne.s32.totalorder %s257, %s273
    %p275 = scmp.eq.s32.totalorder %s22, 0
    %p276 = por %p274, %p275
    %p277 = scmp.le.s32.totalorder 1, %s16
    %p278 = scmp.lt.s32.totalorder %s16, 3
    %p279 = pnand %p277, %p278
    %p280 = pneg %p279
    // Predicated region
    $region9: #{_lambda_.7} parent=5 // pred_check
      _
    $region10: #{_lambda_.7} parent=5 // pred_check_branch
      %282 = sbr.rel (%p279) target = $region12
    $region11: #{_lambda_.7} parent=5 // pred_region
      %s283 = ssub.s32 %s16, 1
      // Predicated region
      $region13: #{_lambda_.7} parent=11 // pred_check
        %p284 = pneg %p77
      $region14: #{_lambda_.7} parent=11 // pred_check_branch
        %286 = sbr.rel (%p284) target = $region16
      $region15: #{_lambda_.7} parent=11 // pred_region
        _
      $region16: #{_lambda_.7} parent=11 // pred_fallthru
        _
      // Predicated region
      $region17: #{_lambda_.7} parent=11 // pred_check
        %p287 = pneg %p98
      $region18: #{_lambda_.7} parent=11 // pred_check_branch
        %289 = sbr.rel (%p287) target = $region20
      $region19: #{_lambda_.7} parent=11 // pred_region
        _
      $region20: #{_lambda_.7} parent=11 // pred_fallthru
        _
      // Predicated region
      $region21: #{_lambda_.7} parent=11 // pred_check
        %p290 = pneg %p119
      $region22: #{_lambda_.7} parent=11 // pred_check_branch
        %292 = sbr.rel (%p290) target = $region24
      $region23: #{_lambda_.7} parent=11 // pred_region
        _
      $region24: #{_lambda_.7} parent=11 // pred_fallthru
        _
      // Predicated region
      $region25: #{_lambda_.7} parent=11 // pred_check
        %p293 = pneg %p140
      $region26: #{_lambda_.7} parent=11 // pred_check_branch
        %295 = sbr.rel (%p293) target = $region28
      $region27: #{_lambda_.7} parent=11 // pred_region
        _
      $region28: #{_lambda_.7} parent=11 // pred_fallthru
        _
      // Predicated region
      $region29: #{_lambda_.7} parent=11 // pred_check
        %p296 = pneg %p161
      $region30: #{_lambda_.7} parent=11 // pred_check_branch
        %298 = sbr.rel (%p296) target = $region32
      $region31: #{_lambda_.7} parent=11 // pred_region
        _
      $region32: #{_lambda_.7} parent=11 // pred_fallthru
        _
    $region12: #{_lambda_.7} parent=5 // pred_fallthru
      _
    %p299 = scmp.lt.s32.totalorder %s16, 2
    // Predicated region
    $region33: #{_lambda_.7} parent=5 // pred_check
      %p300 = pneg %p299
    $region34: #{_lambda_.7} parent=5 // pred_check_branch
      %302 = sbr.rel (%p300) target = $region36
    $region35: #{_lambda_.7} parent=5 // pred_region
      // Predicated region
      $region37: #{_lambda_.7} parent=35 // pred_check
        %p303 = pneg %p50
      $region38: #{_lambda_.7} parent=35 // pred_check_branch
        %305 = sbr.rel (%p303) target = $region40
      $region39: #{_lambda_.7} parent=35 // pred_region
        %p306 = scmp.lt.s32.totalorder %s23, 1
        %s307 = scalar_select %p306, %s23, 1
        %p308 = scmp.lt.s32.totalorder %s24, 0
        %s309 = scalar_select %p308, %s24, 0
        %s310 = smul.addr %s307, 36
        %s311 = sadd.s32 %s309, %s310
        %s312 = smul.addr %s311, 4
        %s313 = scalar_lea.vmem %s0, %s312
      $region40: #{_lambda_.7} parent=35 // pred_fallthru
        _
    $region36: #{_lambda_.7} parent=5 // pred_fallthru
      _
    %p314 = scmp.le.s32.totalorder 1, %s16
    %p315 = scmp.lt.s32.totalorder %s16, 3
    %p316 = pnand %p314, %p315
    %p317 = pneg %p316
    // Predicated region
    $region41: #{_lambda_.7} parent=5 // pred_check
      _
    $region42: #{_lambda_.7} parent=5 // pred_check_branch
      %319 = sbr.rel (%p316) target = $region44
    $region43: #{_lambda_.7} parent=5 // pred_region
      %s320 = ssub.s32 %s16, 1
      %p321 = scmp.lt.s32.totalorder %s25, 1
      %s322 = scalar_select %p321, %s25, 1
      %p323 = scmp.lt.s32.totalorder %s26, 0
      %s324 = scalar_select %p323, %s26, 0
      %s325 = smul.addr %s322, 36
      %s326 = sadd.s32 %s324, %s325
      %s327 = smul.addr %s326, 4
      %s328 = scalar_lea.vmem %s0, %s327
      %p329 = pneg %p56
      %p330 = pneg %p53
      %p331 = pneg %p77
      %p332 = pneg %p74
      %p333 = pneg %p98
      %p334 = pneg %p95
      %p335 = pneg %p119
      %p336 = pneg %p116
      %p337 = pneg %p140
      %p338 = pneg %p137
      %p339 = pneg %p161
      %p340 = pneg %p158
      %p341 = pneg %p189
      %p342 = pneg %p186
      %s343 = smul.u32 2, %s26
      %p344 = scmp.lt.s32.totalorder %s25, 1
      %s345 = scalar_select %p344, %s25, 1
      %p346 = scmp.lt.s32.totalorder %s343, 1
      %s347 = scalar_select %p346, %s343, 1
      %s348 = smul.addr %s345, 2
      %s349 = sadd.s32 %s347, %s348
      %s350 = smul.addr %s349, 8
      %s351 = scalar_lea.vmem %s6, %s350
      %p352 = pneg %p217
      %p353 = pneg %p214
      %s354 = smul.u32 2, %s26
      %p355 = scmp.lt.s32.totalorder %s25, 1
      %s356 = scalar_select %p355, %s25, 1
      %p357 = scmp.lt.s32.totalorder %s354, 1
      %s358 = scalar_select %p357, %s354, 1
      %s359 = smul.addr %s356, 2
      %s360 = sadd.s32 %s358, %s359
      %s361 = smul.addr %s360, 4
      %s362 = scalar_lea.vmem %s7, %s361
      %p363 = pneg %p243
      %p364 = pneg %p240
      %p365 = scmp.lt.s32.totalorder %s25, 1
      %s366 = scalar_select %p365, %s25, 1
      %s367 = scalar_lea.vmem %s8, %s366
      %p368 = pneg %p269
      %p369 = pneg %p266
      %p370 = scmp.lt.s32.totalorder %s25, 1
      %s371 = scalar_select %p370, %s25, 1
      %s372 = smul.addr %s371, 2
      %s373 = smul.addr %s372, 8
      %s374 = scalar_lea.vmem %s9, %s373
      %p375 = scmp.lt.s32.totalorder %s25, 1
      %s376 = scalar_select %p375, %s25, 1
      %p377 = scmp.lt.s32.totalorder %s26, 0
      %s378 = scalar_select %p377, %s26, 0
      %s379 = smul.addr %s376, 36
      %s380 = sadd.s32 %s378, %s379
      %s381 = smul.addr %s380, 4
      %s382 = scalar_lea.vmem %s0, %s381
      %s383 = smul.u32 2, %s26
      %p384 = scmp.lt.s32.totalorder %s25, 1
      %s385 = scalar_select %p384, %s25, 1
      %p386 = scmp.lt.s32.totalorder %s383, 1
      %s387 = scalar_select %p386, %s383, 1
      %s388 = smul.addr %s385, 2
      %s389 = sadd.s32 %s387, %s388
      %s390 = smul.addr %s389, 8
      %s391 = scalar_lea.vmem %s6, %s390
      %s392 = smul.u32 2, %s26
      %s393 = smul.u32 2, %s26
      %p394 = scmp.lt.s32.totalorder %s25, 1
      %s395 = scalar_select %p394, %s25, 1
      %p396 = scmp.lt.s32.totalorder %s393, 1
      %s397 = scalar_select %p396, %s393, 1
      %s398 = smul.addr %s395, 2
      %s399 = sadd.s32 %s397, %s398
      %s400 = smul.addr %s399, 4
      %s401 = scalar_lea.vmem %s7, %s400
      %s402 = smul.u32 2, %s26
      %p403 = scmp.lt.s32.totalorder %s25, 1
      %s404 = scalar_select %p403, %s25, 1
      %s405 = scalar_lea.vmem %s8, %s404
      %p406 = scmp.lt.s32.totalorder %s25, 1
      %s407 = scalar_select %p406, %s25, 1
      %s408 = smul.addr %s407, 2
      %s409 = smul.addr %s408, 8
      %s410 = scalar_lea.vmem %s9, %s409
      %v412 = vld [vmem:[%s382] sm:$0xf]
      %v413 = vld [vmem:[%s382 + $0x4] sm:$0xf]
      %v414 = vld [vmem:[%s382 + $0x8] sm:$0xf]
      %v415 = vld [vmem:[%s382 + $0xc] sm:$0xf]
      %v416 = vld [vmem:[%s382 + $0x10] sm:$0xf]
      %v417 = vld [vmem:[%s382 + $0x14] sm:$0xf]
      %v418 = vld [vmem:[%s382 + $0x18] sm:$0xf]
      %v419 = vld [vmem:[%s382 + $0x1c] sm:$0xf]
      %v420 = vld [vmem:[%s382 + $0x20] sm:$0xf]
      %v421 = vld [vmem:[%s382 + $0x24] sm:$0xf]
      %v422 = vld [vmem:[%s382 + $0x28] sm:$0xf]
      %v423 = vld [vmem:[%s382 + $0x2c] sm:$0xf]
      %v424 = vld [vmem:[%s382 + $0x30] sm:$0xf]
      %v425 = vld [vmem:[%s382 + $0x34] sm:$0xf]
      %v426 = vld [vmem:[%s382 + $0x38] sm:$0xf]
      %v427 = vld [vmem:[%s382 + $0x3c] sm:$0xf]
      %v428 = vld [vmem:[%s382 + $0x40] sm:$0xf]
      %v429 = vld [vmem:[%s382 + $0x44] sm:$0xf]
      %v430 = vld [vmem:[%s382 + $0x48] sm:$0xf]
      %v431 = vld [vmem:[%s382 + $0x4c] sm:$0xf]
      %v432 = vld [vmem:[%s382 + $0x50] sm:$0xf]
      %v433 = vld [vmem:[%s382 + $0x54] sm:$0xf]
      %v434 = vld [vmem:[%s382 + $0x58] sm:$0xf]
      %v435 = vld [vmem:[%s382 + $0x5c] sm:$0xf]
      %v436 = vld [vmem:[%s382 + $0x60] sm:$0xf]
      %v437 = vld [vmem:[%s382 + $0x64] sm:$0xf]
      %v438 = vld [vmem:[%s382 + $0x68] sm:$0xf]
      %v439 = vld [vmem:[%s382 + $0x6c] sm:$0xf]
      %v440 = vld [vmem:[%s382 + $0x70] sm:$0xf]
      %v441 = vld [vmem:[%s382 + $0x74] sm:$0xf]
      %v442 = vld [vmem:[%s382 + $0x78] sm:$0xf]
      %v443 = vld [vmem:[%s382 + $0x7c] sm:$0xf]
      %v444 = vld [vmem:[%s382 + $0x80] sm:$0xf]
      %v445 = vld [vmem:[%s382 + $0x84] sm:$0xf]
      %v446 = vld [vmem:[%s382 + $0x88] sm:$0xf]
      %v447 = vld [vmem:[%s382 + $0x8c] sm:$0xf]
      %v448 = vunpack.c.l.bf16 %v412
      %v449 = vunpack.c.l.bf16 %v413
      %v450 = vunpack.c.l.bf16 %v414
      %v451 = vunpack.c.l.bf16 %v415
      %v452 = vunpack.c.l.bf16 %v416
      %v453 = vunpack.c.l.bf16 %v417
      %v454 = vunpack.c.l.bf16 %v418
      %v455 = vunpack.c.l.bf16 %v419
      %v456 = vunpack.c.l.bf16 %v420
      %v457 = vunpack.c.l.bf16 %v421
      %v458 = vunpack.c.l.bf16 %v422
      %v459 = vunpack.c.l.bf16 %v423
      %v460 = vunpack.c.l.bf16 %v424
      %v461 = vunpack.c.l.bf16 %v425
      %v462 = vunpack.c.l.bf16 %v426
      %v463 = vunpack.c.l.bf16 %v427
      %v464 = vunpack.c.l.bf16 %v428
      %v465 = vunpack.c.l.bf16 %v429
      %v466 = vunpack.c.l.bf16 %v430
      %v467 = vunpack.c.l.bf16 %v431
      %v468 = vunpack.c.l.bf16 %v432
      %v469 = vunpack.c.l.bf16 %v433
      %v470 = vunpack.c.l.bf16 %v434
      %v471 = vunpack.c.l.bf16 %v435
      %v472 = vunpack.c.l.bf16 %v436
      %v473 = vunpack.c.l.bf16 %v437
      %v474 = vunpack.c.l.bf16 %v438
      %v475 = vunpack.c.l.bf16 %v439
      %v476 = vunpack.c.l.bf16 %v440
      %v477 = vunpack.c.l.bf16 %v441
      %v478 = vunpack.c.l.bf16 %v442
      %v479 = vunpack.c.l.bf16 %v443
      %v480 = vunpack.c.l.bf16 %v444
      %v481 = vunpack.c.l.bf16 %v445
      %v482 = vunpack.c.l.bf16 %v446
      %v483 = vunpack.c.l.bf16 %v447
      %vm484 = vcmask 130048
      %v485 = vsel %vm484, %v448, 0.0
      %v486 = vsel %vm484, %v449, 0.0
      %v487 = vadd.f32 %v485, %v486
      %v488 = vsel %vm484, %v450, 0.0
      %v489 = vadd.f32 %v487, %v488
      %v490 = vsel %vm484, %v451, 0.0
      %v491 = vadd.f32 %v489, %v490
      %v492 = vsel %vm484, %v452, 0.0
      %v493 = vadd.f32 %v491, %v492
      %v494 = vsel %vm484, %v453, 0.0
      %v495 = vadd.f32 %v493, %v494
      %v496 = vsel %vm484, %v454, 0.0
      %v497 = vadd.f32 %v495, %v496
      %v498 = vsel %vm484, %v455, 0.0
      %v499 = vadd.f32 %v497, %v498
      %v500 = vsel %vm484, %v456, 0.0
      %v501 = vadd.f32 %v499, %v500
      %v502 = vsel %vm484, %v457, 0.0
      %v503 = vadd.f32 %v501, %v502
      %v504 = vsel %vm484, %v458, 0.0
      %v505 = vadd.f32 %v503, %v504
      %v506 = vsel %vm484, %v459, 0.0
      %v507 = vadd.f32 %v505, %v506
      %v508 = vsel %vm484, %v460, 0.0
      %v509 = vadd.f32 %v507, %v508
      %v510 = vsel %vm484, %v461, 0.0
      %v511 = vadd.f32 %v509, %v510
      %v512 = vsel %vm484, %v462, 0.0
      %v513 = vadd.f32 %v511, %v512
      %v514 = vsel %vm484, %v463, 0.0
      %v515 = vadd.f32 %v513, %v514
      %v516 = vsel %vm484, %v464, 0.0
      %v517 = vadd.f32 %v515, %v516
      %v518 = vsel %vm484, %v465, 0.0
      %v519 = vadd.f32 %v517, %v518
      %v520 = vsel %vm484, %v466, 0.0
      %v521 = vadd.f32 %v519, %v520
      %v522 = vsel %vm484, %v467, 0.0
      %v523 = vadd.f32 %v521, %v522
      %v524 = vsel %vm484, %v468, 0.0
      %v525 = vadd.f32 %v523, %v524
      %v526 = vsel %vm484, %v469, 0.0
      %v527 = vadd.f32 %v525, %v526
      %v528 = vsel %vm484, %v470, 0.0
      %v529 = vadd.f32 %v527, %v528
      %v530 = vsel %vm484, %v471, 0.0
      %v531 = vadd.f32 %v529, %v530
      %v532 = vsel %vm484, %v472, 0.0
      %v533 = vadd.f32 %v531, %v532
      %v534 = vsel %vm484, %v473, 0.0
      %v535 = vadd.f32 %v533, %v534
      %v536 = vsel %vm484, %v474, 0.0
      %v537 = vadd.f32 %v535, %v536
      %v538 = vsel %vm484, %v475, 0.0
      %v539 = vadd.f32 %v537, %v538
      %v540 = vsel %vm484, %v476, 0.0
      %v541 = vadd.f32 %v539, %v540
      %v542 = vsel %vm484, %v477, 0.0
      %v543 = vadd.f32 %v541, %v542
      %v544 = vsel %vm484, %v478, 0.0
      %v545 = vadd.f32 %v543, %v544
      %v546 = vsel %vm484, %v479, 0.0
      %v547 = vadd.f32 %v545, %v546
      %v548 = vsel %vm484, %v480, 0.0
      %v549 = vadd.f32 %v547, %v548
      %v550 = vsel %vm484, %v481, 0.0
      %v551 = vadd.f32 %v549, %v550
      %v552 = vsel %vm484, %v482, 0.0
      %v553 = vadd.f32 %v551, %v552
      %v554 = vsel %vm484, %v483, 0.0
      %v555 = vadd.f32 %v553, %v554
      %v556 = vrot.slane %v555, 4
      %v557 = vadd.f32 %v555, %v556
      %v558 = vrot.slane %v557, 2
      %v559 = vadd.f32 %v557, %v558
      %v560 = vrot.slane %v559, 1
      %v561 = vadd.f32 %v559, %v560
      %v562 = vrcp.pop 288.0
      %v563 = vmul.f32 %v561, %v562
      %v564 = vsub.f32 %v448, %v563
      %v565 = vsub.f32 %v449, %v563
      %v566 = vsub.f32 %v450, %v563
      %v567 = vsub.f32 %v451, %v563
      %v568 = vsub.f32 %v452, %v563
      %v569 = vsub.f32 %v453, %v563
      %v570 = vsub.f32 %v454, %v563
      %v571 = vsub.f32 %v455, %v563
      %v572 = vsub.f32 %v456, %v563
      %v573 = vsub.f32 %v457, %v563
      %v574 = vsub.f32 %v458, %v563
      %v575 = vsub.f32 %v459, %v563
      %v576 = vsub.f32 %v460, %v563
      %v577 = vsub.f32 %v461, %v563
      %v578 = vsub.f32 %v462, %v563
      %v579 = vsub.f32 %v463, %v563
      %v580 = vsub.f32 %v464, %v563
      %v581 = vsub.f32 %v465, %v563
      %v582 = vsub.f32 %v466, %v563
      %v583 = vsub.f32 %v467, %v563
      %v584 = vsub.f32 %v468, %v563
      %v585 = vsub.f32 %v469, %v563
      %v586 = vsub.f32 %v470, %v563
      %v587 = vsub.f32 %v471, %v563
      %v588 = vsub.f32 %v472, %v563
      %v589 = vsub.f32 %v473, %v563
      %v590 = vsub.f32 %v474, %v563
      %v591 = vsub.f32 %v475, %v563
      %v592 = vsub.f32 %v476, %v563
      %v593 = vsub.f32 %v477, %v563
      %v594 = vsub.f32 %v478, %v563
      %v595 = vsub.f32 %v479, %v563
      %v596 = vsub.f32 %v480, %v563
      %v597 = vsub.f32 %v481, %v563
      %v598 = vsub.f32 %v482, %v563
      %v599 = vsub.f32 %v483, %v563
      %v600 = vmul.f32 %v564, %v564
      %v601 = vmul.f32 %v565, %v565
      %v602 = vmul.f32 %v566, %v566
      %v603 = vmul.f32 %v567, %v567
      %v604 = vmul.f32 %v568, %v568
      %v605 = vmul.f32 %v569, %v569
      %v606 = vmul.f32 %v570, %v570
      %v607 = vmul.f32 %v571, %v571
      %v608 = vmul.f32 %v572, %v572
      %v609 = vmul.f32 %v573, %v573
      %v610 = vmul.f32 %v574, %v574
      %v611 = vmul.f32 %v575, %v575
      %v612 = vmul.f32 %v576, %v576
      %v613 = vmul.f32 %v577, %v577
      %v614 = vmul.f32 %v578, %v578
      %v615 = vmul.f32 %v579, %v579
      %v616 = vmul.f32 %v580, %v580
      %v617 = vmul.f32 %v581, %v581
      %v618 = vmul.f32 %v582, %v582
      %v619 = vmul.f32 %v583, %v583
      %v620 = vmul.f32 %v584, %v584
      %v621 = vmul.f32 %v585, %v585
      %v622 = vmul.f32 %v586, %v586
      %v623 = vmul.f32 %v587, %v587
      %v624 = vmul.f32 %v588, %v588
      %v625 = vmul.f32 %v589, %v589
      %v626 = vmul.f32 %v590, %v590
      %v627 = vmul.f32 %v591, %v591
      %v628 = vmul.f32 %v592, %v592
      %v629 = vmul.f32 %v593, %v593
      %v630 = vmul.f32 %v594, %v594
      %v631 = vmul.f32 %v595, %v595
      %v632 = vmul.f32 %v596, %v596
      %v633 = vmul.f32 %v597, %v597
      %v634 = vmul.f32 %v598, %v598
      %v635 = vmul.f32 %v599, %v599
      %v636 = vsel %vm484, %v600, 0.0
      %v637 = vsel %vm484, %v601, 0.0
      %v638 = vadd.f32 %v636, %v637
      %v639 = vsel %vm484, %v602, 0.0
      %v640 = vadd.f32 %v638, %v639
      %v641 = vsel %vm484, %v603, 0.0
      %v642 = vadd.f32 %v640, %v641
      %v643 = vsel %vm484, %v604, 0.0
      %v644 = vadd.f32 %v642, %v643
      %v645 = vsel %vm484, %v605, 0.0
      %v646 = vadd.f32 %v644, %v645
      %v647 = vsel %vm484, %v606, 0.0
      %v648 = vadd.f32 %v646, %v647
      %v649 = vsel %vm484, %v607, 0.0
      %v650 = vadd.f32 %v648, %v649
      %v651 = vsel %vm484, %v608, 0.0
      %v652 = vadd.f32 %v650, %v651
      %v653 = vsel %vm484, %v609, 0.0
      %v654 = vadd.f32 %v652, %v653
      %v655 = vsel %vm484, %v610, 0.0
      %v656 = vadd.f32 %v654, %v655
      %v657 = vsel %vm484, %v611, 0.0
      %v658 = vadd.f32 %v656, %v657
      %v659 = vsel %vm484, %v612, 0.0
      %v660 = vadd.f32 %v658, %v659
      %v661 = vsel %vm484, %v613, 0.0
      %v662 = vadd.f32 %v660, %v661
      %v663 = vsel %vm484, %v614, 0.0
      %v664 = vadd.f32 %v662, %v663
      %v665 = vsel %vm484, %v615, 0.0
      %v666 = vadd.f32 %v664, %v665
      %v667 = vsel %vm484, %v616, 0.0
      %v668 = vadd.f32 %v666, %v667
      %v669 = vsel %vm484, %v617, 0.0
      %v670 = vadd.f32 %v668, %v669
      %v671 = vsel %vm484, %v618, 0.0
      %v672 = vadd.f32 %v670, %v671
      %v673 = vsel %vm484, %v619, 0.0
      %v674 = vadd.f32 %v672, %v673
      %v675 = vsel %vm484, %v620, 0.0
      %v676 = vadd.f32 %v674, %v675
      %v677 = vsel %vm484, %v621, 0.0
      %v678 = vadd.f32 %v676, %v677
      %v679 = vsel %vm484, %v622, 0.0
      %v680 = vadd.f32 %v678, %v679
      %v681 = vsel %vm484, %v623, 0.0
      %v682 = vadd.f32 %v680, %v681
      %v683 = vsel %vm484, %v624, 0.0
      %v684 = vadd.f32 %v682, %v683
      %v685 = vsel %vm484, %v625, 0.0
      %v686 = vadd.f32 %v684, %v685
      %v687 = vsel %vm484, %v626, 0.0
      %v688 = vadd.f32 %v686, %v687
      %v689 = vsel %vm484, %v627, 0.0
      %v690 = vadd.f32 %v688, %v689
      %v691 = vsel %vm484, %v628, 0.0
      %v692 = vadd.f32 %v690, %v691
      %v693 = vsel %vm484, %v629, 0.0
      %v694 = vadd.f32 %v692, %v693
      %v695 = vsel %vm484, %v630, 0.0
      %v696 = vadd.f32 %v694, %v695
      %v697 = vsel %vm484, %v631, 0.0
      %v698 = vadd.f32 %v696, %v697
      %v699 = vsel %vm484, %v632, 0.0
      %v700 = vadd.f32 %v698, %v699
      %v701 = vsel %vm484, %v633, 0.0
      %v702 = vadd.f32 %v700, %v701
      %v703 = vsel %vm484, %v634, 0.0
      %v704 = vadd.f32 %v702, %v703
      %v705 = vsel %vm484, %v635, 0.0
      %v706 = vadd.f32 %v704, %v705
      %v707 = vrot.slane %v706, 4
      %v708 = vadd.f32 %v706, %v707
      %v709 = vrot.slane %v708, 2
      %v710 = vadd.f32 %v708, %v709
      %v711 = vrot.slane %v710, 1
      %v712 = vadd.f32 %v710, %v711
      %v713 = vmul.f32 %v712, %v562
      %v714 = vadd.f32 %v713, 1e-05
      %v715 = vrsqrt.pop %v714
      %v716 = vmul.f32 %v564, %v715
      %v717 = vmul.f32 %v565, %v715
      %v718 = vmul.f32 %v566, %v715
      %v719 = vmul.f32 %v567, %v715
      %v720 = vmul.f32 %v568, %v715
      %v721 = vmul.f32 %v569, %v715
      %v722 = vmul.f32 %v570, %v715
      %v723 = vmul.f32 %v571, %v715
      %v724 = vmul.f32 %v572, %v715
      %v725 = vmul.f32 %v573, %v715
      %v726 = vmul.f32 %v574, %v715
      %v727 = vmul.f32 %v575, %v715
      %v728 = vmul.f32 %v576, %v715
      %v729 = vmul.f32 %v577, %v715
      %v730 = vmul.f32 %v578, %v715
      %v731 = vmul.f32 %v579, %v715
      %v732 = vmul.f32 %v580, %v715
      %v733 = vmul.f32 %v581, %v715
      %v734 = vmul.f32 %v582, %v715
      %v735 = vmul.f32 %v583, %v715
      %v736 = vmul.f32 %v584, %v715
      %v737 = vmul.f32 %v585, %v715
      %v738 = vmul.f32 %v586, %v715
      %v739 = vmul.f32 %v587, %v715
      %v740 = vmul.f32 %v588, %v715
      %v741 = vmul.f32 %v589, %v715
      %v742 = vmul.f32 %v590, %v715
      %v743 = vmul.f32 %v591, %v715
      %v744 = vmul.f32 %v592, %v715
      %v745 = vmul.f32 %v593, %v715
      %v746 = vmul.f32 %v594, %v715
      %v747 = vmul.f32 %v595, %v715
      %v748 = vmul.f32 %v596, %v715
      %v749 = vmul.f32 %v597, %v715
      %v750 = vmul.f32 %v598, %v715
      %v751 = vmul.f32 %v599, %v715
      %v752 = vld [vmem:[%s1] sm:$0xff]
      %v753 = vld [vmem:[%s1 + $0x8] sm:$0xff]
      %v754 = vld [vmem:[%s1 + $0x10] sm:$0xff]
      %v755 = vld [vmem:[%s1 + $0x18] sm:$0xff]
      %v756 = vld [vmem:[%s1 + $0x20] sm:$0xff]
      %v757 = vld [vmem:[%s1 + $0x28] sm:$0xff]
      %v758 = vld [vmem:[%s1 + $0x30] sm:$0xff]
      %v759 = vld [vmem:[%s1 + $0x38] sm:$0xff]
      %v760 = vld [vmem:[%s1 + $0x40] sm:$0xff]
      %v761 = vld [vmem:[%s1 + $0x48] sm:$0xff]
      %v762 = vld [vmem:[%s1 + $0x50] sm:$0xff]
      %v763 = vld [vmem:[%s1 + $0x58] sm:$0xff]
      %v764 = vld [vmem:[%s1 + $0x60] sm:$0xff]
      %v765 = vld [vmem:[%s1 + $0x68] sm:$0xff]
      %v766 = vld [vmem:[%s1 + $0x70] sm:$0xff]
      %v767 = vld [vmem:[%s1 + $0x78] sm:$0xff]
      %v768 = vld [vmem:[%s1 + $0x80] sm:$0xff]
      %v769 = vld [vmem:[%s1 + $0x88] sm:$0xff]
      %v770 = vld [vmem:[%s1 + $0x90] sm:$0xff]
      %v771 = vld [vmem:[%s1 + $0x98] sm:$0xff]
      %v772 = vld [vmem:[%s1 + $0xa0] sm:$0xff]
      %v773 = vld [vmem:[%s1 + $0xa8] sm:$0xff]
      %v774 = vld [vmem:[%s1 + $0xb0] sm:$0xff]
      %v775 = vld [vmem:[%s1 + $0xb8] sm:$0xff]
      %v776 = vld [vmem:[%s1 + $0xc0] sm:$0xff]
      %v777 = vld [vmem:[%s1 + $0xc8] sm:$0xff]
      %v778 = vld [vmem:[%s1 + $0xd0] sm:$0xff]
      %v779 = vld [vmem:[%s1 + $0xd8] sm:$0xff]
      %v780 = vld [vmem:[%s1 + $0xe0] sm:$0xff]
      %v781 = vld [vmem:[%s1 + $0xe8] sm:$0xff]
      %v782 = vld [vmem:[%s1 + $0xf0] sm:$0xff]
      %v783 = vld [vmem:[%s1 + $0xf8] sm:$0xff]
      %v784 = vld [vmem:[%s1 + $0x100] sm:$0xff]
      %v785 = vld [vmem:[%s1 + $0x108] sm:$0xff]
      %v786 = vld [vmem:[%s1 + $0x110] sm:$0xff]
      %v787 = vld [vmem:[%s1 + $0x118] sm:$0xff]
      %789 = vset.pattern.permute.xlu0 0
      %790 = vperm.xlu0 %789, %v752
      %v791 = vpop.permute.xlu0 %790
      %794 = vset.pattern.permute.xlu0 0
      %795 = vperm.xlu0 %794, %v753
      %v796 = vpop.permute.xlu0 %795
      %799 = vset.pattern.permute.xlu0 0
      %800 = vperm.xlu0 %799, %v754
      %v801 = vpop.permute.xlu0 %800
      %804 = vset.pattern.permute.xlu0 0
      %805 = vperm.xlu0 %804, %v755
      %v806 = vpop.permute.xlu0 %805
      %809 = vset.pattern.permute.xlu0 0
      %810 = vperm.xlu0 %809, %v756
      %v811 = vpop.permute.xlu0 %810
      %814 = vset.pattern.permute.xlu0 0
      %815 = vperm.xlu0 %814, %v757
      %v816 = vpop.permute.xlu0 %815
      %819 = vset.pattern.permute.xlu0 0
      %820 = vperm.xlu0 %819, %v758
      %v821 = vpop.permute.xlu0 %820
      %824 = vset.pattern.permute.xlu0 0
      %825 = vperm.xlu0 %824, %v759
      %v826 = vpop.permute.xlu0 %825
      %829 = vset.pattern.permute.xlu0 0
      %830 = vperm.xlu0 %829, %v760
      %v831 = vpop.permute.xlu0 %830
      %834 = vset.pattern.permute.xlu0 0
      %835 = vperm.xlu0 %834, %v761
      %v836 = vpop.permute.xlu0 %835
      %839 = vset.pattern.permute.xlu0 0
      %840 = vperm.xlu0 %839, %v762
      %v841 = vpop.permute.xlu0 %840
      %844 = vset.pattern.permute.xlu0 0
      %845 = vperm.xlu0 %844, %v763
      %v846 = vpop.permute.xlu0 %845
      %849 = vset.pattern.permute.xlu0 0
      %850 = vperm.xlu0 %849, %v764
      %v851 = vpop.permute.xlu0 %850
      %854 = vset.pattern.permute.xlu0 0
      %855 = vperm.xlu0 %854, %v765
      %v856 = vpop.permute.xlu0 %855
      %859 = vset.pattern.permute.xlu0 0
      %860 = vperm.xlu0 %859, %v766
      %v861 = vpop.permute.xlu0 %860
      %864 = vset.pattern.permute.xlu0 0
      %865 = vperm.xlu0 %864, %v767
      %v866 = vpop.permute.xlu0 %865
      %869 = vset.pattern.permute.xlu0 0
      %870 = vperm.xlu0 %869, %v768
      %v871 = vpop.permute.xlu0 %870
      %874 = vset.pattern.permute.xlu0 0
      %875 = vperm.xlu0 %874, %v769
      %v876 = vpop.permute.xlu0 %875
      %879 = vset.pattern.permute.xlu0 0
      %880 = vperm.xlu0 %879, %v770
      %v881 = vpop.permute.xlu0 %880
      %884 = vset.pattern.permute.xlu0 0
      %885 = vperm.xlu0 %884, %v771
      %v886 = vpop.permute.xlu0 %885
      %889 = vset.pattern.permute.xlu0 0
      %890 = vperm.xlu0 %889, %v772
      %v891 = vpop.permute.xlu0 %890
      %894 = vset.pattern.permute.xlu0 0
      %895 = vperm.xlu0 %894, %v773
      %v896 = vpop.permute.xlu0 %895
      %899 = vset.pattern.permute.xlu0 0
      %900 = vperm.xlu0 %899, %v774
      %v901 = vpop.permute.xlu0 %900
      %904 = vset.pattern.permute.xlu0 0
      %905 = vperm.xlu0 %904, %v775
      %v906 = vpop.permute.xlu0 %905
      %909 = vset.pattern.permute.xlu0 0
      %910 = vperm.xlu0 %909, %v776
      %v911 = vpop.permute.xlu0 %910
      %914 = vset.pattern.permute.xlu0 0
      %915 = vperm.xlu0 %914, %v777
      %v916 = vpop.permute.xlu0 %915
      %919 = vset.pattern.permute.xlu0 0
      %920 = vperm.xlu0 %919, %v778
      %v921 = vpop.permute.xlu0 %920
      %924 = vset.pattern.permute.xlu0 0
      %925 = vperm.xlu0 %924, %v779
      %v926 = vpop.permute.xlu0 %925
      %929 = vset.pattern.permute.xlu0 0
      %930 = vperm.xlu0 %929, %v780
      %v931 = vpop.permute.xlu0 %930
      %934 = vset.pattern.permute.xlu0 0
      %935 = vperm.xlu0 %934, %v781
      %v936 = vpop.permute.xlu0 %935
      %939 = vset.pattern.permute.xlu0 0
      %940 = vperm.xlu0 %939, %v782
      %v941 = vpop.permute.xlu0 %940
      %944 = vset.pattern.permute.xlu0 0
      %945 = vperm.xlu0 %944, %v783
      %v946 = vpop.permute.xlu0 %945
      %949 = vset.pattern.permute.xlu0 0
      %950 = vperm.xlu0 %949, %v784
      %v951 = vpop.permute.xlu0 %950
      %954 = vset.pattern.permute.xlu0 0
      %955 = vperm.xlu0 %954, %v785
      %v956 = vpop.permute.xlu0 %955
      %959 = vset.pattern.permute.xlu0 0
      %960 = vperm.xlu0 %959, %v786
      %v961 = vpop.permute.xlu0 %960
      %964 = vset.pattern.permute.xlu0 0
      %965 = vperm.xlu0 %964, %v787
      %v966 = vpop.permute.xlu0 %965
      %v968 = vmul.f32 %v716, %v791
      %v969 = vmul.f32 %v717, %v796
      %v970 = vmul.f32 %v718, %v801
      %v971 = vmul.f32 %v719, %v806
      %v972 = vmul.f32 %v720, %v811
      %v973 = vmul.f32 %v721, %v816
      %v974 = vmul.f32 %v722, %v821
      %v975 = vmul.f32 %v723, %v826
      %v976 = vmul.f32 %v724, %v831
      %v977 = vmul.f32 %v725, %v836
      %v978 = vmul.f32 %v726, %v841
      %v979 = vmul.f32 %v727, %v846
      %v980 = vmul.f32 %v728, %v851
      %v981 = vmul.f32 %v729, %v856
      %v982 = vmul.f32 %v730, %v861
      %v983 = vmul.f32 %v731, %v866
      %v984 = vmul.f32 %v732, %v871
      %v985 = vmul.f32 %v733, %v876
      %v986 = vmul.f32 %v734, %v881
      %v987 = vmul.f32 %v735, %v886
      %v988 = vmul.f32 %v736, %v891
      %v989 = vmul.f32 %v737, %v896
      %v990 = vmul.f32 %v738, %v901
      %v991 = vmul.f32 %v739, %v906
      %v992 = vmul.f32 %v740, %v911
      %v993 = vmul.f32 %v741, %v916
      %v994 = vmul.f32 %v742, %v921
      %v995 = vmul.f32 %v743, %v926
      %v996 = vmul.f32 %v744, %v931
      %v997 = vmul.f32 %v745, %v936
      %v998 = vmul.f32 %v746, %v941
      %v999 = vmul.f32 %v747, %v946
      %v1000 = vmul.f32 %v748, %v951
      %v1001 = vmul.f32 %v749, %v956
      %v1002 = vmul.f32 %v750, %v961
      %v1003 = vmul.f32 %v751, %v966
      %v1004 = vld [vmem:[%s2] sm:$0xff]
      %v1005 = vld [vmem:[%s2 + $0x8] sm:$0xff]
      %v1006 = vld [vmem:[%s2 + $0x10] sm:$0xff]
      %v1007 = vld [vmem:[%s2 + $0x18] sm:$0xff]
      %v1008 = vld [vmem:[%s2 + $0x20] sm:$0xff]
      %v1009 = vld [vmem:[%s2 + $0x28] sm:$0xff]
      %v1010 = vld [vmem:[%s2 + $0x30] sm:$0xff]
      %v1011 = vld [vmem:[%s2 + $0x38] sm:$0xff]
      %v1012 = vld [vmem:[%s2 + $0x40] sm:$0xff]
      %v1013 = vld [vmem:[%s2 + $0x48] sm:$0xff]
      %v1014 = vld [vmem:[%s2 + $0x50] sm:$0xff]
      %v1015 = vld [vmem:[%s2 + $0x58] sm:$0xff]
      %v1016 = vld [vmem:[%s2 + $0x60] sm:$0xff]
      %v1017 = vld [vmem:[%s2 + $0x68] sm:$0xff]
      %v1018 = vld [vmem:[%s2 + $0x70] sm:$0xff]
      %v1019 = vld [vmem:[%s2 + $0x78] sm:$0xff]
      %v1020 = vld [vmem:[%s2 + $0x80] sm:$0xff]
      %v1021 = vld [vmem:[%s2 + $0x88] sm:$0xff]
      %v1022 = vld [vmem:[%s2 + $0x90] sm:$0xff]
      %v1023 = vld [vmem:[%s2 + $0x98] sm:$0xff]
      %v1024 = vld [vmem:[%s2 + $0xa0] sm:$0xff]
      %v1025 = vld [vmem:[%s2 + $0xa8] sm:$0xff]
      %v1026 = vld [vmem:[%s2 + $0xb0] sm:$0xff]
      %v1027 = vld [vmem:[%s2 + $0xb8] sm:$0xff]
      %v1028 = vld [vmem:[%s2 + $0xc0] sm:$0xff]
      %v1029 = vld [vmem:[%s2 + $0xc8] sm:$0xff]
      %v1030 = vld [vmem:[%s2 + $0xd0] sm:$0xff]
      %v1031 = vld [vmem:[%s2 + $0xd8] sm:$0xff]
      %v1032 = vld [vmem:[%s2 + $0xe0] sm:$0xff]
      %v1033 = vld [vmem:[%s2 + $0xe8] sm:$0xff]
      %v1034 = vld [vmem:[%s2 + $0xf0] sm:$0xff]
      %v1035 = vld [vmem:[%s2 + $0xf8] sm:$0xff]
      %v1036 = vld [vmem:[%s2 + $0x100] sm:$0xff]
      %v1037 = vld [vmem:[%s2 + $0x108] sm:$0xff]
      %v1038 = vld [vmem:[%s2 + $0x110] sm:$0xff]
      %v1039 = vld [vmem:[%s2 + $0x118] sm:$0xff]
      %1041 = vset.pattern.permute.xlu0 0
      %1042 = vperm.xlu0 %1041, %v1004
      %v1043 = vpop.permute.xlu0 %1042
      %1046 = vset.pattern.permute.xlu0 0
      %1047 = vperm.xlu0 %1046, %v1005
      %v1048 = vpop.permute.xlu0 %1047
      %1051 = vset.pattern.permute.xlu0 0
      %1052 = vperm.xlu0 %1051, %v1006
      %v1053 = vpop.permute.xlu0 %1052
      %1056 = vset.pattern.permute.xlu0 0
      %1057 = vperm.xlu0 %1056, %v1007
      %v1058 = vpop.permute.xlu0 %1057
      %1061 = vset.pattern.permute.xlu0 0
      %1062 = vperm.xlu0 %1061, %v1008
      %v1063 = vpop.permute.xlu0 %1062
      %1066 = vset.pattern.permute.xlu0 0
      %1067 = vperm.xlu0 %1066, %v1009
      %v1068 = vpop.permute.xlu0 %1067
      %1071 = vset.pattern.permute.xlu0 0
      %1072 = vperm.xlu0 %1071, %v1010
      %v1073 = vpop.permute.xlu0 %1072
      %1076 = vset.pattern.permute.xlu0 0
      %1077 = vperm.xlu0 %1076, %v1011
      %v1078 = vpop.permute.xlu0 %1077
      %1081 = vset.pattern.permute.xlu0 0
      %1082 = vperm.xlu0 %1081, %v1012
      %v1083 = vpop.permute.xlu0 %1082
      %1086 = vset.pattern.permute.xlu0 0
      %1087 = vperm.xlu0 %1086, %v1013
      %v1088 = vpop.permute.xlu0 %1087
      %1091 = vset.pattern.permute.xlu0 0
      %1092 = vperm.xlu0 %1091, %v1014
      %v1093 = vpop.permute.xlu0 %1092
      %1096 = vset.pattern.permute.xlu0 0
      %1097 = vperm.xlu0 %1096, %v1015
      %v1098 = vpop.permute.xlu0 %1097
      %1101 = vset.pattern.permute.xlu0 0
      %1102 = vperm.xlu0 %1101, %v1016
      %v1103 = vpop.permute.xlu0 %1102
      %1106 = vset.pattern.permute.xlu0 0
      %1107 = vperm.xlu0 %1106, %v1017
      %v1108 = vpop.permute.xlu0 %1107
      %1111 = vset.pattern.permute.xlu0 0
      %1112 = vperm.xlu0 %1111, %v1018
      %v1113 = vpop.permute.xlu0 %1112
      %1116 = vset.pattern.permute.xlu0 0
      %1117 = vperm.xlu0 %1116, %v1019
      %v1118 = vpop.permute.xlu0 %1117
      %1121 = vset.pattern.permute.xlu0 0
      %1122 = vperm.xlu0 %1121, %v1020
      %v1123 = vpop.permute.xlu0 %1122
      %1126 = vset.pattern.permute.xlu0 0
      %1127 = vperm.xlu0 %1126, %v1021
      %v1128 = vpop.permute.xlu0 %1127
      %1131 = vset.pattern.permute.xlu0 0
      %1132 = vperm.xlu0 %1131, %v1022
      %v1133 = vpop.permute.xlu0 %1132
      %1136 = vset.pattern.permute.xlu0 0
      %1137 = vperm.xlu0 %1136, %v1023
      %v1138 = vpop.permute.xlu0 %1137
      %1141 = vset.pattern.permute.xlu0 0
      %1142 = vperm.xlu0 %1141, %v1024
      %v1143 = vpop.permute.xlu0 %1142
      %1146 = vset.pattern.permute.xlu0 0
      %1147 = vperm.xlu0 %1146, %v1025
      %v1148 = vpop.permute.xlu0 %1147
      %1151 = vset.pattern.permute.xlu0 0
      %1152 = vperm.xlu0 %1151, %v1026
      %v1153 = vpop.permute.xlu0 %1152
      %1156 = vset.pattern.permute.xlu0 0
      %1157 = vperm.xlu0 %1156, %v1027
      %v1158 = vpop.permute.xlu0 %1157
      %1161 = vset.pattern.permute.xlu0 0
      %1162 = vperm.xlu0 %1161, %v1028
      %v1163 = vpop.permute.xlu0 %1162
      %1166 = vset.pattern.permute.xlu0 0
      %1167 = vperm.xlu0 %1166, %v1029
      %v1168 = vpop.permute.xlu0 %1167
      %1171 = vset.pattern.permute.xlu0 0
      %1172 = vperm.xlu0 %1171, %v1030
      %v1173 = vpop.permute.xlu0 %1172
      %1176 = vset.pattern.permute.xlu0 0
      %1177 = vperm.xlu0 %1176, %v1031
      %v1178 = vpop.permute.xlu0 %1177
      %1181 = vset.pattern.permute.xlu0 0
      %1182 = vperm.xlu0 %1181, %v1032
      %v1183 = vpop.permute.xlu0 %1182
      %1186 = vset.pattern.permute.xlu0 0
      %1187 = vperm.xlu0 %1186, %v1033
      %v1188 = vpop.permute.xlu0 %1187
      %1191 = vset.pattern.permute.xlu0 0
      %1192 = vperm.xlu0 %1191, %v1034
      %v1193 = vpop.permute.xlu0 %1192
      %1196 = vset.pattern.permute.xlu0 0
      %1197 = vperm.xlu0 %1196, %v1035
      %v1198 = vpop.permute.xlu0 %1197
      %1201 = vset.pattern.permute.xlu0 0
      %1202 = vperm.xlu0 %1201, %v1036
      %v1203 = vpop.permute.xlu0 %1202
      %1206 = vset.pattern.permute.xlu0 0
      %1207 = vperm.xlu0 %1206, %v1037
      %v1208 = vpop.permute.xlu0 %1207
      %1211 = vset.pattern.permute.xlu0 0
      %1212 = vperm.xlu0 %1211, %v1038
      %v1213 = vpop.permute.xlu0 %1212
      %1216 = vset.pattern.permute.xlu0 0
      %1217 = vperm.xlu0 %1216, %v1039
      %v1218 = vpop.permute.xlu0 %1217
      %v1220 = vadd.f32 %v968, %v1043
      %v1221 = vadd.f32 %v969, %v1048
      %v1222 = vadd.f32 %v970, %v1053
      %v1223 = vadd.f32 %v971, %v1058
      %v1224 = vadd.f32 %v972, %v1063
      %v1225 = vadd.f32 %v973, %v1068
      %v1226 = vadd.f32 %v974, %v1073
      %v1227 = vadd.f32 %v975, %v1078
      %v1228 = vadd.f32 %v976, %v1083
      %v1229 = vadd.f32 %v977, %v1088
      %v1230 = vadd.f32 %v978, %v1093
      %v1231 = vadd.f32 %v979, %v1098
      %v1232 = vadd.f32 %v980, %v1103
      %v1233 = vadd.f32 %v981, %v1108
      %v1234 = vadd.f32 %v982, %v1113
      %v1235 = vadd.f32 %v983, %v1118
      %v1236 = vadd.f32 %v984, %v1123
      %v1237 = vadd.f32 %v985, %v1128
      %v1238 = vadd.f32 %v986, %v1133
      %v1239 = vadd.f32 %v987, %v1138
      %v1240 = vadd.f32 %v988, %v1143
      %v1241 = vadd.f32 %v989, %v1148
      %v1242 = vadd.f32 %v990, %v1153
      %v1243 = vadd.f32 %v991, %v1158
      %v1244 = vadd.f32 %v992, %v1163
      %v1245 = vadd.f32 %v993, %v1168
      %v1246 = vadd.f32 %v994, %v1173
      %v1247 = vadd.f32 %v995, %v1178
      %v1248 = vadd.f32 %v996, %v1183
      %v1249 = vadd.f32 %v997, %v1188
      %v1250 = vadd.f32 %v998, %v1193
      %v1251 = vadd.f32 %v999, %v1198
      %v1252 = vadd.f32 %v1000, %v1203
      %v1253 = vadd.f32 %v1001, %v1208
      %v1254 = vadd.f32 %v1002, %v1213
      %v1255 = vadd.f32 %v1003, %v1218
      %v1256 = vpack.c.bf16 %v1221, %v1220
      %v1257 = vpack.c.bf16 %v1223, %v1222
      %v1258 = vpack.c.bf16 %v1225, %v1224
      %v1259 = vpack.c.bf16 %v1227, %v1226
      %v1260 = vpack.c.bf16 %v1229, %v1228
      %v1261 = vpack.c.bf16 %v1231, %v1230
      %v1262 = vpack.c.bf16 %v1233, %v1232
      %v1263 = vpack.c.bf16 %v1235, %v1234
      %v1264 = vpack.c.bf16 %v1237, %v1236
      %v1265 = vpack.c.bf16 %v1239, %v1238
      %v1266 = vpack.c.bf16 %v1241, %v1240
      %v1267 = vpack.c.bf16 %v1243, %v1242
      %v1268 = vpack.c.bf16 %v1245, %v1244
      %v1269 = vpack.c.bf16 %v1247, %v1246
      %v1270 = vpack.c.bf16 %v1249, %v1248
      %v1271 = vpack.c.bf16 %v1251, %v1250
      %v1272 = vpack.c.bf16 %v1253, %v1252
      %v1273 = vpack.c.bf16 %v1255, %v1254
      %v1274 = vld [vmem:[%s3] sm:$0xf]
      %v1275 = vld [vmem:[%s3 + $0x4] sm:$0xf]
      %v1276 = vld [vmem:[%s3 + $0x8] sm:$0xf]
      %v1277 = vld [vmem:[%s3 + $0xc] sm:$0xf]
      %v1278 = vld [vmem:[%s3 + $0x10] sm:$0xf]
      %v1279 = vld [vmem:[%s3 + $0x14] sm:$0xf]
      %v1280 = vld [vmem:[%s3 + $0x18] sm:$0xf]
      %v1281 = vld [vmem:[%s3 + $0x1c] sm:$0xf]
      %v1282 = vld [vmem:[%s3 + $0x20] sm:$0xf]
      %v1283 = vld [vmem:[%s3 + $0x24] sm:$0xf]
      %v1284 = vld [vmem:[%s3 + $0x28] sm:$0xf]
      %v1285 = vld [vmem:[%s3 + $0x2c] sm:$0xf]
      %v1286 = vld [vmem:[%s3 + $0x30] sm:$0xf]
      %v1287 = vld [vmem:[%s3 + $0x34] sm:$0xf]
      %v1288 = vld [vmem:[%s3 + $0x38] sm:$0xf]
      %v1289 = vld [vmem:[%s3 + $0x3c] sm:$0xf]
      %v1290 = vld [vmem:[%s3 + $0x40] sm:$0xf]
      %v1291 = vld [vmem:[%s3 + $0x44] sm:$0xf]
      %v1292 = vld [vmem:[%s3 + $0x48] sm:$0xf]
      %v1293 = vld [vmem:[%s3 + $0x4c] sm:$0xf]
      %v1294 = vld [vmem:[%s3 + $0x50] sm:$0xf]
      %v1295 = vld [vmem:[%s3 + $0x54] sm:$0xf]
      %v1296 = vld [vmem:[%s3 + $0x58] sm:$0xf]
      %v1297 = vld [vmem:[%s3 + $0x5c] sm:$0xf]
      %v1298 = vld [vmem:[%s3 + $0x60] sm:$0xf]
      %v1299 = vld [vmem:[%s3 + $0x64] sm:$0xf]
      %v1300 = vld [vmem:[%s3 + $0x68] sm:$0xf]
      %v1301 = vld [vmem:[%s3 + $0x6c] sm:$0xf]
      %v1302 = vld [vmem:[%s3 + $0x70] sm:$0xf]
      %v1303 = vld [vmem:[%s3 + $0x74] sm:$0xf]
      %v1304 = vld [vmem:[%s3 + $0x78] sm:$0xf]
      %v1305 = vld [vmem:[%s3 + $0x7c] sm:$0xf]
      %v1306 = vld [vmem:[%s3 + $0x80] sm:$0xf]
      %v1307 = vld [vmem:[%s3 + $0x84] sm:$0xf]
      %v1308 = vld [vmem:[%s3 + $0x88] sm:$0xf]
      %v1309 = vld [vmem:[%s3 + $0x8c] sm:$0xf]
      %v1310 = vld [vmem:[%s4] sm:$0x1]
      %v1312 = vlaneseq
      %v1313 = vshrl.u32 %v1312, 7
      %v1314 = vsub.s32 0, %v1313
      %v1315 = vrot.slane %v1310, %v1314
      %1317 = vxpose.xlu0.c.b16.start [1/8] %v1256, 128
      %1318 = vxpose.xlu0.c.b16.cont [2/8] %v1257, 128
      %1319 = vxpose.xlu0.c.b16.cont [3/8] %v1258, 128
      %1320 = vxpose.xlu0.c.b16.cont [4/8] %v1259, 128
      %1321 = vxpose.xlu0.c.b16.cont [5/8] %v1260, 128
      %1322 = vxpose.xlu0.c.b16.cont [6/8] %v1261, 128
      %1323 = vxpose.xlu0.c.b16.cont [7/8] %v1262, 128
      %1324 = vxpose.xlu0.c.b16.end [8/8] %v1263, 128
      %v1325 = vpop.trf.xlu0
      %v1326 = vpop.trf.xlu0
      %v1327 = vpop.trf.xlu0
      %v1328 = vpop.trf.xlu0
      %v1329 = vpop.trf.xlu0
      %v1330 = vpop.trf.xlu0
      %v1331 = vpop.trf.xlu0
      %v1332 = vpop.trf.xlu0
      %1333 = vxpose.xlu0.c.b16.start [1/8] %v1264, 128
      %1334 = vxpose.xlu0.c.b16.cont [2/8] %v1265, 128
      %1335 = vxpose.xlu0.c.b16.cont [3/8] %v1266, 128
      %1336 = vxpose.xlu0.c.b16.cont [4/8] %v1267, 128
      %1337 = vxpose.xlu0.c.b16.cont [5/8] %v1268, 128
      %1338 = vxpose.xlu0.c.b16.cont [6/8] %v1269, 128
      %1339 = vxpose.xlu0.c.b16.cont [7/8] %v1270, 128
      %1340 = vxpose.xlu0.c.b16.end [8/8] %v1271, 128
      %v1341 = vpop.trf.xlu0
      %v1342 = vpop.trf.xlu0
      %v1343 = vpop.trf.xlu0
      %v1344 = vpop.trf.xlu0
      %v1345 = vpop.trf.xlu0
      %v1346 = vpop.trf.xlu0
      %v1347 = vpop.trf.xlu0
      %v1348 = vpop.trf.xlu0
      %1349 = vxpose.xlu0.c.b16.start [1/8] %v1272, 128
      %1350 = vxpose.xlu0.c.b16.cont [2/8] %v1273, 128
      %1351 = vxpose.xlu0.c.b16.cont [3/8] 0, 128
      %1352 = vxpose.xlu0.c.b16.cont [4/8] 0, 128
      %1353 = vxpose.xlu0.c.b16.cont [5/8] 0, 128
      %1354 = vxpose.xlu0.c.b16.cont [6/8] 0, 128
      %1355 = vxpose.xlu0.c.b16.cont [7/8] 0, 128
      %1356 = vxpose.xlu0.c.b16.end [8/8] 0, 128
      %v1357 = vpop.trf.xlu0
      %v1358 = vpop.trf.xlu0
      %v1359 = vpop.trf.xlu0
      %v1360 = vpop.trf.xlu0
      %v1361 = vpop.trf.xlu0
      %v1362 = vpop.trf.xlu0
      %v1363 = vpop.trf.xlu0
      %v1364 = vpop.trf.xlu0
      %v1401 = vunpack.c.l.b16 %v1274
      %v1402 = vunpack.c.l.b16 %v1275
      %v1403 = vunpack.c.l.b16 %v1276
      %v1404 = vunpack.c.l.b16 %v1277
      %v1405 = vunpack.c.l.b16 %v1278
      %v1406 = vunpack.c.l.b16 %v1279
      %v1407 = vunpack.c.l.b16 %v1280
      %v1408 = vunpack.c.l.b16 %v1281
      %v1409 = vunpack.c.l.b16 %v1282
      %v1410 = vunpack.c.l.b16 %v1283
      %v1411 = vunpack.c.l.b16 %v1284
      %v1412 = vunpack.c.l.b16 %v1285
      %v1413 = vunpack.c.l.b16 %v1286
      %v1414 = vunpack.c.l.b16 %v1287
      %v1415 = vunpack.c.l.b16 %v1288
      %v1416 = vunpack.c.l.b16 %v1289
      %v1417 = vunpack.c.l.b16 %v1290
      %v1418 = vunpack.c.l.b16 %v1291
      %v1419 = vunpack.c.l.b16 %v1292
      %v1420 = vunpack.c.l.b16 %v1293
      %v1421 = vunpack.c.l.b16 %v1294
      %v1422 = vunpack.c.l.b16 %v1295
      %v1423 = vunpack.c.l.b16 %v1296
      %v1424 = vunpack.c.l.b16 %v1297
      %v1425 = vunpack.c.l.b16 %v1298
      %v1426 = vunpack.c.l.b16 %v1299
      %v1427 = vunpack.c.l.b16 %v1300
      %v1428 = vunpack.c.l.b16 %v1301
      %v1429 = vunpack.c.l.b16 %v1302
      %v1430 = vunpack.c.l.b16 %v1303
      %v1431 = vunpack.c.l.b16 %v1304
      %v1432 = vunpack.c.l.b16 %v1305
      %v1433 = vunpack.c.l.b16 %v1306
      %v1434 = vunpack.c.l.b16 %v1307
      %v1435 = vunpack.c.l.b16 %v1308
      %v1436 = vunpack.c.l.b16 %v1309
      %v1437 = vpack.c.b16 %v1402, %v1401
      %v1438 = vpack.c.b16 %v1404, %v1403
      %v1439 = vpack.c.b16 %v1406, %v1405
      %v1440 = vpack.c.b16 %v1408, %v1407
      %v1441 = vpack.c.b16 %v1410, %v1409
      %v1442 = vpack.c.b16 %v1412, %v1411
      %v1443 = vpack.c.b16 %v1414, %v1413
      %v1444 = vpack.c.b16 %v1416, %v1415
      %v1445 = vpack.c.b16 %v1418, %v1417
      %v1446 = vpack.c.b16 %v1420, %v1419
      %v1447 = vpack.c.b16 %v1422, %v1421
      %v1448 = vpack.c.b16 %v1424, %v1423
      %v1449 = vpack.c.b16 %v1426, %v1425
      %v1450 = vpack.c.b16 %v1428, %v1427
      %v1451 = vpack.c.b16 %v1430, %v1429
      %v1452 = vpack.c.b16 %v1432, %v1431
      %v1453 = vpack.c.b16 %v1434, %v1433
      %v1454 = vpack.c.b16 %v1436, %v1435
      %vm1473 = vcmask 261120
      %v1475 = vsel %vm1473, %v1357, 0
      %1477 = vmatprep.subr.bf16.mxu0 0
      %1478 = vmatpush1.bf16.msra.mxu0 %v1437
      %1479 = vmatprep.subr.bf16.mxu0 0
      %1480 = vmatpush1.bf16.msra.mxu0 %v1438
      %1481 = vmatprep.subr.bf16.mxu0 0
      %1482 = vmatpush1.bf16.msra.mxu0 %v1439
      %1483 = vmatprep.subr.bf16.mxu0 0
      %1484 = vmatpush1.bf16.msra.mxu0 %v1440
      %1485 = vmatprep.subr.bf16.mxu0 0
      %1486 = vmatpush1.bf16.msra.mxu0 %v1441
      %1487 = vmatprep.subr.bf16.mxu0 0
      %1488 = vmatpush1.bf16.msra.mxu0 %v1442
      %1489 = vmatprep.subr.bf16.mxu0 0
      %1490 = vmatpush1.bf16.msra.mxu0 %v1443
      %1491 = vmatprep.subr.bf16.mxu0 0
      %1492 = vmatpush1.bf16.msra.mxu0 %v1444
      %1493 = vmatprep.subr.bf16.mxu0 0
      %1494 = vmatpush1.bf16.msra.mxu0 %v1445
      %1495 = vmatprep.subr.bf16.mxu0 0
      %1496 = vmatpush1.bf16.msra.mxu0 %v1446
      %1497 = vmatprep.subr.bf16.mxu0 0
      %1498 = vmatpush1.bf16.msra.mxu0 %v1447
      %1499 = vmatprep.subr.bf16.mxu0 0
      %1500 = vmatpush1.bf16.msra.mxu0 %v1448
      %1501 = vmatprep.subr.bf16.mxu0 0
      %1502 = vmatpush1.bf16.msra.mxu0 %v1449
      %1503 = vmatprep.subr.bf16.mxu0 0
      %1504 = vmatpush1.bf16.msra.mxu0 %v1450
      %1505 = vmatprep.subr.bf16.mxu0 0
      %1506 = vmatpush1.bf16.msra.mxu0 %v1451
      %1507 = vmatprep.subr.bf16.mxu0 0
      %1508 = vmatpush1.bf16.msra.mxu0 %v1452
      %1509 = vmatprep.mubr.bf16.mxu0 %v1341
      %1510 = vmatmul.mubr.bf16.gmra.mrb[0].mxu0 %v1325
      %v1511 = vpop.f32.mrb[0].mxu0
      %v1512 = vadd.f32 %v1315, %v1511
      %v1513 = vpop.f32.mrb[0].mxu0
      %v1514 = vpop.f32.mrb[0].mxu0
      %v1515 = vadd.f32 %v1315, %v1514
      %v1516 = vpop.f32.mrb[0].mxu0
      %1517 = vdwg.mxu0
      %1518 = vmatprep.subr.bf16.mxu0 0
      %1519 = vmatpush1.bf16.msra.mxu0 %v1453
      %1520 = vmatprep.subr.bf16.mxu0 0
      %1521 = vmatpush1.bf16.msra.mxu0 %v1454
      %1522 = vmatprep.subr.bf16.mxu0 0
      %1523 = vmatpush1.bf16.msra.mxu0 0
      %1524 = vmatprep.subr.bf16.mxu0 0
      %1525 = vmatpush1.bf16.msra.mxu0 0
      %1526 = vmatprep.subr.bf16.mxu0 0
      %1527 = vmatpush1.bf16.msra.mxu0 0
      %1528 = vmatprep.subr.bf16.mxu0 0
      %1529 = vmatpush1.bf16.msra.mxu0 0
      %1530 = vmatprep.subr.bf16.mxu0 0
      %1531 = vmatpush1.bf16.msra.mxu0 0
      %1532 = vmatprep.subr.bf16.mxu0 0
      %1533 = vmatpush1.bf16.msra.mxu0 0
      %1534 = vmatprep.subr.bf16.mxu0 0
      %1535 = vmatpush1.bf16.msra.mxu0 0
      %1536 = vmatprep.subr.bf16.mxu0 0
      %1537 = vmatpush1.bf16.msra.mxu0 0
      %1538 = vmatprep.subr.bf16.mxu0 0
      %1539 = vmatpush1.bf16.msra.mxu0 0
      %1540 = vmatprep.subr.bf16.mxu0 0
      %1541 = vmatpush1.bf16.msra.mxu0 0
      %1542 = vmatprep.subr.bf16.mxu0 0
      %1543 = vmatpush1.bf16.msra.mxu0 0
      %1544 = vmatprep.subr.bf16.mxu0 0
      %1545 = vmatpush1.bf16.msra.mxu0 0
      %1546 = vmatprep.subr.bf16.mxu0 0
      %1547 = vmatpush1.bf16.msra.mxu0 0
      %1548 = vmatprep.subr.bf16.mxu0 0
      %1549 = vmatpush1.bf16.msra.mxu0 0
      %1550 = vmatprep.mubr.bf16.mxu0 0
      %1551 = vmatmul.mubr.bf16.gmra.mrb[0].mxu0 %v1475
      %v1552 = vpop.f32.mrb[0].mxu0
      %v1553 = vadd.f32 %v1512, %v1552
      %v1554 = vpop.f32.mrb[0].mxu0
      %v1555 = vpop.f32.mrb[0].mxu0
      %v1556 = vadd.f32 %v1515, %v1555
      %v1557 = vpop.f32.mrb[0].mxu0
      %1558 = vdwg.mxu0
      %v1559 = vld [vmem:[%s5] sm:$0xf]
      %v1560 = vld [vmem:[%s5 + $0x4] sm:$0xf]
      %v1561 = vld [vmem:[%s5 + $0x8] sm:$0xf]
      %v1562 = vld [vmem:[%s5 + $0xc] sm:$0xf]
      %v1563 = vmul.f32 %v1553, %v1553
      %v1564 = vmul.f32 %v1556, %v1556
      %v1565 = vsel %vm1473, %v1563, 0.0
      %1566 = vadd.xlane.f32.xlu0 %v1565
      %v1567 = vpop.xlane.xlu0 %1566
      %v1568 = vsel %vm1473, %v1564, 0.0
      %1569 = vadd.xlane.f32.xlu0 %v1568
      %v1570 = vpop.xlane.xlu0 %1569
      %v1571 = vmul.f32 %v1567, 0.5
      %v1572 = vmul.f32 %v1570, 0.5
      %v1573 = vpack.c.bf16 %v1556, %v1553
      %v1578 = vunpack.c.l.b16 %v1559
      %v1579 = vunpack.c.l.b16 %v1560
      %v1580 = vunpack.c.l.b16 %v1561
      %v1581 = vunpack.c.l.b16 %v1562
      %v1582 = vpack.c.b16 %v1579, %v1578
      %v1583 = vpack.c.b16 %v1581, %v1580
      %v1587 = vsel %vm1473, %v1573, 0
      %1589 = vmatprep.subr.bf16.mxu0 0
      %1590 = vmatpush1.bf16.msra.mxu0 %v1582
      %1591 = vmatprep.subr.bf16.mxu0 0
      %1592 = vmatpush1.bf16.msra.mxu0 %v1583
      %1593 = vmatprep.subr.bf16.mxu0 0
      %1594 = vmatpush1.bf16.msra.mxu0 0
      %1595 = vmatprep.subr.bf16.mxu0 0
      %1596 = vmatpush1.bf16.msra.mxu0 0
      %1597 = vmatprep.subr.bf16.mxu0 0
      %1598 = vmatpush1.bf16.msra.mxu0 0
      %1599 = vmatprep.subr.bf16.mxu0 0
      %1600 = vmatpush1.bf16.msra.mxu0 0
      %1601 = vmatprep.subr.bf16.mxu0 0
      %1602 = vmatpush1.bf16.msra.mxu0 0
      %1603 = vmatprep.subr.bf16.mxu0 0
      %1604 = vmatpush1.bf16.msra.mxu0 0
      %1605 = vmatprep.subr.bf16.mxu0 0
      %1606 = vmatpush1.bf16.msra.mxu0 0
      %1607 = vmatprep.subr.bf16.mxu0 0
      %1608 = vmatpush1.bf16.msra.mxu0 0
      %1609 = vmatprep.subr.bf16.mxu0 0
      %1610 = vmatpush1.bf16.msra.mxu0 0
      %1611 = vmatprep.subr.bf16.mxu0 0
      %1612 = vmatpush1.bf16.msra.mxu0 0
      %1613 = vmatprep.subr.bf16.mxu0 0
      %1614 = vmatpush1.bf16.msra.mxu0 0
      %1615 = vmatprep.subr.bf16.mxu0 0
      %1616 = vmatpush1.bf16.msra.mxu0 0
      %1617 = vmatprep.subr.bf16.mxu0 0
      %1618 = vmatpush1.bf16.msra.mxu0 0
      %1619 = vmatprep.subr.bf16.mxu0 0
      %1620 = vmatpush1.bf16.msra.mxu0 0
      %1621 = vmatprep.mubr.bf16.mxu0 0
      %1622 = vmatmul.mubr.bf16.gmra.mrb[0].mxu0 %v1587
      %v1623 = vpop.f32.mrb[0].mxu0
      %v1624 = vadd.f32 0.0, %v1623
      %v1625 = vpop.f32.mrb[0].mxu0
      %v1626 = vpop.f32.mrb[0].mxu0
      %v1627 = vadd.f32 0.0, %v1626
      %v1628 = vpop.f32.mrb[0].mxu0
      %1629 = vdwg.mxu0
      %v1630 = vsub.f32 %v1624, %v1571
      %v1631 = vsub.f32 %v1627, %v1572
      %v1632 = vmul.f32 %v1630, 1.442695
      %v1633 = vpow.pop %v1632
      %v1634 = vmul.f32 %v1631, 1.442695
      %v1635 = vpow.pop %v1634
      %v1636 = vmul.f32 %v1633, 0.25
      %v1637 = vmul.f32 %v1635, 0.25
      %1640 = vrot.lane.b32.xlu0 %v1563, 96
      %v1641 = vpop.permute.xlu0 %1640
      %1642 = vrot.lane.b32.xlu0 %v1564, 96
      %v1643 = vpop.permute.xlu0 %1642
      %v1646 = vsel %vm1473, %v1641, 0.0
      %1647 = vadd.xlane.f32.xlu0 %v1646
      %v1648 = vpop.xlane.xlu0 %1647
      %v1649 = vsel %vm1473, %v1643, 0.0
      %1650 = vadd.xlane.f32.xlu0 %v1649
      %v1651 = vpop.xlane.xlu0 %1650
      %v1652 = vmul.f32 %v1648, 0.5
      %v1653 = vmul.f32 %v1651, 0.5
      %1655 = vrot.lane.b32.xlu0 %v1573, 96
      %v1656 = vpop.permute.xlu0 %1655
      %v1658 = vsel %vm1473, %v1656, 0
      %1660 = vmatprep.subr.bf16.mxu0 0
      %1661 = vmatpush1.bf16.msra.mxu0 %v1582
      %1662 = vmatprep.subr.bf16.mxu0 0
      %1663 = vmatpush1.bf16.msra.mxu0 %v1583
      %1664 = vmatprep.subr.bf16.mxu0 0
      %1665 = vmatpush1.bf16.msra.mxu0 0
      %1666 = vmatprep.subr.bf16.mxu0 0
      %1667 = vmatpush1.bf16.msra.mxu0 0
      %1668 = vmatprep.subr.bf16.mxu0 0
      %1669 = vmatpush1.bf16.msra.mxu0 0
      %1670 = vmatprep.subr.bf16.mxu0 0
      %1671 = vmatpush1.bf16.msra.mxu0 0
      %1672 = vmatprep.subr.bf16.mxu0 0
      %1673 = vmatpush1.bf16.msra.mxu0 0
      %1674 = vmatprep.subr.bf16.mxu0 0
      %1675 = vmatpush1.bf16.msra.mxu0 0
      %1676 = vmatprep.subr.bf16.mxu0 0
      %1677 = vmatpush1.bf16.msra.mxu0 0
      %1678 = vmatprep.subr.bf16.mxu0 0
      %1679 = vmatpush1.bf16.msra.mxu0 0
      %1680 = vmatprep.subr.bf16.mxu0 0
      %1681 = vmatpush1.bf16.msra.mxu0 0
      %1682 = vmatprep.subr.bf16.mxu0 0
      %1683 = vmatpush1.bf16.msra.mxu0 0
      %1684 = vmatprep.subr.bf16.mxu0 0
      %1685 = vmatpush1.bf16.msra.mxu0 0
      %1686 = vmatprep.subr.bf16.mxu0 0
      %1687 = vmatpush1.bf16.msra.mxu0 0
      %1688 = vmatprep.subr.bf16.mxu0 0
      %1689 = vmatpush1.bf16.msra.mxu0 0
      %1690 = vmatprep.subr.bf16.mxu0 0
      %1691 = vmatpush1.bf16.msra.mxu0 0
      %1692 = vmatprep.mubr.bf16.mxu0 0
      %1693 = vmatmul.mubr.bf16.gmra.mrb[0].mxu0 %v1658
      %v1694 = vpop.f32.mrb[0].mxu0
      %v1695 = vadd.f32 0.0, %v1694
      %v1696 = vpop.f32.mrb[0].mxu0
      %v1697 = vpop.f32.mrb[0].mxu0
      %v1698 = vadd.f32 0.0, %v1697
      %v1699 = vpop.f32.mrb[0].mxu0
      %1700 = vdwg.mxu0
      %v1701 = vsub.f32 %v1695, %v1652
      %v1702 = vsub.f32 %v1698, %v1653
      %v1703 = vmul.f32 %v1701, 1.442695
      %v1704 = vpow.pop %v1703
      %v1705 = vmul.f32 %v1702, 1.442695
      %v1706 = vpow.pop %v1705
      %v1707 = vmul.f32 %v1704, 0.25
      %v1708 = vmul.f32 %v1706, 0.25
      %1709 = vst.msk [vmem:[%s391] sm:$0xff] %vm484, %v1707
      %1710 = vst.msk [vmem:[%s391 + $0x8] sm:$0xff] %vm484, %v1708
      %v1711 = vunpack.c.l.b16 %v1573
      %v1712 = vunpack.c.h.b16 %v1573
      %v1713 = vpack.c.b16 %v1711, %v1711
      %v1714 = vpack.c.b16 %v1712, %v1712
      %1715 = vrot.lane.b32.xlu0 %v1713, 64
      %v1716 = vpop.permute.xlu0 %1715
      %1717 = vrot.lane.b32.xlu0 %v1714, 64
      %v1718 = vpop.permute.xlu0 %1717
      %vm1721 = vcmask 257024
      %1722 = vst.msk [vmem:[%s401] sm:$0xf] %vm1721, %v1716
      %1723 = vst.msk [vmem:[%s401 + $0x4] sm:$0xf] %vm1721, %v1718
      %p1724 = scmp.eq.s32.totalorder %s26, 0
      // Predicated region
      $region45: #{_lambda_.7} parent=43 // pred_check
        %p1725 = pneg %p1724
      $region46: #{_lambda_.7} parent=43 // pred_check_branch
        %1727 = sbr.rel (%p1725) target = $region48
      $region47: #{_lambda_.7} parent=43 // pred_region
        %vm1728 = vcmask 122880
        %1729 = vst.msk [vmem:[%s405] sm:$0x1] %vm1728, 0.0
        %1730 = vst.msk [vmem:[%s410] sm:$0xff] %vm1473, 0.0
        %1731 = vst.msk [vmem:[%s410 + $0x8] sm:$0xff] %vm1473, 0.0
      $region48: #{_lambda_.7} parent=43 // pred_fallthru
        _
      %v1732 = vld [vmem:[%s405] sm:$0x1]
      %v1733 = vsel %vm484, %v1636, 0.0
      %v1734 = vsel %vm484, %v1637, 0.0
      %v1735 = vadd.f32 %v1733, %v1734
      %v1736 = vrot.slane %v1735, 4
      %v1737 = vadd.f32 %v1735, %v1736
      %v1738 = vrot.slane %v1737, 2
      %v1739 = vadd.f32 %v1737, %v1738
      %v1740 = vrot.slane %v1739, 1
      %v1741 = vadd.f32 %v1739, %v1740
      %v1742 = vadd.f32 %v1732, %v1741
      %vm1743 = vcmask 122880
      %1744 = vst.msk [vmem:[%s405] sm:$0x1] %vm1743, %v1742
      %v1745 = vld [vmem:[%s410] sm:$0xff]
      %v1746 = vld [vmem:[%s410 + $0x8] sm:$0xff]
      %v1747 = vpack.c.bf16 %v1637, %v1636
      %1748 = vxpose.xlu0.c.b16.start [1/8] %v1747, 128
      %1749 = vxpose.xlu0.c.b16.cont [2/8] 0, 128
      %1750 = vxpose.xlu0.c.b16.cont [3/8] 0, 128
      %1751 = vxpose.xlu0.c.b16.cont [4/8] 0, 128
      %1752 = vxpose.xlu0.c.b16.cont [5/8] 0, 128
      %1753 = vxpose.xlu0.c.b16.cont [6/8] 0, 128
      %1754 = vxpose.xlu0.c.b16.cont [7/8] 0, 128
      %1755 = vxpose.xlu0.c.b16.end [8/8] 0, 128
      %v1756 = vpop.trf.xlu0
      %v1757 = vpop.trf.xlu0
      %v1758 = vpop.trf.xlu0
      %v1759 = vpop.trf.xlu0
      %v1760 = vpop.trf.xlu0
      %v1761 = vpop.trf.xlu0
      %v1762 = vpop.trf.xlu0
      %v1763 = vpop.trf.xlu0
      %1764 = vrot.lane.b32.xlu0 %v1573, 64
      %v1765 = vpop.permute.xlu0 %1764
      %v1768 = vsel %vm484, %v1756, 0
      %1770 = vmatprep.subr.bf16.mxu0 0
      %1771 = vmatpush1.bf16.msra.mxu0 %v1765
      %1772 = vmatprep.subr.bf16.mxu0 0
      %1773 = vmatpush1.bf16.msra.mxu0 0
      %1774 = vmatprep.subr.bf16.mxu0 0
      %1775 = vmatpush1.bf16.msra.mxu0 0
      %1776 = vmatprep.subr.bf16.mxu0 0
      %1777 = vmatpush1.bf16.msra.mxu0 0
      %1778 = vmatprep.subr.bf16.mxu0 0
      %1779 = vmatpush1.bf16.msra.mxu0 0
      %1780 = vmatprep.subr.bf16.mxu0 0
      %1781 = vmatpush1.bf16.msra.mxu0 0
      %1782 = vmatprep.subr.bf16.mxu0 0
      %1783 = vmatpush1.bf16.msra.mxu0 0
      %1784 = vmatprep.subr.bf16.mxu0 0
      %1785 = vmatpush1.bf16.msra.mxu0 0
      %1786 = vmatprep.subr.bf16.mxu0 0
      %1787 = vmatpush1.bf16.msra.mxu0 0
      %1788 = vmatprep.subr.bf16.mxu0 0
      %1789 = vmatpush1.bf16.msra.mxu0 0
      %1790 = vmatprep.subr.bf16.mxu0 0
      %1791 = vmatpush1.bf16.msra.mxu0 0
      %1792 = vmatprep.subr.bf16.mxu0 0
      %1793 = vmatpush1.bf16.msra.mxu0 0
      %1794 = vmatprep.subr.bf16.mxu0 0
      %1795 = vmatpush1.bf16.msra.mxu0 0
      %1796 = vmatprep.subr.bf16.mxu0 0
      %1797 = vmatpush1.bf16.msra.mxu0 0
      %1798 = vmatprep.subr.bf16.mxu0 0
      %1799 = vmatpush1.bf16.msra.mxu0 0
      %1800 = vmatprep.subr.bf16.mxu0 0
      %1801 = vmatpush1.bf16.msra.mxu0 0
      %1802 = vmatprep.mubr.bf16.mxu0 0
      %1803 = vmatmul.mubr.bf16.gmra.mrb[0].mxu0 %v1768
      %v1804 = vpop.f32.mrb[0].mxu0
      %v1805 = vadd.f32 0.0, %v1804
      %v1806 = vpop.f32.mrb[0].mxu0
      %v1807 = vpop.f32.mrb[0].mxu0
      %v1808 = vadd.f32 0.0, %v1807
      %v1809 = vpop.f32.mrb[0].mxu0
      %1810 = vdwg.mxu0
      %v1811 = vadd.f32 %v1745, %v1805
      %v1812 = vadd.f32 %v1746, %v1808
      %1813 = vst.msk [vmem:[%s410] sm:$0xff] %vm1473, %v1811
      %1814 = vst.msk [vmem:[%s410 + $0x8] sm:$0xff] %vm1473, %v1812
      %s1815 = smul.u32 2, %s26
      %p1816 = scmp.lt.s32.totalorder %s25, 1
      %s1817 = scalar_select %p1816, %s25, 1
      %p1818 = scmp.lt.s32.totalorder %s1815, 1
      %s1819 = scalar_select %p1818, %s1815, 1
      %s1820 = smul.addr %s1817, 2
      %s1821 = sadd.s32 %s1819, %s1820
      %s1822 = smul.addr %s1821, 8
      %s1823 = scalar_lea.vmem %s6, %s1822
      %s1824 = smul.u32 2, %s26
      %p1825 = scmp.lt.s32.totalorder %s25, 1
      %s1826 = scalar_select %p1825, %s25, 1
      %p1827 = scmp.lt.s32.totalorder %s1824, 1
      %s1828 = scalar_select %p1827, %s1824, 1
      %s1829 = smul.addr %s1826, 2
      %s1830 = sadd.s32 %s1828, %s1829
      %s1831 = smul.addr %s1830, 4
      %s1832 = scalar_lea.vmem %s7, %s1831
      %p1833 = scmp.lt.s32.totalorder %s25, 1
      %s1834 = scalar_select %p1833, %s25, 1
      %s1835 = scalar_lea.vmem %s8, %s1834
      %p1836 = scmp.lt.s32.totalorder %s25, 1
      %s1837 = scalar_select %p1836, %s25, 1
      %s1838 = smul.addr %s1837, 2
      %s1839 = smul.addr %s1838, 8
      %s1840 = scalar_lea.vmem %s9, %s1839
      // Predicated region
      $region49: #{_lambda_.7} parent=43 // pred_check
        %p1841 = pneg %p186
      $region50: #{_lambda_.7} parent=43 // pred_check_branch
        %1843 = sbr.rel (%p1841) target = $region52
      $region51: #{_lambda_.7} parent=43 // pred_region
        %s1844 = smul.u32 2, %s26
      $region52: #{_lambda_.7} parent=43 // pred_fallthru
        _
      // Predicated region
      $region53: #{_lambda_.7} parent=43 // pred_check
        %p1845 = pneg %p214
      $region54: #{_lambda_.7} parent=43 // pred_check_branch
        %1847 = sbr.rel (%p1845) target = $region56
      $region55: #{_lambda_.7} parent=43 // pred_region
        %s1848 = smul.u32 2, %s26
      $region56: #{_lambda_.7} parent=43 // pred_fallthru
        _
      // Predicated region
      $region57: #{_lambda_.7} parent=43 // pred_check
        %p1849 = pneg %p240
      $region58: #{_lambda_.7} parent=43 // pred_check_branch
        %1851 = sbr.rel (%p1849) target = $region60
      $region59: #{_lambda_.7} parent=43 // pred_region
        _
      $region60: #{_lambda_.7} parent=43 // pred_fallthru
        _
      // Predicated region
      $region61: #{_lambda_.7} parent=43 // pred_check
        %p1852 = pneg %p266
      $region62: #{_lambda_.7} parent=43 // pred_check_branch
        %1854 = sbr.rel (%p1852) target = $region64
      $region63: #{_lambda_.7} parent=43 // pred_region
        _
      $region64: #{_lambda_.7} parent=43 // pred_fallthru
        _
    $region44: #{_lambda_.7} parent=5 // pred_fallthru
      _
    %p1855 = scmp.le.s32.totalorder 2, %s16
    // Predicated region
    $region65: #{_lambda_.7} parent=5 // pred_check
      %p1856 = pneg %p1855
    $region66: #{_lambda_.7} parent=5 // pred_check_branch
      %1858 = sbr.rel (%p1856) target = $region68
    $region67: #{_lambda_.7} parent=5 // pred_region
      %s1859 = ssub.s32 %s16, 2
      // Predicated region
      $region69: #{_lambda_.7} parent=67 // pred_check
        %p1860 = pneg %p192
      $region70: #{_lambda_.7} parent=67 // pred_check_branch
        %1862 = sbr.rel (%p1860) target = $region72
      $region71: #{_lambda_.7} parent=67 // pred_region
        %s1863 = smul.u32 2, %s28
        %p1864 = scmp.lt.s32.totalorder %s27, 1
        %s1865 = scalar_select %p1864, %s27, 1
        %p1866 = scmp.lt.s32.totalorder %s1863, 1
        %s1867 = scalar_select %p1866, %s1863, 1
        %s1868 = smul.addr %s1865, 2
        %s1869 = sadd.s32 %s1867, %s1868
        %s1870 = smul.addr %s1869, 8
        %s1871 = scalar_lea.vmem %s6, %s1870
      $region72: #{_lambda_.7} parent=67 // pred_fallthru
        _
      // Predicated region
      $region73: #{_lambda_.7} parent=67 // pred_check
        %p1872 = pneg %p220
      $region74: #{_lambda_.7} parent=67 // pred_check_branch
        %1874 = sbr.rel (%p1872) target = $region76
      $region75: #{_lambda_.7} parent=67 // pred_region
        %s1875 = smul.u32 2, %s28
        %p1876 = scmp.lt.s32.totalorder %s27, 1
        %s1877 = scalar_select %p1876, %s27, 1
        %p1878 = scmp.lt.s32.totalorder %s1875, 1
        %s1879 = scalar_select %p1878, %s1875, 1
        %s1880 = smul.addr %s1877, 2
        %s1881 = sadd.s32 %s1879, %s1880
        %s1882 = smul.addr %s1881, 4
        %s1883 = scalar_lea.vmem %s7, %s1882
      $region76: #{_lambda_.7} parent=67 // pred_fallthru
        _
      // Predicated region
      $region77: #{_lambda_.7} parent=67 // pred_check
        %p1884 = pneg %p246
      $region78: #{_lambda_.7} parent=67 // pred_check_branch
        %1886 = sbr.rel (%p1884) target = $region80
      $region79: #{_lambda_.7} parent=67 // pred_region
        %p1887 = scmp.lt.s32.totalorder %s27, 1
        %s1888 = scalar_select %p1887, %s27, 1
        %s1889 = scalar_lea.vmem %s8, %s1888
      $region80: #{_lambda_.7} parent=67 // pred_fallthru
        _
      // Predicated region
      $region81: #{_lambda_.7} parent=67 // pred_check
        %p1890 = pneg %p272
      $region82: #{_lambda_.7} parent=67 // pred_check_branch
        %1892 = sbr.rel (%p1890) target = $region84
      $region83: #{_lambda_.7} parent=67 // pred_region
        %p1893 = scmp.lt.s32.totalorder %s27, 1
        %s1894 = scalar_select %p1893, %s27, 1
        %s1895 = smul.addr %s1894, 2
        %s1896 = smul.addr %s1895, 8
        %s1897 = scalar_lea.vmem %s9, %s1896
      $region84: #{_lambda_.7} parent=67 // pred_fallthru
        _
    $region68: #{_lambda_.7} parent=5 // pred_fallthru
      _
  $region6: #{_lambda_.7} parent=0 // loop_footer
    %s20 = sadd.s32 1, %s16
  $region7: #{_lambda_.7} parent=0 // loop_footer_branch
    %15 = sbr.rel target = $region3
  $region8: #{_lambda_.7} parent=0 // loop_exit
    _

// kernel: _lambda_.8
$region0: #{_lambda_.8}
  #allocation0 [shape = 'u32[]', space=smem, size = 0x4, offset = 0x4, fixed_abs, tag = 'smem constant byte address 0x4 - core index']
  #allocation1 [shape = 'u32[144,128]{1,0:T(1,128)}', space=vmem, size = 0x12000, scoped, tag = 'internal scratch']
  %s0 = inlined_call_operand.vmem [shape: f32[2,16,16], index: 0, kind: input, shape index: {}]
  %s1 = inlined_call_operand.vmem [shape: bf16[2,16,32], index: 1, kind: input, shape index: {}]
  %s2 = inlined_call_operand.vmem [shape: f32[2,1,16], index: 2, kind: input, shape index: {}]
  %s3 = inlined_call_operand.vmem [shape: f32[2,16,32], index: 3, kind: input, shape index: {}]
  %s4 = inlined_call_operand.vmem [shape: bf16[32,32], index: 4, kind: input, shape index: {}]
  %s5 = inlined_call_operand.vmem [shape: f32[1,32], index: 5, kind: input, shape index: {}]
  %s6 = inlined_call_operand.vmem [shape: f32[1,32], index: 6, kind: input, shape index: {}]
  %s7 = inlined_call_operand.vmem [shape: f32[1,32], index: 7, kind: input, shape index: {}]
  %s8 = inlined_call_operand.vmem [shape: bf16[32,32], index: 8, kind: input, shape index: {}]
  %s9 = inlined_call_operand.vmem [shape: f32[1,32], index: 9, kind: input, shape index: {}]
  %s10 = inlined_call_operand.vmem [shape: bf16[32,32], index: 10, kind: input, shape index: {}]
  %s11 = inlined_call_operand.vmem [shape: f32[1,32], index: 11, kind: input, shape index: {}]
  %s12 = inlined_call_operand.vmem [shape: bf16[2,32,16], index: 12, kind: output, shape index: {}]
  %s13 = sld [smem:[#allocation0]]
  $region81: #{_lambda_.8} parent=0
    _
  %s15 = ssub.s32 1, %s13
  %s16 = scalar_select 0, %s15, %s13
  loop: start=0, step=1, limit=4
  $region2: #{_lambda_.8} parent=0 // loop_pre_header
    _
  $region3: #{_lambda_.8} parent=0 // loop_header
    %s18 = sphi 0, %s22
    %p19 = scmp.ge.s32.totalorder %s18, 4
    %s25 = sphi 0, %s37
    %s26 = sphi 0, %s33
    %s27 = sphi 0, %s25
    %s28 = sphi 0, %s26
    %s29 = sphi 0, %s27
    %s30 = sphi 0, %s28
    %s42 = sphi 0, %s44
    %s45 = sphi 0, %s42
    %s46 = sphi 0, %s45
    %s62 = sphi 0, %s46
    %s70 = sphi 0, %s72
    %s73 = sphi 0, %s70
    %s74 = sphi 0, %s73
    %s90 = sphi 0, %s74
    %s96 = sphi 0, %s98
    %s99 = sphi 0, %s96
    %s100 = sphi 0, %s99
    %s116 = sphi 0, %s100
    %s122 = sphi 0, %s124
    %s125 = sphi 0, %s122
    %s126 = sphi 0, %s125
    %s142 = sphi 0, %s126
    %s146 = sphi 0, %s146
    %s148 = sphi 0, %s146
    %s149 = sphi 0, %s148
    %s163 = sphi 0, %s149
    %s167 = sphi 0, %s167
    %s169 = sphi 0, %s167
    %s170 = sphi 0, %s169
    %s184 = sphi 0, %s170
    %s188 = sphi 0, %s188
    %s190 = sphi 0, %s188
    %s191 = sphi 0, %s190
    %s205 = sphi 0, %s191
    %s209 = sphi 0, %s209
    %s211 = sphi 0, %s209
    %s212 = sphi 0, %s211
    %s226 = sphi 0, %s212
    %s230 = sphi 0, %s230
    %s232 = sphi 0, %s230
    %s233 = sphi 0, %s232
    %s247 = sphi 0, %s233
    %s251 = sphi 0, %s251
    %s253 = sphi 0, %s251
    %s254 = sphi 0, %s253
    %s268 = sphi 0, %s254
    %s272 = sphi 0, %s272
    %s274 = sphi 0, %s272
    %s275 = sphi 0, %s274
    %s289 = sphi 0, %s275
    %s293 = sphi 0, %s293
    %s295 = sphi 0, %s293
    %s296 = sphi 0, %s295
    %s310 = sphi 0, %s296
    %s318 = sphi 0, %s320
    %s321 = sphi 0, %s318
    %s322 = sphi 0, %s321
    %s338 = sphi 0, %s322
  $region4: #{_lambda_.8} parent=0 // loop_header_branch
    %21 = sbr.rel (%p19) target = $region8
  $region5: #{_lambda_.8} parent=0 // loop_body
    %s23 = ssub.s32 %s18, 1
    %s24 = ssub.s32 %s18, 2
    %s31 = sadd.s32 1, %s26
    %p32 = scmp.ge.s32.totalorder %s31, 1
    %s33 = scalar_select %p32, 0, %s31
    %s34 = sadd.s32 1, %s25
    %s35 = scalar_select %p32, %s34, %s25
    %p36 = scmp.ge.s32.totalorder %s35, 2
    %s37 = scalar_select %p36, 0, %s35
    %s38 = ssub.s32 %s25, %s37
    %s39 = ssub.s32 %s26, %s33
    %s40 = sor.u32 %s38, %s39
    %p41 = scmp.eq.s32.totalorder %s40, 0
    %s43 = sadd.s32 %s42, 1
    %s44 = scalar_select %p41, %s42, %s43
    %p47 = pneg %p41
    %p48 = scmp.eq.s32.totalorder %s18, 1
    %p49 = por %p47, %p48
    %p50 = scmp.ne.s32.totalorder %s42, %s45
    %p51 = scmp.eq.s32.totalorder %s18, 0
    %p52 = por %p50, %p51
    %p53 = scmp.ne.s32.totalorder %s42, %s45
    %p54 = scmp.eq.s32.totalorder %s23, 1
    %p55 = por %p53, %p54
    %p56 = scmp.ne.s32.totalorder %s45, %s46
    %p57 = scmp.eq.s32.totalorder %s23, 0
    %p58 = por %p56, %p57
    %p59 = scmp.ne.s32.totalorder %s45, %s46
    %p60 = scmp.eq.s32.totalorder %s24, 1
    %p61 = por %p59, %p60
    %p63 = scmp.ne.s32.totalorder %s46, %s62
    %p64 = scmp.eq.s32.totalorder %s24, 0
    %p65 = por %p63, %p64
    %s66 = ssub.s32 %s25, %s37
    %s67 = ssub.s32 %s26, %s33
    %s68 = sor.u32 %s66, %s67
    %p69 = scmp.eq.s32.totalorder %s68, 0
    %s71 = sadd.s32 %s70, 1
    %s72 = scalar_select %p69, %s70, %s71
    %p75 = pneg %p69
    %p76 = scmp.eq.s32.totalorder %s18, 1
    %p77 = por %p75, %p76
    %p78 = scmp.ne.s32.totalorder %s70, %s73
    %p79 = scmp.eq.s32.totalorder %s18, 0
    %p80 = por %p78, %p79
    %p81 = scmp.ne.s32.totalorder %s70, %s73
    %p82 = scmp.eq.s32.totalorder %s23, 1
    %p83 = por %p81, %p82
    %p84 = scmp.ne.s32.totalorder %s73, %s74
    %p85 = scmp.eq.s32.totalorder %s23, 0
    %p86 = por %p84, %p85
    %p87 = scmp.ne.s32.totalorder %s73, %s74
    %p88 = scmp.eq.s32.totalorder %s24, 1
    %p89 = por %p87, %p88
    %p91 = scmp.ne.s32.totalorder %s74, %s90
    %p92 = scmp.eq.s32.totalorder %s24, 0
    %p93 = por %p91, %p92
    %s94 = ssub.s32 %s25, %s37
    %p95 = scmp.eq.s32.totalorder %s94, 0
    %s97 = sadd.s32 %s96, 1
    %s98 = scalar_select %p95, %s96, %s97
    %p101 = pneg %p95
    %p102 = scmp.eq.s32.totalorder %s18, 1
    %p103 = por %p101, %p102
    %p104 = scmp.ne.s32.totalorder %s96, %s99
    %p105 = scmp.eq.s32.totalorder %s18, 0
    %p106 = por %p104, %p105
    %p107 = scmp.ne.s32.totalorder %s96, %s99
    %p108 = scmp.eq.s32.totalorder %s23, 1
    %p109 = por %p107, %p108
    %p110 = scmp.ne.s32.totalorder %s99, %s100
    %p111 = scmp.eq.s32.totalorder %s23, 0
    %p112 = por %p110, %p111
    %p113 = scmp.ne.s32.totalorder %s99, %s100
    %p114 = scmp.eq.s32.totalorder %s24, 1
    %p115 = por %p113, %p114
    %p117 = scmp.ne.s32.totalorder %s100, %s116
    %p118 = scmp.eq.s32.totalorder %s24, 0
    %p119 = por %p117, %p118
    %s120 = ssub.s32 %s25, %s37
    %p121 = scmp.eq.s32.totalorder %s120, 0
    %s123 = sadd.s32 %s122, 1
    %s124 = scalar_select %p121, %s122, %s123
    %p127 = pneg %p121
    %p128 = scmp.eq.s32.totalorder %s18, 1
    %p129 = por %p127, %p128
    %p130 = scmp.ne.s32.totalorder %s122, %s125
    %p131 = scmp.eq.s32.totalorder %s18, 0
    %p132 = por %p130, %p131
    %p133 = scmp.ne.s32.totalorder %s122, %s125
    %p134 = scmp.eq.s32.totalorder %s23, 1
    %p135 = por %p133, %p134
    %p136 = scmp.ne.s32.totalorder %s125, %s126
    %p137 = scmp.eq.s32.totalorder %s23, 0
    %p138 = por %p136, %p137
    %p139 = scmp.ne.s32.totalorder %s125, %s126
    %p140 = scmp.eq.s32.totalorder %s24, 1
    %p141 = por %p139, %p140
    %p143 = scmp.ne.s32.totalorder %s126, %s142
    %p144 = scmp.eq.s32.totalorder %s24, 0
    %p145 = por %p143, %p144
    %s147 = sadd.s32 %s146, 1
    %p150 = scmp.eq.s32.totalorder %s18, 1
    %p151 = scmp.ne.s32.totalorder %s146, %s148
    %p152 = scmp.eq.s32.totalorder %s18, 0
    %p153 = por %p151, %p152
    %p154 = scmp.ne.s32.totalorder %s146, %s148
    %p155 = scmp.eq.s32.totalorder %s23, 1
    %p156 = por %p154, %p155
    %p157 = scmp.ne.s32.totalorder %s148, %s149
    %p158 = scmp.eq.s32.totalorder %s23, 0
    %p159 = por %p157, %p158
    %p160 = scmp.ne.s32.totalorder %s148, %s149
    %p161 = scmp.eq.s32.totalorder %s24, 1
    %p162 = por %p160, %p161
    %p164 = scmp.ne.s32.totalorder %s149, %s163
    %p165 = scmp.eq.s32.totalorder %s24, 0
    %p166 = por %p164, %p165
    %s168 = sadd.s32 %s167, 1
    %p171 = scmp.eq.s32.totalorder %s18, 1
    %p172 = scmp.ne.s32.totalorder %s167, %s169
    %p173 = scmp.eq.s32.totalorder %s18, 0
    %p174 = por %p172, %p173
    %p175 = scmp.ne.s32.totalorder %s167, %s169
    %p176 = scmp.eq.s32.totalorder %s23, 1
    %p177 = por %p175, %p176
    %p178 = scmp.ne.s32.totalorder %s169, %s170
    %p179 = scmp.eq.s32.totalorder %s23, 0
    %p180 = por %p178, %p179
    %p181 = scmp.ne.s32.totalorder %s169, %s170
    %p182 = scmp.eq.s32.totalorder %s24, 1
    %p183 = por %p181, %p182
    %p185 = scmp.ne.s32.totalorder %s170, %s184
    %p186 = scmp.eq.s32.totalorder %s24, 0
    %p187 = por %p185, %p186
    %s189 = sadd.s32 %s188, 1
    %p192 = scmp.eq.s32.totalorder %s18, 1
    %p193 = scmp.ne.s32.totalorder %s188, %s190
    %p194 = scmp.eq.s32.totalorder %s18, 0
    %p195 = por %p193, %p194
    %p196 = scmp.ne.s32.totalorder %s188, %s190
    %p197 = scmp.eq.s32.totalorder %s23, 1
    %p198 = por %p196, %p197
    %p199 = scmp.ne.s32.totalorder %s190, %s191
    %p200 = scmp.eq.s32.totalorder %s23, 0
    %p201 = por %p199, %p200
    %p202 = scmp.ne.s32.totalorder %s190, %s191
    %p203 = scmp.eq.s32.totalorder %s24, 1
    %p204 = por %p202, %p203
    %p206 = scmp.ne.s32.totalorder %s191, %s205
    %p207 = scmp.eq.s32.totalorder %s24, 0
    %p208 = por %p206, %p207
    %s210 = sadd.s32 %s209, 1
    %p213 = scmp.eq.s32.totalorder %s18, 1
    %p214 = scmp.ne.s32.totalorder %s209, %s211
    %p215 = scmp.eq.s32.totalorder %s18, 0
    %p216 = por %p214, %p215
    %p217 = scmp.ne.s32.totalorder %s209, %s211
    %p218 = scmp.eq.s32.totalorder %s23, 1
    %p219 = por %p217, %p218
    %p220 = scmp.ne.s32.totalorder %s211, %s212
    %p221 = scmp.eq.s32.totalorder %s23, 0
    %p222 = por %p220, %p221
    %p223 = scmp.ne.s32.totalorder %s211, %s212
    %p224 = scmp.eq.s32.totalorder %s24, 1
    %p225 = por %p223, %p224
    %p227 = scmp.ne.s32.totalorder %s212, %s226
    %p228 = scmp.eq.s32.totalorder %s24, 0
    %p229 = por %p227, %p228
    %s231 = sadd.s32 %s230, 1
    %p234 = scmp.eq.s32.totalorder %s18, 1
    %p235 = scmp.ne.s32.totalorder %s230, %s232
    %p236 = scmp.eq.s32.totalorder %s18, 0
    %p237 = por %p235, %p236
    %p238 = scmp.ne.s32.totalorder %s230, %s232
    %p239 = scmp.eq.s32.totalorder %s23, 1
    %p240 = por %p238, %p239
    %p241 = scmp.ne.s32.totalorder %s232, %s233
    %p242 = scmp.eq.s32.totalorder %s23, 0
    %p243 = por %p241, %p242
    %p244 = scmp.ne.s32.totalorder %s232, %s233
    %p245 = scmp.eq.s32.totalorder %s24, 1
    %p246 = por %p244, %p245
    %p248 = scmp.ne.s32.totalorder %s233, %s247
    %p249 = scmp.eq.s32.totalorder %s24, 0
    %p250 = por %p248, %p249
    %s252 = sadd.s32 %s251, 1
    %p255 = scmp.eq.s32.totalorder %s18, 1
    %p256 = scmp.ne.s32.totalorder %s251, %s253
    %p257 = scmp.eq.s32.totalorder %s18, 0
    %p258 = por %p256, %p257
    %p259 = scmp.ne.s32.totalorder %s251, %s253
    %p260 = scmp.eq.s32.totalorder %s23, 1
    %p261 = por %p259, %p260
    %p262 = scmp.ne.s32.totalorder %s253, %s254
    %p263 = scmp.eq.s32.totalorder %s23, 0
    %p264 = por %p262, %p263
    %p265 = scmp.ne.s32.totalorder %s253, %s254
    %p266 = scmp.eq.s32.totalorder %s24, 1
    %p267 = por %p265, %p266
    %p269 = scmp.ne.s32.totalorder %s254, %s268
    %p270 = scmp.eq.s32.totalorder %s24, 0
    %p271 = por %p269, %p270
    %s273 = sadd.s32 %s272, 1
    %p276 = scmp.eq.s32.totalorder %s18, 1
    %p277 = scmp.ne.s32.totalorder %s272, %s274
    %p278 = scmp.eq.s32.totalorder %s18, 0
    %p279 = por %p277, %p278
    %p280 = scmp.ne.s32.totalorder %s272, %s274
    %p281 = scmp.eq.s32.totalorder %s23, 1
    %p282 = por %p280, %p281
    %p283 = scmp.ne.s32.totalorder %s274, %s275
    %p284 = scmp.eq.s32.totalorder %s23, 0
    %p285 = por %p283, %p284
    %p286 = scmp.ne.s32.totalorder %s274, %s275
    %p287 = scmp.eq.s32.totalorder %s24, 1
    %p288 = por %p286, %p287
    %p290 = scmp.ne.s32.totalorder %s275, %s289
    %p291 = scmp.eq.s32.totalorder %s24, 0
    %p292 = por %p290, %p291
    %s294 = sadd.s32 %s293, 1
    %p297 = scmp.eq.s32.totalorder %s18, 1
    %p298 = scmp.ne.s32.totalorder %s293, %s295
    %p299 = scmp.eq.s32.totalorder %s18, 0
    %p300 = por %p298, %p299
    %p301 = scmp.ne.s32.totalorder %s293, %s295
    %p302 = scmp.eq.s32.totalorder %s23, 1
    %p303 = por %p301, %p302
    %p304 = scmp.ne.s32.totalorder %s295, %s296
    %p305 = scmp.eq.s32.totalorder %s23, 0
    %p306 = por %p304, %p305
    %p307 = scmp.ne.s32.totalorder %s295, %s296
    %p308 = scmp.eq.s32.totalorder %s24, 1
    %p309 = por %p307, %p308
    %p311 = scmp.ne.s32.totalorder %s296, %s310
    %p312 = scmp.eq.s32.totalorder %s24, 0
    %p313 = por %p311, %p312
    %s314 = ssub.s32 %s25, %s37
    %s315 = ssub.s32 %s26, %s33
    %s316 = sor.u32 %s314, %s315
    %p317 = scmp.eq.s32.totalorder %s316, 0
    %s319 = sadd.s32 %s318, 1
    %s320 = scalar_select %p317, %s318, %s319
    %p323 = pneg %p317
    %p324 = scmp.eq.s32.totalorder %s18, 1
    %p325 = por %p323, %p324
    %p326 = scmp.ne.s32.totalorder %s318, %s321
    %p327 = scmp.eq.s32.totalorder %s18, 0
    %p328 = por %p326, %p327
    %p329 = scmp.ne.s32.totalorder %s318, %s321
    %p330 = scmp.eq.s32.totalorder %s23, 1
    %p331 = por %p329, %p330
    %p332 = scmp.ne.s32.totalorder %s321, %s322
    %p333 = scmp.eq.s32.totalorder %s23, 0
    %p334 = por %p332, %p333
    %p335 = scmp.ne.s32.totalorder %s321, %s322
    %p336 = scmp.eq.s32.totalorder %s24, 1
    %p337 = por %p335, %p336
    %p339 = scmp.ne.s32.totalorder %s322, %s338
    %p340 = scmp.eq.s32.totalorder %s24, 0
    %p341 = por %p339, %p340
    %p342 = scmp.le.s32.totalorder 1, %s18
    %p343 = scmp.lt.s32.totalorder %s18, 3
    %p344 = pnand %p342, %p343
    %p345 = pneg %p344
    // Predicated region
    $region9: #{_lambda_.8} parent=5 // pred_check
      _
    $region10: #{_lambda_.8} parent=5 // pred_check_branch
      %347 = sbr.rel (%p344) target = $region12
    $region11: #{_lambda_.8} parent=5 // pred_region
      %s348 = ssub.s32 %s18, 1
      // Predicated region
      $region13: #{_lambda_.8} parent=11 // pred_check
        %p349 = pneg %p159
      $region14: #{_lambda_.8} parent=11 // pred_check_branch
        %351 = sbr.rel (%p349) target = $region16
      $region15: #{_lambda_.8} parent=11 // pred_region
        _
      $region16: #{_lambda_.8} parent=11 // pred_fallthru
        _
      // Predicated region
      $region17: #{_lambda_.8} parent=11 // pred_check
        %p352 = pneg %p180
      $region18: #{_lambda_.8} parent=11 // pred_check_branch
        %354 = sbr.rel (%p352) target = $region20
      $region19: #{_lambda_.8} parent=11 // pred_region
        _
      $region20: #{_lambda_.8} parent=11 // pred_fallthru
        _
      // Predicated region
      $region21: #{_lambda_.8} parent=11 // pred_check
        %p355 = pneg %p201
      $region22: #{_lambda_.8} parent=11 // pred_check_branch
        %357 = sbr.rel (%p355) target = $region24
      $region23: #{_lambda_.8} parent=11 // pred_region
        _
      $region24: #{_lambda_.8} parent=11 // pred_fallthru
        _
      // Predicated region
      $region25: #{_lambda_.8} parent=11 // pred_check
        %p358 = pneg %p222
      $region26: #{_lambda_.8} parent=11 // pred_check_branch
        %360 = sbr.rel (%p358) target = $region28
      $region27: #{_lambda_.8} parent=11 // pred_region
        _
      $region28: #{_lambda_.8} parent=11 // pred_fallthru
        _
      // Predicated region
      $region29: #{_lambda_.8} parent=11 // pred_check
        %p361 = pneg %p243
      $region30: #{_lambda_.8} parent=11 // pred_check_branch
        %363 = sbr.rel (%p361) target = $region32
      $region31: #{_lambda_.8} parent=11 // pred_region
        _
      $region32: #{_lambda_.8} parent=11 // pred_fallthru
        _
      // Predicated region
      $region33: #{_lambda_.8} parent=11 // pred_check
        %p364 = pneg %p264
      $region34: #{_lambda_.8} parent=11 // pred_check_branch
        %366 = sbr.rel (%p364) target = $region36
      $region35: #{_lambda_.8} parent=11 // pred_region
        _
      $region36: #{_lambda_.8} parent=11 // pred_fallthru
        _
      // Predicated region
      $region37: #{_lambda_.8} parent=11 // pred_check
        %p367 = pneg %p285
      $region38: #{_lambda_.8} parent=11 // pred_check_branch
        %369 = sbr.rel (%p367) target = $region40
      $region39: #{_lambda_.8} parent=11 // pred_region
        _
      $region40: #{_lambda_.8} parent=11 // pred_fallthru
        _
      // Predicated region
      $region41: #{_lambda_.8} parent=11 // pred_check
        %p370 = pneg %p306
      $region42: #{_lambda_.8} parent=11 // pred_check_branch
        %372 = sbr.rel (%p370) target = $region44
      $region43: #{_lambda_.8} parent=11 // pred_region
        _
      $region44: #{_lambda_.8} parent=11 // pred_fallthru
        _
    $region12: #{_lambda_.8} parent=5 // pred_fallthru
      _
    %p373 = scmp.lt.s32.totalorder %s18, 2
    // Predicated region
    $region45: #{_lambda_.8} parent=5 // pred_check
      %p374 = pneg %p373
    $region46: #{_lambda_.8} parent=5 // pred_check_branch
      %376 = sbr.rel (%p374) target = $region48
    $region47: #{_lambda_.8} parent=5 // pred_region
      // Predicated region
      $region49: #{_lambda_.8} parent=47 // pred_check
        %p377 = pneg %p52
      $region50: #{_lambda_.8} parent=47 // pred_check_branch
        %379 = sbr.rel (%p377) target = $region52
      $region51: #{_lambda_.8} parent=47 // pred_region
        %s380 = smul.u32 2, %s26
        %p381 = scmp.lt.s32.totalorder %s25, 1
        %s382 = scalar_select %p381, %s25, 1
        %p383 = scmp.lt.s32.totalorder %s380, 1
        %s384 = scalar_select %p383, %s380, 1
        %s385 = smul.addr %s382, 2
        %s386 = sadd.s32 %s384, %s385
        %s387 = smul.addr %s386, 8
        %s388 = scalar_lea.vmem %s0, %s387
        %s389 = smul.u32 2, %s26
      $region52: #{_lambda_.8} parent=47 // pred_fallthru
        _
      // Predicated region
      $region53: #{_lambda_.8} parent=47 // pred_check
        %p390 = pneg %p80
      $region54: #{_lambda_.8} parent=47 // pred_check_branch
        %392 = sbr.rel (%p390) target = $region56
      $region55: #{_lambda_.8} parent=47 // pred_region
        %s393 = smul.u32 2, %s26
        %p394 = scmp.lt.s32.totalorder %s25, 1
        %s395 = scalar_select %p394, %s25, 1
        %p396 = scmp.lt.s32.totalorder %s393, 1
        %s397 = scalar_select %p396, %s393, 1
        %s398 = smul.addr %s395, 2
        %s399 = sadd.s32 %s397, %s398
        %s400 = smul.addr %s399, 4
        %s401 = scalar_lea.vmem %s1, %s400
        %s402 = smul.u32 2, %s26
      $region56: #{_lambda_.8} parent=47 // pred_fallthru
        _
      // Predicated region
      $region57: #{_lambda_.8} parent=47 // pred_check
        %p403 = pneg %p106
      $region58: #{_lambda_.8} parent=47 // pred_check_branch
        %405 = sbr.rel (%p403) target = $region60
      $region59: #{_lambda_.8} parent=47 // pred_region
        %p406 = scmp.lt.s32.totalorder %s25, 1
        %s407 = scalar_select %p406, %s25, 1
        %s408 = scalar_lea.vmem %s2, %s407
      $region60: #{_lambda_.8} parent=47 // pred_fallthru
        _
      // Predicated region
      $region61: #{_lambda_.8} parent=47 // pred_check
        %p409 = pneg %p132
      $region62: #{_lambda_.8} parent=47 // pred_check_branch
        %411 = sbr.rel (%p409) target = $region64
      $region63: #{_lambda_.8} parent=47 // pred_region
        %p412 = scmp.lt.s32.totalorder %s25, 1
        %s413 = scalar_select %p412, %s25, 1
        %s414 = smul.addr %s413, 2
        %s415 = smul.addr %s414, 8
        %s416 = scalar_lea.vmem %s3, %s415
      $region64: #{_lambda_.8} parent=47 // pred_fallthru
        _
    $region48: #{_lambda_.8} parent=5 // pred_fallthru
      _
    %p417 = scmp.le.s32.totalorder 1, %s18
    %p418 = scmp.lt.s32.totalorder %s18, 3
    %p419 = pnand %p417, %p418
    %p420 = pneg %p419
    // Predicated region
    $region65: #{_lambda_.8} parent=5 // pred_check
      _
    $region66: #{_lambda_.8} parent=5 // pred_check_branch
      %422 = sbr.rel (%p419) target = $region68
    $region67: #{_lambda_.8} parent=5 // pred_region
      %s423 = ssub.s32 %s18, 1
      %s424 = smul.u32 2, %s28
      %p425 = scmp.lt.s32.totalorder %s27, 1
      %s426 = scalar_select %p425, %s27, 1
      %p427 = scmp.lt.s32.totalorder %s424, 1
      %s428 = scalar_select %p427, %s424, 1
      %s429 = smul.addr %s426, 2
      %s430 = sadd.s32 %s428, %s429
      %s431 = smul.addr %s430, 8
      %s432 = scalar_lea.vmem %s0, %s431
      %p433 = pneg %p58
      %p434 = pneg %p55
      %s435 = smul.u32 2, %s28
      %p436 = scmp.lt.s32.totalorder %s27, 1
      %s437 = scalar_select %p436, %s27, 1
      %p438 = scmp.lt.s32.totalorder %s435, 1
      %s439 = scalar_select %p438, %s435, 1
      %s440 = smul.addr %s437, 2
      %s441 = sadd.s32 %s439, %s440
      %s442 = smul.addr %s441, 4
      %s443 = scalar_lea.vmem %s1, %s442
      %p444 = pneg %p86
      %p445 = pneg %p83
      %p446 = scmp.lt.s32.totalorder %s27, 1
      %s447 = scalar_select %p446, %s27, 1
      %s448 = scalar_lea.vmem %s2, %s447
      %p449 = pneg %p112
      %p450 = pneg %p109
      %p451 = scmp.lt.s32.totalorder %s27, 1
      %s452 = scalar_select %p451, %s27, 1
      %s453 = smul.addr %s452, 2
      %s454 = smul.addr %s453, 8
      %s455 = scalar_lea.vmem %s3, %s454
      %p456 = pneg %p138
      %p457 = pneg %p135
      %p458 = pneg %p159
      %p459 = pneg %p156
      %p460 = pneg %p180
      %p461 = pneg %p177
      %p462 = pneg %p201
      %p463 = pneg %p198
      %p464 = pneg %p222
      %p465 = pneg %p219
      %p466 = pneg %p243
      %p467 = pneg %p240
      %p468 = pneg %p264
      %p469 = pneg %p261
      %p470 = pneg %p285
      %p471 = pneg %p282
      %p472 = pneg %p306
      %p473 = pneg %p303
      %p474 = pneg %p334
      %p475 = pneg %p331
      %p476 = scmp.lt.s32.totalorder %s27, 1
      %s477 = scalar_select %p476, %s27, 1
      %p478 = scmp.lt.s32.totalorder %s28, 0
      %s479 = scalar_select %p478, %s28, 0
      %s480 = smul.addr %s477, 4
      %s481 = sadd.s32 %s479, %s480
      %s482 = smul.addr %s481, 4
      %s483 = scalar_lea.vmem %s12, %s482
      %s484 = smul.u32 2, %s28
      %p485 = scmp.lt.s32.totalorder %s27, 1
      %s486 = scalar_select %p485, %s27, 1
      %p487 = scmp.lt.s32.totalorder %s484, 1
      %s488 = scalar_select %p487, %s484, 1
      %s489 = smul.addr %s486, 2
      %s490 = sadd.s32 %s488, %s489
      %s491 = smul.addr %s490, 8
      %s492 = scalar_lea.vmem %s0, %s491
      %s493 = smul.u32 2, %s28
      %s494 = smul.u32 2, %s28
      %p495 = scmp.lt.s32.totalorder %s27, 1
      %s496 = scalar_select %p495, %s27, 1
      %p497 = scmp.lt.s32.totalorder %s494, 1
      %s498 = scalar_select %p497, %s494, 1
      %s499 = smul.addr %s496, 2
      %s500 = sadd.s32 %s498, %s499
      %s501 = smul.addr %s500, 4
      %s502 = scalar_lea.vmem %s1, %s501
      %s503 = smul.u32 2, %s28
      %p504 = scmp.lt.s32.totalorder %s27, 1
      %s505 = scalar_select %p504, %s27, 1
      %s506 = scalar_lea.vmem %s2, %s505
      %p507 = scmp.lt.s32.totalorder %s27, 1
      %s508 = scalar_select %p507, %s27, 1
      %s509 = smul.addr %s508, 2
      %s510 = smul.addr %s509, 8
      %s511 = scalar_lea.vmem %s3, %s510
      %p512 = scmp.lt.s32.totalorder %s27, 1
      %s513 = scalar_select %p512, %s27, 1
      %p514 = scmp.lt.s32.totalorder %s28, 0
      %s515 = scalar_select %p514, %s28, 0
      %s516 = smul.addr %s513, 4
      %s517 = sadd.s32 %s515, %s516
      %s518 = smul.addr %s517, 4
      %s519 = scalar_lea.vmem %s12, %s518
      %v521 = vld [vmem:[%s492] sm:$0xff]
      %v522 = vld [vmem:[%s492 + $0x8] sm:$0xff]
      %v523 = vld [vmem:[%s502] sm:$0xf]
      %v524 = vld [vmem:[%s502 + $0x4] sm:$0xf]
      %v525 = vunpack.c.l.bf16 %v523
      %v526 = vunpack.c.l.bf16 %v524
      %v527 = vld [vmem:[%s506] sm:$0x1]
      %v528 = vld [vmem:[%s511] sm:$0xff]
      %v529 = vld [vmem:[%s511 + $0x8] sm:$0xff]
      %v531 = vlaneseq
      %v532 = vshrl.u32 %v531, 7
      %v533 = vsub.s32 0, %v532
      %v534 = vrot.slane %v527, %v533
      %v536 = vmul.f32 %v521, %v534
      %v537 = vmul.f32 %v522, %v534
      %vm538 = vcmask 130048
      %v539 = vsel %vm538, %v536, 0.0
      %540 = vadd.xlane.f32.xlu0 %v539
      %v541 = vpop.xlane.xlu0 %540
      %v542 = vsel %vm538, %v537, 0.0
      %543 = vadd.xlane.f32.xlu0 %v542
      %v544 = vpop.xlane.xlu0 %543
      %v545 = vpack.c.bf16 %v522, %v521
      %v546 = vpack.c.bf16 %v529, %v528
      %v548 = vsel %vm538, %v545, 0
      %550 = vmatprep.subr.bf16.mxu0 0
      %551 = vmatpush1.bf16.msra.mxu0 %v546
      %552 = vmatprep.subr.bf16.mxu0 0
      %553 = vmatpush1.bf16.msra.mxu0 0
      %554 = vmatprep.subr.bf16.mxu0 0
      %555 = vmatpush1.bf16.msra.mxu0 0
      %556 = vmatprep.subr.bf16.mxu0 0
      %557 = vmatpush1.bf16.msra.mxu0 0
      %558 = vmatprep.subr.bf16.mxu0 0
      %559 = vmatpush1.bf16.msra.mxu0 0
      %560 = vmatprep.subr.bf16.mxu0 0
      %561 = vmatpush1.bf16.msra.mxu0 0
      %562 = vmatprep.subr.bf16.mxu0 0
      %563 = vmatpush1.bf16.msra.mxu0 0
      %564 = vmatprep.subr.bf16.mxu0 0
      %565 = vmatpush1.bf16.msra.mxu0 0
      %566 = vmatprep.subr.bf16.mxu0 0
      %567 = vmatpush1.bf16.msra.mxu0 0
      %568 = vmatprep.subr.bf16.mxu0 0
      %569 = vmatpush1.bf16.msra.mxu0 0
      %570 = vmatprep.subr.bf16.mxu0 0
      %571 = vmatpush1.bf16.msra.mxu0 0
      %572 = vmatprep.subr.bf16.mxu0 0
      %573 = vmatpush1.bf16.msra.mxu0 0
      %574 = vmatprep.subr.bf16.mxu0 0
      %575 = vmatpush1.bf16.msra.mxu0 0
      %576 = vmatprep.subr.bf16.mxu0 0
      %577 = vmatpush1.bf16.msra.mxu0 0
      %578 = vmatprep.subr.bf16.mxu0 0
      %579 = vmatpush1.bf16.msra.mxu0 0
      %580 = vmatprep.subr.bf16.mxu0 0
      %581 = vmatpush1.bf16.msra.mxu0 0
      %582 = vmatprep.mubr.bf16.mxu0 0
      %583 = vmatmul.mubr.bf16.gmra.mrb[0].mxu0 %v548
      %v584 = vpop.f32.mrb[0].mxu0
      %v585 = vadd.f32 0.0, %v584
      %v586 = vpop.f32.mrb[0].mxu0
      %v587 = vpop.f32.mrb[0].mxu0
      %v588 = vadd.f32 0.0, %v587
      %v589 = vpop.f32.mrb[0].mxu0
      %590 = vdwg.mxu0
      %v591 = vadd.f32 %v541, 1e-08
      %v592 = vadd.f32 %v544, 1e-08
      %v593 = vrcp.pop %v591
      %v594 = vrcp.pop %v592
      %v595 = vmul.f32 %v585, %v593
      %v596 = vmul.f32 %v588, %v594
      %v597 = vpack.c.bf16 %v596, %v595
      %v598 = vld [vmem:[%s4] sm:$0xf]
      %v599 = vld [vmem:[%s4 + $0x4] sm:$0xf]
      %v600 = vld [vmem:[%s4 + $0x8] sm:$0xf]
      %v601 = vld [vmem:[%s4 + $0xc] sm:$0xf]
      %v606 = vunpack.c.l.b16 %v598
      %v607 = vunpack.c.l.b16 %v599
      %v608 = vunpack.c.l.b16 %v600
      %v609 = vunpack.c.l.b16 %v601
      %v610 = vpack.c.b16 %v607, %v606
      %v611 = vpack.c.b16 %v609, %v608
      %vm614 = vcmask 261120
      %v616 = vsel %vm614, %v597, 0
      %618 = vmatprep.subr.bf16.mxu0 0
      %619 = vmatpush1.bf16.msra.mxu0 %v610
      %620 = vmatprep.subr.bf16.mxu0 0
      %621 = vmatpush1.bf16.msra.mxu0 %v611
      %622 = vmatprep.subr.bf16.mxu0 0
      %623 = vmatpush1.bf16.msra.mxu0 0
      %624 = vmatprep.subr.bf16.mxu0 0
      %625 = vmatpush1.bf16.msra.mxu0 0
      %626 = vmatprep.subr.bf16.mxu0 0
      %627 = vmatpush1.bf16.msra.mxu0 0
      %628 = vmatprep.subr.bf16.mxu0 0
      %629 = vmatpush1.bf16.msra.mxu0 0
      %630 = vmatprep.subr.bf16.mxu0 0
      %631 = vmatpush1.bf16.msra.mxu0 0
      %632 = vmatprep.subr.bf16.mxu0 0
      %633 = vmatpush1.bf16.msra.mxu0 0
      %634 = vmatprep.subr.bf16.mxu0 0
      %635 = vmatpush1.bf16.msra.mxu0 0
      %636 = vmatprep.subr.bf16.mxu0 0
      %637 = vmatpush1.bf16.msra.mxu0 0
      %638 = vmatprep.subr.bf16.mxu0 0
      %639 = vmatpush1.bf16.msra.mxu0 0
      %640 = vmatprep.subr.bf16.mxu0 0
      %641 = vmatpush1.bf16.msra.mxu0 0
      %642 = vmatprep.subr.bf16.mxu0 0
      %643 = vmatpush1.bf16.msra.mxu0 0
      %644 = vmatprep.subr.bf16.mxu0 0
      %645 = vmatpush1.bf16.msra.mxu0 0
      %646 = vmatprep.subr.bf16.mxu0 0
      %647 = vmatpush1.bf16.msra.mxu0 0
      %648 = vmatprep.subr.bf16.mxu0 0
      %649 = vmatpush1.bf16.msra.mxu0 0
      %650 = vmatprep.mubr.bf16.mxu0 0
      %651 = vmatmul.mubr.bf16.gmra.mrb[0].mxu0 %v616
      %v652 = vpop.f32.mrb[0].mxu0
      %v653 = vadd.f32 0.0, %v652
      %v654 = vpop.f32.mrb[0].mxu0
      %v655 = vpop.f32.mrb[0].mxu0
      %v656 = vadd.f32 0.0, %v655
      %v657 = vpop.f32.mrb[0].mxu0
      %658 = vdwg.mxu0
      %v659 = vadd.f32 %v525, %v653
      %v660 = vadd.f32 %v526, %v656
      %v661 = vld [vmem:[%s5] sm:$0x1]
      %v663 = vlaneseq
      %v664 = vshrl.u32 %v663, 7
      %v665 = vsub.s32 0, %v664
      %v666 = vrot.slane %v661, %v665
      %v668 = vadd.f32 %v659, %v666
      %v669 = vadd.f32 %v660, %v666
      %v670 = vld [vmem:[%s6] sm:$0x1]
      %v671 = vld [vmem:[%s7] sm:$0x1]
      %v672 = vsel %vm614, %v668, 0.0
      %673 = vadd.xlane.f32.xlu0 %v672
      %v674 = vpop.xlane.xlu0 %673
      %v675 = vsel %vm614, %v669, 0.0
      %676 = vadd.xlane.f32.xlu0 %v675
      %v677 = vpop.xlane.xlu0 %676
      %v678 = vrcp.pop 32.0
      %v679 = vmul.f32 %v674, %v678
      %v680 = vmul.f32 %v677, %v678
      %v681 = vsub.f32 %v668, %v679
      %v682 = vsub.f32 %v669, %v680
      %v683 = vmul.f32 %v681, %v681
      %v684 = vmul.f32 %v682, %v682
      %v685 = vsel %vm614, %v683, 0.0
      %686 = vadd.xlane.f32.xlu0 %v685
      %v687 = vpop.xlane.xlu0 %686
      %v688 = vsel %vm614, %v684, 0.0
      %689 = vadd.xlane.f32.xlu0 %v688
      %v690 = vpop.xlane.xlu0 %689
      %v691 = vmul.f32 %v687, %v678
      %v692 = vmul.f32 %v690, %v678
      %v693 = vadd.f32 %v691, 1e-05
      %v694 = vadd.f32 %v692, 1e-05
      %v695 = vrsqrt.pop %v693
      %v696 = vrsqrt.pop %v694
      %v697 = vmul.f32 %v681, %v695
      %v698 = vmul.f32 %v682, %v696
      %v700 = vlaneseq
      %v701 = vshrl.u32 %v700, 7
      %v702 = vsub.s32 0, %v701
      %v703 = vrot.slane %v670, %v702
      %v705 = vmul.f32 %v697, %v703
      %v706 = vmul.f32 %v698, %v703
      %v708 = vlaneseq
      %v709 = vshrl.u32 %v708, 7
      %v710 = vsub.s32 0, %v709
      %v711 = vrot.slane %v671, %v710
      %v713 = vadd.f32 %v705, %v711
      %v714 = vadd.f32 %v706, %v711
      %v715 = vpack.c.bf16 %v714, %v713
      %v716 = vld [vmem:[%s8] sm:$0xf]
      %v717 = vld [vmem:[%s8 + $0x4] sm:$0xf]
      %v718 = vld [vmem:[%s8 + $0x8] sm:$0xf]
      %v719 = vld [vmem:[%s8 + $0xc] sm:$0xf]
      %v720 = vld [vmem:[%s9] sm:$0x1]
      %v722 = vlaneseq
      %v723 = vshrl.u32 %v722, 7
      %v724 = vsub.s32 0, %v723
      %v725 = vrot.slane %v720, %v724
      %v731 = vunpack.c.l.b16 %v716
      %v732 = vunpack.c.l.b16 %v717
      %v733 = vunpack.c.l.b16 %v718
      %v734 = vunpack.c.l.b16 %v719
      %v735 = vpack.c.b16 %v732, %v731
      %v736 = vpack.c.b16 %v734, %v733
      %v740 = vsel %vm614, %v715, 0
      %742 = vmatprep.subr.bf16.mxu0 0
      %743 = vmatpush1.bf16.msra.mxu0 %v735
      %744 = vmatprep.subr.bf16.mxu0 0
      %745 = vmatpush1.bf16.msra.mxu0 %v736
      %746 = vmatprep.subr.bf16.mxu0 0
      %747 = vmatpush1.bf16.msra.mxu0 0
      %748 = vmatprep.subr.bf16.mxu0 0
      %749 = vmatpush1.bf16.msra.mxu0 0
      %750 = vmatprep.subr.bf16.mxu0 0
      %751 = vmatpush1.bf16.msra.mxu0 0
      %752 = vmatprep.subr.bf16.mxu0 0
      %753 = vmatpush1.bf16.msra.mxu0 0
      %754 = vmatprep.subr.bf16.mxu0 0
      %755 = vmatpush1.bf16.msra.mxu0 0
      %756 = vmatprep.subr.bf16.mxu0 0
      %757 = vmatpush1.bf16.msra.mxu0 0
      %758 = vmatprep.subr.bf16.mxu0 0
      %759 = vmatpush1.bf16.msra.mxu0 0
      %760 = vmatprep.subr.bf16.mxu0 0
      %761 = vmatpush1.bf16.msra.mxu0 0
      %762 = vmatprep.subr.bf16.mxu0 0
      %763 = vmatpush1.bf16.msra.mxu0 0
      %764 = vmatprep.subr.bf16.mxu0 0
      %765 = vmatpush1.bf16.msra.mxu0 0
      %766 = vmatprep.subr.bf16.mxu0 0
      %767 = vmatpush1.bf16.msra.mxu0 0
      %768 = vmatprep.subr.bf16.mxu0 0
      %769 = vmatpush1.bf16.msra.mxu0 0
      %770 = vmatprep.subr.bf16.mxu0 0
      %771 = vmatpush1.bf16.msra.mxu0 0
      %772 = vmatprep.subr.bf16.mxu0 0
      %773 = vmatpush1.bf16.msra.mxu0 0
      %774 = vmatprep.mubr.bf16.mxu0 0
      %775 = vmatmul.mubr.bf16.gmra.mrb[0].mxu0 %v740
      %v776 = vpop.f32.mrb[0].mxu0
      %v777 = vadd.f32 %v725, %v776
      %v778 = vpop.f32.mrb[0].mxu0
      %v779 = vpop.f32.mrb[0].mxu0
      %v780 = vadd.f32 %v725, %v779
      %v781 = vpop.f32.mrb[0].mxu0
      %782 = vdwg.mxu0
      %v783 = vmul.f32 %v777, %v777
      %v784 = vmul.f32 %v780, %v780
      %v785 = vmul.f32 %v777, %v783
      %v786 = vmul.f32 %v780, %v784
      %v787 = vmul.f32 %v785, 0.044715
      %v788 = vmul.f32 %v786, 0.044715
      %v789 = vadd.f32 %v777, %v787
      %v790 = vadd.f32 %v780, %v788
      %v791 = vmul.f32 %v789, 0.7978846
      %v792 = vmul.f32 %v790, 0.7978846
      %v793 = vtanh.pop %v791
      %v794 = vtanh.pop %v792
      %v795 = vadd.f32 %v793, 1.0
      %v796 = vadd.f32 %v794, 1.0
      %v797 = vmul.f32 %v795, 0.5
      %v798 = vmul.f32 %v796, 0.5
      %v799 = vmul.f32 %v777, %v797
      %v800 = vmul.f32 %v780, %v798
      %v801 = vpack.c.bf16 %v800, %v799
      %v802 = vld [vmem:[%s10] sm:$0xf]
      %v803 = vld [vmem:[%s10 + $0x4] sm:$0xf]
      %v804 = vld [vmem:[%s10 + $0x8] sm:$0xf]
      %v805 = vld [vmem:[%s10 + $0xc] sm:$0xf]
      %v806 = vld [vmem:[%s11] sm:$0x1]
      %v808 = vlaneseq
      %v809 = vshrl.u32 %v808, 7
      %v810 = vsub.s32 0, %v809
      %v811 = vrot.slane %v806, %v810
      %v817 = vunpack.c.l.b16 %v802
      %v818 = vunpack.c.l.b16 %v803
      %v819 = vunpack.c.l.b16 %v804
      %v820 = vunpack.c.l.b16 %v805
      %v821 = vpack.c.b16 %v818, %v817
      %v822 = vpack.c.b16 %v820, %v819
      %v826 = vsel %vm614, %v801, 0
      %828 = vmatprep.subr.bf16.mxu0 0
      %829 = vmatpush1.bf16.msra.mxu0 %v821
      %830 = vmatprep.subr.bf16.mxu0 0
      %831 = vmatpush1.bf16.msra.mxu0 %v822
      %832 = vmatprep.subr.bf16.mxu0 0
      %833 = vmatpush1.bf16.msra.mxu0 0
      %834 = vmatprep.subr.bf16.mxu0 0
      %835 = vmatpush1.bf16.msra.mxu0 0
      %836 = vmatprep.subr.bf16.mxu0 0
      %837 = vmatpush1.bf16.msra.mxu0 0
      %838 = vmatprep.subr.bf16.mxu0 0
      %839 = vmatpush1.bf16.msra.mxu0 0
      %840 = vmatprep.subr.bf16.mxu0 0
      %841 = vmatpush1.bf16.msra.mxu0 0
      %842 = vmatprep.subr.bf16.mxu0 0
      %843 = vmatpush1.bf16.msra.mxu0 0
      %844 = vmatprep.subr.bf16.mxu0 0
      %845 = vmatpush1.bf16.msra.mxu0 0
      %846 = vmatprep.subr.bf16.mxu0 0
      %847 = vmatpush1.bf16.msra.mxu0 0
      %848 = vmatprep.subr.bf16.mxu0 0
      %849 = vmatpush1.bf16.msra.mxu0 0
      %850 = vmatprep.subr.bf16.mxu0 0
      %851 = vmatpush1.bf16.msra.mxu0 0
      %852 = vmatprep.subr.bf16.mxu0 0
      %853 = vmatpush1.bf16.msra.mxu0 0
      %854 = vmatprep.subr.bf16.mxu0 0
      %855 = vmatpush1.bf16.msra.mxu0 0
      %856 = vmatprep.subr.bf16.mxu0 0
      %857 = vmatpush1.bf16.msra.mxu0 0
      %858 = vmatprep.subr.bf16.mxu0 0
      %859 = vmatpush1.bf16.msra.mxu0 0
      %860 = vmatprep.mubr.bf16.mxu0 0
      %861 = vmatmul.mubr.bf16.gmra.mrb[0].mxu0 %v826
      %v862 = vpop.f32.mrb[0].mxu0
      %v863 = vadd.f32 %v811, %v862
      %v864 = vpop.f32.mrb[0].mxu0
      %v865 = vpop.f32.mrb[0].mxu0
      %v866 = vadd.f32 %v811, %v865
      %v867 = vpop.f32.mrb[0].mxu0
      %868 = vdwg.mxu0
      %v869 = vadd.f32 %v668, %v863
      %v870 = vadd.f32 %v669, %v866
      %871 = vxpose.xlu0.b32.start [1/16] %v869, 128
      %872 = vxpose.xlu0.b32.cont [2/16] %v870, 128
      %873 = vxpose.xlu0.b32.cont [3/16] 0.0, 128
      %874 = vxpose.xlu0.b32.cont [4/16] 0.0, 128
      %875 = vxpose.xlu0.b32.cont [5/16] 0.0, 128
      %876 = vxpose.xlu0.b32.cont [6/16] 0.0, 128
      %877 = vxpose.xlu0.b32.cont [7/16] 0.0, 128
      %878 = vxpose.xlu0.b32.cont [8/16] 0.0, 128
      %879 = vxpose.xlu0.b32.cont [9/16] 0.0, 128
      %880 = vxpose.xlu0.b32.cont [10/16] 0.0, 128
      %881 = vxpose.xlu0.b32.cont [11/16] 0.0, 128
      %882 = vxpose.xlu0.b32.cont [12/16] 0.0, 128
      %883 = vxpose.xlu0.b32.cont [13/16] 0.0, 128
      %884 = vxpose.xlu0.b32.cont [14/16] 0.0, 128
      %885 = vxpose.xlu0.b32.cont [15/16] 0.0, 128
      %886 = vxpose.xlu0.b32.end [16/16] 0.0, 128
      %v887 = vpop.trf.xlu0
      %v888 = vpop.trf.xlu0
      %v889 = vpop.trf.xlu0
      %v890 = vpop.trf.xlu0
      %v891 = vpop.trf.xlu0
      %v892 = vpop.trf.xlu0
      %v893 = vpop.trf.xlu0
      %v894 = vpop.trf.xlu0
      %v895 = vpop.trf.xlu0
      %v896 = vpop.trf.xlu0
      %v897 = vpop.trf.xlu0
      %v898 = vpop.trf.xlu0
      %v899 = vpop.trf.xlu0
      %v900 = vpop.trf.xlu0
      %v901 = vpop.trf.xlu0
      %v902 = vpop.trf.xlu0
      %v903 = vpack.c.bf16 %v888, %v887
      %v904 = vpack.c.bf16 %v890, %v889
      %v907 = vunpack.c.l.b16 %v903
      %v908 = vunpack.c.h.b16 %v903
      %v909 = vunpack.c.l.b16 %v904
      %v910 = vunpack.c.h.b16 %v904
      %v911 = vpack.c.b16 %v907, %v907
      %v912 = vpack.c.b16 %v908, %v908
      %v913 = vpack.c.b16 %v909, %v909
      %v914 = vpack.c.b16 %v910, %v910
      %vm919 = vcmask 125952
      %920 = vst.msk [vmem:[%s519] sm:$0xf] %vm919, %v911
      %921 = vst.msk [vmem:[%s519 + $0x4] sm:$0xf] %vm919, %v912
      %922 = vst.msk [vmem:[%s519 + $0x8] sm:$0xf] %vm919, %v913
      %923 = vst.msk [vmem:[%s519 + $0xc] sm:$0xf] %vm919, %v914
      %p924 = scmp.lt.s32.totalorder %s27, 1
      %s925 = scalar_select %p924, %s27, 1
      %p926 = scmp.lt.s32.totalorder %s28, 0
      %s927 = scalar_select %p926, %s28, 0
      %s928 = smul.addr %s925, 4
      %s929 = sadd.s32 %s927, %s928
      %s930 = smul.addr %s929, 4
      %s931 = scalar_lea.vmem %s12, %s930
      // Predicated region
      $region69: #{_lambda_.8} parent=67 // pred_check
        %p932 = pneg %p331
      $region70: #{_lambda_.8} parent=67 // pred_check_branch
        %934 = sbr.rel (%p932) target = $region72
      $region71: #{_lambda_.8} parent=67 // pred_region
        _
      $region72: #{_lambda_.8} parent=67 // pred_fallthru
        _
    $region68: #{_lambda_.8} parent=5 // pred_fallthru
      _
    %p935 = scmp.le.s32.totalorder 2, %s18
    // Predicated region
    $region73: #{_lambda_.8} parent=5 // pred_check
      %p936 = pneg %p935
    $region74: #{_lambda_.8} parent=5 // pred_check_branch
      %938 = sbr.rel (%p936) target = $region76
    $region75: #{_lambda_.8} parent=5 // pred_region
      %s939 = ssub.s32 %s18, 2
      // Predicated region
      $region77: #{_lambda_.8} parent=75 // pred_check
        %p940 = pneg %p337
      $region78: #{_lambda_.8} parent=75 // pred_check_branch
        %942 = sbr.rel (%p940) target = $region80
      $region79: #{_lambda_.8} parent=75 // pred_region
        %p943 = scmp.lt.s32.totalorder %s29, 1
        %s944 = scalar_select %p943, %s29, 1
        %p945 = scmp.lt.s32.totalorder %s30, 0
        %s946 = scalar_select %p945, %s30, 0
        %s947 = smul.addr %s944, 4
        %s948 = sadd.s32 %s946, %s947
        %s949 = smul.addr %s948, 4
        %s950 = scalar_lea.vmem %s12, %s949
      $region80: #{_lambda_.8} parent=75 // pred_fallthru
        _
    $region76: #{_lambda_.8} parent=5 // pred_fallthru
      _
  $region6: #{_lambda_.8} parent=0 // loop_footer
    %s22 = sadd.s32 1, %s18
  $region7: #{_lambda_.8} parent=0 // loop_footer_branch
    %17 = sbr.rel target = $region3
  $region8: #{_lambda_.8} parent=0 // loop_exit
    _

// kernel: _lambda_.9
$region0: #{_lambda_.9}
  #allocation0 [shape = 'u32[]', space=smem, size = 0x4, offset = 0x4, fixed_abs, tag = 'smem constant byte address 0x4 - core index']
  #allocation1 [shape = 'u32[144,128]{1,0:T(1,128)}', space=vmem, size = 0x12000, scoped, tag = 'internal scratch']
  %s0 = inlined_call_operand.vmem [shape: bf16[2,288,4], index: 0, kind: input, shape index: {}]
  %s1 = inlined_call_operand.vmem [shape: bf16[288,64], index: 1, kind: input, shape index: {}]
  %s2 = inlined_call_operand.vmem [shape: f32[1,64], index: 2, kind: input, shape index: {}]
  %s3 = inlined_call_operand.vmem [shape: bf16[2,4,64], index: 3, kind: output, shape index: {}]
  %s4 = sld [smem:[#allocation0]]
  $region45: #{_lambda_.9} parent=0
    _
  %s6 = ssub.s32 1, %s4
  %s7 = scalar_select 0, %s6, %s4
  loop: start=0, step=1, limit=4
  $region2: #{_lambda_.9} parent=0 // loop_pre_header
    _
  $region3: #{_lambda_.9} parent=0 // loop_header
    %s9 = sphi 0, %s13
    %p10 = scmp.ge.s32.totalorder %s9, 4
    %s16 = sphi 0, %s28
    %s17 = sphi 0, %s24
    %s18 = sphi 0, %s16
    %s19 = sphi 0, %s17
    %s20 = sphi 0, %s18
    %s21 = sphi 0, %s19
    %s33 = sphi 0, %s35
    %s36 = sphi 0, %s33
    %s37 = sphi 0, %s36
    %s53 = sphi 0, %s37
    %s57 = sphi 0, %s57
    %s59 = sphi 0, %s57
    %s60 = sphi 0, %s59
    %s74 = sphi 0, %s60
    %s78 = sphi 0, %s78
    %s80 = sphi 0, %s78
    %s81 = sphi 0, %s80
    %s95 = sphi 0, %s81
    %s103 = sphi 0, %s105
    %s106 = sphi 0, %s103
    %s107 = sphi 0, %s106
    %s123 = sphi 0, %s107
  $region4: #{_lambda_.9} parent=0 // loop_header_branch
    %12 = sbr.rel (%p10) target = $region8
  $region5: #{_lambda_.9} parent=0 // loop_body
    %s14 = ssub.s32 %s9, 1
    %s15 = ssub.s32 %s9, 2
    %s22 = sadd.s32 1, %s17
    %p23 = scmp.ge.s32.totalorder %s22, 1
    %s24 = scalar_select %p23, 0, %s22
    %s25 = sadd.s32 1, %s16
    %s26 = scalar_select %p23, %s25, %s16
    %p27 = scmp.ge.s32.totalorder %s26, 2
    %s28 = scalar_select %p27, 0, %s26
    %s29 = ssub.s32 %s16, %s28
    %s30 = ssub.s32 %s17, %s24
    %s31 = sor.u32 %s29, %s30
    %p32 = scmp.eq.s32.totalorder %s31, 0
    %s34 = sadd.s32 %s33, 1
    %s35 = scalar_select %p32, %s33, %s34
    %p38 = pneg %p32
    %p39 = scmp.eq.s32.totalorder %s9, 1
    %p40 = por %p38, %p39
    %p41 = scmp.ne.s32.totalorder %s33, %s36
    %p42 = scmp.eq.s32.totalorder %s9, 0
    %p43 = por %p41, %p42
    %p44 = scmp.ne.s32.totalorder %s33, %s36
    %p45 = scmp.eq.s32.totalorder %s14, 1
    %p46 = por %p44, %p45
    %p47 = scmp.ne.s32.totalorder %s36, %s37
    %p48 = scmp.eq.s32.totalorder %s14, 0
    %p49 = por %p47, %p48
    %p50 = scmp.ne.s32.totalorder %s36, %s37
    %p51 = scmp.eq.s32.totalorder %s15, 1
    %p52 = por %p50, %p51
    %p54 = scmp.ne.s32.totalorder %s37, %s53
    %p55 = scmp.eq.s32.totalorder %s15, 0
    %p56 = por %p54, %p55
    %s58 = sadd.s32 %s57, 1
    %p61 = scmp.eq.s32.totalorder %s9, 1
    %p62 = scmp.ne.s32.totalorder %s57, %s59
    %p63 = scmp.eq.s32.totalorder %s9, 0
    %p64 = por %p62, %p63
    %p65 = scmp.ne.s32.totalorder %s57, %s59
    %p66 = scmp.eq.s32.totalorder %s14, 1
    %p67 = por %p65, %p66
    %p68 = scmp.ne.s32.totalorder %s59, %s60
    %p69 = scmp.eq.s32.totalorder %s14, 0
    %p70 = por %p68, %p69
    %p71 = scmp.ne.s32.totalorder %s59, %s60
    %p72 = scmp.eq.s32.totalorder %s15, 1
    %p73 = por %p71, %p72
    %p75 = scmp.ne.s32.totalorder %s60, %s74
    %p76 = scmp.eq.s32.totalorder %s15, 0
    %p77 = por %p75, %p76
    %s79 = sadd.s32 %s78, 1
    %p82 = scmp.eq.s32.totalorder %s9, 1
    %p83 = scmp.ne.s32.totalorder %s78, %s80
    %p84 = scmp.eq.s32.totalorder %s9, 0
    %p85 = por %p83, %p84
    %p86 = scmp.ne.s32.totalorder %s78, %s80
    %p87 = scmp.eq.s32.totalorder %s14, 1
    %p88 = por %p86, %p87
    %p89 = scmp.ne.s32.totalorder %s80, %s81
    %p90 = scmp.eq.s32.totalorder %s14, 0
    %p91 = por %p89, %p90
    %p92 = scmp.ne.s32.totalorder %s80, %s81
    %p93 = scmp.eq.s32.totalorder %s15, 1
    %p94 = por %p92, %p93
    %p96 = scmp.ne.s32.totalorder %s81, %s95
    %p97 = scmp.eq.s32.totalorder %s15, 0
    %p98 = por %p96, %p97
    %s99 = ssub.s32 %s16, %s28
    %s100 = ssub.s32 %s17, %s24
    %s101 = sor.u32 %s99, %s100
    %p102 = scmp.eq.s32.totalorder %s101, 0
    %s104 = sadd.s32 %s103, 1
    %s105 = scalar_select %p102, %s103, %s104
    %p108 = pneg %p102
    %p109 = scmp.eq.s32.totalorder %s9, 1
    %p110 = por %p108, %p109
    %p111 = scmp.ne.s32.totalorder %s103, %s106
    %p112 = scmp.eq.s32.totalorder %s9, 0
    %p113 = por %p111, %p112
    %p114 = scmp.ne.s32.totalorder %s103, %s106
    %p115 = scmp.eq.s32.totalorder %s14, 1
    %p116 = por %p114, %p115
    %p117 = scmp.ne.s32.totalorder %s106, %s107
    %p118 = scmp.eq.s32.totalorder %s14, 0
    %p119 = por %p117, %p118
    %p120 = scmp.ne.s32.totalorder %s106, %s107
    %p121 = scmp.eq.s32.totalorder %s15, 1
    %p122 = por %p120, %p121
    %p124 = scmp.ne.s32.totalorder %s107, %s123
    %p125 = scmp.eq.s32.totalorder %s15, 0
    %p126 = por %p124, %p125
    %p127 = scmp.le.s32.totalorder 1, %s9
    %p128 = scmp.lt.s32.totalorder %s9, 3
    %p129 = pnand %p127, %p128
    %p130 = pneg %p129
    // Predicated region
    $region9: #{_lambda_.9} parent=5 // pred_check
      _
    $region10: #{_lambda_.9} parent=5 // pred_check_branch
      %132 = sbr.rel (%p129) target = $region12
    $region11: #{_lambda_.9} parent=5 // pred_region
      %s133 = ssub.s32 %s9, 1
      // Predicated region
      $region13: #{_lambda_.9} parent=11 // pred_check
        %p134 = pneg %p70
      $region14: #{_lambda_.9} parent=11 // pred_check_branch
        %136 = sbr.rel (%p134) target = $region16
      $region15: #{_lambda_.9} parent=11 // pred_region
        _
      $region16: #{_lambda_.9} parent=11 // pred_fallthru
        _
      // Predicated region
      $region17: #{_lambda_.9} parent=11 // pred_check
        %p137 = pneg %p91
      $region18: #{_lambda_.9} parent=11 // pred_check_branch
        %139 = sbr.rel (%p137) target = $region20
      $region19: #{_lambda_.9} parent=11 // pred_region
        _
      $region20: #{_lambda_.9} parent=11 // pred_fallthru
        _
    $region12: #{_lambda_.9} parent=5 // pred_fallthru
      _
    %p140 = scmp.lt.s32.totalorder %s9, 2
    // Predicated region
    $region21: #{_lambda_.9} parent=5 // pred_check
      %p141 = pneg %p140
    $region22: #{_lambda_.9} parent=5 // pred_check_branch
      %143 = sbr.rel (%p141) target = $region24
    $region23: #{_lambda_.9} parent=5 // pred_region
      // Predicated region
      $region25: #{_lambda_.9} parent=23 // pred_check
        %p144 = pneg %p43
      $region26: #{_lambda_.9} parent=23 // pred_check_branch
        %146 = sbr.rel (%p144) target = $region28
      $region27: #{_lambda_.9} parent=23 // pred_region
        %p147 = scmp.lt.s32.totalorder %s16, 1
        %s148 = scalar_select %p147, %s16, 1
        %p149 = scmp.lt.s32.totalorder %s17, 0
        %s150 = scalar_select %p149, %s17, 0
        %s151 = smul.addr %s148, 36
        %s152 = sadd.s32 %s150, %s151
        %s153 = smul.addr %s152, 4
        %s154 = scalar_lea.vmem %s0, %s153
      $region28: #{_lambda_.9} parent=23 // pred_fallthru
        _
    $region24: #{_lambda_.9} parent=5 // pred_fallthru
      _
    %p155 = scmp.le.s32.totalorder 1, %s9
    %p156 = scmp.lt.s32.totalorder %s9, 3
    %p157 = pnand %p155, %p156
    %p158 = pneg %p157
    // Predicated region
    $region29: #{_lambda_.9} parent=5 // pred_check
      _
    $region30: #{_lambda_.9} parent=5 // pred_check_branch
      %160 = sbr.rel (%p157) target = $region32
    $region31: #{_lambda_.9} parent=5 // pred_region
      %s161 = ssub.s32 %s9, 1
      %p162 = scmp.lt.s32.totalorder %s18, 1
      %s163 = scalar_select %p162, %s18, 1
      %p164 = scmp.lt.s32.totalorder %s19, 0
      %s165 = scalar_select %p164, %s19, 0
      %s166 = smul.addr %s163, 36
      %s167 = sadd.s32 %s165, %s166
      %s168 = smul.addr %s167, 4
      %s169 = scalar_lea.vmem %s0, %s168
      %p170 = pneg %p49
      %p171 = pneg %p46
      %p172 = pneg %p70
      %p173 = pneg %p67
      %p174 = pneg %p91
      %p175 = pneg %p88
      %p176 = pneg %p119
      %p177 = pneg %p116
      %p178 = scmp.lt.s32.totalorder %s18, 1
      %s179 = scalar_select %p178, %s18, 1
      %p180 = scmp.lt.s32.totalorder %s19, 0
      %s181 = scalar_select %p180, %s19, 0
      %s182 = sadd.s32 %s181, %s179
      %s183 = smul.addr %s182, 2
      %s184 = scalar_lea.vmem %s3, %s183
      %p185 = scmp.lt.s32.totalorder %s18, 1
      %s186 = scalar_select %p185, %s18, 1
      %p187 = scmp.lt.s32.totalorder %s19, 0
      %s188 = scalar_select %p187, %s19, 0
      %s189 = smul.addr %s186, 36
      %s190 = sadd.s32 %s188, %s189
      %s191 = smul.addr %s190, 4
      %s192 = scalar_lea.vmem %s0, %s191
      %p193 = scmp.lt.s32.totalorder %s18, 1
      %s194 = scalar_select %p193, %s18, 1
      %p195 = scmp.lt.s32.totalorder %s19, 0
      %s196 = scalar_select %p195, %s19, 0
      %s197 = sadd.s32 %s196, %s194
      %s198 = smul.addr %s197, 2
      %s199 = scalar_lea.vmem %s3, %s198
      %v201 = vld [vmem:[%s192] sm:$0xf]
      %v202 = vld [vmem:[%s192 + $0x4] sm:$0xf]
      %v203 = vld [vmem:[%s192 + $0x8] sm:$0xf]
      %v204 = vld [vmem:[%s192 + $0xc] sm:$0xf]
      %v205 = vld [vmem:[%s192 + $0x10] sm:$0xf]
      %v206 = vld [vmem:[%s192 + $0x14] sm:$0xf]
      %v207 = vld [vmem:[%s192 + $0x18] sm:$0xf]
      %v208 = vld [vmem:[%s192 + $0x1c] sm:$0xf]
      %v209 = vld [vmem:[%s192 + $0x20] sm:$0xf]
      %v210 = vld [vmem:[%s192 + $0x24] sm:$0xf]
      %v211 = vld [vmem:[%s192 + $0x28] sm:$0xf]
      %v212 = vld [vmem:[%s192 + $0x2c] sm:$0xf]
      %v213 = vld [vmem:[%s192 + $0x30] sm:$0xf]
      %v214 = vld [vmem:[%s192 + $0x34] sm:$0xf]
      %v215 = vld [vmem:[%s192 + $0x38] sm:$0xf]
      %v216 = vld [vmem:[%s192 + $0x3c] sm:$0xf]
      %v217 = vld [vmem:[%s192 + $0x40] sm:$0xf]
      %v218 = vld [vmem:[%s192 + $0x44] sm:$0xf]
      %v219 = vld [vmem:[%s192 + $0x48] sm:$0xf]
      %v220 = vld [vmem:[%s192 + $0x4c] sm:$0xf]
      %v221 = vld [vmem:[%s192 + $0x50] sm:$0xf]
      %v222 = vld [vmem:[%s192 + $0x54] sm:$0xf]
      %v223 = vld [vmem:[%s192 + $0x58] sm:$0xf]
      %v224 = vld [vmem:[%s192 + $0x5c] sm:$0xf]
      %v225 = vld [vmem:[%s192 + $0x60] sm:$0xf]
      %v226 = vld [vmem:[%s192 + $0x64] sm:$0xf]
      %v227 = vld [vmem:[%s192 + $0x68] sm:$0xf]
      %v228 = vld [vmem:[%s192 + $0x6c] sm:$0xf]
      %v229 = vld [vmem:[%s192 + $0x70] sm:$0xf]
      %v230 = vld [vmem:[%s192 + $0x74] sm:$0xf]
      %v231 = vld [vmem:[%s192 + $0x78] sm:$0xf]
      %v232 = vld [vmem:[%s192 + $0x7c] sm:$0xf]
      %v233 = vld [vmem:[%s192 + $0x80] sm:$0xf]
      %v234 = vld [vmem:[%s192 + $0x84] sm:$0xf]
      %v235 = vld [vmem:[%s192 + $0x88] sm:$0xf]
      %v236 = vld [vmem:[%s192 + $0x8c] sm:$0xf]
      %v237 = vld [vmem:[%s1] sm:$0xf]
      %v238 = vld [vmem:[%s1 + $0x4] sm:$0xf]
      %v239 = vld [vmem:[%s1 + $0x8] sm:$0xf]
      %v240 = vld [vmem:[%s1 + $0xc] sm:$0xf]
      %v241 = vld [vmem:[%s1 + $0x10] sm:$0xf]
      %v242 = vld [vmem:[%s1 + $0x14] sm:$0xf]
      %v243 = vld [vmem:[%s1 + $0x18] sm:$0xf]
      %v244 = vld [vmem:[%s1 + $0x1c] sm:$0xf]
      %v245 = vld [vmem:[%s1 + $0x20] sm:$0xf]
      %v246 = vld [vmem:[%s1 + $0x24] sm:$0xf]
      %v247 = vld [vmem:[%s1 + $0x28] sm:$0xf]
      %v248 = vld [vmem:[%s1 + $0x2c] sm:$0xf]
      %v249 = vld [vmem:[%s1 + $0x30] sm:$0xf]
      %v250 = vld [vmem:[%s1 + $0x34] sm:$0xf]
      %v251 = vld [vmem:[%s1 + $0x38] sm:$0xf]
      %v252 = vld [vmem:[%s1 + $0x3c] sm:$0xf]
      %v253 = vld [vmem:[%s1 + $0x40] sm:$0xf]
      %v254 = vld [vmem:[%s1 + $0x44] sm:$0xf]
      %v255 = vld [vmem:[%s1 + $0x48] sm:$0xf]
      %v256 = vld [vmem:[%s1 + $0x4c] sm:$0xf]
      %v257 = vld [vmem:[%s1 + $0x50] sm:$0xf]
      %v258 = vld [vmem:[%s1 + $0x54] sm:$0xf]
      %v259 = vld [vmem:[%s1 + $0x58] sm:$0xf]
      %v260 = vld [vmem:[%s1 + $0x5c] sm:$0xf]
      %v261 = vld [vmem:[%s1 + $0x60] sm:$0xf]
      %v262 = vld [vmem:[%s1 + $0x64] sm:$0xf]
      %v263 = vld [vmem:[%s1 + $0x68] sm:$0xf]
      %v264 = vld [vmem:[%s1 + $0x6c] sm:$0xf]
      %v265 = vld [vmem:[%s1 + $0x70] sm:$0xf]
      %v266 = vld [vmem:[%s1 + $0x74] sm:$0xf]
      %v267 = vld [vmem:[%s1 + $0x78] sm:$0xf]
      %v268 = vld [vmem:[%s1 + $0x7c] sm:$0xf]
      %v269 = vld [vmem:[%s1 + $0x80] sm:$0xf]
      %v270 = vld [vmem:[%s1 + $0x84] sm:$0xf]
      %v271 = vld [vmem:[%s1 + $0x88] sm:$0xf]
      %v272 = vld [vmem:[%s1 + $0x8c] sm:$0xf]
      %v273 = vld [vmem:[%s2] sm:$0x1]
      %v275 = vlaneseq
      %v276 = vshrl.u32 %v275, 7
      %v277 = vsub.s32 0, %v276
      %v278 = vrot.slane %v273, %v277
      %v316 = vunpack.c.l.b16 %v201
      %v317 = vunpack.c.l.b16 %v202
      %v318 = vunpack.c.l.b16 %v203
      %v319 = vunpack.c.l.b16 %v204
      %v320 = vunpack.c.l.b16 %v205
      %v321 = vunpack.c.l.b16 %v206
      %v322 = vunpack.c.l.b16 %v207
      %v323 = vunpack.c.l.b16 %v208
      %v324 = vunpack.c.l.b16 %v209
      %v325 = vunpack.c.l.b16 %v210
      %v326 = vunpack.c.l.b16 %v211
      %v327 = vunpack.c.l.b16 %v212
      %v328 = vunpack.c.l.b16 %v213
      %v329 = vunpack.c.l.b16 %v214
      %v330 = vunpack.c.l.b16 %v215
      %v331 = vunpack.c.l.b16 %v216
      %v332 = vunpack.c.l.b16 %v217
      %v333 = vunpack.c.l.b16 %v218
      %v334 = vunpack.c.l.b16 %v219
      %v335 = vunpack.c.l.b16 %v220
      %v336 = vunpack.c.l.b16 %v221
      %v337 = vunpack.c.l.b16 %v222
      %v338 = vunpack.c.l.b16 %v223
      %v339 = vunpack.c.l.b16 %v224
      %v340 = vunpack.c.l.b16 %v225
      %v341 = vunpack.c.l.b16 %v226
      %v342 = vunpack.c.l.b16 %v227
      %v343 = vunpack.c.l.b16 %v228
      %v344 = vunpack.c.l.b16 %v229
      %v345 = vunpack.c.l.b16 %v230
      %v346 = vunpack.c.l.b16 %v231
      %v347 = vunpack.c.l.b16 %v232
      %v348 = vunpack.c.l.b16 %v233
      %v349 = vunpack.c.l.b16 %v234
      %v350 = vunpack.c.l.b16 %v235
      %v351 = vunpack.c.l.b16 %v236
      %v352 = vpack.c.b16 %v317, %v316
      %v353 = vpack.c.b16 %v319, %v318
      %v354 = vpack.c.b16 %v321, %v320
      %v355 = vpack.c.b16 %v323, %v322
      %v356 = vpack.c.b16 %v325, %v324
      %v357 = vpack.c.b16 %v327, %v326
      %v358 = vpack.c.b16 %v329, %v328
      %v359 = vpack.c.b16 %v331, %v330
      %v360 = vpack.c.b16 %v333, %v332
      %v361 = vpack.c.b16 %v335, %v334
      %v362 = vpack.c.b16 %v337, %v336
      %v363 = vpack.c.b16 %v339, %v338
      %v364 = vpack.c.b16 %v341, %v340
      %v365 = vpack.c.b16 %v343, %v342
      %v366 = vpack.c.b16 %v345, %v344
      %v367 = vpack.c.b16 %v347, %v346
      %v368 = vpack.c.b16 %v349, %v348
      %v369 = vpack.c.b16 %v351, %v350
      %388 = vxpose.xlu0.c.b16.start [1/8] %v352, 128
      %389 = vxpose.xlu0.c.b16.cont [2/8] %v353, 128
      %390 = vxpose.xlu0.c.b16.cont [3/8] %v354, 128
      %391 = vxpose.xlu0.c.b16.cont [4/8] %v355, 128
      %392 = vxpose.xlu0.c.b16.cont [5/8] %v356, 128
      %393 = vxpose.xlu0.c.b16.cont [6/8] %v357, 128
      %394 = vxpose.xlu0.c.b16.cont [7/8] %v358, 128
      %395 = vxpose.xlu0.c.b16.end [8/8] %v359, 128
      %v396 = vpop.trf.xlu0
      %v397 = vpop.trf.xlu0
      %v398 = vpop.trf.xlu0
      %v399 = vpop.trf.xlu0
      %v400 = vpop.trf.xlu0
      %v401 = vpop.trf.xlu0
      %v402 = vpop.trf.xlu0
      %v403 = vpop.trf.xlu0
      %404 = vxpose.xlu0.c.b16.start [1/8] %v360, 128
      %405 = vxpose.xlu0.c.b16.cont [2/8] %v361, 128
      %406 = vxpose.xlu0.c.b16.cont [3/8] %v362, 128
      %407 = vxpose.xlu0.c.b16.cont [4/8] %v363, 128
      %408 = vxpose.xlu0.c.b16.cont [5/8] %v364, 128
      %409 = vxpose.xlu0.c.b16.cont [6/8] %v365, 128
      %410 = vxpose.xlu0.c.b16.cont [7/8] %v366, 128
      %411 = vxpose.xlu0.c.b16.end [8/8] %v367, 128
      %v412 = vpop.trf.xlu0
      %v413 = vpop.trf.xlu0
      %v414 = vpop.trf.xlu0
      %v415 = vpop.trf.xlu0
      %v416 = vpop.trf.xlu0
      %v417 = vpop.trf.xlu0
      %v418 = vpop.trf.xlu0
      %v419 = vpop.trf.xlu0
      %420 = vxpose.xlu0.c.b16.start [1/8] %v368, 128
      %421 = vxpose.xlu0.c.b16.cont [2/8] %v369, 128
      %422 = vxpose.xlu0.c.b16.cont [3/8] 0, 128
      %423 = vxpose.xlu0.c.b16.cont [4/8] 0, 128
      %424 = vxpose.xlu0.c.b16.cont [5/8] 0, 128
      %425 = vxpose.xlu0.c.b16.cont [6/8] 0, 128
      %426 = vxpose.xlu0.c.b16.cont [7/8] 0, 128
      %427 = vxpose.xlu0.c.b16.end [8/8] 0, 128
      %v428 = vpop.trf.xlu0
      %v429 = vpop.trf.xlu0
      %v430 = vpop.trf.xlu0
      %v431 = vpop.trf.xlu0
      %v432 = vpop.trf.xlu0
      %v433 = vpop.trf.xlu0
      %v434 = vpop.trf.xlu0
      %v435 = vpop.trf.xlu0
      %v472 = vunpack.c.l.b16 %v237
      %v473 = vunpack.c.l.b16 %v238
      %v474 = vunpack.c.l.b16 %v239
      %v475 = vunpack.c.l.b16 %v240
      %v476 = vunpack.c.l.b16 %v241
      %v477 = vunpack.c.l.b16 %v242
      %v478 = vunpack.c.l.b16 %v243
      %v479 = vunpack.c.l.b16 %v244
      %v480 = vunpack.c.l.b16 %v245
      %v481 = vunpack.c.l.b16 %v246
      %v482 = vunpack.c.l.b16 %v247
      %v483 = vunpack.c.l.b16 %v248
      %v484 = vunpack.c.l.b16 %v249
      %v485 = vunpack.c.l.b16 %v250
      %v486 = vunpack.c.l.b16 %v251
      %v487 = vunpack.c.l.b16 %v252
      %v488 = vunpack.c.l.b16 %v253
      %v489 = vunpack.c.l.b16 %v254
      %v490 = vunpack.c.l.b16 %v255
      %v491 = vunpack.c.l.b16 %v256
      %v492 = vunpack.c.l.b16 %v257
      %v493 = vunpack.c.l.b16 %v258
      %v494 = vunpack.c.l.b16 %v259
      %v495 = vunpack.c.l.b16 %v260
      %v496 = vunpack.c.l.b16 %v261
      %v497 = vunpack.c.l.b16 %v262
      %v498 = vunpack.c.l.b16 %v263
      %v499 = vunpack.c.l.b16 %v264
      %v500 = vunpack.c.l.b16 %v265
      %v501 = vunpack.c.l.b16 %v266
      %v502 = vunpack.c.l.b16 %v267
      %v503 = vunpack.c.l.b16 %v268
      %v504 = vunpack.c.l.b16 %v269
      %v505 = vunpack.c.l.b16 %v270
      %v506 = vunpack.c.l.b16 %v271
      %v507 = vunpack.c.l.b16 %v272
      %v508 = vpack.c.b16 %v473, %v472
      %v509 = vpack.c.b16 %v475, %v474
      %v510 = vpack.c.b16 %v477, %v476
      %v511 = vpack.c.b16 %v479, %v478
      %v512 = vpack.c.b16 %v481, %v480
      %v513 = vpack.c.b16 %v483, %v482
      %v514 = vpack.c.b16 %v485, %v484
      %v515 = vpack.c.b16 %v487, %v486
      %v516 = vpack.c.b16 %v489, %v488
      %v517 = vpack.c.b16 %v491, %v490
      %v518 = vpack.c.b16 %v493, %v492
      %v519 = vpack.c.b16 %v495, %v494
      %v520 = vpack.c.b16 %v497, %v496
      %v521 = vpack.c.b16 %v499, %v498
      %v522 = vpack.c.b16 %v501, %v500
      %v523 = vpack.c.b16 %v503, %v502
      %v524 = vpack.c.b16 %v505, %v504
      %v525 = vpack.c.b16 %v507, %v506
      %vm544 = vcmask 261120
      %v546 = vsel %vm544, %v428, 0
      %548 = vmatprep.subr.bf16.mxu0 0
      %549 = vmatpush1.bf16.msra.mxu0 %v508
      %550 = vmatprep.subr.bf16.mxu0 0
      %551 = vmatpush1.bf16.msra.mxu0 %v509
      %552 = vmatprep.subr.bf16.mxu0 0
      %553 = vmatpush1.bf16.msra.mxu0 %v510
      %554 = vmatprep.subr.bf16.mxu0 0
      %555 = vmatpush1.bf16.msra.mxu0 %v511
      %556 = vmatprep.subr.bf16.mxu0 0
      %557 = vmatpush1.bf16.msra.mxu0 %v512
      %558 = vmatprep.subr.bf16.mxu0 0
      %559 = vmatpush1.bf16.msra.mxu0 %v513
      %560 = vmatprep.subr.bf16.mxu0 0
      %561 = vmatpush1.bf16.msra.mxu0 %v514
      %562 = vmatprep.subr.bf16.mxu0 0
      %563 = vmatpush1.bf16.msra.mxu0 %v515
      %564 = vmatprep.subr.bf16.mxu0 0
      %565 = vmatpush1.bf16.msra.mxu0 %v516
      %566 = vmatprep.subr.bf16.mxu0 0
      %567 = vmatpush1.bf16.msra.mxu0 %v517
      %568 = vmatprep.subr.bf16.mxu0 0
      %569 = vmatpush1.bf16.msra.mxu0 %v518
      %570 = vmatprep.subr.bf16.mxu0 0
      %571 = vmatpush1.bf16.msra.mxu0 %v519
      %572 = vmatprep.subr.bf16.mxu0 0
      %573 = vmatpush1.bf16.msra.mxu0 %v520
      %574 = vmatprep.subr.bf16.mxu0 0
      %575 = vmatpush1.bf16.msra.mxu0 %v521
      %576 = vmatprep.subr.bf16.mxu0 0
      %577 = vmatpush1.bf16.msra.mxu0 %v522
      %578 = vmatprep.subr.bf16.mxu0 0
      %579 = vmatpush1.bf16.msra.mxu0 %v523
      %580 = vmatprep.mubr.bf16.mxu0 %v412
      %581 = vmatmul.mubr.bf16.gmra.mrb[0].mxu0 %v396
      %v582 = vpop.f32.mrb[0].mxu0
      %v583 = vadd.f32 %v278, %v582
      %v584 = vpop.f32.mrb[0].mxu0
      %v585 = vpop.f32.mrb[0].mxu0
      %v586 = vpop.f32.mrb[0].mxu0
      %587 = vdwg.mxu0
      %588 = vmatprep.subr.bf16.mxu0 0
      %589 = vmatpush1.bf16.msra.mxu0 %v524
      %590 = vmatprep.subr.bf16.mxu0 0
      %591 = vmatpush1.bf16.msra.mxu0 %v525
      %592 = vmatprep.subr.bf16.mxu0 0
      %593 = vmatpush1.bf16.msra.mxu0 0
      %594 = vmatprep.subr.bf16.mxu0 0
      %595 = vmatpush1.bf16.msra.mxu0 0
      %596 = vmatprep.subr.bf16.mxu0 0
      %597 = vmatpush1.bf16.msra.mxu0 0
      %598 = vmatprep.subr.bf16.mxu0 0
      %599 = vmatpush1.bf16.msra.mxu0 0
      %600 = vmatprep.subr.bf16.mxu0 0
      %601 = vmatpush1.bf16.msra.mxu0 0
      %602 = vmatprep.subr.bf16.mxu0 0
      %603 = vmatpush1.bf16.msra.mxu0 0
      %604 = vmatprep.subr.bf16.mxu0 0
      %605 = vmatpush1.bf16.msra.mxu0 0
      %606 = vmatprep.subr.bf16.mxu0 0
      %607 = vmatpush1.bf16.msra.mxu0 0
      %608 = vmatprep.subr.bf16.mxu0 0
      %609 = vmatpush1.bf16.msra.mxu0 0
      %610 = vmatprep.subr.bf16.mxu0 0
      %611 = vmatpush1.bf16.msra.mxu0 0
      %612 = vmatprep.subr.bf16.mxu0 0
      %613 = vmatpush1.bf16.msra.mxu0 0
      %614 = vmatprep.subr.bf16.mxu0 0
      %615 = vmatpush1.bf16.msra.mxu0 0
      %616 = vmatprep.subr.bf16.mxu0 0
      %617 = vmatpush1.bf16.msra.mxu0 0
      %618 = vmatprep.subr.bf16.mxu0 0
      %619 = vmatpush1.bf16.msra.mxu0 0
      %620 = vmatprep.mubr.bf16.mxu0 0
      %621 = vmatmul.mubr.bf16.gmra.mrb[0].mxu0 %v546
      %v622 = vpop.f32.mrb[0].mxu0
      %v623 = vadd.f32 %v583, %v622
      %v624 = vpop.f32.mrb[0].mxu0
      %v625 = vpop.f32.mrb[0].mxu0
      %v626 = vpop.f32.mrb[0].mxu0
      %627 = vdwg.mxu0
      %v628 = vpack.c.bf16 %v623, %v623
      %vm629 = vcmask 517120
      %630 = vst.msk [vmem:[%s199] sm:$0x3] %vm629, %v628
      %p631 = scmp.lt.s32.totalorder %s18, 1
      %s632 = scalar_select %p631, %s18, 1
      %p633 = scmp.lt.s32.totalorder %s19, 0
      %s634 = scalar_select %p633, %s19, 0
      %s635 = sadd.s32 %s634, %s632
      %s636 = smul.addr %s635, 2
      %s637 = scalar_lea.vmem %s3, %s636
      // Predicated region
      $region33: #{_lambda_.9} parent=31 // pred_check
        %p638 = pneg %p116
      $region34: #{_lambda_.9} parent=31 // pred_check_branch
        %640 = sbr.rel (%p638) target = $region36
      $region35: #{_lambda_.9} parent=31 // pred_region
        _
      $region36: #{_lambda_.9} parent=31 // pred_fallthru
        _
    $region32: #{_lambda_.9} parent=5 // pred_fallthru
      _
    %p641 = scmp.le.s32.totalorder 2, %s9
    // Predicated region
    $region37: #{_lambda_.9} parent=5 // pred_check
      %p642 = pneg %p641
    $region38: #{_lambda_.9} parent=5 // pred_check_branch
      %644 = sbr.rel (%p642) target = $region40
    $region39: #{_lambda_.9} parent=5 // pred_region
      %s645 = ssub.s32 %s9, 2
      // Predicated region
      $region41: #{_lambda_.9} parent=39 // pred_check
        %p646 = pneg %p122
      $region42: #{_lambda_.9} parent=39 // pred_check_branch
        %648 = sbr.rel (%p646) target = $region44
      $region43: #{_lambda_.9} parent=39 // pred_region
        %p649 = scmp.lt.s32.totalorder %s20, 1
        %s650 = scalar_select %p649, %s20, 1
        %p651 = scmp.lt.s32.totalorder %s21, 0
        %s652 = scalar_select %p651, %s21, 0
        %s653 = sadd.s32 %s652, %s650
        %s654 = smul.addr %s653, 2
        %s655 = scalar_lea.vmem %s3, %s654
      $region44: #{_lambda_.9} parent=39 // pred_fallthru
        _
    $region40: #{_lambda_.9} parent=5 // pred_fallthru
      _
  $region6: #{_lambda_.9} parent=0 // loop_footer
    %s13 = sadd.s32 1, %s9
  $region7: #{_lambda_.9} parent=0 // loop_footer_branch
    %8 = sbr.rel target = $region3
  $region8: #{_lambda_.9} parent=0 // loop_exit
    _

</llo_original>
